<compile_context>
chip_gen: v7x
topology: tpu7x:2x2x1
jax: 0.10.0
libtpu: 0.0.40
codegen_flags: <defaults>
</compile_context>

<pallas_src>
import jax
import jax.numpy as jnp
from jax.experimental import pallas as pl
from jax.experimental.pallas import tpu as pltpu

LEAK = 0.1
BN_EPS = 1e-5
TM_MAX = 512        # max row tile of the im2col GEMM
STATS_ROWS = 8      # per-tile stats block padded to 8 sublanes (row 0 = sum, row 1 = sum of squares)


def _round_up(x, m):
    return (x + m - 1) // m * m


# ----------------------------- Pallas kernels -----------------------------

def _gemm_stats_kernel(a_ref, w_ref, y_ref, stats_ref):
    """y = a @ w (bf16 operands, fp32 accumulation on the MXU).
    stats block (per M-tile): row 0 = per-channel sum, row 1 = per-channel sum of squares."""
    y = jnp.dot(a_ref[...], w_ref[...], preferred_element_type=jnp.float32)
    y_ref[...] = y
    s = jnp.sum(y, axis=0, keepdims=True)
    ss = jnp.sum(y * y, axis=0, keepdims=True)
    pad = jnp.zeros((STATS_ROWS - 2, s.shape[1]), jnp.float32)
    stats_ref[...] = jnp.concatenate([s, ss, pad], axis=0)


def _gemm_kernel(a_ref, w_ref, y_ref):
    """Plain GEMM (used for the final decoder layer: no BN, no activation)."""
    y_ref[...] = jnp.dot(a_ref[...], w_ref[...], preferred_element_type=jnp.float32)


def _bn_lrelu_kernel(y_ref, scale_ref, shift_ref, o_ref):
    """o = leaky_relu(y * scale + shift), per-output-channel folded BatchNorm; bf16 output."""
    z = y_ref[...] * scale_ref[...] + shift_ref[...]
    o_ref[...] = jnp.where(z >= 0, z, LEAK * z).astype(o_ref.dtype)


# ----------------------------- kernel wrappers -----------------------------

def _gemm(patches, wmat, *, with_stats):
    """patches: [M, K], wmat: [K, OC].
    Returns (y_pad [Mp, OCp] fp32, stats [8, OCp] fp32 or None, dims)."""
    M, K = patches.shape
    _, OC = wmat.shape
    tm = min(TM_MAX, _round_up(max(M, 1), 128))
    Mp = _round_up(max(M, 1), tm)
    Kp = _round_up(K, 128)
    OCp = _round_up(OC, 128)
    n_tiles = Mp // tm

    a = jnp.pad(patches.astype(jnp.bfloat16), ((0, Mp - M), (0, Kp - K)))
    w = jnp.pad(wmat.astype(jnp.bfloat16), ((0, Kp - K), (0, OCp - OC)))

    a_spec = pl.BlockSpec((tm, Kp), lambda i: (i, 0))
    w_spec = pl.BlockSpec((Kp, OCp), lambda i: (0, 0))
    y_spec = pl.BlockSpec((tm, OCp), lambda i: (i, 0))
    cparams = pltpu.CompilerParams(dimension_semantics=("parallel",))

    if with_stats:
        y_pad, part = pl.pallas_call(
            _gemm_stats_kernel,
            out_shape=(jax.ShapeDtypeStruct((Mp, OCp), jnp.float32),
                       jax.ShapeDtypeStruct((n_tiles * STATS_ROWS, OCp), jnp.float32)),
            grid=(n_tiles,),
            in_specs=[a_spec, w_spec],
            out_specs=(y_spec, pl.BlockSpec((STATS_ROWS, OCp), lambda i: (i, 0))),
            compiler_params=cparams,
        )(a, w)
        # tiny cross-tile reduction of the per-tile partial stats (zero-padded rows contribute nothing)
        stats = jnp.sum(part.reshape(n_tiles, STATS_ROWS, OCp), axis=0)
    else:
        y_pad = pl.pallas_call(
            _gemm_kernel,
            out_shape=jax.ShapeDtypeStruct((Mp, OCp), jnp.float32),
            grid=(n_tiles,),
            in_specs=[a_spec, w_spec],
            out_specs=y_spec,
            compiler_params=cparams,
        )(a, w)
        stats = None
    return y_pad, stats, (M, OC, Mp, OCp, tm)


def _bn_lrelu(y_pad, scale, shift, Mp, OCp, tm):
    OC = scale.shape[0]
    sc = jnp.pad(scale, (0, OCp - OC)).reshape(1, OCp)
    sh = jnp.pad(shift, (0, OCp - OC)).reshape(1, OCp)
    return pl.pallas_call(
        _bn_lrelu_kernel,
        out_shape=jax.ShapeDtypeStruct((Mp, OCp), jnp.bfloat16),
        grid=(Mp // tm,),
        in_specs=[pl.BlockSpec((tm, OCp), lambda i: (i, 0)),
                  pl.BlockSpec((1, OCp), lambda i: (0, 0)),
                  pl.BlockSpec((1, OCp), lambda i: (0, 0))],
        out_specs=pl.BlockSpec((tm, OCp), lambda i: (i, 0)),
        compiler_params=pltpu.CompilerParams(dimension_semantics=("parallel",)),
    )(y_pad, sc, sh)


# ----------------------------- conv glue (channels-last im2col) -----------------------------

def _im2col_nhwc(xpad, KH, KW, stride, OH, OW):
    """xpad: [N, Hp, Wp, C] (already zero-padded) -> patches [N*OH*OW, KH*KW*C] (tap-major, channel-minor)."""
    N, _, _, C = xpad.shape
    cols = []
    for dh in range(KH):
        for dw in range(KW):
            sl = xpad[:, dh:dh + stride * (OH - 1) + 1:stride,
                         dw:dw + stride * (OW - 1) + 1:stride, :]     # [N, OH, OW, C]
            cols.append(sl)
    p = jnp.concatenate(cols, axis=-1)                                # [N, OH, OW, KH*KW*C]
    return p.reshape(N * OH * OW, KH * KW * C)


def _finish_layer(y_pad, stats, dims, gamma, beta, N, OH, OW, apply_bn_act):
    M, OC, Mp, OCp, tm = dims
    if apply_bn_act:
        s = stats[0, :OC]
        ss = stats[1, :OC]
        mean = s / M
        var = jnp.maximum(ss / M - mean * mean, 0.0)   # biased variance (PyTorch BN training mode), clamped
        inv = gamma / jnp.sqrt(var + BN_EPS)
        scale = inv
        shift = beta - mean * inv
        y_pad = _bn_lrelu(y_pad, scale, shift, Mp, OCp, tm)           # bf16 slab
    # stay channels-last; no NCHW round trip between layers
    return y_pad[:M, :OC].reshape(N, OH, OW, OC)


def conv2d_bn_lrelu(x, w, gamma, beta, *, stride=2, padding=1, apply_bn_act=True):
    """x: NHWC (bf16), w: [OC, C, KH, KW] (nn.Conv2d layout, bias=False)."""
    N, H, W, C = x.shape
    OC, _, KH, KW = w.shape
    OH = (H + 2 * padding - KH) // stride + 1
    OW = (W + 2 * padding - KW) // stride + 1
    xpad = jnp.pad(x, ((0, 0), (padding, padding), (padding, padding), (0, 0)))
    patches = _im2col_nhwc(xpad, KH, KW, stride, OH, OW)
    wmat = w.transpose(2, 3, 1, 0).reshape(KH * KW * C, OC)          # (kh, kw, c) x oc
    y_pad, stats, dims = _gemm(patches, wmat, with_stats=apply_bn_act)
    return _finish_layer(y_pad, stats, dims, gamma, beta, N, OH, OW, apply_bn_act)


def convtranspose2d_bn_lrelu(x, w, gamma, beta, *, stride=2, padding=1,
                             output_padding=1, apply_bn_act=True):
    """x: NHWC (bf16), w: [C_in, C_out, KH, KW] (nn.ConvTranspose2d layout, bias=False)."""
    N, H, W, C = x.shape
    _, OC, KH, KW = w.shape
    # transposed conv == stride-1 conv over the stride-dilated input with flipped / transposed kernel
    Hd, Wd = stride * (H - 1) + 1, stride * (W - 1) + 1
    xd = jnp.zeros((N, Hd, Wd, C), x.dtype).at[:, ::stride, ::stride, :].set(x)
    pad_lo = KH - 1 - padding
    pad_hi = KH - 1 - padding + output_padding
    xpad = jnp.pad(xd, ((0, 0), (pad_lo, pad_hi), (pad_lo, pad_hi), (0, 0)))
    OH = (H - 1) * stride - 2 * padding + KH + output_padding
    OW = (W - 1) * stride - 2 * padding + KW + output_padding
    patches = _im2col_nhwc(xpad, KH, KW, 1, OH, OW)
    wf = w[:, :, ::-1, ::-1]                                          # spatial flip
    wmat = wf.transpose(2, 3, 0, 1).reshape(KH * KW * C, OC)          # (kh, kw, c_in) x c_out
    y_pad, stats, dims = _gemm(patches, wmat, with_stats=apply_bn_act)
    return _finish_layer(y_pad, stats, dims, gamma, beta, N, OH, OW, apply_bn_act)


# ----------------------------- model -----------------------------

def init_params(key, in_ch=3):
    enc_ch = [in_ch, 32, 64, 128, 256]
    dec_ch = [256, 128, 64, 32, in_ch]
    params = {"enc_w": [], "enc_g": [], "enc_b": [],
              "dec_w": [], "dec_g": [], "dec_b": []}
    for i in range(4):
        key, k = jax.random.split(key)
        params["enc_w"].append(
            0.1 * jax.random.normal(k, (enc_ch[i + 1], enc_ch[i], 3, 3), jnp.float32))
        params["enc_g"].append(jnp.ones((enc_ch[i + 1],), jnp.float32))   # BatchNorm gamma init
        params["enc_b"].append(jnp.zeros((enc_ch[i + 1],), jnp.float32))  # BatchNorm beta init
    for i in range(4):
        key, k = jax.random.split(key)
        params["dec_w"].append(
            0.1 * jax.random.normal(k, (dec_ch[i], dec_ch[i + 1], 3, 3), jnp.float32))
        if i < 3:
            params["dec_g"].append(jnp.ones((dec_ch[i + 1],), jnp.float32))
            params["dec_b"].append(jnp.zeros((dec_ch[i + 1],), jnp.float32))
    return params


def cnn_autoencoder_forward(params, x):
    # TODO(synk): self.layer_disp (cv2 host-side visualization) has no Pallas equivalent; omitted.
    # NCHW fp32 at the boundary -> channels-last bf16 internally (MXU-native, half HBM traffic)
    h = jnp.transpose(x, (0, 2, 3, 1)).astype(jnp.bfloat16)
    for i in range(4):  # encoder
        h = conv2d_bn_lrelu(h, params["enc_w"][i], params["enc_g"][i], params["enc_b"][i],
                            stride=2, padding=1, apply_bn_act=True)
    for i in range(3):  # decoder (with BN + LeakyReLU)
        h = convtranspose2d_bn_lrelu(h, params["dec_w"][i], params["dec_g"][i], params["dec_b"][i],
                                     stride=2, padding=1, output_padding=1, apply_bn_act=True)
    # final decoder layer: no BN, no activation (stats-free GEMM, fp32 output)
    h = convtranspose2d_bn_lrelu(h, params["dec_w"][3], None, None,
                                 stride=2, padding=1, output_padding=1, apply_bn_act=False)
    return jnp.transpose(h, (0, 3, 1, 2)).astype(jnp.float32)         # back to NCHW at the boundary


if __name__ == "__main__":
    key = jax.random.PRNGKey(0)
    key, kx = jax.random.split(key)
    x = jax.random.uniform(kx, (2, 3, 16, 16), jnp.float32)   # NCHW, like PyTorch input_size=[_, 3, H, W]
    params = init_params(key, in_ch=3)

    y = jax.jit(cnn_autoencoder_forward)(params, x)
    y = jax.block_until_ready(y)
    assert y.shape == x.shape, (y.shape, x.shape)
    assert jnp.all(jnp.isfinite(y))
    print("KERNEL_OK")
</pallas_src>

<mosaic_0001>
module attributes {stable_mosaic.version = 11 : i64} {
  func.func @_gemm_stats_kernel(%arg0: i32, %arg1: memref<128x128xbf16, #tpu.memory_space<vmem>>, %arg2: memref<128x128xbf16, #tpu.memory_space<vmem>>, %arg3: memref<128x128xf32, #tpu.memory_space<vmem>>, %arg4: memref<8x128xf32, #tpu.memory_space<vmem>>) attributes {dimension_semantics = [#tpu.dimension_semantics<parallel>], iteration_bounds = array<i64: 1>, scalar_prefetch = 0 : i64, scratch_operands = 0 : i64, tpu.core_type = #tpu.core_type<tc>, window_params = [{transform_indices = @transform_0, window_bounds = array<i64: 128, 128>}, {pipeline_mode = #tpu.pipeline_mode<synchronous>, transform_indices = @transform_1, window_bounds = array<i64: 128, 128>}, {transform_indices = @transform_2, window_bounds = array<i64: 128, 128>}, {transform_indices = @transform_3, window_bounds = array<i64: 8, 128>}]} {
    %c0 = arith.constant 0 : index
    %c0_0 = arith.constant 0 : index
    %0 = vector.load %arg1[%c0, %c0_0] : memref<128x128xbf16, #tpu.memory_space<vmem>>, vector<128x128xbf16>
    %c0_1 = arith.constant 0 : index
    %c0_2 = arith.constant 0 : index
    %1 = vector.load %arg2[%c0_1, %c0_2] : memref<128x128xbf16, #tpu.memory_space<vmem>>, vector<128x128xbf16>
    %cst = arith.constant dense<0.000000e+00> : vector<128x128xf32>
    %2 = tpu.matmul %0, %1, %cst {dimension_numbers = #tpu.dot_dimension_numbers<[1], [0], [0], [1], [0, 0, 1, 1], [], []>} : vector<128x128xbf16>, vector<128x128xbf16>, vector<128x128xf32> -> vector<128x128xf32>
    %c0_3 = arith.constant 0 : index
    %c0_4 = arith.constant 0 : index
    %3 = vector.load %arg3[%c0_3, %c0_4] : memref<128x128xf32, #tpu.memory_space<vmem>>, vector<128x128xf32>
    tpu.vector_store %arg3[%c0_3, %c0_4], %2 {strides = array<i32>} : memref<128x128xf32, #tpu.memory_space<vmem>>, vector<128x128xf32>,
    %cst_5 = arith.constant dense<0.000000e+00> : vector<128xf32>
    %4 = vector.multi_reduction <add>, %2, %cst_5 [0] : vector<128x128xf32> to vector<128xf32>
    %5 = vector.shape_cast %4 : vector<128xf32> to vector<1x128xf32>
    %6 = arith.mulf %2, %2 : vector<128x128xf32>
    %cst_6 = arith.constant dense<0.000000e+00> : vector<128xf32>
    %7 = vector.multi_reduction <add>, %6, %cst_6 [0] : vector<128x128xf32> to vector<128xf32>
    %8 = vector.shape_cast %7 : vector<128xf32> to vector<1x128xf32>
    %cst_7 = arith.constant 0.000000e+00 : f32
    %9 = vector.broadcast %cst_7 : f32 to vector<6x128xf32>
    %10 = tpu.concatenate %5, %8, %9 in 0 : vector<1x128xf32>, vector<1x128xf32>, vector<6x128xf32> -> vector<8x128xf32>
    %c0_8 = arith.constant 0 : index
    %c0_9 = arith.constant 0 : index
    %11 = vector.load %arg4[%c0_8, %c0_9] : memref<8x128xf32, #tpu.memory_space<vmem>>, vector<8x128xf32>
    tpu.vector_store %arg4[%c0_8, %c0_9], %10 {strides = array<i32>} : memref<8x128xf32, #tpu.memory_space<vmem>>, vector<8x128xf32>,
    return
  }
  func.func @transform_0(%arg0: i32) -> (i32, i32) {
    %c0_i32 = arith.constant 0 : i32
    %c0_i32_0 = arith.constant 0 : i32
    return %arg0, %c0_i32 : i32, i32
  }
  func.func @transform_1(%arg0: i32) -> (i32, i32) {
    %c0_i32 = arith.constant 0 : i32
    %c0_i32_0 = arith.constant 0 : i32
    %c0_i32_1 = arith.constant 0 : i32
    return %c0_i32, %c0_i32_0 : i32, i32
  }
  func.func @transform_2(%arg0: i32) -> (i32, i32) {
    %c0_i32 = arith.constant 0 : i32
    %c0_i32_0 = arith.constant 0 : i32
    return %arg0, %c0_i32 : i32, i32
  }
  func.func @transform_3(%arg0: i32) -> (i32, i32) {
    %c0_i32 = arith.constant 0 : i32
    %c0_i32_0 = arith.constant 0 : i32
    return %arg0, %c0_i32 : i32, i32
  }
}

module attributes {stable_mosaic.version = 11 : i64} {
  func.func @_bn_lrelu_kernel(%arg0: i32, %arg1: memref<128x128xf32, #tpu.memory_space<vmem>>, %arg2: memref<1x128xf32, #tpu.memory_space<vmem>>, %arg3: memref<1x128xf32, #tpu.memory_space<vmem>>, %arg4: memref<128x128xbf16, #tpu.memory_space<vmem>>) attributes {dimension_semantics = [#tpu.dimension_semantics<parallel>], iteration_bounds = array<i64: 1>, scalar_prefetch = 0 : i64, scratch_operands = 0 : i64, tpu.core_type = #tpu.core_type<tc>, window_params = [{transform_indices = @transform_0, window_bounds = array<i64: 128, 128>}, {pipeline_mode = #tpu.pipeline_mode<synchronous>, transform_indices = @transform_1, window_bounds = array<i64: 1, 128>}, {pipeline_mode = #tpu.pipeline_mode<synchronous>, transform_indices = @transform_2, window_bounds = array<i64: 1, 128>}, {transform_indices = @transform_3, window_bounds = array<i64: 128, 128>}]} {
    %c0 = arith.constant 0 : index
    %c0_0 = arith.constant 0 : index
    %0 = vector.load %arg1[%c0, %c0_0] : memref<128x128xf32, #tpu.memory_space<vmem>>, vector<128x128xf32>
    %c0_1 = arith.constant 0 : index
    %c0_2 = arith.constant 0 : index
    %1 = vector.load %arg2[%c0_1, %c0_2] : memref<1x128xf32, #tpu.memory_space<vmem>>, vector<1x128xf32>
    %2 = vector.broadcast %1 : vector<1x128xf32> to vector<128x128xf32>
    %3 = arith.mulf %0, %2 : vector<128x128xf32>
    %c0_3 = arith.constant 0 : index
    %c0_4 = arith.constant 0 : index
    %4 = vector.load %arg3[%c0_3, %c0_4] : memref<1x128xf32, #tpu.memory_space<vmem>>, vector<1x128xf32>
    %5 = vector.broadcast %4 : vector<1x128xf32> to vector<128x128xf32>
    %6 = arith.addf %3, %5 : vector<128x128xf32>
    %cst = arith.constant 0.000000e+00 : f32
    %7 = vector.broadcast %cst : f32 to vector<128x128xf32>
    %8 = arith.cmpf oge, %6, %7 : vector<128x128xf32>
    %cst_5 = arith.constant 1.000000e-01 : f32
    %9 = vector.broadcast %cst_5 : f32 to vector<128x128xf32>
    %10 = arith.mulf %9, %6 : vector<128x128xf32>
    %11 = arith.select %8, %6, %10 : vector<128x128xi1>, vector<128x128xf32>
    %12 = arith.truncf %11 : vector<128x128xf32> to vector<128x128xbf16>
    %c0_6 = arith.constant 0 : index
    %c0_7 = arith.constant 0 : index
    %13 = vector.load %arg4[%c0_6, %c0_7] : memref<128x128xbf16, #tpu.memory_space<vmem>>, vector<128x128xbf16>
    tpu.vector_store %arg4[%c0_6, %c0_7], %12 {strides = array<i32>} : memref<128x128xbf16, #tpu.memory_space<vmem>>, vector<128x128xbf16>,
    return
  }
  func.func @transform_0(%arg0: i32) -> (i32, i32) {
    %c0_i32 = arith.constant 0 : i32
    %c0_i32_0 = arith.constant 0 : i32
    return %arg0, %c0_i32 : i32, i32
  }
  func.func @transform_1(%arg0: i32) -> (i32, i32) {
    %c0_i32 = arith.constant 0 : i32
    %c0_i32_0 = arith.constant 0 : i32
    %c0_i32_1 = arith.constant 0 : i32
    return %c0_i32, %c0_i32_0 : i32, i32
  }
  func.func @transform_2(%arg0: i32) -> (i32, i32) {
    %c0_i32 = arith.constant 0 : i32
    %c0_i32_0 = arith.constant 0 : i32
    %c0_i32_1 = arith.constant 0 : i32
    return %c0_i32, %c0_i32_0 : i32, i32
  }
  func.func @transform_3(%arg0: i32) -> (i32, i32) {
    %c0_i32 = arith.constant 0 : i32
    %c0_i32_0 = arith.constant 0 : i32
    return %arg0, %c0_i32 : i32, i32
  }
}

module attributes {stable_mosaic.version = 11 : i64} {
  func.func @_gemm_stats_kernel(%arg0: i32, %arg1: memref<128x384xbf16, #tpu.memory_space<vmem>>, %arg2: memref<384x128xbf16, #tpu.memory_space<vmem>>, %arg3: memref<128x128xf32, #tpu.memory_space<vmem>>, %arg4: memref<8x128xf32, #tpu.memory_space<vmem>>) attributes {dimension_semantics = [#tpu.dimension_semantics<parallel>], iteration_bounds = array<i64: 1>, scalar_prefetch = 0 : i64, scratch_operands = 0 : i64, tpu.core_type = #tpu.core_type<tc>, window_params = [{transform_indices = @transform_0, window_bounds = array<i64: 128, 384>}, {pipeline_mode = #tpu.pipeline_mode<synchronous>, transform_indices = @transform_1, window_bounds = array<i64: 384, 128>}, {transform_indices = @transform_2, window_bounds = array<i64: 128, 128>}, {transform_indices = @transform_3, window_bounds = array<i64: 8, 128>}]} {
    %c0 = arith.constant 0 : index
    %c0_0 = arith.constant 0 : index
    %0 = vector.load %arg1[%c0, %c0_0] : memref<128x384xbf16, #tpu.memory_space<vmem>>, vector<128x384xbf16>
    %c0_1 = arith.constant 0 : index
    %c0_2 = arith.constant 0 : index
    %1 = vector.load %arg2[%c0_1, %c0_2] : memref<384x128xbf16, #tpu.memory_space<vmem>>, vector<384x128xbf16>
    %cst = arith.constant dense<0.000000e+00> : vector<128x128xf32>
    %2 = tpu.matmul %0, %1, %cst {dimension_numbers = #tpu.dot_dimension_numbers<[1], [0], [0], [1], [0, 0, 1, 1], [], []>} : vector<128x384xbf16>, vector<384x128xbf16>, vector<128x128xf32> -> vector<128x128xf32>
    %c0_3 = arith.constant 0 : index
    %c0_4 = arith.constant 0 : index
    %3 = vector.load %arg3[%c0_3, %c0_4] : memref<128x128xf32, #tpu.memory_space<vmem>>, vector<128x128xf32>
    tpu.vector_store %arg3[%c0_3, %c0_4], %2 {strides = array<i32>} : memref<128x128xf32, #tpu.memory_space<vmem>>, vector<128x128xf32>,
    %cst_5 = arith.constant dense<0.000000e+00> : vector<128xf32>
    %4 = vector.multi_reduction <add>, %2, %cst_5 [0] : vector<128x128xf32> to vector<128xf32>
    %5 = vector.shape_cast %4 : vector<128xf32> to vector<1x128xf32>
    %6 = arith.mulf %2, %2 : vector<128x128xf32>
    %cst_6 = arith.constant dense<0.000000e+00> : vector<128xf32>
    %7 = vector.multi_reduction <add>, %6, %cst_6 [0] : vector<128x128xf32> to vector<128xf32>
    %8 = vector.shape_cast %7 : vector<128xf32> to vector<1x128xf32>
    %cst_7 = arith.constant 0.000000e+00 : f32
    %9 = vector.broadcast %cst_7 : f32 to vector<6x128xf32>
    %10 = tpu.concatenate %5, %8, %9 in 0 : vector<1x128xf32>, vector<1x128xf32>, vector<6x128xf32> -> vector<8x128xf32>
    %c0_8 = arith.constant 0 : index
    %c0_9 = arith.constant 0 : index
    %11 = vector.load %arg4[%c0_8, %c0_9] : memref<8x128xf32, #tpu.memory_space<vmem>>, vector<8x128xf32>
    tpu.vector_store %arg4[%c0_8, %c0_9], %10 {strides = array<i32>} : memref<8x128xf32, #tpu.memory_space<vmem>>, vector<8x128xf32>,
    return
  }
  func.func @transform_0(%arg0: i32) -> (i32, i32) {
    %c0_i32 = arith.constant 0 : i32
    %c0_i32_0 = arith.constant 0 : i32
    return %arg0, %c0_i32 : i32, i32
  }
  func.func @transform_1(%arg0: i32) -> (i32, i32) {
    %c0_i32 = arith.constant 0 : i32
    %c0_i32_0 = arith.constant 0 : i32
    %c0_i32_1 = arith.constant 0 : i32
    return %c0_i32, %c0_i32_0 : i32, i32
  }
  func.func @transform_2(%arg0: i32) -> (i32, i32) {
    %c0_i32 = arith.constant 0 : i32
    %c0_i32_0 = arith.constant 0 : i32
    return %arg0, %c0_i32 : i32, i32
  }
  func.func @transform_3(%arg0: i32) -> (i32, i32) {
    %c0_i32 = arith.constant 0 : i32
    %c0_i32_0 = arith.constant 0 : i32
    return %arg0, %c0_i32 : i32, i32
  }
}

module attributes {stable_mosaic.version = 11 : i64} {
  func.func @_gemm_stats_kernel(%arg0: i32, %arg1: memref<128x640xbf16, #tpu.memory_space<vmem>>, %arg2: memref<640x128xbf16, #tpu.memory_space<vmem>>, %arg3: memref<128x128xf32, #tpu.memory_space<vmem>>, %arg4: memref<8x128xf32, #tpu.memory_space<vmem>>) attributes {dimension_semantics = [#tpu.dimension_semantics<parallel>], iteration_bounds = array<i64: 1>, scalar_prefetch = 0 : i64, scratch_operands = 0 : i64, tpu.core_type = #tpu.core_type<tc>, window_params = [{transform_indices = @transform_0, window_bounds = array<i64: 128, 640>}, {pipeline_mode = #tpu.pipeline_mode<synchronous>, transform_indices = @transform_1, window_bounds = array<i64: 640, 128>}, {transform_indices = @transform_2, window_bounds = array<i64: 128, 128>}, {transform_indices = @transform_3, window_bounds = array<i64: 8, 128>}]} {
    %c0 = arith.constant 0 : index
    %c0_0 = arith.constant 0 : index
    %0 = vector.load %arg1[%c0, %c0_0] : memref<128x640xbf16, #tpu.memory_space<vmem>>, vector<128x640xbf16>
    %c0_1 = arith.constant 0 : index
    %c0_2 = arith.constant 0 : index
    %1 = vector.load %arg2[%c0_1, %c0_2] : memref<640x128xbf16, #tpu.memory_space<vmem>>, vector<640x128xbf16>
    %cst = arith.constant dense<0.000000e+00> : vector<128x128xf32>
    %2 = tpu.matmul %0, %1, %cst {dimension_numbers = #tpu.dot_dimension_numbers<[1], [0], [0], [1], [0, 0, 1, 1], [], []>} : vector<128x640xbf16>, vector<640x128xbf16>, vector<128x128xf32> -> vector<128x128xf32>
    %c0_3 = arith.constant 0 : index
    %c0_4 = arith.constant 0 : index
    %3 = vector.load %arg3[%c0_3, %c0_4] : memref<128x128xf32, #tpu.memory_space<vmem>>, vector<128x128xf32>
    tpu.vector_store %arg3[%c0_3, %c0_4], %2 {strides = array<i32>} : memref<128x128xf32, #tpu.memory_space<vmem>>, vector<128x128xf32>,
    %cst_5 = arith.constant dense<0.000000e+00> : vector<128xf32>
    %4 = vector.multi_reduction <add>, %2, %cst_5 [0] : vector<128x128xf32> to vector<128xf32>
    %5 = vector.shape_cast %4 : vector<128xf32> to vector<1x128xf32>
    %6 = arith.mulf %2, %2 : vector<128x128xf32>
    %cst_6 = arith.constant dense<0.000000e+00> : vector<128xf32>
    %7 = vector.multi_reduction <add>, %6, %cst_6 [0] : vector<128x128xf32> to vector<128xf32>
    %8 = vector.shape_cast %7 : vector<128xf32> to vector<1x128xf32>
    %cst_7 = arith.constant 0.000000e+00 : f32
    %9 = vector.broadcast %cst_7 : f32 to vector<6x128xf32>
    %10 = tpu.concatenate %5, %8, %9 in 0 : vector<1x128xf32>, vector<1x128xf32>, vector<6x128xf32> -> vector<8x128xf32>
    %c0_8 = arith.constant 0 : index
    %c0_9 = arith.constant 0 : index
    %11 = vector.load %arg4[%c0_8, %c0_9] : memref<8x128xf32, #tpu.memory_space<vmem>>, vector<8x128xf32>
    tpu.vector_store %arg4[%c0_8, %c0_9], %10 {strides = array<i32>} : memref<8x128xf32, #tpu.memory_space<vmem>>, vector<8x128xf32>,
    return
  }
  func.func @transform_0(%arg0: i32) -> (i32, i32) {
    %c0_i32 = arith.constant 0 : i32
    %c0_i32_0 = arith.constant 0 : i32
    return %arg0, %c0_i32 : i32, i32
  }
  func.func @transform_1(%arg0: i32) -> (i32, i32) {
    %c0_i32 = arith.constant 0 : i32
    %c0_i32_0 = arith.constant 0 : i32
    %c0_i32_1 = arith.constant 0 : i32
    return %c0_i32, %c0_i32_0 : i32, i32
  }
  func.func @transform_2(%arg0: i32) -> (i32, i32) {
    %c0_i32 = arith.constant 0 : i32
    %c0_i32_0 = arith.constant 0 : i32
    return %arg0, %c0_i32 : i32, i32
  }
  func.func @transform_3(%arg0: i32) -> (i32, i32) {
    %c0_i32 = arith.constant 0 : i32
    %c0_i32_0 = arith.constant 0 : i32
    return %arg0, %c0_i32 : i32, i32
  }
}

module attributes {stable_mosaic.version = 11 : i64} {
  func.func @_gemm_stats_kernel(%arg0: i32, %arg1: memref<128x1152xbf16, #tpu.memory_space<vmem>>, %arg2: memref<1152x256xbf16, #tpu.memory_space<vmem>>, %arg3: memref<128x256xf32, #tpu.memory_space<vmem>>, %arg4: memref<8x256xf32, #tpu.memory_space<vmem>>) attributes {dimension_semantics = [#tpu.dimension_semantics<parallel>], iteration_bounds = array<i64: 1>, scalar_prefetch = 0 : i64, scratch_operands = 0 : i64, tpu.core_type = #tpu.core_type<tc>, window_params = [{transform_indices = @transform_0, window_bounds = array<i64: 128, 1152>}, {pipeline_mode = #tpu.pipeline_mode<synchronous>, transform_indices = @transform_1, window_bounds = array<i64: 1152, 256>}, {transform_indices = @transform_2, window_bounds = array<i64: 128, 256>}, {transform_indices = @transform_3, window_bounds = array<i64: 8, 256>}]} {
    %c0 = arith.constant 0 : index
    %c0_0 = arith.constant 0 : index
    %0 = vector.load %arg1[%c0, %c0_0] : memref<128x1152xbf16, #tpu.memory_space<vmem>>, vector<128x1152xbf16>
    %c0_1 = arith.constant 0 : index
    %c0_2 = arith.constant 0 : index
    %1 = vector.load %arg2[%c0_1, %c0_2] : memref<1152x256xbf16, #tpu.memory_space<vmem>>, vector<1152x256xbf16>
    %cst = arith.constant dense<0.000000e+00> : vector<128x256xf32>
    %2 = tpu.matmul %0, %1, %cst {dimension_numbers = #tpu.dot_dimension_numbers<[1], [0], [0], [1], [0, 0, 1, 1], [], []>} : vector<128x1152xbf16>, vector<1152x256xbf16>, vector<128x256xf32> -> vector<128x256xf32>
    %c0_3 = arith.constant 0 : index
    %c0_4 = arith.constant 0 : index
    %3 = vector.load %arg3[%c0_3, %c0_4] : memref<128x256xf32, #tpu.memory_space<vmem>>, vector<128x256xf32>
    tpu.vector_store %arg3[%c0_3, %c0_4], %2 {strides = array<i32>} : memref<128x256xf32, #tpu.memory_space<vmem>>, vector<128x256xf32>,
    %cst_5 = arith.constant dense<0.000000e+00> : vector<256xf32>
    %4 = vector.multi_reduction <add>, %2, %cst_5 [0] : vector<128x256xf32> to vector<256xf32>
    %5 = vector.shape_cast %4 : vector<256xf32> to vector<1x256xf32>
    %6 = arith.mulf %2, %2 : vector<128x256xf32>
    %cst_6 = arith.constant dense<0.000000e+00> : vector<256xf32>
    %7 = vector.multi_reduction <add>, %6, %cst_6 [0] : vector<128x256xf32> to vector<256xf32>
    %8 = vector.shape_cast %7 : vector<256xf32> to vector<1x256xf32>
    %cst_7 = arith.constant 0.000000e+00 : f32
    %9 = vector.broadcast %cst_7 : f32 to vector<6x256xf32>
    %10 = tpu.concatenate %5, %8, %9 in 0 : vector<1x256xf32>, vector<1x256xf32>, vector<6x256xf32> -> vector<8x256xf32>
    %c0_8 = arith.constant 0 : index
    %c0_9 = arith.constant 0 : index
    %11 = vector.load %arg4[%c0_8, %c0_9] : memref<8x256xf32, #tpu.memory_space<vmem>>, vector<8x256xf32>
    tpu.vector_store %arg4[%c0_8, %c0_9], %10 {strides = array<i32>} : memref<8x256xf32, #tpu.memory_space<vmem>>, vector<8x256xf32>,
    return
  }
  func.func @transform_0(%arg0: i32) -> (i32, i32) {
    %c0_i32 = arith.constant 0 : i32
    %c0_i32_0 = arith.constant 0 : i32
    return %arg0, %c0_i32 : i32, i32
  }
  func.func @transform_1(%arg0: i32) -> (i32, i32) {
    %c0_i32 = arith.constant 0 : i32
    %c0_i32_0 = arith.constant 0 : i32
    %c0_i32_1 = arith.constant 0 : i32
    return %c0_i32, %c0_i32_0 : i32, i32
  }
  func.func @transform_2(%arg0: i32) -> (i32, i32) {
    %c0_i32 = arith.constant 0 : i32
    %c0_i32_0 = arith.constant 0 : i32
    return %arg0, %c0_i32 : i32, i32
  }
  func.func @transform_3(%arg0: i32) -> (i32, i32) {
    %c0_i32 = arith.constant 0 : i32
    %c0_i32_0 = arith.constant 0 : i32
    return %arg0, %c0_i32 : i32, i32
  }
}

module attributes {stable_mosaic.version = 11 : i64} {
  func.func @_bn_lrelu_kernel(%arg0: i32, %arg1: memref<128x256xf32, #tpu.memory_space<vmem>>, %arg2: memref<1x256xf32, #tpu.memory_space<vmem>>, %arg3: memref<1x256xf32, #tpu.memory_space<vmem>>, %arg4: memref<128x256xbf16, #tpu.memory_space<vmem>>) attributes {dimension_semantics = [#tpu.dimension_semantics<parallel>], iteration_bounds = array<i64: 1>, scalar_prefetch = 0 : i64, scratch_operands = 0 : i64, tpu.core_type = #tpu.core_type<tc>, window_params = [{transform_indices = @transform_0, window_bounds = array<i64: 128, 256>}, {pipeline_mode = #tpu.pipeline_mode<synchronous>, transform_indices = @transform_1, window_bounds = array<i64: 1, 256>}, {pipeline_mode = #tpu.pipeline_mode<synchronous>, transform_indices = @transform_2, window_bounds = array<i64: 1, 256>}, {transform_indices = @transform_3, window_bounds = array<i64: 128, 256>}]} {
    %c0 = arith.constant 0 : index
    %c0_0 = arith.constant 0 : index
    %0 = vector.load %arg1[%c0, %c0_0] : memref<128x256xf32, #tpu.memory_space<vmem>>, vector<128x256xf32>
    %c0_1 = arith.constant 0 : index
    %c0_2 = arith.constant 0 : index
    %1 = vector.load %arg2[%c0_1, %c0_2] : memref<1x256xf32, #tpu.memory_space<vmem>>, vector<1x256xf32>
    %2 = vector.broadcast %1 : vector<1x256xf32> to vector<128x256xf32>
    %3 = arith.mulf %0, %2 : vector<128x256xf32>
    %c0_3 = arith.constant 0 : index
    %c0_4 = arith.constant 0 : index
    %4 = vector.load %arg3[%c0_3, %c0_4] : memref<1x256xf32, #tpu.memory_space<vmem>>, vector<1x256xf32>
    %5 = vector.broadcast %4 : vector<1x256xf32> to vector<128x256xf32>
    %6 = arith.addf %3, %5 : vector<128x256xf32>
    %cst = arith.constant 0.000000e+00 : f32
    %7 = vector.broadcast %cst : f32 to vector<128x256xf32>
    %8 = arith.cmpf oge, %6, %7 : vector<128x256xf32>
    %cst_5 = arith.constant 1.000000e-01 : f32
    %9 = vector.broadcast %cst_5 : f32 to vector<128x256xf32>
    %10 = arith.mulf %9, %6 : vector<128x256xf32>
    %11 = arith.select %8, %6, %10 : vector<128x256xi1>, vector<128x256xf32>
    %12 = arith.truncf %11 : vector<128x256xf32> to vector<128x256xbf16>
    %c0_6 = arith.constant 0 : index
    %c0_7 = arith.constant 0 : index
    %13 = vector.load %arg4[%c0_6, %c0_7] : memref<128x256xbf16, #tpu.memory_space<vmem>>, vector<128x256xbf16>
    tpu.vector_store %arg4[%c0_6, %c0_7], %12 {strides = array<i32>} : memref<128x256xbf16, #tpu.memory_space<vmem>>, vector<128x256xbf16>,
    return
  }
  func.func @transform_0(%arg0: i32) -> (i32, i32) {
    %c0_i32 = arith.constant 0 : i32
    %c0_i32_0 = arith.constant 0 : i32
    return %arg0, %c0_i32 : i32, i32
  }
  func.func @transform_1(%arg0: i32) -> (i32, i32) {
    %c0_i32 = arith.constant 0 : i32
    %c0_i32_0 = arith.constant 0 : i32
    %c0_i32_1 = arith.constant 0 : i32
    return %c0_i32, %c0_i32_0 : i32, i32
  }
  func.func @transform_2(%arg0: i32) -> (i32, i32) {
    %c0_i32 = arith.constant 0 : i32
    %c0_i32_0 = arith.constant 0 : i32
    %c0_i32_1 = arith.constant 0 : i32
    return %c0_i32, %c0_i32_0 : i32, i32
  }
  func.func @transform_3(%arg0: i32) -> (i32, i32) {
    %c0_i32 = arith.constant 0 : i32
    %c0_i32_0 = arith.constant 0 : i32
    return %arg0, %c0_i32 : i32, i32
  }
}

module attributes {stable_mosaic.version = 11 : i64} {
  func.func @_gemm_stats_kernel(%arg0: i32, %arg1: memref<128x2304xbf16, #tpu.memory_space<vmem>>, %arg2: memref<2304x128xbf16, #tpu.memory_space<vmem>>, %arg3: memref<128x128xf32, #tpu.memory_space<vmem>>, %arg4: memref<8x128xf32, #tpu.memory_space<vmem>>) attributes {dimension_semantics = [#tpu.dimension_semantics<parallel>], iteration_bounds = array<i64: 1>, scalar_prefetch = 0 : i64, scratch_operands = 0 : i64, tpu.core_type = #tpu.core_type<tc>, window_params = [{transform_indices = @transform_0, window_bounds = array<i64: 128, 2304>}, {pipeline_mode = #tpu.pipeline_mode<synchronous>, transform_indices = @transform_1, window_bounds = array<i64: 2304, 128>}, {transform_indices = @transform_2, window_bounds = array<i64: 128, 128>}, {transform_indices = @transform_3, window_bounds = array<i64: 8, 128>}]} {
    %c0 = arith.constant 0 : index
    %c0_0 = arith.constant 0 : index
    %0 = vector.load %arg1[%c0, %c0_0] : memref<128x2304xbf16, #tpu.memory_space<vmem>>, vector<128x2304xbf16>
    %c0_1 = arith.constant 0 : index
    %c0_2 = arith.constant 0 : index
    %1 = vector.load %arg2[%c0_1, %c0_2] : memref<2304x128xbf16, #tpu.memory_space<vmem>>, vector<2304x128xbf16>
    %cst = arith.constant dense<0.000000e+00> : vector<128x128xf32>
    %2 = tpu.matmul %0, %1, %cst {dimension_numbers = #tpu.dot_dimension_numbers<[1], [0], [0], [1], [0, 0, 1, 1], [], []>} : vector<128x2304xbf16>, vector<2304x128xbf16>, vector<128x128xf32> -> vector<128x128xf32>
    %c0_3 = arith.constant 0 : index
    %c0_4 = arith.constant 0 : index
    %3 = vector.load %arg3[%c0_3, %c0_4] : memref<128x128xf32, #tpu.memory_space<vmem>>, vector<128x128xf32>
    tpu.vector_store %arg3[%c0_3, %c0_4], %2 {strides = array<i32>} : memref<128x128xf32, #tpu.memory_space<vmem>>, vector<128x128xf32>,
    %cst_5 = arith.constant dense<0.000000e+00> : vector<128xf32>
    %4 = vector.multi_reduction <add>, %2, %cst_5 [0] : vector<128x128xf32> to vector<128xf32>
    %5 = vector.shape_cast %4 : vector<128xf32> to vector<1x128xf32>
    %6 = arith.mulf %2, %2 : vector<128x128xf32>
    %cst_6 = arith.constant dense<0.000000e+00> : vector<128xf32>
    %7 = vector.multi_reduction <add>, %6, %cst_6 [0] : vector<128x128xf32> to vector<128xf32>
    %8 = vector.shape_cast %7 : vector<128xf32> to vector<1x128xf32>
    %cst_7 = arith.constant 0.000000e+00 : f32
    %9 = vector.broadcast %cst_7 : f32 to vector<6x128xf32>
    %10 = tpu.concatenate %5, %8, %9 in 0 : vector<1x128xf32>, vector<1x128xf32>, vector<6x128xf32> -> vector<8x128xf32>
    %c0_8 = arith.constant 0 : index
    %c0_9 = arith.constant 0 : index
    %11 = vector.load %arg4[%c0_8, %c0_9] : memref<8x128xf32, #tpu.memory_space<vmem>>, vector<8x128xf32>
    tpu.vector_store %arg4[%c0_8, %c0_9], %10 {strides = array<i32>} : memref<8x128xf32, #tpu.memory_space<vmem>>, vector<8x128xf32>,
    return
  }
  func.func @transform_0(%arg0: i32) -> (i32, i32) {
    %c0_i32 = arith.constant 0 : i32
    %c0_i32_0 = arith.constant 0 : i32
    return %arg0, %c0_i32 : i32, i32
  }
  func.func @transform_1(%arg0: i32) -> (i32, i32) {
    %c0_i32 = arith.constant 0 : i32
    %c0_i32_0 = arith.constant 0 : i32
    %c0_i32_1 = arith.constant 0 : i32
    return %c0_i32, %c0_i32_0 : i32, i32
  }
  func.func @transform_2(%arg0: i32) -> (i32, i32) {
    %c0_i32 = arith.constant 0 : i32
    %c0_i32_0 = arith.constant 0 : i32
    return %arg0, %c0_i32 : i32, i32
  }
  func.func @transform_3(%arg0: i32) -> (i32, i32) {
    %c0_i32 = arith.constant 0 : i32
    %c0_i32_0 = arith.constant 0 : i32
    return %arg0, %c0_i32 : i32, i32
  }
}

module attributes {stable_mosaic.version = 11 : i64} {
  func.func @_gemm_stats_kernel(%arg0: i32, %arg1: memref<128x1152xbf16, #tpu.memory_space<vmem>>, %arg2: memref<1152x128xbf16, #tpu.memory_space<vmem>>, %arg3: memref<128x128xf32, #tpu.memory_space<vmem>>, %arg4: memref<8x128xf32, #tpu.memory_space<vmem>>) attributes {dimension_semantics = [#tpu.dimension_semantics<parallel>], iteration_bounds = array<i64: 1>, scalar_prefetch = 0 : i64, scratch_operands = 0 : i64, tpu.core_type = #tpu.core_type<tc>, window_params = [{transform_indices = @transform_0, window_bounds = array<i64: 128, 1152>}, {pipeline_mode = #tpu.pipeline_mode<synchronous>, transform_indices = @transform_1, window_bounds = array<i64: 1152, 128>}, {transform_indices = @transform_2, window_bounds = array<i64: 128, 128>}, {transform_indices = @transform_3, window_bounds = array<i64: 8, 128>}]} {
    %c0 = arith.constant 0 : index
    %c0_0 = arith.constant 0 : index
    %0 = vector.load %arg1[%c0, %c0_0] : memref<128x1152xbf16, #tpu.memory_space<vmem>>, vector<128x1152xbf16>
    %c0_1 = arith.constant 0 : index
    %c0_2 = arith.constant 0 : index
    %1 = vector.load %arg2[%c0_1, %c0_2] : memref<1152x128xbf16, #tpu.memory_space<vmem>>, vector<1152x128xbf16>
    %cst = arith.constant dense<0.000000e+00> : vector<128x128xf32>
    %2 = tpu.matmul %0, %1, %cst {dimension_numbers = #tpu.dot_dimension_numbers<[1], [0], [0], [1], [0, 0, 1, 1], [], []>} : vector<128x1152xbf16>, vector<1152x128xbf16>, vector<128x128xf32> -> vector<128x128xf32>
    %c0_3 = arith.constant 0 : index
    %c0_4 = arith.constant 0 : index
    %3 = vector.load %arg3[%c0_3, %c0_4] : memref<128x128xf32, #tpu.memory_space<vmem>>, vector<128x128xf32>
    tpu.vector_store %arg3[%c0_3, %c0_4], %2 {strides = array<i32>} : memref<128x128xf32, #tpu.memory_space<vmem>>, vector<128x128xf32>,
    %cst_5 = arith.constant dense<0.000000e+00> : vector<128xf32>
    %4 = vector.multi_reduction <add>, %2, %cst_5 [0] : vector<128x128xf32> to vector<128xf32>
    %5 = vector.shape_cast %4 : vector<128xf32> to vector<1x128xf32>
    %6 = arith.mulf %2, %2 : vector<128x128xf32>
    %cst_6 = arith.constant dense<0.000000e+00> : vector<128xf32>
    %7 = vector.multi_reduction <add>, %6, %cst_6 [0] : vector<128x128xf32> to vector<128xf32>
    %8 = vector.shape_cast %7 : vector<128xf32> to vector<1x128xf32>
    %cst_7 = arith.constant 0.000000e+00 : f32
    %9 = vector.broadcast %cst_7 : f32 to vector<6x128xf32>
    %10 = tpu.concatenate %5, %8, %9 in 0 : vector<1x128xf32>, vector<1x128xf32>, vector<6x128xf32> -> vector<8x128xf32>
    %c0_8 = arith.constant 0 : index
    %c0_9 = arith.constant 0 : index
    %11 = vector.load %arg4[%c0_8, %c0_9] : memref<8x128xf32, #tpu.memory_space<vmem>>, vector<8x128xf32>
    tpu.vector_store %arg4[%c0_8, %c0_9], %10 {strides = array<i32>} : memref<8x128xf32, #tpu.memory_space<vmem>>, vector<8x128xf32>,
    return
  }
  func.func @transform_0(%arg0: i32) -> (i32, i32) {
    %c0_i32 = arith.constant 0 : i32
    %c0_i32_0 = arith.constant 0 : i32
    return %arg0, %c0_i32 : i32, i32
  }
  func.func @transform_1(%arg0: i32) -> (i32, i32) {
    %c0_i32 = arith.constant 0 : i32
    %c0_i32_0 = arith.constant 0 : i32
    %c0_i32_1 = arith.constant 0 : i32
    return %c0_i32, %c0_i32_0 : i32, i32
  }
  func.func @transform_2(%arg0: i32) -> (i32, i32) {
    %c0_i32 = arith.constant 0 : i32
    %c0_i32_0 = arith.constant 0 : i32
    return %arg0, %c0_i32 : i32, i32
  }
  func.func @transform_3(%arg0: i32) -> (i32, i32) {
    %c0_i32 = arith.constant 0 : i32
    %c0_i32_0 = arith.constant 0 : i32
    return %arg0, %c0_i32 : i32, i32
  }
}

module attributes {stable_mosaic.version = 11 : i64} {
  func.func @_gemm_kernel(%arg0: i32, %arg1: memref<512x384xbf16, #tpu.memory_space<vmem>>, %arg2: memref<384x128xbf16, #tpu.memory_space<vmem>>, %arg3: memref<512x128xf32, #tpu.memory_space<vmem>>) attributes {dimension_semantics = [#tpu.dimension_semantics<parallel>], iteration_bounds = array<i64: 1>, scalar_prefetch = 0 : i64, scratch_operands = 0 : i64, tpu.core_type = #tpu.core_type<tc>, window_params = [{transform_indices = @transform_0, window_bounds = array<i64: 512, 384>}, {pipeline_mode = #tpu.pipeline_mode<synchronous>, transform_indices = @transform_1, window_bounds = array<i64: 384, 128>}, {transform_indices = @transform_2, window_bounds = array<i64: 512, 128>}]} {
    %c0 = arith.constant 0 : index
    %c0_0 = arith.constant 0 : index
    %0 = vector.load %arg1[%c0, %c0_0] : memref<512x384xbf16, #tpu.memory_space<vmem>>, vector<512x384xbf16>
    %c0_1 = arith.constant 0 : index
    %c0_2 = arith.constant 0 : index
    %1 = vector.load %arg2[%c0_1, %c0_2] : memref<384x128xbf16, #tpu.memory_space<vmem>>, vector<384x128xbf16>
    %cst = arith.constant dense<0.000000e+00> : vector<512x128xf32>
    %2 = tpu.matmul %0, %1, %cst {dimension_numbers = #tpu.dot_dimension_numbers<[1], [0], [0], [1], [0, 0, 1, 1], [], []>} : vector<512x384xbf16>, vector<384x128xbf16>, vector<512x128xf32> -> vector<512x128xf32>
    %c0_3 = arith.constant 0 : index
    %c0_4 = arith.constant 0 : index
    %3 = vector.load %arg3[%c0_3, %c0_4] : memref<512x128xf32, #tpu.memory_space<vmem>>, vector<512x128xf32>
    tpu.vector_store %arg3[%c0_3, %c0_4], %2 {strides = array<i32>} : memref<512x128xf32, #tpu.memory_space<vmem>>, vector<512x128xf32>,
    return
  }
  func.func @transform_0(%arg0: i32) -> (i32, i32) {
    %c0_i32 = arith.constant 0 : i32
    %c0_i32_0 = arith.constant 0 : i32
    return %arg0, %c0_i32 : i32, i32
  }
  func.func @transform_1(%arg0: i32) -> (i32, i32) {
    %c0_i32 = arith.constant 0 : i32
    %c0_i32_0 = arith.constant 0 : i32
    %c0_i32_1 = arith.constant 0 : i32
    return %c0_i32, %c0_i32_0 : i32, i32
  }
  func.func @transform_2(%arg0: i32) -> (i32, i32) {
    %c0_i32 = arith.constant 0 : i32
    %c0_i32_0 = arith.constant 0 : i32
    return %arg0, %c0_i32 : i32, i32
  }
}

</mosaic_0001>

<llo_original>
// kernel: cnn_autoencoder_forward.15
$region0: #{cnn_autoencoder_forward.15}
  #allocation0 [shape = 'u32[]', space=smem, size = 0x4, offset = 0x4, fixed_abs, tag = 'smem constant byte address 0x4 - core index']
  #allocation1 [shape = 'u32[144,128]{1,0:T(1,128)}', space=vmem, size = 0x12000, scoped, tag = 'internal scratch']
  %s0 = inlined_call_operand.vmem [shape: bf16[128,128], index: 0, kind: input, shape index: {}]
  %s1 = inlined_call_operand.vmem [shape: bf16[128,128], index: 1, kind: input, shape index: {}]
  %s2 = inlined_call_operand.vmem [shape: f32[128,128], index: 2, kind: output, shape index: {0}]
  %s3 = inlined_call_operand.vmem [shape: f32[8,128], index: 3, kind: output, shape index: {1}]
  %4 = xla_tuple %s2, %s3
  %s5 = sld [smem:[#allocation0]]
  $region26: #{cnn_autoencoder_forward.15} parent=0
    _
  %s7 = ssub.s32 1, %s5
  %s8 = scalar_select 0, %s7, %s5
  // Predicated region
  $region2: #{cnn_autoencoder_forward.15} parent=0 // pred_check
    _
  $region3: #{cnn_autoencoder_forward.15} parent=0 // pred_check_branch
    %10 = sbr.rel (0) target = $region5
  $region4: #{cnn_autoencoder_forward.15} parent=0 // pred_region
    _
  $region5: #{cnn_autoencoder_forward.15} parent=0 // pred_fallthru
    _
  // Predicated region
  $region6: #{cnn_autoencoder_forward.15} parent=0 // pred_check
    _
  $region7: #{cnn_autoencoder_forward.15} parent=0 // pred_check_branch
    %12 = sbr.rel (0) target = $region9
  $region8: #{cnn_autoencoder_forward.15} parent=0 // pred_region
    _
  $region9: #{cnn_autoencoder_forward.15} parent=0 // pred_fallthru
    _
  %v14 = vld [vmem:[%s0] sm:$0xf]
  %v15 = vld [vmem:[%s0 + $0x4] sm:$0xf]
  %v16 = vld [vmem:[%s0 + $0x8] sm:$0xf]
  %v17 = vld [vmem:[%s0 + $0xc] sm:$0xf]
  %v18 = vld [vmem:[%s0 + $0x10] sm:$0xf]
  %v19 = vld [vmem:[%s0 + $0x14] sm:$0xf]
  %v20 = vld [vmem:[%s0 + $0x18] sm:$0xf]
  %v21 = vld [vmem:[%s0 + $0x1c] sm:$0xf]
  %v22 = vld [vmem:[%s0 + $0x20] sm:$0xf]
  %v23 = vld [vmem:[%s0 + $0x24] sm:$0xf]
  %v24 = vld [vmem:[%s0 + $0x28] sm:$0xf]
  %v25 = vld [vmem:[%s0 + $0x2c] sm:$0xf]
  %v26 = vld [vmem:[%s0 + $0x30] sm:$0xf]
  %v27 = vld [vmem:[%s0 + $0x34] sm:$0xf]
  %v28 = vld [vmem:[%s0 + $0x38] sm:$0xf]
  %v29 = vld [vmem:[%s0 + $0x3c] sm:$0xf]
  %v30 = vld [vmem:[%s1] sm:$0xf]
  %v31 = vld [vmem:[%s1 + $0x4] sm:$0xf]
  %v32 = vld [vmem:[%s1 + $0x8] sm:$0xf]
  %v33 = vld [vmem:[%s1 + $0xc] sm:$0xf]
  %v34 = vld [vmem:[%s1 + $0x10] sm:$0xf]
  %v35 = vld [vmem:[%s1 + $0x14] sm:$0xf]
  %v36 = vld [vmem:[%s1 + $0x18] sm:$0xf]
  %v37 = vld [vmem:[%s1 + $0x1c] sm:$0xf]
  %v38 = vld [vmem:[%s1 + $0x20] sm:$0xf]
  %v39 = vld [vmem:[%s1 + $0x24] sm:$0xf]
  %v40 = vld [vmem:[%s1 + $0x28] sm:$0xf]
  %v41 = vld [vmem:[%s1 + $0x2c] sm:$0xf]
  %v42 = vld [vmem:[%s1 + $0x30] sm:$0xf]
  %v43 = vld [vmem:[%s1 + $0x34] sm:$0xf]
  %v44 = vld [vmem:[%s1 + $0x38] sm:$0xf]
  %v45 = vld [vmem:[%s1 + $0x3c] sm:$0xf]
  %v62 = vunpack.c.l.b16 %v14
  %v63 = vunpack.c.l.b16 %v15
  %v64 = vunpack.c.l.b16 %v16
  %v65 = vunpack.c.l.b16 %v17
  %v66 = vunpack.c.l.b16 %v18
  %v67 = vunpack.c.l.b16 %v19
  %v68 = vunpack.c.l.b16 %v20
  %v69 = vunpack.c.l.b16 %v21
  %v70 = vunpack.c.l.b16 %v22
  %v71 = vunpack.c.l.b16 %v23
  %v72 = vunpack.c.l.b16 %v24
  %v73 = vunpack.c.l.b16 %v25
  %v74 = vunpack.c.l.b16 %v26
  %v75 = vunpack.c.l.b16 %v27
  %v76 = vunpack.c.l.b16 %v28
  %v77 = vunpack.c.l.b16 %v29
  %v78 = vpack.c.b16 %v63, %v62
  %v79 = vpack.c.b16 %v65, %v64
  %v80 = vpack.c.b16 %v67, %v66
  %v81 = vpack.c.b16 %v69, %v68
  %v82 = vpack.c.b16 %v71, %v70
  %v83 = vpack.c.b16 %v73, %v72
  %v84 = vpack.c.b16 %v75, %v74
  %v85 = vpack.c.b16 %v77, %v76
  %v110 = vunpack.c.l.b16 %v30
  %v111 = vunpack.c.l.b16 %v31
  %v112 = vunpack.c.l.b16 %v32
  %v113 = vunpack.c.l.b16 %v33
  %v114 = vunpack.c.l.b16 %v34
  %v115 = vunpack.c.l.b16 %v35
  %v116 = vunpack.c.l.b16 %v36
  %v117 = vunpack.c.l.b16 %v37
  %v118 = vunpack.c.l.b16 %v38
  %v119 = vunpack.c.l.b16 %v39
  %v120 = vunpack.c.l.b16 %v40
  %v121 = vunpack.c.l.b16 %v41
  %v122 = vunpack.c.l.b16 %v42
  %v123 = vunpack.c.l.b16 %v43
  %v124 = vunpack.c.l.b16 %v44
  %v125 = vunpack.c.l.b16 %v45
  %v126 = vpack.c.b16 %v111, %v110
  %v127 = vpack.c.b16 %v113, %v112
  %v128 = vpack.c.b16 %v115, %v114
  %v129 = vpack.c.b16 %v117, %v116
  %v130 = vpack.c.b16 %v119, %v118
  %v131 = vpack.c.b16 %v121, %v120
  %v132 = vpack.c.b16 %v123, %v122
  %v133 = vpack.c.b16 %v125, %v124
  %142 = vmatprep.subr.bf16.mxu0 0
  %143 = vmatpush1.bf16.msra.mxu0 %v126
  %144 = vmatprep.subr.bf16.mxu0 0
  %145 = vmatpush1.bf16.msra.mxu0 %v127
  %146 = vmatprep.subr.bf16.mxu0 0
  %147 = vmatpush1.bf16.msra.mxu0 %v128
  %148 = vmatprep.subr.bf16.mxu0 0
  %149 = vmatpush1.bf16.msra.mxu0 %v129
  %150 = vmatprep.subr.bf16.mxu0 0
  %151 = vmatpush1.bf16.msra.mxu0 %v130
  %152 = vmatprep.subr.bf16.mxu0 0
  %153 = vmatpush1.bf16.msra.mxu0 %v131
  %154 = vmatprep.subr.bf16.mxu0 0
  %155 = vmatpush1.bf16.msra.mxu0 %v132
  %156 = vmatprep.subr.bf16.mxu0 0
  %157 = vmatpush1.bf16.msra.mxu0 %v133
  %158 = vmatprep.subr.bf16.mxu0 0
  %159 = vmatpush1.bf16.msra.mxu0 0
  %160 = vmatprep.subr.bf16.mxu0 0
  %161 = vmatpush1.bf16.msra.mxu0 0
  %162 = vmatprep.subr.bf16.mxu0 0
  %163 = vmatpush1.bf16.msra.mxu0 0
  %164 = vmatprep.subr.bf16.mxu0 0
  %165 = vmatpush1.bf16.msra.mxu0 0
  %166 = vmatprep.subr.bf16.mxu0 0
  %167 = vmatpush1.bf16.msra.mxu0 0
  %168 = vmatprep.subr.bf16.mxu0 0
  %169 = vmatpush1.bf16.msra.mxu0 0
  %170 = vmatprep.subr.bf16.mxu0 0
  %171 = vmatpush1.bf16.msra.mxu0 0
  %172 = vmatprep.subr.bf16.mxu0 0
  %173 = vmatpush1.bf16.msra.mxu0 0
  %174 = vmatprep.mubr.bf16.mxu0 0
  %175 = vmatmul.mubr.bf16.gmra.mrb[0].mxu0 %v78
  %v176 = vpop.f32.mrb[0].mxu0
  %v177 = vadd.f32 0.0, %v176
  %v178 = vpop.f32.mrb[0].mxu0
  %v179 = vpop.f32.mrb[0].mxu0
  %v180 = vadd.f32 0.0, %v179
  %v181 = vpop.f32.mrb[0].mxu0
  %182 = vmatprep.mubr.bf16.mxu0 0
  %183 = vmatmul.mubr.bf16.gmra.mrb[0].mxu0 %v79
  %v184 = vpop.f32.mrb[0].mxu0
  %v185 = vadd.f32 0.0, %v184
  %v186 = vpop.f32.mrb[0].mxu0
  %v187 = vpop.f32.mrb[0].mxu0
  %v188 = vadd.f32 0.0, %v187
  %v189 = vpop.f32.mrb[0].mxu0
  %190 = vmatprep.mubr.bf16.mxu0 0
  %191 = vmatmul.mubr.bf16.gmra.mrb[0].mxu0 %v80
  %v192 = vpop.f32.mrb[0].mxu0
  %v193 = vadd.f32 0.0, %v192
  %v194 = vpop.f32.mrb[0].mxu0
  %v195 = vpop.f32.mrb[0].mxu0
  %v196 = vadd.f32 0.0, %v195
  %v197 = vpop.f32.mrb[0].mxu0
  %198 = vmatprep.mubr.bf16.mxu0 0
  %199 = vmatmul.mubr.bf16.gmra.mrb[0].mxu0 %v81
  %v200 = vpop.f32.mrb[0].mxu0
  %v201 = vadd.f32 0.0, %v200
  %v202 = vpop.f32.mrb[0].mxu0
  %v203 = vpop.f32.mrb[0].mxu0
  %v204 = vadd.f32 0.0, %v203
  %v205 = vpop.f32.mrb[0].mxu0
  %206 = vmatprep.mubr.bf16.mxu0 0
  %207 = vmatmul.mubr.bf16.gmra.mrb[0].mxu0 %v82
  %v208 = vpop.f32.mrb[0].mxu0
  %v209 = vadd.f32 0.0, %v208
  %v210 = vpop.f32.mrb[0].mxu0
  %v211 = vpop.f32.mrb[0].mxu0
  %v212 = vadd.f32 0.0, %v211
  %v213 = vpop.f32.mrb[0].mxu0
  %214 = vmatprep.mubr.bf16.mxu0 0
  %215 = vmatmul.mubr.bf16.gmra.mrb[0].mxu0 %v83
  %v216 = vpop.f32.mrb[0].mxu0
  %v217 = vadd.f32 0.0, %v216
  %v218 = vpop.f32.mrb[0].mxu0
  %v219 = vpop.f32.mrb[0].mxu0
  %v220 = vadd.f32 0.0, %v219
  %v221 = vpop.f32.mrb[0].mxu0
  %222 = vmatprep.mubr.bf16.mxu0 0
  %223 = vmatmul.mubr.bf16.gmra.mrb[0].mxu0 %v84
  %v224 = vpop.f32.mrb[0].mxu0
  %v225 = vadd.f32 0.0, %v224
  %v226 = vpop.f32.mrb[0].mxu0
  %v227 = vpop.f32.mrb[0].mxu0
  %v228 = vadd.f32 0.0, %v227
  %v229 = vpop.f32.mrb[0].mxu0
  %230 = vmatprep.mubr.bf16.mxu0 0
  %231 = vmatmul.mubr.bf16.gmra.mrb[0].mxu0 %v85
  %v232 = vpop.f32.mrb[0].mxu0
  %v233 = vadd.f32 0.0, %v232
  %v234 = vpop.f32.mrb[0].mxu0
  %v235 = vpop.f32.mrb[0].mxu0
  %v236 = vadd.f32 0.0, %v235
  %v237 = vpop.f32.mrb[0].mxu0
  %238 = vdwg.mxu0
  %239 = vst [vmem:[%s2] sm:$0xff] %v177
  %240 = vst [vmem:[%s2 + $0x8] sm:$0xff] %v180
  %241 = vst [vmem:[%s2 + $0x10] sm:$0xff] %v185
  %242 = vst [vmem:[%s2 + $0x18] sm:$0xff] %v188
  %243 = vst [vmem:[%s2 + $0x20] sm:$0xff] %v193
  %244 = vst [vmem:[%s2 + $0x28] sm:$0xff] %v196
  %245 = vst [vmem:[%s2 + $0x30] sm:$0xff] %v201
  %246 = vst [vmem:[%s2 + $0x38] sm:$0xff] %v204
  %247 = vst [vmem:[%s2 + $0x40] sm:$0xff] %v209
  %248 = vst [vmem:[%s2 + $0x48] sm:$0xff] %v212
  %249 = vst [vmem:[%s2 + $0x50] sm:$0xff] %v217
  %250 = vst [vmem:[%s2 + $0x58] sm:$0xff] %v220
  %251 = vst [vmem:[%s2 + $0x60] sm:$0xff] %v225
  %252 = vst [vmem:[%s2 + $0x68] sm:$0xff] %v228
  %253 = vst [vmem:[%s2 + $0x70] sm:$0xff] %v233
  %254 = vst [vmem:[%s2 + $0x78] sm:$0xff] %v236
  %v255 = vadd.f32 %v177, %v180
  %v256 = vadd.f32 %v255, %v185
  %v257 = vadd.f32 %v256, %v188
  %v258 = vadd.f32 %v257, %v193
  %v259 = vadd.f32 %v258, %v196
  %v260 = vadd.f32 %v259, %v201
  %v261 = vadd.f32 %v260, %v204
  %v262 = vadd.f32 %v261, %v209
  %v263 = vadd.f32 %v262, %v212
  %v264 = vadd.f32 %v263, %v217
  %v265 = vadd.f32 %v264, %v220
  %v266 = vadd.f32 %v265, %v225
  %v267 = vadd.f32 %v266, %v228
  %v268 = vadd.f32 %v267, %v233
  %v269 = vadd.f32 %v268, %v236
  %v270 = vrot.slane %v269, 4
  %v271 = vadd.f32 %v269, %v270
  %v272 = vrot.slane %v271, 2
  %v273 = vadd.f32 %v271, %v272
  %v274 = vrot.slane %v273, 1
  %v275 = vadd.f32 %v273, %v274
  %v276 = vmul.f32 %v177, %v177
  %v277 = vmul.f32 %v180, %v180
  %v278 = vmul.f32 %v185, %v185
  %v279 = vmul.f32 %v188, %v188
  %v280 = vmul.f32 %v193, %v193
  %v281 = vmul.f32 %v196, %v196
  %v282 = vmul.f32 %v201, %v201
  %v283 = vmul.f32 %v204, %v204
  %v284 = vmul.f32 %v209, %v209
  %v285 = vmul.f32 %v212, %v212
  %v286 = vmul.f32 %v217, %v217
  %v287 = vmul.f32 %v220, %v220
  %v288 = vmul.f32 %v225, %v225
  %v289 = vmul.f32 %v228, %v228
  %v290 = vmul.f32 %v233, %v233
  %v291 = vmul.f32 %v236, %v236
  %v292 = vadd.f32 %v276, %v277
  %v293 = vadd.f32 %v292, %v278
  %v294 = vadd.f32 %v293, %v279
  %v295 = vadd.f32 %v294, %v280
  %v296 = vadd.f32 %v295, %v281
  %v297 = vadd.f32 %v296, %v282
  %v298 = vadd.f32 %v297, %v283
  %v299 = vadd.f32 %v298, %v284
  %v300 = vadd.f32 %v299, %v285
  %v301 = vadd.f32 %v300, %v286
  %v302 = vadd.f32 %v301, %v287
  %v303 = vadd.f32 %v302, %v288
  %v304 = vadd.f32 %v303, %v289
  %v305 = vadd.f32 %v304, %v290
  %v306 = vadd.f32 %v305, %v291
  %v307 = vrot.slane %v306, 4
  %v308 = vadd.f32 %v306, %v307
  %v309 = vrot.slane %v308, 2
  %v310 = vadd.f32 %v308, %v309
  %v311 = vrot.slane %v310, 1
  %v312 = vadd.f32 %v310, %v311
  %vm313 = vcmask 1040384
  %v314 = vsel %vm313, %v275, %v312
  %vm315 = vcmask 1041408
  %v316 = vsel %vm315, %v314, 0.0
  %317 = vst [vmem:[%s3] sm:$0xff] %v316
  // Predicated region
  $region10: #{cnn_autoencoder_forward.15} parent=0 // pred_check
    _
  $region11: #{cnn_autoencoder_forward.15} parent=0 // pred_check_branch
    %319 = sbr.rel (0) target = $region13
  $region12: #{cnn_autoencoder_forward.15} parent=0 // pred_region
    _
  $region13: #{cnn_autoencoder_forward.15} parent=0 // pred_fallthru
    _
  // Predicated region
  $region14: #{cnn_autoencoder_forward.15} parent=0 // pred_check
    _
  $region15: #{cnn_autoencoder_forward.15} parent=0 // pred_check_branch
    %321 = sbr.rel (0) target = $region17
  $region16: #{cnn_autoencoder_forward.15} parent=0 // pred_region
    _
  $region17: #{cnn_autoencoder_forward.15} parent=0 // pred_fallthru
    _
  // Predicated region
  $region18: #{cnn_autoencoder_forward.15} parent=0 // pred_check
    _
  $region19: #{cnn_autoencoder_forward.15} parent=0 // pred_check_branch
    %323 = sbr.rel (0) target = $region21
  $region20: #{cnn_autoencoder_forward.15} parent=0 // pred_region
    _
  $region21: #{cnn_autoencoder_forward.15} parent=0 // pred_fallthru
    _
  // Predicated region
  $region22: #{cnn_autoencoder_forward.15} parent=0 // pred_check
    _
  $region23: #{cnn_autoencoder_forward.15} parent=0 // pred_check_branch
    %325 = sbr.rel (0) target = $region25
  $region24: #{cnn_autoencoder_forward.15} parent=0 // pred_region
    _
  $region25: #{cnn_autoencoder_forward.15} parent=0 // pred_fallthru
    _

// kernel: cnn_autoencoder_forward.16
$region0: #{cnn_autoencoder_forward.16}
  #allocation0 [shape = 'u32[]', space=smem, size = 0x4, offset = 0x4, fixed_abs, tag = 'smem constant byte address 0x4 - core index']
  #allocation1 [shape = 'u32[144,128]{1,0:T(1,128)}', space=vmem, size = 0x12000, scoped, tag = 'internal scratch']
  %s0 = inlined_call_operand.vmem [shape: f32[128,128], index: 0, kind: input, shape index: {}]
  %s1 = inlined_call_operand.vmem [shape: f32[1,128], index: 1, kind: input, shape index: {}]
  %s2 = inlined_call_operand.vmem [shape: f32[1,128], index: 2, kind: input, shape index: {}]
  %s3 = inlined_call_operand.vmem [shape: bf16[128,128], index: 3, kind: output, shape index: {}]
  %s4 = sld [smem:[#allocation0]]
  $region22: #{cnn_autoencoder_forward.16} parent=0
    _
  %s6 = ssub.s32 1, %s4
  %s7 = scalar_select 0, %s6, %s4
  // Predicated region
  $region2: #{cnn_autoencoder_forward.16} parent=0 // pred_check
    _
  $region3: #{cnn_autoencoder_forward.16} parent=0 // pred_check_branch
    %9 = sbr.rel (0) target = $region5
  $region4: #{cnn_autoencoder_forward.16} parent=0 // pred_region
    _
  $region5: #{cnn_autoencoder_forward.16} parent=0 // pred_fallthru
    _
  // Predicated region
  $region6: #{cnn_autoencoder_forward.16} parent=0 // pred_check
    _
  $region7: #{cnn_autoencoder_forward.16} parent=0 // pred_check_branch
    %11 = sbr.rel (0) target = $region9
  $region8: #{cnn_autoencoder_forward.16} parent=0 // pred_region
    _
  $region9: #{cnn_autoencoder_forward.16} parent=0 // pred_fallthru
    _
  // Predicated region
  $region10: #{cnn_autoencoder_forward.16} parent=0 // pred_check
    _
  $region11: #{cnn_autoencoder_forward.16} parent=0 // pred_check_branch
    %13 = sbr.rel (0) target = $region13
  $region12: #{cnn_autoencoder_forward.16} parent=0 // pred_region
    _
  $region13: #{cnn_autoencoder_forward.16} parent=0 // pred_fallthru
    _
  %v14 = vld [vmem:[%s0] sm:$0xff]
  %v15 = vld [vmem:[%s0 + $0x8] sm:$0xff]
  %v16 = vld [vmem:[%s0 + $0x10] sm:$0xff]
  %v17 = vld [vmem:[%s0 + $0x18] sm:$0xff]
  %v18 = vld [vmem:[%s0 + $0x20] sm:$0xff]
  %v19 = vld [vmem:[%s0 + $0x28] sm:$0xff]
  %v20 = vld [vmem:[%s0 + $0x30] sm:$0xff]
  %v21 = vld [vmem:[%s0 + $0x38] sm:$0xff]
  %v22 = vld [vmem:[%s0 + $0x40] sm:$0xff]
  %v23 = vld [vmem:[%s0 + $0x48] sm:$0xff]
  %v24 = vld [vmem:[%s0 + $0x50] sm:$0xff]
  %v25 = vld [vmem:[%s0 + $0x58] sm:$0xff]
  %v26 = vld [vmem:[%s0 + $0x60] sm:$0xff]
  %v27 = vld [vmem:[%s0 + $0x68] sm:$0xff]
  %v28 = vld [vmem:[%s0 + $0x70] sm:$0xff]
  %v29 = vld [vmem:[%s0 + $0x78] sm:$0xff]
  %v30 = vld [vmem:[%s1] sm:$0x1]
  %v32 = vlaneseq
  %v33 = vshrl.u32 %v32, 7
  %v34 = vsub.s32 0, %v33
  %v35 = vrot.slane %v30, %v34
  %v37 = vmul.f32 %v14, %v35
  %v38 = vmul.f32 %v15, %v35
  %v39 = vmul.f32 %v16, %v35
  %v40 = vmul.f32 %v17, %v35
  %v41 = vmul.f32 %v18, %v35
  %v42 = vmul.f32 %v19, %v35
  %v43 = vmul.f32 %v20, %v35
  %v44 = vmul.f32 %v21, %v35
  %v45 = vmul.f32 %v22, %v35
  %v46 = vmul.f32 %v23, %v35
  %v47 = vmul.f32 %v24, %v35
  %v48 = vmul.f32 %v25, %v35
  %v49 = vmul.f32 %v26, %v35
  %v50 = vmul.f32 %v27, %v35
  %v51 = vmul.f32 %v28, %v35
  %v52 = vmul.f32 %v29, %v35
  %v53 = vld [vmem:[%s2] sm:$0x1]
  %v55 = vlaneseq
  %v56 = vshrl.u32 %v55, 7
  %v57 = vsub.s32 0, %v56
  %v58 = vrot.slane %v53, %v57
  %v60 = vadd.f32 %v37, %v58
  %v61 = vadd.f32 %v38, %v58
  %v62 = vadd.f32 %v39, %v58
  %v63 = vadd.f32 %v40, %v58
  %v64 = vadd.f32 %v41, %v58
  %v65 = vadd.f32 %v42, %v58
  %v66 = vadd.f32 %v43, %v58
  %v67 = vadd.f32 %v44, %v58
  %v68 = vadd.f32 %v45, %v58
  %v69 = vadd.f32 %v46, %v58
  %v70 = vadd.f32 %v47, %v58
  %v71 = vadd.f32 %v48, %v58
  %v72 = vadd.f32 %v49, %v58
  %v73 = vadd.f32 %v50, %v58
  %v74 = vadd.f32 %v51, %v58
  %v75 = vadd.f32 %v52, %v58
  %vm76 = vcmp.ge.f32.partialorder %v60, 0.0
  %vm77 = vcmp.ge.f32.partialorder %v61, 0.0
  %vm78 = vcmp.ge.f32.partialorder %v62, 0.0
  %vm79 = vcmp.ge.f32.partialorder %v63, 0.0
  %vm80 = vcmp.ge.f32.partialorder %v64, 0.0
  %vm81 = vcmp.ge.f32.partialorder %v65, 0.0
  %vm82 = vcmp.ge.f32.partialorder %v66, 0.0
  %vm83 = vcmp.ge.f32.partialorder %v67, 0.0
  %vm84 = vcmp.ge.f32.partialorder %v68, 0.0
  %vm85 = vcmp.ge.f32.partialorder %v69, 0.0
  %vm86 = vcmp.ge.f32.partialorder %v70, 0.0
  %vm87 = vcmp.ge.f32.partialorder %v71, 0.0
  %vm88 = vcmp.ge.f32.partialorder %v72, 0.0
  %vm89 = vcmp.ge.f32.partialorder %v73, 0.0
  %vm90 = vcmp.ge.f32.partialorder %v74, 0.0
  %vm91 = vcmp.ge.f32.partialorder %v75, 0.0
  %v92 = vmul.f32 %v60, 0.1
  %v93 = vmul.f32 %v61, 0.1
  %v94 = vmul.f32 %v62, 0.1
  %v95 = vmul.f32 %v63, 0.1
  %v96 = vmul.f32 %v64, 0.1
  %v97 = vmul.f32 %v65, 0.1
  %v98 = vmul.f32 %v66, 0.1
  %v99 = vmul.f32 %v67, 0.1
  %v100 = vmul.f32 %v68, 0.1
  %v101 = vmul.f32 %v69, 0.1
  %v102 = vmul.f32 %v70, 0.1
  %v103 = vmul.f32 %v71, 0.1
  %v104 = vmul.f32 %v72, 0.1
  %v105 = vmul.f32 %v73, 0.1
  %v106 = vmul.f32 %v74, 0.1
  %v107 = vmul.f32 %v75, 0.1
  %v108 = vsel %vm76, %v60, %v92
  %v109 = vsel %vm77, %v61, %v93
  %v110 = vsel %vm78, %v62, %v94
  %v111 = vsel %vm79, %v63, %v95
  %v112 = vsel %vm80, %v64, %v96
  %v113 = vsel %vm81, %v65, %v97
  %v114 = vsel %vm82, %v66, %v98
  %v115 = vsel %vm83, %v67, %v99
  %v116 = vsel %vm84, %v68, %v100
  %v117 = vsel %vm85, %v69, %v101
  %v118 = vsel %vm86, %v70, %v102
  %v119 = vsel %vm87, %v71, %v103
  %v120 = vsel %vm88, %v72, %v104
  %v121 = vsel %vm89, %v73, %v105
  %v122 = vsel %vm90, %v74, %v106
  %v123 = vsel %vm91, %v75, %v107
  %v124 = vpack.c.bf16 %v109, %v108
  %v125 = vpack.c.bf16 %v111, %v110
  %v126 = vpack.c.bf16 %v113, %v112
  %v127 = vpack.c.bf16 %v115, %v114
  %v128 = vpack.c.bf16 %v117, %v116
  %v129 = vpack.c.bf16 %v119, %v118
  %v130 = vpack.c.bf16 %v121, %v120
  %v131 = vpack.c.bf16 %v123, %v122
  %v140 = vunpack.c.l.b16 %v124
  %v141 = vunpack.c.h.b16 %v124
  %v142 = vunpack.c.l.b16 %v125
  %v143 = vunpack.c.h.b16 %v125
  %v144 = vunpack.c.l.b16 %v126
  %v145 = vunpack.c.h.b16 %v126
  %v146 = vunpack.c.l.b16 %v127
  %v147 = vunpack.c.h.b16 %v127
  %v148 = vunpack.c.l.b16 %v128
  %v149 = vunpack.c.h.b16 %v128
  %v150 = vunpack.c.l.b16 %v129
  %v151 = vunpack.c.h.b16 %v129
  %v152 = vunpack.c.l.b16 %v130
  %v153 = vunpack.c.h.b16 %v130
  %v154 = vunpack.c.l.b16 %v131
  %v155 = vunpack.c.h.b16 %v131
  %v156 = vpack.c.b16 %v140, %v140
  %v157 = vpack.c.b16 %v141, %v141
  %v158 = vpack.c.b16 %v142, %v142
  %v159 = vpack.c.b16 %v143, %v143
  %v160 = vpack.c.b16 %v144, %v144
  %v161 = vpack.c.b16 %v145, %v145
  %v162 = vpack.c.b16 %v146, %v146
  %v163 = vpack.c.b16 %v147, %v147
  %v164 = vpack.c.b16 %v148, %v148
  %v165 = vpack.c.b16 %v149, %v149
  %v166 = vpack.c.b16 %v150, %v150
  %v167 = vpack.c.b16 %v151, %v151
  %v168 = vpack.c.b16 %v152, %v152
  %v169 = vpack.c.b16 %v153, %v153
  %v170 = vpack.c.b16 %v154, %v154
  %v171 = vpack.c.b16 %v155, %v155
  %188 = vst [vmem:[%s3] sm:$0xf] %v156
  %189 = vst [vmem:[%s3 + $0x4] sm:$0xf] %v157
  %190 = vst [vmem:[%s3 + $0x8] sm:$0xf] %v158
  %191 = vst [vmem:[%s3 + $0xc] sm:$0xf] %v159
  %192 = vst [vmem:[%s3 + $0x10] sm:$0xf] %v160
  %193 = vst [vmem:[%s3 + $0x14] sm:$0xf] %v161
  %194 = vst [vmem:[%s3 + $0x18] sm:$0xf] %v162
  %195 = vst [vmem:[%s3 + $0x1c] sm:$0xf] %v163
  %196 = vst [vmem:[%s3 + $0x20] sm:$0xf] %v164
  %197 = vst [vmem:[%s3 + $0x24] sm:$0xf] %v165
  %198 = vst [vmem:[%s3 + $0x28] sm:$0xf] %v166
  %199 = vst [vmem:[%s3 + $0x2c] sm:$0xf] %v167
  %200 = vst [vmem:[%s3 + $0x30] sm:$0xf] %v168
  %201 = vst [vmem:[%s3 + $0x34] sm:$0xf] %v169
  %202 = vst [vmem:[%s3 + $0x38] sm:$0xf] %v170
  %203 = vst [vmem:[%s3 + $0x3c] sm:$0xf] %v171
  // Predicated region
  $region14: #{cnn_autoencoder_forward.16} parent=0 // pred_check
    _
  $region15: #{cnn_autoencoder_forward.16} parent=0 // pred_check_branch
    %205 = sbr.rel (0) target = $region17
  $region16: #{cnn_autoencoder_forward.16} parent=0 // pred_region
    _
  $region17: #{cnn_autoencoder_forward.16} parent=0 // pred_fallthru
    _
  // Predicated region
  $region18: #{cnn_autoencoder_forward.16} parent=0 // pred_check
    _
  $region19: #{cnn_autoencoder_forward.16} parent=0 // pred_check_branch
    %207 = sbr.rel (0) target = $region21
  $region20: #{cnn_autoencoder_forward.16} parent=0 // pred_region
    _
  $region21: #{cnn_autoencoder_forward.16} parent=0 // pred_fallthru
    _

// kernel: cnn_autoencoder_forward.17
$region0: #{cnn_autoencoder_forward.17}
  #allocation0 [shape = 'u32[]', space=smem, size = 0x4, offset = 0x4, fixed_abs, tag = 'smem constant byte address 0x4 - core index']
  #allocation1 [shape = 'u32[144,128]{1,0:T(1,128)}', space=vmem, size = 0x12000, scoped, tag = 'internal scratch']
  %s0 = inlined_call_operand.vmem [shape: bf16[128,384], index: 0, kind: input, shape index: {}]
  %s1 = inlined_call_operand.vmem [shape: bf16[384,128], index: 1, kind: input, shape index: {}]
  %s2 = inlined_call_operand.vmem [shape: f32[128,128], index: 2, kind: output, shape index: {0}]
  %s3 = inlined_call_operand.vmem [shape: f32[8,128], index: 3, kind: output, shape index: {1}]
  %4 = xla_tuple %s2, %s3
  %s5 = sld [smem:[#allocation0]]
  $region26: #{cnn_autoencoder_forward.17} parent=0
    _
  %s7 = ssub.s32 1, %s5
  %s8 = scalar_select 0, %s7, %s5
  // Predicated region
  $region2: #{cnn_autoencoder_forward.17} parent=0 // pred_check
    _
  $region3: #{cnn_autoencoder_forward.17} parent=0 // pred_check_branch
    %10 = sbr.rel (0) target = $region5
  $region4: #{cnn_autoencoder_forward.17} parent=0 // pred_region
    _
  $region5: #{cnn_autoencoder_forward.17} parent=0 // pred_fallthru
    _
  // Predicated region
  $region6: #{cnn_autoencoder_forward.17} parent=0 // pred_check
    _
  $region7: #{cnn_autoencoder_forward.17} parent=0 // pred_check_branch
    %12 = sbr.rel (0) target = $region9
  $region8: #{cnn_autoencoder_forward.17} parent=0 // pred_region
    _
  $region9: #{cnn_autoencoder_forward.17} parent=0 // pred_fallthru
    _
  %v14 = vld [vmem:[%s0] sm:$0xff]
  %v15 = vld [vmem:[%s0 + $0x8] sm:$0xf]
  %v16 = vld [vmem:[%s0 + $0xc] sm:$0xff]
  %v17 = vld [vmem:[%s0 + $0x14] sm:$0xf]
  %v18 = vld [vmem:[%s0 + $0x18] sm:$0xff]
  %v19 = vld [vmem:[%s0 + $0x20] sm:$0xf]
  %v20 = vld [vmem:[%s0 + $0x24] sm:$0xff]
  %v21 = vld [vmem:[%s0 + $0x2c] sm:$0xf]
  %v22 = vld [vmem:[%s0 + $0x30] sm:$0xff]
  %v23 = vld [vmem:[%s0 + $0x38] sm:$0xf]
  %v24 = vld [vmem:[%s0 + $0x3c] sm:$0xff]
  %v25 = vld [vmem:[%s0 + $0x44] sm:$0xf]
  %v26 = vld [vmem:[%s0 + $0x48] sm:$0xff]
  %v27 = vld [vmem:[%s0 + $0x50] sm:$0xf]
  %v28 = vld [vmem:[%s0 + $0x54] sm:$0xff]
  %v29 = vld [vmem:[%s0 + $0x5c] sm:$0xf]
  %v30 = vld [vmem:[%s0 + $0x60] sm:$0xff]
  %v31 = vld [vmem:[%s0 + $0x68] sm:$0xf]
  %v32 = vld [vmem:[%s0 + $0x6c] sm:$0xff]
  %v33 = vld [vmem:[%s0 + $0x74] sm:$0xf]
  %v34 = vld [vmem:[%s0 + $0x78] sm:$0xff]
  %v35 = vld [vmem:[%s0 + $0x80] sm:$0xf]
  %v36 = vld [vmem:[%s0 + $0x84] sm:$0xff]
  %v37 = vld [vmem:[%s0 + $0x8c] sm:$0xf]
  %v38 = vld [vmem:[%s0 + $0x90] sm:$0xff]
  %v39 = vld [vmem:[%s0 + $0x98] sm:$0xf]
  %v40 = vld [vmem:[%s0 + $0x9c] sm:$0xff]
  %v41 = vld [vmem:[%s0 + $0xa4] sm:$0xf]
  %v42 = vld [vmem:[%s0 + $0xa8] sm:$0xff]
  %v43 = vld [vmem:[%s0 + $0xb0] sm:$0xf]
  %v44 = vld [vmem:[%s0 + $0xb4] sm:$0xff]
  %v45 = vld [vmem:[%s0 + $0xbc] sm:$0xf]
  %v46 = vld [vmem:[%s1] sm:$0xf]
  %v47 = vld [vmem:[%s1 + $0x4] sm:$0xf]
  %v48 = vld [vmem:[%s1 + $0x8] sm:$0xf]
  %v49 = vld [vmem:[%s1 + $0xc] sm:$0xf]
  %v50 = vld [vmem:[%s1 + $0x10] sm:$0xf]
  %v51 = vld [vmem:[%s1 + $0x14] sm:$0xf]
  %v52 = vld [vmem:[%s1 + $0x18] sm:$0xf]
  %v53 = vld [vmem:[%s1 + $0x1c] sm:$0xf]
  %v54 = vld [vmem:[%s1 + $0x20] sm:$0xf]
  %v55 = vld [vmem:[%s1 + $0x24] sm:$0xf]
  %v56 = vld [vmem:[%s1 + $0x28] sm:$0xf]
  %v57 = vld [vmem:[%s1 + $0x2c] sm:$0xf]
  %v58 = vld [vmem:[%s1 + $0x30] sm:$0xf]
  %v59 = vld [vmem:[%s1 + $0x34] sm:$0xf]
  %v60 = vld [vmem:[%s1 + $0x38] sm:$0xf]
  %v61 = vld [vmem:[%s1 + $0x3c] sm:$0xf]
  %v62 = vld [vmem:[%s1 + $0x40] sm:$0xf]
  %v63 = vld [vmem:[%s1 + $0x44] sm:$0xf]
  %v64 = vld [vmem:[%s1 + $0x48] sm:$0xf]
  %v65 = vld [vmem:[%s1 + $0x4c] sm:$0xf]
  %v66 = vld [vmem:[%s1 + $0x50] sm:$0xf]
  %v67 = vld [vmem:[%s1 + $0x54] sm:$0xf]
  %v68 = vld [vmem:[%s1 + $0x58] sm:$0xf]
  %v69 = vld [vmem:[%s1 + $0x5c] sm:$0xf]
  %v70 = vld [vmem:[%s1 + $0x60] sm:$0xf]
  %v71 = vld [vmem:[%s1 + $0x64] sm:$0xf]
  %v72 = vld [vmem:[%s1 + $0x68] sm:$0xf]
  %v73 = vld [vmem:[%s1 + $0x6c] sm:$0xf]
  %v74 = vld [vmem:[%s1 + $0x70] sm:$0xf]
  %v75 = vld [vmem:[%s1 + $0x74] sm:$0xf]
  %v76 = vld [vmem:[%s1 + $0x78] sm:$0xf]
  %v77 = vld [vmem:[%s1 + $0x7c] sm:$0xf]
  %v78 = vld [vmem:[%s1 + $0x80] sm:$0xf]
  %v79 = vld [vmem:[%s1 + $0x84] sm:$0xf]
  %v80 = vld [vmem:[%s1 + $0x88] sm:$0xf]
  %v81 = vld [vmem:[%s1 + $0x8c] sm:$0xf]
  %v82 = vld [vmem:[%s1 + $0x90] sm:$0xf]
  %v83 = vld [vmem:[%s1 + $0x94] sm:$0xf]
  %v84 = vld [vmem:[%s1 + $0x98] sm:$0xf]
  %v85 = vld [vmem:[%s1 + $0x9c] sm:$0xf]
  %v86 = vld [vmem:[%s1 + $0xa0] sm:$0xf]
  %v87 = vld [vmem:[%s1 + $0xa4] sm:$0xf]
  %v88 = vld [vmem:[%s1 + $0xa8] sm:$0xf]
  %v89 = vld [vmem:[%s1 + $0xac] sm:$0xf]
  %v90 = vld [vmem:[%s1 + $0xb0] sm:$0xf]
  %v91 = vld [vmem:[%s1 + $0xb4] sm:$0xf]
  %v92 = vld [vmem:[%s1 + $0xb8] sm:$0xf]
  %v93 = vld [vmem:[%s1 + $0xbc] sm:$0xf]
  %v126 = vunpack.c.l.b16 %v14
  %v127 = vunpack.c.h.b16 %v14
  %v128 = vunpack.c.l.b16 %v15
  %v129 = vunpack.c.l.b16 %v16
  %v130 = vunpack.c.h.b16 %v16
  %v131 = vunpack.c.l.b16 %v17
  %v132 = vunpack.c.l.b16 %v18
  %v133 = vunpack.c.h.b16 %v18
  %v134 = vunpack.c.l.b16 %v19
  %v135 = vunpack.c.l.b16 %v20
  %v136 = vunpack.c.h.b16 %v20
  %v137 = vunpack.c.l.b16 %v21
  %v138 = vunpack.c.l.b16 %v22
  %v139 = vunpack.c.h.b16 %v22
  %v140 = vunpack.c.l.b16 %v23
  %v141 = vunpack.c.l.b16 %v24
  %v142 = vunpack.c.h.b16 %v24
  %v143 = vunpack.c.l.b16 %v25
  %v144 = vunpack.c.l.b16 %v26
  %v145 = vunpack.c.h.b16 %v26
  %v146 = vunpack.c.l.b16 %v27
  %v147 = vunpack.c.l.b16 %v28
  %v148 = vunpack.c.h.b16 %v28
  %v149 = vunpack.c.l.b16 %v29
  %v150 = vunpack.c.l.b16 %v30
  %v151 = vunpack.c.h.b16 %v30
  %v152 = vunpack.c.l.b16 %v31
  %v153 = vunpack.c.l.b16 %v32
  %v154 = vunpack.c.h.b16 %v32
  %v155 = vunpack.c.l.b16 %v33
  %v156 = vunpack.c.l.b16 %v34
  %v157 = vunpack.c.h.b16 %v34
  %v158 = vunpack.c.l.b16 %v35
  %v159 = vunpack.c.l.b16 %v36
  %v160 = vunpack.c.h.b16 %v36
  %v161 = vunpack.c.l.b16 %v37
  %v162 = vunpack.c.l.b16 %v38
  %v163 = vunpack.c.h.b16 %v38
  %v164 = vunpack.c.l.b16 %v39
  %v165 = vunpack.c.l.b16 %v40
  %v166 = vunpack.c.h.b16 %v40
  %v167 = vunpack.c.l.b16 %v41
  %v168 = vunpack.c.l.b16 %v42
  %v169 = vunpack.c.h.b16 %v42
  %v170 = vunpack.c.l.b16 %v43
  %v171 = vunpack.c.l.b16 %v44
  %v172 = vunpack.c.h.b16 %v44
  %v173 = vunpack.c.l.b16 %v45
  %v174 = vpack.c.b16 %v129, %v126
  %v175 = vpack.c.b16 %v130, %v127
  %v176 = vpack.c.b16 %v131, %v128
  %v177 = vpack.c.b16 %v135, %v132
  %v178 = vpack.c.b16 %v136, %v133
  %v179 = vpack.c.b16 %v137, %v134
  %v180 = vpack.c.b16 %v141, %v138
  %v181 = vpack.c.b16 %v142, %v139
  %v182 = vpack.c.b16 %v143, %v140
  %v183 = vpack.c.b16 %v147, %v144
  %v184 = vpack.c.b16 %v148, %v145
  %v185 = vpack.c.b16 %v149, %v146
  %v186 = vpack.c.b16 %v153, %v150
  %v187 = vpack.c.b16 %v154, %v151
  %v188 = vpack.c.b16 %v155, %v152
  %v189 = vpack.c.b16 %v159, %v156
  %v190 = vpack.c.b16 %v160, %v157
  %v191 = vpack.c.b16 %v161, %v158
  %v192 = vpack.c.b16 %v165, %v162
  %v193 = vpack.c.b16 %v166, %v163
  %v194 = vpack.c.b16 %v167, %v164
  %v195 = vpack.c.b16 %v171, %v168
  %v196 = vpack.c.b16 %v172, %v169
  %v197 = vpack.c.b16 %v173, %v170
  %v270 = vunpack.c.l.b16 %v46
  %v271 = vunpack.c.l.b16 %v47
  %v272 = vunpack.c.l.b16 %v48
  %v273 = vunpack.c.l.b16 %v49
  %v274 = vunpack.c.l.b16 %v50
  %v275 = vunpack.c.l.b16 %v51
  %v276 = vunpack.c.l.b16 %v52
  %v277 = vunpack.c.l.b16 %v53
  %v278 = vunpack.c.l.b16 %v54
  %v279 = vunpack.c.l.b16 %v55
  %v280 = vunpack.c.l.b16 %v56
  %v281 = vunpack.c.l.b16 %v57
  %v282 = vunpack.c.l.b16 %v58
  %v283 = vunpack.c.l.b16 %v59
  %v284 = vunpack.c.l.b16 %v60
  %v285 = vunpack.c.l.b16 %v61
  %v286 = vunpack.c.l.b16 %v62
  %v287 = vunpack.c.l.b16 %v63
  %v288 = vunpack.c.l.b16 %v64
  %v289 = vunpack.c.l.b16 %v65
  %v290 = vunpack.c.l.b16 %v66
  %v291 = vunpack.c.l.b16 %v67
  %v292 = vunpack.c.l.b16 %v68
  %v293 = vunpack.c.l.b16 %v69
  %v294 = vunpack.c.l.b16 %v70
  %v295 = vunpack.c.l.b16 %v71
  %v296 = vunpack.c.l.b16 %v72
  %v297 = vunpack.c.l.b16 %v73
  %v298 = vunpack.c.l.b16 %v74
  %v299 = vunpack.c.l.b16 %v75
  %v300 = vunpack.c.l.b16 %v76
  %v301 = vunpack.c.l.b16 %v77
  %v302 = vunpack.c.l.b16 %v78
  %v303 = vunpack.c.l.b16 %v79
  %v304 = vunpack.c.l.b16 %v80
  %v305 = vunpack.c.l.b16 %v81
  %v306 = vunpack.c.l.b16 %v82
  %v307 = vunpack.c.l.b16 %v83
  %v308 = vunpack.c.l.b16 %v84
  %v309 = vunpack.c.l.b16 %v85
  %v310 = vunpack.c.l.b16 %v86
  %v311 = vunpack.c.l.b16 %v87
  %v312 = vunpack.c.l.b16 %v88
  %v313 = vunpack.c.l.b16 %v89
  %v314 = vunpack.c.l.b16 %v90
  %v315 = vunpack.c.l.b16 %v91
  %v316 = vunpack.c.l.b16 %v92
  %v317 = vunpack.c.l.b16 %v93
  %v318 = vpack.c.b16 %v271, %v270
  %v319 = vpack.c.b16 %v273, %v272
  %v320 = vpack.c.b16 %v275, %v274
  %v321 = vpack.c.b16 %v277, %v276
  %v322 = vpack.c.b16 %v279, %v278
  %v323 = vpack.c.b16 %v281, %v280
  %v324 = vpack.c.b16 %v283, %v282
  %v325 = vpack.c.b16 %v285, %v284
  %v326 = vpack.c.b16 %v287, %v286
  %v327 = vpack.c.b16 %v289, %v288
  %v328 = vpack.c.b16 %v291, %v290
  %v329 = vpack.c.b16 %v293, %v292
  %v330 = vpack.c.b16 %v295, %v294
  %v331 = vpack.c.b16 %v297, %v296
  %v332 = vpack.c.b16 %v299, %v298
  %v333 = vpack.c.b16 %v301, %v300
  %v334 = vpack.c.b16 %v303, %v302
  %v335 = vpack.c.b16 %v305, %v304
  %v336 = vpack.c.b16 %v307, %v306
  %v337 = vpack.c.b16 %v309, %v308
  %v338 = vpack.c.b16 %v311, %v310
  %v339 = vpack.c.b16 %v313, %v312
  %v340 = vpack.c.b16 %v315, %v314
  %v341 = vpack.c.b16 %v317, %v316
  %366 = vmatprep.subr.bf16.mxu0 0
  %367 = vmatpush1.bf16.msra.mxu0 %v318
  %368 = vmatprep.subr.bf16.mxu0 0
  %369 = vmatpush1.bf16.msra.mxu0 %v319
  %370 = vmatprep.subr.bf16.mxu0 0
  %371 = vmatpush1.bf16.msra.mxu0 %v320
  %372 = vmatprep.subr.bf16.mxu0 0
  %373 = vmatpush1.bf16.msra.mxu0 %v321
  %374 = vmatprep.subr.bf16.mxu0 0
  %375 = vmatpush1.bf16.msra.mxu0 %v322
  %376 = vmatprep.subr.bf16.mxu0 0
  %377 = vmatpush1.bf16.msra.mxu0 %v323
  %378 = vmatprep.subr.bf16.mxu0 0
  %379 = vmatpush1.bf16.msra.mxu0 %v324
  %380 = vmatprep.subr.bf16.mxu0 0
  %381 = vmatpush1.bf16.msra.mxu0 %v325
  %382 = vmatprep.subr.bf16.mxu0 0
  %383 = vmatpush1.bf16.msra.mxu0 %v326
  %384 = vmatprep.subr.bf16.mxu0 0
  %385 = vmatpush1.bf16.msra.mxu0 %v327
  %386 = vmatprep.subr.bf16.mxu0 0
  %387 = vmatpush1.bf16.msra.mxu0 %v328
  %388 = vmatprep.subr.bf16.mxu0 0
  %389 = vmatpush1.bf16.msra.mxu0 %v329
  %390 = vmatprep.subr.bf16.mxu0 0
  %391 = vmatpush1.bf16.msra.mxu0 %v330
  %392 = vmatprep.subr.bf16.mxu0 0
  %393 = vmatpush1.bf16.msra.mxu0 %v331
  %394 = vmatprep.subr.bf16.mxu0 0
  %395 = vmatpush1.bf16.msra.mxu0 %v332
  %396 = vmatprep.subr.bf16.mxu0 0
  %397 = vmatpush1.bf16.msra.mxu0 %v333
  %398 = vmatprep.mubr.bf16.mxu0 %v175
  %399 = vmatmul.mubr.bf16.gmra.mrb[0].mxu0 %v174
  %v400 = vpop.f32.mrb[0].mxu0
  %v401 = vadd.f32 0.0, %v400
  %v402 = vpop.f32.mrb[0].mxu0
  %v403 = vpop.f32.mrb[0].mxu0
  %v404 = vadd.f32 0.0, %v403
  %v405 = vpop.f32.mrb[0].mxu0
  %406 = vmatprep.mubr.bf16.mxu0 %v178
  %407 = vmatmul.mubr.bf16.gmra.mrb[0].mxu0 %v177
  %v408 = vpop.f32.mrb[0].mxu0
  %v409 = vadd.f32 0.0, %v408
  %v410 = vpop.f32.mrb[0].mxu0
  %v411 = vpop.f32.mrb[0].mxu0
  %v412 = vadd.f32 0.0, %v411
  %v413 = vpop.f32.mrb[0].mxu0
  %414 = vmatprep.mubr.bf16.mxu0 %v181
  %415 = vmatmul.mubr.bf16.gmra.mrb[0].mxu0 %v180
  %v416 = vpop.f32.mrb[0].mxu0
  %v417 = vadd.f32 0.0, %v416
  %v418 = vpop.f32.mrb[0].mxu0
  %v419 = vpop.f32.mrb[0].mxu0
  %v420 = vadd.f32 0.0, %v419
  %v421 = vpop.f32.mrb[0].mxu0
  %422 = vmatprep.mubr.bf16.mxu0 %v184
  %423 = vmatmul.mubr.bf16.gmra.mrb[0].mxu0 %v183
  %v424 = vpop.f32.mrb[0].mxu0
  %v425 = vadd.f32 0.0, %v424
  %v426 = vpop.f32.mrb[0].mxu0
  %v427 = vpop.f32.mrb[0].mxu0
  %v428 = vadd.f32 0.0, %v427
  %v429 = vpop.f32.mrb[0].mxu0
  %430 = vmatprep.mubr.bf16.mxu0 %v187
  %431 = vmatmul.mubr.bf16.gmra.mrb[0].mxu0 %v186
  %v432 = vpop.f32.mrb[0].mxu0
  %v433 = vadd.f32 0.0, %v432
  %v434 = vpop.f32.mrb[0].mxu0
  %v435 = vpop.f32.mrb[0].mxu0
  %v436 = vadd.f32 0.0, %v435
  %v437 = vpop.f32.mrb[0].mxu0
  %438 = vmatprep.mubr.bf16.mxu0 %v190
  %439 = vmatmul.mubr.bf16.gmra.mrb[0].mxu0 %v189
  %v440 = vpop.f32.mrb[0].mxu0
  %v441 = vadd.f32 0.0, %v440
  %v442 = vpop.f32.mrb[0].mxu0
  %v443 = vpop.f32.mrb[0].mxu0
  %v444 = vadd.f32 0.0, %v443
  %v445 = vpop.f32.mrb[0].mxu0
  %446 = vmatprep.mubr.bf16.mxu0 %v193
  %447 = vmatmul.mubr.bf16.gmra.mrb[0].mxu0 %v192
  %v448 = vpop.f32.mrb[0].mxu0
  %v449 = vadd.f32 0.0, %v448
  %v450 = vpop.f32.mrb[0].mxu0
  %v451 = vpop.f32.mrb[0].mxu0
  %v452 = vadd.f32 0.0, %v451
  %v453 = vpop.f32.mrb[0].mxu0
  %454 = vmatprep.mubr.bf16.mxu0 %v196
  %455 = vmatmul.mubr.bf16.gmra.mrb[0].mxu0 %v195
  %v456 = vpop.f32.mrb[0].mxu0
  %v457 = vadd.f32 0.0, %v456
  %v458 = vpop.f32.mrb[0].mxu0
  %v459 = vpop.f32.mrb[0].mxu0
  %v460 = vadd.f32 0.0, %v459
  %v461 = vpop.f32.mrb[0].mxu0
  %462 = vdwg.mxu0
  %463 = vmatprep.subr.bf16.mxu0 0
  %464 = vmatpush1.bf16.msra.mxu0 %v334
  %465 = vmatprep.subr.bf16.mxu0 0
  %466 = vmatpush1.bf16.msra.mxu0 %v335
  %467 = vmatprep.subr.bf16.mxu0 0
  %468 = vmatpush1.bf16.msra.mxu0 %v336
  %469 = vmatprep.subr.bf16.mxu0 0
  %470 = vmatpush1.bf16.msra.mxu0 %v337
  %471 = vmatprep.subr.bf16.mxu0 0
  %472 = vmatpush1.bf16.msra.mxu0 %v338
  %473 = vmatprep.subr.bf16.mxu0 0
  %474 = vmatpush1.bf16.msra.mxu0 %v339
  %475 = vmatprep.subr.bf16.mxu0 0
  %476 = vmatpush1.bf16.msra.mxu0 %v340
  %477 = vmatprep.subr.bf16.mxu0 0
  %478 = vmatpush1.bf16.msra.mxu0 %v341
  %479 = vmatprep.subr.bf16.mxu0 0
  %480 = vmatpush1.bf16.msra.mxu0 0
  %481 = vmatprep.subr.bf16.mxu0 0
  %482 = vmatpush1.bf16.msra.mxu0 0
  %483 = vmatprep.subr.bf16.mxu0 0
  %484 = vmatpush1.bf16.msra.mxu0 0
  %485 = vmatprep.subr.bf16.mxu0 0
  %486 = vmatpush1.bf16.msra.mxu0 0
  %487 = vmatprep.subr.bf16.mxu0 0
  %488 = vmatpush1.bf16.msra.mxu0 0
  %489 = vmatprep.subr.bf16.mxu0 0
  %490 = vmatpush1.bf16.msra.mxu0 0
  %491 = vmatprep.subr.bf16.mxu0 0
  %492 = vmatpush1.bf16.msra.mxu0 0
  %493 = vmatprep.subr.bf16.mxu0 0
  %494 = vmatpush1.bf16.msra.mxu0 0
  %495 = vmatprep.mubr.bf16.mxu0 0
  %496 = vmatmul.mubr.bf16.gmra.mrb[0].mxu0 %v176
  %v497 = vpop.f32.mrb[0].mxu0
  %v498 = vadd.f32 %v401, %v497
  %v499 = vpop.f32.mrb[0].mxu0
  %v500 = vpop.f32.mrb[0].mxu0
  %v501 = vadd.f32 %v404, %v500
  %v502 = vpop.f32.mrb[0].mxu0
  %503 = vmatprep.mubr.bf16.mxu0 0
  %504 = vmatmul.mubr.bf16.gmra.mrb[0].mxu0 %v179
  %v505 = vpop.f32.mrb[0].mxu0
  %v506 = vadd.f32 %v409, %v505
  %v507 = vpop.f32.mrb[0].mxu0
  %v508 = vpop.f32.mrb[0].mxu0
  %v509 = vadd.f32 %v412, %v508
  %v510 = vpop.f32.mrb[0].mxu0
  %511 = vmatprep.mubr.bf16.mxu0 0
  %512 = vmatmul.mubr.bf16.gmra.mrb[0].mxu0 %v182
  %v513 = vpop.f32.mrb[0].mxu0
  %v514 = vadd.f32 %v417, %v513
  %v515 = vpop.f32.mrb[0].mxu0
  %v516 = vpop.f32.mrb[0].mxu0
  %v517 = vadd.f32 %v420, %v516
  %v518 = vpop.f32.mrb[0].mxu0
  %519 = vmatprep.mubr.bf16.mxu0 0
  %520 = vmatmul.mubr.bf16.gmra.mrb[0].mxu0 %v185
  %v521 = vpop.f32.mrb[0].mxu0
  %v522 = vadd.f32 %v425, %v521
  %v523 = vpop.f32.mrb[0].mxu0
  %v524 = vpop.f32.mrb[0].mxu0
  %v525 = vadd.f32 %v428, %v524
  %v526 = vpop.f32.mrb[0].mxu0
  %527 = vmatprep.mubr.bf16.mxu0 0
  %528 = vmatmul.mubr.bf16.gmra.mrb[0].mxu0 %v188
  %v529 = vpop.f32.mrb[0].mxu0
  %v530 = vadd.f32 %v433, %v529
  %v531 = vpop.f32.mrb[0].mxu0
  %v532 = vpop.f32.mrb[0].mxu0
  %v533 = vadd.f32 %v436, %v532
  %v534 = vpop.f32.mrb[0].mxu0
  %535 = vmatprep.mubr.bf16.mxu0 0
  %536 = vmatmul.mubr.bf16.gmra.mrb[0].mxu0 %v191
  %v537 = vpop.f32.mrb[0].mxu0
  %v538 = vadd.f32 %v441, %v537
  %v539 = vpop.f32.mrb[0].mxu0
  %v540 = vpop.f32.mrb[0].mxu0
  %v541 = vadd.f32 %v444, %v540
  %v542 = vpop.f32.mrb[0].mxu0
  %543 = vmatprep.mubr.bf16.mxu0 0
  %544 = vmatmul.mubr.bf16.gmra.mrb[0].mxu0 %v194
  %v545 = vpop.f32.mrb[0].mxu0
  %v546 = vadd.f32 %v449, %v545
  %v547 = vpop.f32.mrb[0].mxu0
  %v548 = vpop.f32.mrb[0].mxu0
  %v549 = vadd.f32 %v452, %v548
  %v550 = vpop.f32.mrb[0].mxu0
  %551 = vmatprep.mubr.bf16.mxu0 0
  %552 = vmatmul.mubr.bf16.gmra.mrb[0].mxu0 %v197
  %v553 = vpop.f32.mrb[0].mxu0
  %v554 = vadd.f32 %v457, %v553
  %v555 = vpop.f32.mrb[0].mxu0
  %v556 = vpop.f32.mrb[0].mxu0
  %v557 = vadd.f32 %v460, %v556
  %v558 = vpop.f32.mrb[0].mxu0
  %559 = vdwg.mxu0
  %560 = vst [vmem:[%s2] sm:$0xff] %v498
  %561 = vst [vmem:[%s2 + $0x8] sm:$0xff] %v501
  %562 = vst [vmem:[%s2 + $0x10] sm:$0xff] %v506
  %563 = vst [vmem:[%s2 + $0x18] sm:$0xff] %v509
  %564 = vst [vmem:[%s2 + $0x20] sm:$0xff] %v514
  %565 = vst [vmem:[%s2 + $0x28] sm:$0xff] %v517
  %566 = vst [vmem:[%s2 + $0x30] sm:$0xff] %v522
  %567 = vst [vmem:[%s2 + $0x38] sm:$0xff] %v525
  %568 = vst [vmem:[%s2 + $0x40] sm:$0xff] %v530
  %569 = vst [vmem:[%s2 + $0x48] sm:$0xff] %v533
  %570 = vst [vmem:[%s2 + $0x50] sm:$0xff] %v538
  %571 = vst [vmem:[%s2 + $0x58] sm:$0xff] %v541
  %572 = vst [vmem:[%s2 + $0x60] sm:$0xff] %v546
  %573 = vst [vmem:[%s2 + $0x68] sm:$0xff] %v549
  %574 = vst [vmem:[%s2 + $0x70] sm:$0xff] %v554
  %575 = vst [vmem:[%s2 + $0x78] sm:$0xff] %v557
  %v576 = vadd.f32 %v498, %v501
  %v577 = vadd.f32 %v576, %v506
  %v578 = vadd.f32 %v577, %v509
  %v579 = vadd.f32 %v578, %v514
  %v580 = vadd.f32 %v579, %v517
  %v581 = vadd.f32 %v580, %v522
  %v582 = vadd.f32 %v581, %v525
  %v583 = vadd.f32 %v582, %v530
  %v584 = vadd.f32 %v583, %v533
  %v585 = vadd.f32 %v584, %v538
  %v586 = vadd.f32 %v585, %v541
  %v587 = vadd.f32 %v586, %v546
  %v588 = vadd.f32 %v587, %v549
  %v589 = vadd.f32 %v588, %v554
  %v590 = vadd.f32 %v589, %v557
  %v591 = vrot.slane %v590, 4
  %v592 = vadd.f32 %v590, %v591
  %v593 = vrot.slane %v592, 2
  %v594 = vadd.f32 %v592, %v593
  %v595 = vrot.slane %v594, 1
  %v596 = vadd.f32 %v594, %v595
  %v597 = vmul.f32 %v498, %v498
  %v598 = vmul.f32 %v501, %v501
  %v599 = vmul.f32 %v506, %v506
  %v600 = vmul.f32 %v509, %v509
  %v601 = vmul.f32 %v514, %v514
  %v602 = vmul.f32 %v517, %v517
  %v603 = vmul.f32 %v522, %v522
  %v604 = vmul.f32 %v525, %v525
  %v605 = vmul.f32 %v530, %v530
  %v606 = vmul.f32 %v533, %v533
  %v607 = vmul.f32 %v538, %v538
  %v608 = vmul.f32 %v541, %v541
  %v609 = vmul.f32 %v546, %v546
  %v610 = vmul.f32 %v549, %v549
  %v611 = vmul.f32 %v554, %v554
  %v612 = vmul.f32 %v557, %v557
  %v613 = vadd.f32 %v597, %v598
  %v614 = vadd.f32 %v613, %v599
  %v615 = vadd.f32 %v614, %v600
  %v616 = vadd.f32 %v615, %v601
  %v617 = vadd.f32 %v616, %v602
  %v618 = vadd.f32 %v617, %v603
  %v619 = vadd.f32 %v618, %v604
  %v620 = vadd.f32 %v619, %v605
  %v621 = vadd.f32 %v620, %v606
  %v622 = vadd.f32 %v621, %v607
  %v623 = vadd.f32 %v622, %v608
  %v624 = vadd.f32 %v623, %v609
  %v625 = vadd.f32 %v624, %v610
  %v626 = vadd.f32 %v625, %v611
  %v627 = vadd.f32 %v626, %v612
  %v628 = vrot.slane %v627, 4
  %v629 = vadd.f32 %v627, %v628
  %v630 = vrot.slane %v629, 2
  %v631 = vadd.f32 %v629, %v630
  %v632 = vrot.slane %v631, 1
  %v633 = vadd.f32 %v631, %v632
  %vm634 = vcmask 1040384
  %v635 = vsel %vm634, %v596, %v633
  %vm636 = vcmask 1041408
  %v637 = vsel %vm636, %v635, 0.0
  %638 = vst [vmem:[%s3] sm:$0xff] %v637
  // Predicated region
  $region10: #{cnn_autoencoder_forward.17} parent=0 // pred_check
    _
  $region11: #{cnn_autoencoder_forward.17} parent=0 // pred_check_branch
    %640 = sbr.rel (0) target = $region13
  $region12: #{cnn_autoencoder_forward.17} parent=0 // pred_region
    _
  $region13: #{cnn_autoencoder_forward.17} parent=0 // pred_fallthru
    _
  // Predicated region
  $region14: #{cnn_autoencoder_forward.17} parent=0 // pred_check
    _
  $region15: #{cnn_autoencoder_forward.17} parent=0 // pred_check_branch
    %642 = sbr.rel (0) target = $region17
  $region16: #{cnn_autoencoder_forward.17} parent=0 // pred_region
    _
  $region17: #{cnn_autoencoder_forward.17} parent=0 // pred_fallthru
    _
  // Predicated region
  $region18: #{cnn_autoencoder_forward.17} parent=0 // pred_check
    _
  $region19: #{cnn_autoencoder_forward.17} parent=0 // pred_check_branch
    %644 = sbr.rel (0) target = $region21
  $region20: #{cnn_autoencoder_forward.17} parent=0 // pred_region
    _
  $region21: #{cnn_autoencoder_forward.17} parent=0 // pred_fallthru
    _
  // Predicated region
  $region22: #{cnn_autoencoder_forward.17} parent=0 // pred_check
    _
  $region23: #{cnn_autoencoder_forward.17} parent=0 // pred_check_branch
    %646 = sbr.rel (0) target = $region25
  $region24: #{cnn_autoencoder_forward.17} parent=0 // pred_region
    _
  $region25: #{cnn_autoencoder_forward.17} parent=0 // pred_fallthru
    _

// kernel: cnn_autoencoder_forward.19
$region0: #{cnn_autoencoder_forward.19}
  #allocation0 [shape = 'u32[]', space=smem, size = 0x4, offset = 0x4, fixed_abs, tag = 'smem constant byte address 0x4 - core index']
  #allocation1 [shape = 'u32[144,128]{1,0:T(1,128)}', space=vmem, size = 0x12000, scoped, tag = 'internal scratch']
  %s0 = inlined_call_operand.vmem [shape: bf16[128,640], index: 0, kind: input, shape index: {}]
  %s1 = inlined_call_operand.vmem [shape: bf16[640,128], index: 1, kind: input, shape index: {}]
  %s2 = inlined_call_operand.vmem [shape: f32[128,128], index: 2, kind: output, shape index: {0}]
  %s3 = inlined_call_operand.vmem [shape: f32[8,128], index: 3, kind: output, shape index: {1}]
  %4 = xla_tuple %s2, %s3
  %s5 = sld [smem:[#allocation0]]
  $region26: #{cnn_autoencoder_forward.19} parent=0
    _
  %s7 = ssub.s32 1, %s5
  %s8 = scalar_select 0, %s7, %s5
  // Predicated region
  $region2: #{cnn_autoencoder_forward.19} parent=0 // pred_check
    _
  $region3: #{cnn_autoencoder_forward.19} parent=0 // pred_check_branch
    %10 = sbr.rel (0) target = $region5
  $region4: #{cnn_autoencoder_forward.19} parent=0 // pred_region
    _
  $region5: #{cnn_autoencoder_forward.19} parent=0 // pred_fallthru
    _
  // Predicated region
  $region6: #{cnn_autoencoder_forward.19} parent=0 // pred_check
    _
  $region7: #{cnn_autoencoder_forward.19} parent=0 // pred_check_branch
    %12 = sbr.rel (0) target = $region9
  $region8: #{cnn_autoencoder_forward.19} parent=0 // pred_region
    _
  $region9: #{cnn_autoencoder_forward.19} parent=0 // pred_fallthru
    _
  %v14 = vld [vmem:[%s0] sm:$0xff]
  %v15 = vld [vmem:[%s0 + $0x8] sm:$0xff]
  %v16 = vld [vmem:[%s0 + $0x10] sm:$0xf]
  %v17 = vld [vmem:[%s0 + $0x14] sm:$0xff]
  %v18 = vld [vmem:[%s0 + $0x1c] sm:$0xff]
  %v19 = vld [vmem:[%s0 + $0x24] sm:$0xf]
  %v20 = vld [vmem:[%s0 + $0x28] sm:$0xff]
  %v21 = vld [vmem:[%s0 + $0x30] sm:$0xff]
  %v22 = vld [vmem:[%s0 + $0x38] sm:$0xf]
  %v23 = vld [vmem:[%s0 + $0x3c] sm:$0xff]
  %v24 = vld [vmem:[%s0 + $0x44] sm:$0xff]
  %v25 = vld [vmem:[%s0 + $0x4c] sm:$0xf]
  %v26 = vld [vmem:[%s0 + $0x50] sm:$0xff]
  %v27 = vld [vmem:[%s0 + $0x58] sm:$0xff]
  %v28 = vld [vmem:[%s0 + $0x60] sm:$0xf]
  %v29 = vld [vmem:[%s0 + $0x64] sm:$0xff]
  %v30 = vld [vmem:[%s0 + $0x6c] sm:$0xff]
  %v31 = vld [vmem:[%s0 + $0x74] sm:$0xf]
  %v32 = vld [vmem:[%s0 + $0x78] sm:$0xff]
  %v33 = vld [vmem:[%s0 + $0x80] sm:$0xff]
  %v34 = vld [vmem:[%s0 + $0x88] sm:$0xf]
  %v35 = vld [vmem:[%s0 + $0x8c] sm:$0xff]
  %v36 = vld [vmem:[%s0 + $0x94] sm:$0xff]
  %v37 = vld [vmem:[%s0 + $0x9c] sm:$0xf]
  %v38 = vld [vmem:[%s0 + $0xa0] sm:$0xff]
  %v39 = vld [vmem:[%s0 + $0xa8] sm:$0xff]
  %v40 = vld [vmem:[%s0 + $0xb0] sm:$0xf]
  %v41 = vld [vmem:[%s0 + $0xb4] sm:$0xff]
  %v42 = vld [vmem:[%s0 + $0xbc] sm:$0xff]
  %v43 = vld [vmem:[%s0 + $0xc4] sm:$0xf]
  %v44 = vld [vmem:[%s0 + $0xc8] sm:$0xff]
  %v45 = vld [vmem:[%s0 + $0xd0] sm:$0xff]
  %v46 = vld [vmem:[%s0 + $0xd8] sm:$0xf]
  %v47 = vld [vmem:[%s0 + $0xdc] sm:$0xff]
  %v48 = vld [vmem:[%s0 + $0xe4] sm:$0xff]
  %v49 = vld [vmem:[%s0 + $0xec] sm:$0xf]
  %v50 = vld [vmem:[%s0 + $0xf0] sm:$0xff]
  %v51 = vld [vmem:[%s0 + $0xf8] sm:$0xff]
  %v52 = vld [vmem:[%s0 + $0x100] sm:$0xf]
  %v53 = vld [vmem:[%s0 + $0x104] sm:$0xff]
  %v54 = vld [vmem:[%s0 + $0x10c] sm:$0xff]
  %v55 = vld [vmem:[%s0 + $0x114] sm:$0xf]
  %v56 = vld [vmem:[%s0 + $0x118] sm:$0xff]
  %v57 = vld [vmem:[%s0 + $0x120] sm:$0xff]
  %v58 = vld [vmem:[%s0 + $0x128] sm:$0xf]
  %v59 = vld [vmem:[%s0 + $0x12c] sm:$0xff]
  %v60 = vld [vmem:[%s0 + $0x134] sm:$0xff]
  %v61 = vld [vmem:[%s0 + $0x13c] sm:$0xf]
  %v62 = vld [vmem:[%s1] sm:$0xf]
  %v63 = vld [vmem:[%s1 + $0x4] sm:$0xf]
  %v64 = vld [vmem:[%s1 + $0x8] sm:$0xf]
  %v65 = vld [vmem:[%s1 + $0xc] sm:$0xf]
  %v66 = vld [vmem:[%s1 + $0x10] sm:$0xf]
  %v67 = vld [vmem:[%s1 + $0x14] sm:$0xf]
  %v68 = vld [vmem:[%s1 + $0x18] sm:$0xf]
  %v69 = vld [vmem:[%s1 + $0x1c] sm:$0xf]
  %v70 = vld [vmem:[%s1 + $0x20] sm:$0xf]
  %v71 = vld [vmem:[%s1 + $0x24] sm:$0xf]
  %v72 = vld [vmem:[%s1 + $0x28] sm:$0xf]
  %v73 = vld [vmem:[%s1 + $0x2c] sm:$0xf]
  %v74 = vld [vmem:[%s1 + $0x30] sm:$0xf]
  %v75 = vld [vmem:[%s1 + $0x34] sm:$0xf]
  %v76 = vld [vmem:[%s1 + $0x38] sm:$0xf]
  %v77 = vld [vmem:[%s1 + $0x3c] sm:$0xf]
  %v78 = vld [vmem:[%s1 + $0x40] sm:$0xf]
  %v79 = vld [vmem:[%s1 + $0x44] sm:$0xf]
  %v80 = vld [vmem:[%s1 + $0x48] sm:$0xf]
  %v81 = vld [vmem:[%s1 + $0x4c] sm:$0xf]
  %v82 = vld [vmem:[%s1 + $0x50] sm:$0xf]
  %v83 = vld [vmem:[%s1 + $0x54] sm:$0xf]
  %v84 = vld [vmem:[%s1 + $0x58] sm:$0xf]
  %v85 = vld [vmem:[%s1 + $0x5c] sm:$0xf]
  %v86 = vld [vmem:[%s1 + $0x60] sm:$0xf]
  %v87 = vld [vmem:[%s1 + $0x64] sm:$0xf]
  %v88 = vld [vmem:[%s1 + $0x68] sm:$0xf]
  %v89 = vld [vmem:[%s1 + $0x6c] sm:$0xf]
  %v90 = vld [vmem:[%s1 + $0x70] sm:$0xf]
  %v91 = vld [vmem:[%s1 + $0x74] sm:$0xf]
  %v92 = vld [vmem:[%s1 + $0x78] sm:$0xf]
  %v93 = vld [vmem:[%s1 + $0x7c] sm:$0xf]
  %v94 = vld [vmem:[%s1 + $0x80] sm:$0xf]
  %v95 = vld [vmem:[%s1 + $0x84] sm:$0xf]
  %v96 = vld [vmem:[%s1 + $0x88] sm:$0xf]
  %v97 = vld [vmem:[%s1 + $0x8c] sm:$0xf]
  %v98 = vld [vmem:[%s1 + $0x90] sm:$0xf]
  %v99 = vld [vmem:[%s1 + $0x94] sm:$0xf]
  %v100 = vld [vmem:[%s1 + $0x98] sm:$0xf]
  %v101 = vld [vmem:[%s1 + $0x9c] sm:$0xf]
  %v102 = vld [vmem:[%s1 + $0xa0] sm:$0xf]
  %v103 = vld [vmem:[%s1 + $0xa4] sm:$0xf]
  %v104 = vld [vmem:[%s1 + $0xa8] sm:$0xf]
  %v105 = vld [vmem:[%s1 + $0xac] sm:$0xf]
  %v106 = vld [vmem:[%s1 + $0xb0] sm:$0xf]
  %v107 = vld [vmem:[%s1 + $0xb4] sm:$0xf]
  %v108 = vld [vmem:[%s1 + $0xb8] sm:$0xf]
  %v109 = vld [vmem:[%s1 + $0xbc] sm:$0xf]
  %v110 = vld [vmem:[%s1 + $0xc0] sm:$0xf]
  %v111 = vld [vmem:[%s1 + $0xc4] sm:$0xf]
  %v112 = vld [vmem:[%s1 + $0xc8] sm:$0xf]
  %v113 = vld [vmem:[%s1 + $0xcc] sm:$0xf]
  %v114 = vld [vmem:[%s1 + $0xd0] sm:$0xf]
  %v115 = vld [vmem:[%s1 + $0xd4] sm:$0xf]
  %v116 = vld [vmem:[%s1 + $0xd8] sm:$0xf]
  %v117 = vld [vmem:[%s1 + $0xdc] sm:$0xf]
  %v118 = vld [vmem:[%s1 + $0xe0] sm:$0xf]
  %v119 = vld [vmem:[%s1 + $0xe4] sm:$0xf]
  %v120 = vld [vmem:[%s1 + $0xe8] sm:$0xf]
  %v121 = vld [vmem:[%s1 + $0xec] sm:$0xf]
  %v122 = vld [vmem:[%s1 + $0xf0] sm:$0xf]
  %v123 = vld [vmem:[%s1 + $0xf4] sm:$0xf]
  %v124 = vld [vmem:[%s1 + $0xf8] sm:$0xf]
  %v125 = vld [vmem:[%s1 + $0xfc] sm:$0xf]
  %v126 = vld [vmem:[%s1 + $0x100] sm:$0xf]
  %v127 = vld [vmem:[%s1 + $0x104] sm:$0xf]
  %v128 = vld [vmem:[%s1 + $0x108] sm:$0xf]
  %v129 = vld [vmem:[%s1 + $0x10c] sm:$0xf]
  %v130 = vld [vmem:[%s1 + $0x110] sm:$0xf]
  %v131 = vld [vmem:[%s1 + $0x114] sm:$0xf]
  %v132 = vld [vmem:[%s1 + $0x118] sm:$0xf]
  %v133 = vld [vmem:[%s1 + $0x11c] sm:$0xf]
  %v134 = vld [vmem:[%s1 + $0x120] sm:$0xf]
  %v135 = vld [vmem:[%s1 + $0x124] sm:$0xf]
  %v136 = vld [vmem:[%s1 + $0x128] sm:$0xf]
  %v137 = vld [vmem:[%s1 + $0x12c] sm:$0xf]
  %v138 = vld [vmem:[%s1 + $0x130] sm:$0xf]
  %v139 = vld [vmem:[%s1 + $0x134] sm:$0xf]
  %v140 = vld [vmem:[%s1 + $0x138] sm:$0xf]
  %v141 = vld [vmem:[%s1 + $0x13c] sm:$0xf]
  %v190 = vunpack.c.l.b16 %v14
  %v191 = vunpack.c.h.b16 %v14
  %v192 = vunpack.c.l.b16 %v15
  %v193 = vunpack.c.h.b16 %v15
  %v194 = vunpack.c.l.b16 %v16
  %v195 = vunpack.c.l.b16 %v17
  %v196 = vunpack.c.h.b16 %v17
  %v197 = vunpack.c.l.b16 %v18
  %v198 = vunpack.c.h.b16 %v18
  %v199 = vunpack.c.l.b16 %v19
  %v200 = vunpack.c.l.b16 %v20
  %v201 = vunpack.c.h.b16 %v20
  %v202 = vunpack.c.l.b16 %v21
  %v203 = vunpack.c.h.b16 %v21
  %v204 = vunpack.c.l.b16 %v22
  %v205 = vunpack.c.l.b16 %v23
  %v206 = vunpack.c.h.b16 %v23
  %v207 = vunpack.c.l.b16 %v24
  %v208 = vunpack.c.h.b16 %v24
  %v209 = vunpack.c.l.b16 %v25
  %v210 = vunpack.c.l.b16 %v26
  %v211 = vunpack.c.h.b16 %v26
  %v212 = vunpack.c.l.b16 %v27
  %v213 = vunpack.c.h.b16 %v27
  %v214 = vunpack.c.l.b16 %v28
  %v215 = vunpack.c.l.b16 %v29
  %v216 = vunpack.c.h.b16 %v29
  %v217 = vunpack.c.l.b16 %v30
  %v218 = vunpack.c.h.b16 %v30
  %v219 = vunpack.c.l.b16 %v31
  %v220 = vunpack.c.l.b16 %v32
  %v221 = vunpack.c.h.b16 %v32
  %v222 = vunpack.c.l.b16 %v33
  %v223 = vunpack.c.h.b16 %v33
  %v224 = vunpack.c.l.b16 %v34
  %v225 = vunpack.c.l.b16 %v35
  %v226 = vunpack.c.h.b16 %v35
  %v227 = vunpack.c.l.b16 %v36
  %v228 = vunpack.c.h.b16 %v36
  %v229 = vunpack.c.l.b16 %v37
  %v230 = vunpack.c.l.b16 %v38
  %v231 = vunpack.c.h.b16 %v38
  %v232 = vunpack.c.l.b16 %v39
  %v233 = vunpack.c.h.b16 %v39
  %v234 = vunpack.c.l.b16 %v40
  %v235 = vunpack.c.l.b16 %v41
  %v236 = vunpack.c.h.b16 %v41
  %v237 = vunpack.c.l.b16 %v42
  %v238 = vunpack.c.h.b16 %v42
  %v239 = vunpack.c.l.b16 %v43
  %v240 = vunpack.c.l.b16 %v44
  %v241 = vunpack.c.h.b16 %v44
  %v242 = vunpack.c.l.b16 %v45
  %v243 = vunpack.c.h.b16 %v45
  %v244 = vunpack.c.l.b16 %v46
  %v245 = vunpack.c.l.b16 %v47
  %v246 = vunpack.c.h.b16 %v47
  %v247 = vunpack.c.l.b16 %v48
  %v248 = vunpack.c.h.b16 %v48
  %v249 = vunpack.c.l.b16 %v49
  %v250 = vunpack.c.l.b16 %v50
  %v251 = vunpack.c.h.b16 %v50
  %v252 = vunpack.c.l.b16 %v51
  %v253 = vunpack.c.h.b16 %v51
  %v254 = vunpack.c.l.b16 %v52
  %v255 = vunpack.c.l.b16 %v53
  %v256 = vunpack.c.h.b16 %v53
  %v257 = vunpack.c.l.b16 %v54
  %v258 = vunpack.c.h.b16 %v54
  %v259 = vunpack.c.l.b16 %v55
  %v260 = vunpack.c.l.b16 %v56
  %v261 = vunpack.c.h.b16 %v56
  %v262 = vunpack.c.l.b16 %v57
  %v263 = vunpack.c.h.b16 %v57
  %v264 = vunpack.c.l.b16 %v58
  %v265 = vunpack.c.l.b16 %v59
  %v266 = vunpack.c.h.b16 %v59
  %v267 = vunpack.c.l.b16 %v60
  %v268 = vunpack.c.h.b16 %v60
  %v269 = vunpack.c.l.b16 %v61
  %v270 = vpack.c.b16 %v195, %v190
  %v271 = vpack.c.b16 %v196, %v191
  %v272 = vpack.c.b16 %v197, %v192
  %v273 = vpack.c.b16 %v198, %v193
  %v274 = vpack.c.b16 %v199, %v194
  %v275 = vpack.c.b16 %v205, %v200
  %v276 = vpack.c.b16 %v206, %v201
  %v277 = vpack.c.b16 %v207, %v202
  %v278 = vpack.c.b16 %v208, %v203
  %v279 = vpack.c.b16 %v209, %v204
  %v280 = vpack.c.b16 %v215, %v210
  %v281 = vpack.c.b16 %v216, %v211
  %v282 = vpack.c.b16 %v217, %v212
  %v283 = vpack.c.b16 %v218, %v213
  %v284 = vpack.c.b16 %v219, %v214
  %v285 = vpack.c.b16 %v225, %v220
  %v286 = vpack.c.b16 %v226, %v221
  %v287 = vpack.c.b16 %v227, %v222
  %v288 = vpack.c.b16 %v228, %v223
  %v289 = vpack.c.b16 %v229, %v224
  %v290 = vpack.c.b16 %v235, %v230
  %v291 = vpack.c.b16 %v236, %v231
  %v292 = vpack.c.b16 %v237, %v232
  %v293 = vpack.c.b16 %v238, %v233
  %v294 = vpack.c.b16 %v239, %v234
  %v295 = vpack.c.b16 %v245, %v240
  %v296 = vpack.c.b16 %v246, %v241
  %v297 = vpack.c.b16 %v247, %v242
  %v298 = vpack.c.b16 %v248, %v243
  %v299 = vpack.c.b16 %v249, %v244
  %v300 = vpack.c.b16 %v255, %v250
  %v301 = vpack.c.b16 %v256, %v251
  %v302 = vpack.c.b16 %v257, %v252
  %v303 = vpack.c.b16 %v258, %v253
  %v304 = vpack.c.b16 %v259, %v254
  %v305 = vpack.c.b16 %v265, %v260
  %v306 = vpack.c.b16 %v266, %v261
  %v307 = vpack.c.b16 %v267, %v262
  %v308 = vpack.c.b16 %v268, %v263
  %v309 = vpack.c.b16 %v269, %v264
  %v430 = vunpack.c.l.b16 %v62
  %v431 = vunpack.c.l.b16 %v63
  %v432 = vunpack.c.l.b16 %v64
  %v433 = vunpack.c.l.b16 %v65
  %v434 = vunpack.c.l.b16 %v66
  %v435 = vunpack.c.l.b16 %v67
  %v436 = vunpack.c.l.b16 %v68
  %v437 = vunpack.c.l.b16 %v69
  %v438 = vunpack.c.l.b16 %v70
  %v439 = vunpack.c.l.b16 %v71
  %v440 = vunpack.c.l.b16 %v72
  %v441 = vunpack.c.l.b16 %v73
  %v442 = vunpack.c.l.b16 %v74
  %v443 = vunpack.c.l.b16 %v75
  %v444 = vunpack.c.l.b16 %v76
  %v445 = vunpack.c.l.b16 %v77
  %v446 = vunpack.c.l.b16 %v78
  %v447 = vunpack.c.l.b16 %v79
  %v448 = vunpack.c.l.b16 %v80
  %v449 = vunpack.c.l.b16 %v81
  %v450 = vunpack.c.l.b16 %v82
  %v451 = vunpack.c.l.b16 %v83
  %v452 = vunpack.c.l.b16 %v84
  %v453 = vunpack.c.l.b16 %v85
  %v454 = vunpack.c.l.b16 %v86
  %v455 = vunpack.c.l.b16 %v87
  %v456 = vunpack.c.l.b16 %v88
  %v457 = vunpack.c.l.b16 %v89
  %v458 = vunpack.c.l.b16 %v90
  %v459 = vunpack.c.l.b16 %v91
  %v460 = vunpack.c.l.b16 %v92
  %v461 = vunpack.c.l.b16 %v93
  %v462 = vunpack.c.l.b16 %v94
  %v463 = vunpack.c.l.b16 %v95
  %v464 = vunpack.c.l.b16 %v96
  %v465 = vunpack.c.l.b16 %v97
  %v466 = vunpack.c.l.b16 %v98
  %v467 = vunpack.c.l.b16 %v99
  %v468 = vunpack.c.l.b16 %v100
  %v469 = vunpack.c.l.b16 %v101
  %v470 = vunpack.c.l.b16 %v102
  %v471 = vunpack.c.l.b16 %v103
  %v472 = vunpack.c.l.b16 %v104
  %v473 = vunpack.c.l.b16 %v105
  %v474 = vunpack.c.l.b16 %v106
  %v475 = vunpack.c.l.b16 %v107
  %v476 = vunpack.c.l.b16 %v108
  %v477 = vunpack.c.l.b16 %v109
  %v478 = vunpack.c.l.b16 %v110
  %v479 = vunpack.c.l.b16 %v111
  %v480 = vunpack.c.l.b16 %v112
  %v481 = vunpack.c.l.b16 %v113
  %v482 = vunpack.c.l.b16 %v114
  %v483 = vunpack.c.l.b16 %v115
  %v484 = vunpack.c.l.b16 %v116
  %v485 = vunpack.c.l.b16 %v117
  %v486 = vunpack.c.l.b16 %v118
  %v487 = vunpack.c.l.b16 %v119
  %v488 = vunpack.c.l.b16 %v120
  %v489 = vunpack.c.l.b16 %v121
  %v490 = vunpack.c.l.b16 %v122
  %v491 = vunpack.c.l.b16 %v123
  %v492 = vunpack.c.l.b16 %v124
  %v493 = vunpack.c.l.b16 %v125
  %v494 = vunpack.c.l.b16 %v126
  %v495 = vunpack.c.l.b16 %v127
  %v496 = vunpack.c.l.b16 %v128
  %v497 = vunpack.c.l.b16 %v129
  %v498 = vunpack.c.l.b16 %v130
  %v499 = vunpack.c.l.b16 %v131
  %v500 = vunpack.c.l.b16 %v132
  %v501 = vunpack.c.l.b16 %v133
  %v502 = vunpack.c.l.b16 %v134
  %v503 = vunpack.c.l.b16 %v135
  %v504 = vunpack.c.l.b16 %v136
  %v505 = vunpack.c.l.b16 %v137
  %v506 = vunpack.c.l.b16 %v138
  %v507 = vunpack.c.l.b16 %v139
  %v508 = vunpack.c.l.b16 %v140
  %v509 = vunpack.c.l.b16 %v141
  %v510 = vpack.c.b16 %v431, %v430
  %v511 = vpack.c.b16 %v433, %v432
  %v512 = vpack.c.b16 %v435, %v434
  %v513 = vpack.c.b16 %v437, %v436
  %v514 = vpack.c.b16 %v439, %v438
  %v515 = vpack.c.b16 %v441, %v440
  %v516 = vpack.c.b16 %v443, %v442
  %v517 = vpack.c.b16 %v445, %v444
  %v518 = vpack.c.b16 %v447, %v446
  %v519 = vpack.c.b16 %v449, %v448
  %v520 = vpack.c.b16 %v451, %v450
  %v521 = vpack.c.b16 %v453, %v452
  %v522 = vpack.c.b16 %v455, %v454
  %v523 = vpack.c.b16 %v457, %v456
  %v524 = vpack.c.b16 %v459, %v458
  %v525 = vpack.c.b16 %v461, %v460
  %v526 = vpack.c.b16 %v463, %v462
  %v527 = vpack.c.b16 %v465, %v464
  %v528 = vpack.c.b16 %v467, %v466
  %v529 = vpack.c.b16 %v469, %v468
  %v530 = vpack.c.b16 %v471, %v470
  %v531 = vpack.c.b16 %v473, %v472
  %v532 = vpack.c.b16 %v475, %v474
  %v533 = vpack.c.b16 %v477, %v476
  %v534 = vpack.c.b16 %v479, %v478
  %v535 = vpack.c.b16 %v481, %v480
  %v536 = vpack.c.b16 %v483, %v482
  %v537 = vpack.c.b16 %v485, %v484
  %v538 = vpack.c.b16 %v487, %v486
  %v539 = vpack.c.b16 %v489, %v488
  %v540 = vpack.c.b16 %v491, %v490
  %v541 = vpack.c.b16 %v493, %v492
  %v542 = vpack.c.b16 %v495, %v494
  %v543 = vpack.c.b16 %v497, %v496
  %v544 = vpack.c.b16 %v499, %v498
  %v545 = vpack.c.b16 %v501, %v500
  %v546 = vpack.c.b16 %v503, %v502
  %v547 = vpack.c.b16 %v505, %v504
  %v548 = vpack.c.b16 %v507, %v506
  %v549 = vpack.c.b16 %v509, %v508
  %590 = vmatprep.subr.bf16.mxu0 0
  %591 = vmatpush1.bf16.msra.mxu0 %v510
  %592 = vmatprep.subr.bf16.mxu0 0
  %593 = vmatpush1.bf16.msra.mxu0 %v511
  %594 = vmatprep.subr.bf16.mxu0 0
  %595 = vmatpush1.bf16.msra.mxu0 %v512
  %596 = vmatprep.subr.bf16.mxu0 0
  %597 = vmatpush1.bf16.msra.mxu0 %v513
  %598 = vmatprep.subr.bf16.mxu0 0
  %599 = vmatpush1.bf16.msra.mxu0 %v514
  %600 = vmatprep.subr.bf16.mxu0 0
  %601 = vmatpush1.bf16.msra.mxu0 %v515
  %602 = vmatprep.subr.bf16.mxu0 0
  %603 = vmatpush1.bf16.msra.mxu0 %v516
  %604 = vmatprep.subr.bf16.mxu0 0
  %605 = vmatpush1.bf16.msra.mxu0 %v517
  %606 = vmatprep.subr.bf16.mxu0 0
  %607 = vmatpush1.bf16.msra.mxu0 %v518
  %608 = vmatprep.subr.bf16.mxu0 0
  %609 = vmatpush1.bf16.msra.mxu0 %v519
  %610 = vmatprep.subr.bf16.mxu0 0
  %611 = vmatpush1.bf16.msra.mxu0 %v520
  %612 = vmatprep.subr.bf16.mxu0 0
  %613 = vmatpush1.bf16.msra.mxu0 %v521
  %614 = vmatprep.subr.bf16.mxu0 0
  %615 = vmatpush1.bf16.msra.mxu0 %v522
  %616 = vmatprep.subr.bf16.mxu0 0
  %617 = vmatpush1.bf16.msra.mxu0 %v523
  %618 = vmatprep.subr.bf16.mxu0 0
  %619 = vmatpush1.bf16.msra.mxu0 %v524
  %620 = vmatprep.subr.bf16.mxu0 0
  %621 = vmatpush1.bf16.msra.mxu0 %v525
  %622 = vmatprep.mubr.bf16.mxu0 %v271
  %623 = vmatmul.mubr.bf16.gmra.mrb[0].mxu0 %v270
  %v624 = vpop.f32.mrb[0].mxu0
  %v625 = vadd.f32 0.0, %v624
  %v626 = vpop.f32.mrb[0].mxu0
  %v627 = vpop.f32.mrb[0].mxu0
  %v628 = vadd.f32 0.0, %v627
  %v629 = vpop.f32.mrb[0].mxu0
  %630 = vmatprep.mubr.bf16.mxu0 %v276
  %631 = vmatmul.mubr.bf16.gmra.mrb[0].mxu0 %v275
  %v632 = vpop.f32.mrb[0].mxu0
  %v633 = vadd.f32 0.0, %v632
  %v634 = vpop.f32.mrb[0].mxu0
  %v635 = vpop.f32.mrb[0].mxu0
  %v636 = vadd.f32 0.0, %v635
  %v637 = vpop.f32.mrb[0].mxu0
  %638 = vmatprep.mubr.bf16.mxu0 %v281
  %639 = vmatmul.mubr.bf16.gmra.mrb[0].mxu0 %v280
  %v640 = vpop.f32.mrb[0].mxu0
  %v641 = vadd.f32 0.0, %v640
  %v642 = vpop.f32.mrb[0].mxu0
  %v643 = vpop.f32.mrb[0].mxu0
  %v644 = vadd.f32 0.0, %v643
  %v645 = vpop.f32.mrb[0].mxu0
  %646 = vmatprep.mubr.bf16.mxu0 %v286
  %647 = vmatmul.mubr.bf16.gmra.mrb[0].mxu0 %v285
  %v648 = vpop.f32.mrb[0].mxu0
  %v649 = vadd.f32 0.0, %v648
  %v650 = vpop.f32.mrb[0].mxu0
  %v651 = vpop.f32.mrb[0].mxu0
  %v652 = vadd.f32 0.0, %v651
  %v653 = vpop.f32.mrb[0].mxu0
  %654 = vmatprep.mubr.bf16.mxu0 %v291
  %655 = vmatmul.mubr.bf16.gmra.mrb[0].mxu0 %v290
  %v656 = vpop.f32.mrb[0].mxu0
  %v657 = vadd.f32 0.0, %v656
  %v658 = vpop.f32.mrb[0].mxu0
  %v659 = vpop.f32.mrb[0].mxu0
  %v660 = vadd.f32 0.0, %v659
  %v661 = vpop.f32.mrb[0].mxu0
  %662 = vmatprep.mubr.bf16.mxu0 %v296
  %663 = vmatmul.mubr.bf16.gmra.mrb[0].mxu0 %v295
  %v664 = vpop.f32.mrb[0].mxu0
  %v665 = vadd.f32 0.0, %v664
  %v666 = vpop.f32.mrb[0].mxu0
  %v667 = vpop.f32.mrb[0].mxu0
  %v668 = vadd.f32 0.0, %v667
  %v669 = vpop.f32.mrb[0].mxu0
  %670 = vmatprep.mubr.bf16.mxu0 %v301
  %671 = vmatmul.mubr.bf16.gmra.mrb[0].mxu0 %v300
  %v672 = vpop.f32.mrb[0].mxu0
  %v673 = vadd.f32 0.0, %v672
  %v674 = vpop.f32.mrb[0].mxu0
  %v675 = vpop.f32.mrb[0].mxu0
  %v676 = vadd.f32 0.0, %v675
  %v677 = vpop.f32.mrb[0].mxu0
  %678 = vmatprep.mubr.bf16.mxu0 %v306
  %679 = vmatmul.mubr.bf16.gmra.mrb[0].mxu0 %v305
  %v680 = vpop.f32.mrb[0].mxu0
  %v681 = vadd.f32 0.0, %v680
  %v682 = vpop.f32.mrb[0].mxu0
  %v683 = vpop.f32.mrb[0].mxu0
  %v684 = vadd.f32 0.0, %v683
  %v685 = vpop.f32.mrb[0].mxu0
  %686 = vdwg.mxu0
  %687 = vmatprep.subr.bf16.mxu0 0
  %688 = vmatpush1.bf16.msra.mxu0 %v526
  %689 = vmatprep.subr.bf16.mxu0 0
  %690 = vmatpush1.bf16.msra.mxu0 %v527
  %691 = vmatprep.subr.bf16.mxu0 0
  %692 = vmatpush1.bf16.msra.mxu0 %v528
  %693 = vmatprep.subr.bf16.mxu0 0
  %694 = vmatpush1.bf16.msra.mxu0 %v529
  %695 = vmatprep.subr.bf16.mxu0 0
  %696 = vmatpush1.bf16.msra.mxu0 %v530
  %697 = vmatprep.subr.bf16.mxu0 0
  %698 = vmatpush1.bf16.msra.mxu0 %v531
  %699 = vmatprep.subr.bf16.mxu0 0
  %700 = vmatpush1.bf16.msra.mxu0 %v532
  %701 = vmatprep.subr.bf16.mxu0 0
  %702 = vmatpush1.bf16.msra.mxu0 %v533
  %703 = vmatprep.subr.bf16.mxu0 0
  %704 = vmatpush1.bf16.msra.mxu0 %v534
  %705 = vmatprep.subr.bf16.mxu0 0
  %706 = vmatpush1.bf16.msra.mxu0 %v535
  %707 = vmatprep.subr.bf16.mxu0 0
  %708 = vmatpush1.bf16.msra.mxu0 %v536
  %709 = vmatprep.subr.bf16.mxu0 0
  %710 = vmatpush1.bf16.msra.mxu0 %v537
  %711 = vmatprep.subr.bf16.mxu0 0
  %712 = vmatpush1.bf16.msra.mxu0 %v538
  %713 = vmatprep.subr.bf16.mxu0 0
  %714 = vmatpush1.bf16.msra.mxu0 %v539
  %715 = vmatprep.subr.bf16.mxu0 0
  %716 = vmatpush1.bf16.msra.mxu0 %v540
  %717 = vmatprep.subr.bf16.mxu0 0
  %718 = vmatpush1.bf16.msra.mxu0 %v541
  %719 = vmatprep.mubr.bf16.mxu0 %v273
  %720 = vmatmul.mubr.bf16.gmra.mrb[0].mxu0 %v272
  %v721 = vpop.f32.mrb[0].mxu0
  %v722 = vadd.f32 %v625, %v721
  %v723 = vpop.f32.mrb[0].mxu0
  %v724 = vpop.f32.mrb[0].mxu0
  %v725 = vadd.f32 %v628, %v724
  %v726 = vpop.f32.mrb[0].mxu0
  %727 = vmatprep.mubr.bf16.mxu0 %v278
  %728 = vmatmul.mubr.bf16.gmra.mrb[0].mxu0 %v277
  %v729 = vpop.f32.mrb[0].mxu0
  %v730 = vadd.f32 %v633, %v729
  %v731 = vpop.f32.mrb[0].mxu0
  %v732 = vpop.f32.mrb[0].mxu0
  %v733 = vadd.f32 %v636, %v732
  %v734 = vpop.f32.mrb[0].mxu0
  %735 = vmatprep.mubr.bf16.mxu0 %v283
  %736 = vmatmul.mubr.bf16.gmra.mrb[0].mxu0 %v282
  %v737 = vpop.f32.mrb[0].mxu0
  %v738 = vadd.f32 %v641, %v737
  %v739 = vpop.f32.mrb[0].mxu0
  %v740 = vpop.f32.mrb[0].mxu0
  %v741 = vadd.f32 %v644, %v740
  %v742 = vpop.f32.mrb[0].mxu0
  %743 = vmatprep.mubr.bf16.mxu0 %v288
  %744 = vmatmul.mubr.bf16.gmra.mrb[0].mxu0 %v287
  %v745 = vpop.f32.mrb[0].mxu0
  %v746 = vadd.f32 %v649, %v745
  %v747 = vpop.f32.mrb[0].mxu0
  %v748 = vpop.f32.mrb[0].mxu0
  %v749 = vadd.f32 %v652, %v748
  %v750 = vpop.f32.mrb[0].mxu0
  %751 = vmatprep.mubr.bf16.mxu0 %v293
  %752 = vmatmul.mubr.bf16.gmra.mrb[0].mxu0 %v292
  %v753 = vpop.f32.mrb[0].mxu0
  %v754 = vadd.f32 %v657, %v753
  %v755 = vpop.f32.mrb[0].mxu0
  %v756 = vpop.f32.mrb[0].mxu0
  %v757 = vadd.f32 %v660, %v756
  %v758 = vpop.f32.mrb[0].mxu0
  %759 = vmatprep.mubr.bf16.mxu0 %v298
  %760 = vmatmul.mubr.bf16.gmra.mrb[0].mxu0 %v297
  %v761 = vpop.f32.mrb[0].mxu0
  %v762 = vadd.f32 %v665, %v761
  %v763 = vpop.f32.mrb[0].mxu0
  %v764 = vpop.f32.mrb[0].mxu0
  %v765 = vadd.f32 %v668, %v764
  %v766 = vpop.f32.mrb[0].mxu0
  %767 = vmatprep.mubr.bf16.mxu0 %v303
  %768 = vmatmul.mubr.bf16.gmra.mrb[0].mxu0 %v302
  %v769 = vpop.f32.mrb[0].mxu0
  %v770 = vadd.f32 %v673, %v769
  %v771 = vpop.f32.mrb[0].mxu0
  %v772 = vpop.f32.mrb[0].mxu0
  %v773 = vadd.f32 %v676, %v772
  %v774 = vpop.f32.mrb[0].mxu0
  %775 = vmatprep.mubr.bf16.mxu0 %v308
  %776 = vmatmul.mubr.bf16.gmra.mrb[0].mxu0 %v307
  %v777 = vpop.f32.mrb[0].mxu0
  %v778 = vadd.f32 %v681, %v777
  %v779 = vpop.f32.mrb[0].mxu0
  %v780 = vpop.f32.mrb[0].mxu0
  %v781 = vadd.f32 %v684, %v780
  %v782 = vpop.f32.mrb[0].mxu0
  %783 = vdwg.mxu0
  %784 = vmatprep.subr.bf16.mxu0 0
  %785 = vmatpush1.bf16.msra.mxu0 %v542
  %786 = vmatprep.subr.bf16.mxu0 0
  %787 = vmatpush1.bf16.msra.mxu0 %v543
  %788 = vmatprep.subr.bf16.mxu0 0
  %789 = vmatpush1.bf16.msra.mxu0 %v544
  %790 = vmatprep.subr.bf16.mxu0 0
  %791 = vmatpush1.bf16.msra.mxu0 %v545
  %792 = vmatprep.subr.bf16.mxu0 0
  %793 = vmatpush1.bf16.msra.mxu0 %v546
  %794 = vmatprep.subr.bf16.mxu0 0
  %795 = vmatpush1.bf16.msra.mxu0 %v547
  %796 = vmatprep.subr.bf16.mxu0 0
  %797 = vmatpush1.bf16.msra.mxu0 %v548
  %798 = vmatprep.subr.bf16.mxu0 0
  %799 = vmatpush1.bf16.msra.mxu0 %v549
  %800 = vmatprep.subr.bf16.mxu0 0
  %801 = vmatpush1.bf16.msra.mxu0 0
  %802 = vmatprep.subr.bf16.mxu0 0
  %803 = vmatpush1.bf16.msra.mxu0 0
  %804 = vmatprep.subr.bf16.mxu0 0
  %805 = vmatpush1.bf16.msra.mxu0 0
  %806 = vmatprep.subr.bf16.mxu0 0
  %807 = vmatpush1.bf16.msra.mxu0 0
  %808 = vmatprep.subr.bf16.mxu0 0
  %809 = vmatpush1.bf16.msra.mxu0 0
  %810 = vmatprep.subr.bf16.mxu0 0
  %811 = vmatpush1.bf16.msra.mxu0 0
  %812 = vmatprep.subr.bf16.mxu0 0
  %813 = vmatpush1.bf16.msra.mxu0 0
  %814 = vmatprep.subr.bf16.mxu0 0
  %815 = vmatpush1.bf16.msra.mxu0 0
  %816 = vmatprep.mubr.bf16.mxu0 0
  %817 = vmatmul.mubr.bf16.gmra.mrb[0].mxu0 %v274
  %v818 = vpop.f32.mrb[0].mxu0
  %v819 = vadd.f32 %v722, %v818
  %v820 = vpop.f32.mrb[0].mxu0
  %v821 = vpop.f32.mrb[0].mxu0
  %v822 = vadd.f32 %v725, %v821
  %v823 = vpop.f32.mrb[0].mxu0
  %824 = vmatprep.mubr.bf16.mxu0 0
  %825 = vmatmul.mubr.bf16.gmra.mrb[0].mxu0 %v279
  %v826 = vpop.f32.mrb[0].mxu0
  %v827 = vadd.f32 %v730, %v826
  %v828 = vpop.f32.mrb[0].mxu0
  %v829 = vpop.f32.mrb[0].mxu0
  %v830 = vadd.f32 %v733, %v829
  %v831 = vpop.f32.mrb[0].mxu0
  %832 = vmatprep.mubr.bf16.mxu0 0
  %833 = vmatmul.mubr.bf16.gmra.mrb[0].mxu0 %v284
  %v834 = vpop.f32.mrb[0].mxu0
  %v835 = vadd.f32 %v738, %v834
  %v836 = vpop.f32.mrb[0].mxu0
  %v837 = vpop.f32.mrb[0].mxu0
  %v838 = vadd.f32 %v741, %v837
  %v839 = vpop.f32.mrb[0].mxu0
  %840 = vmatprep.mubr.bf16.mxu0 0
  %841 = vmatmul.mubr.bf16.gmra.mrb[0].mxu0 %v289
  %v842 = vpop.f32.mrb[0].mxu0
  %v843 = vadd.f32 %v746, %v842
  %v844 = vpop.f32.mrb[0].mxu0
  %v845 = vpop.f32.mrb[0].mxu0
  %v846 = vadd.f32 %v749, %v845
  %v847 = vpop.f32.mrb[0].mxu0
  %848 = vmatprep.mubr.bf16.mxu0 0
  %849 = vmatmul.mubr.bf16.gmra.mrb[0].mxu0 %v294
  %v850 = vpop.f32.mrb[0].mxu0
  %v851 = vadd.f32 %v754, %v850
  %v852 = vpop.f32.mrb[0].mxu0
  %v853 = vpop.f32.mrb[0].mxu0
  %v854 = vadd.f32 %v757, %v853
  %v855 = vpop.f32.mrb[0].mxu0
  %856 = vmatprep.mubr.bf16.mxu0 0
  %857 = vmatmul.mubr.bf16.gmra.mrb[0].mxu0 %v299
  %v858 = vpop.f32.mrb[0].mxu0
  %v859 = vadd.f32 %v762, %v858
  %v860 = vpop.f32.mrb[0].mxu0
  %v861 = vpop.f32.mrb[0].mxu0
  %v862 = vadd.f32 %v765, %v861
  %v863 = vpop.f32.mrb[0].mxu0
  %864 = vmatprep.mubr.bf16.mxu0 0
  %865 = vmatmul.mubr.bf16.gmra.mrb[0].mxu0 %v304
  %v866 = vpop.f32.mrb[0].mxu0
  %v867 = vadd.f32 %v770, %v866
  %v868 = vpop.f32.mrb[0].mxu0
  %v869 = vpop.f32.mrb[0].mxu0
  %v870 = vadd.f32 %v773, %v869
  %v871 = vpop.f32.mrb[0].mxu0
  %872 = vmatprep.mubr.bf16.mxu0 0
  %873 = vmatmul.mubr.bf16.gmra.mrb[0].mxu0 %v309
  %v874 = vpop.f32.mrb[0].mxu0
  %v875 = vadd.f32 %v778, %v874
  %v876 = vpop.f32.mrb[0].mxu0
  %v877 = vpop.f32.mrb[0].mxu0
  %v878 = vadd.f32 %v781, %v877
  %v879 = vpop.f32.mrb[0].mxu0
  %880 = vdwg.mxu0
  %881 = vst [vmem:[%s2] sm:$0xff] %v819
  %882 = vst [vmem:[%s2 + $0x8] sm:$0xff] %v822
  %883 = vst [vmem:[%s2 + $0x10] sm:$0xff] %v827
  %884 = vst [vmem:[%s2 + $0x18] sm:$0xff] %v830
  %885 = vst [vmem:[%s2 + $0x20] sm:$0xff] %v835
  %886 = vst [vmem:[%s2 + $0x28] sm:$0xff] %v838
  %887 = vst [vmem:[%s2 + $0x30] sm:$0xff] %v843
  %888 = vst [vmem:[%s2 + $0x38] sm:$0xff] %v846
  %889 = vst [vmem:[%s2 + $0x40] sm:$0xff] %v851
  %890 = vst [vmem:[%s2 + $0x48] sm:$0xff] %v854
  %891 = vst [vmem:[%s2 + $0x50] sm:$0xff] %v859
  %892 = vst [vmem:[%s2 + $0x58] sm:$0xff] %v862
  %893 = vst [vmem:[%s2 + $0x60] sm:$0xff] %v867
  %894 = vst [vmem:[%s2 + $0x68] sm:$0xff] %v870
  %895 = vst [vmem:[%s2 + $0x70] sm:$0xff] %v875
  %896 = vst [vmem:[%s2 + $0x78] sm:$0xff] %v878
  %v897 = vadd.f32 %v819, %v822
  %v898 = vadd.f32 %v897, %v827
  %v899 = vadd.f32 %v898, %v830
  %v900 = vadd.f32 %v899, %v835
  %v901 = vadd.f32 %v900, %v838
  %v902 = vadd.f32 %v901, %v843
  %v903 = vadd.f32 %v902, %v846
  %v904 = vadd.f32 %v903, %v851
  %v905 = vadd.f32 %v904, %v854
  %v906 = vadd.f32 %v905, %v859
  %v907 = vadd.f32 %v906, %v862
  %v908 = vadd.f32 %v907, %v867
  %v909 = vadd.f32 %v908, %v870
  %v910 = vadd.f32 %v909, %v875
  %v911 = vadd.f32 %v910, %v878
  %v912 = vrot.slane %v911, 4
  %v913 = vadd.f32 %v911, %v912
  %v914 = vrot.slane %v913, 2
  %v915 = vadd.f32 %v913, %v914
  %v916 = vrot.slane %v915, 1
  %v917 = vadd.f32 %v915, %v916
  %v918 = vmul.f32 %v819, %v819
  %v919 = vmul.f32 %v822, %v822
  %v920 = vmul.f32 %v827, %v827
  %v921 = vmul.f32 %v830, %v830
  %v922 = vmul.f32 %v835, %v835
  %v923 = vmul.f32 %v838, %v838
  %v924 = vmul.f32 %v843, %v843
  %v925 = vmul.f32 %v846, %v846
  %v926 = vmul.f32 %v851, %v851
  %v927 = vmul.f32 %v854, %v854
  %v928 = vmul.f32 %v859, %v859
  %v929 = vmul.f32 %v862, %v862
  %v930 = vmul.f32 %v867, %v867
  %v931 = vmul.f32 %v870, %v870
  %v932 = vmul.f32 %v875, %v875
  %v933 = vmul.f32 %v878, %v878
  %v934 = vadd.f32 %v918, %v919
  %v935 = vadd.f32 %v934, %v920
  %v936 = vadd.f32 %v935, %v921
  %v937 = vadd.f32 %v936, %v922
  %v938 = vadd.f32 %v937, %v923
  %v939 = vadd.f32 %v938, %v924
  %v940 = vadd.f32 %v939, %v925
  %v941 = vadd.f32 %v940, %v926
  %v942 = vadd.f32 %v941, %v927
  %v943 = vadd.f32 %v942, %v928
  %v944 = vadd.f32 %v943, %v929
  %v945 = vadd.f32 %v944, %v930
  %v946 = vadd.f32 %v945, %v931
  %v947 = vadd.f32 %v946, %v932
  %v948 = vadd.f32 %v947, %v933
  %v949 = vrot.slane %v948, 4
  %v950 = vadd.f32 %v948, %v949
  %v951 = vrot.slane %v950, 2
  %v952 = vadd.f32 %v950, %v951
  %v953 = vrot.slane %v952, 1
  %v954 = vadd.f32 %v952, %v953
  %vm955 = vcmask 1040384
  %v956 = vsel %vm955, %v917, %v954
  %vm957 = vcmask 1041408
  %v958 = vsel %vm957, %v956, 0.0
  %959 = vst [vmem:[%s3] sm:$0xff] %v958
  // Predicated region
  $region10: #{cnn_autoencoder_forward.19} parent=0 // pred_check
    _
  $region11: #{cnn_autoencoder_forward.19} parent=0 // pred_check_branch
    %961 = sbr.rel (0) target = $region13
  $region12: #{cnn_autoencoder_forward.19} parent=0 // pred_region
    _
  $region13: #{cnn_autoencoder_forward.19} parent=0 // pred_fallthru
    _
  // Predicated region
  $region14: #{cnn_autoencoder_forward.19} parent=0 // pred_check
    _
  $region15: #{cnn_autoencoder_forward.19} parent=0 // pred_check_branch
    %963 = sbr.rel (0) target = $region17
  $region16: #{cnn_autoencoder_forward.19} parent=0 // pred_region
    _
  $region17: #{cnn_autoencoder_forward.19} parent=0 // pred_fallthru
    _
  // Predicated region
  $region18: #{cnn_autoencoder_forward.19} parent=0 // pred_check
    _
  $region19: #{cnn_autoencoder_forward.19} parent=0 // pred_check_branch
    %965 = sbr.rel (0) target = $region21
  $region20: #{cnn_autoencoder_forward.19} parent=0 // pred_region
    _
  $region21: #{cnn_autoencoder_forward.19} parent=0 // pred_fallthru
    _
  // Predicated region
  $region22: #{cnn_autoencoder_forward.19} parent=0 // pred_check
    _
  $region23: #{cnn_autoencoder_forward.19} parent=0 // pred_check_branch
    %967 = sbr.rel (0) target = $region25
  $region24: #{cnn_autoencoder_forward.19} parent=0 // pred_region
    _
  $region25: #{cnn_autoencoder_forward.19} parent=0 // pred_fallthru
    _

// kernel: cnn_autoencoder_forward.22
$region0: #{cnn_autoencoder_forward.22}
  #allocation0 [shape = 'u32[]', space=smem, size = 0x4, offset = 0x4, fixed_abs, tag = 'smem constant byte address 0x4 - core index']
  #allocation1 [shape = 'u32[144,128]{1,0:T(1,128)}', space=vmem, size = 0x12000, scoped, tag = 'internal scratch']
  %s0 = inlined_call_operand.vmem [shape: f32[128,256], index: 0, kind: input, shape index: {}]
  %s1 = inlined_call_operand.vmem [shape: f32[1,256], index: 1, kind: input, shape index: {}]
  %s2 = inlined_call_operand.vmem [shape: f32[1,256], index: 2, kind: input, shape index: {}]
  %s3 = inlined_call_operand.vmem [shape: bf16[128,256], index: 3, kind: output, shape index: {}]
  %s4 = sld [smem:[#allocation0]]
  $region22: #{cnn_autoencoder_forward.22} parent=0
    _
  %s6 = ssub.s32 1, %s4
  %s7 = scalar_select 0, %s6, %s4
  // Predicated region
  $region2: #{cnn_autoencoder_forward.22} parent=0 // pred_check
    _
  $region3: #{cnn_autoencoder_forward.22} parent=0 // pred_check_branch
    %9 = sbr.rel (0) target = $region5
  $region4: #{cnn_autoencoder_forward.22} parent=0 // pred_region
    _
  $region5: #{cnn_autoencoder_forward.22} parent=0 // pred_fallthru
    _
  // Predicated region
  $region6: #{cnn_autoencoder_forward.22} parent=0 // pred_check
    _
  $region7: #{cnn_autoencoder_forward.22} parent=0 // pred_check_branch
    %11 = sbr.rel (0) target = $region9
  $region8: #{cnn_autoencoder_forward.22} parent=0 // pred_region
    _
  $region9: #{cnn_autoencoder_forward.22} parent=0 // pred_fallthru
    _
  // Predicated region
  $region10: #{cnn_autoencoder_forward.22} parent=0 // pred_check
    _
  $region11: #{cnn_autoencoder_forward.22} parent=0 // pred_check_branch
    %13 = sbr.rel (0) target = $region13
  $region12: #{cnn_autoencoder_forward.22} parent=0 // pred_region
    _
  $region13: #{cnn_autoencoder_forward.22} parent=0 // pred_fallthru
    _
  %v14 = vld [vmem:[%s0] sm:$0xff]
  %v15 = vld [vmem:[%s0 + $0x8] sm:$0xff]
  %v16 = vld [vmem:[%s0 + $0x10] sm:$0xff]
  %v17 = vld [vmem:[%s0 + $0x18] sm:$0xff]
  %v18 = vld [vmem:[%s0 + $0x20] sm:$0xff]
  %v19 = vld [vmem:[%s0 + $0x28] sm:$0xff]
  %v20 = vld [vmem:[%s0 + $0x30] sm:$0xff]
  %v21 = vld [vmem:[%s0 + $0x38] sm:$0xff]
  %v22 = vld [vmem:[%s0 + $0x40] sm:$0xff]
  %v23 = vld [vmem:[%s0 + $0x48] sm:$0xff]
  %v24 = vld [vmem:[%s0 + $0x50] sm:$0xff]
  %v25 = vld [vmem:[%s0 + $0x58] sm:$0xff]
  %v26 = vld [vmem:[%s0 + $0x60] sm:$0xff]
  %v27 = vld [vmem:[%s0 + $0x68] sm:$0xff]
  %v28 = vld [vmem:[%s0 + $0x70] sm:$0xff]
  %v29 = vld [vmem:[%s0 + $0x78] sm:$0xff]
  %v30 = vld [vmem:[%s0 + $0x80] sm:$0xff]
  %v31 = vld [vmem:[%s0 + $0x88] sm:$0xff]
  %v32 = vld [vmem:[%s0 + $0x90] sm:$0xff]
  %v33 = vld [vmem:[%s0 + $0x98] sm:$0xff]
  %v34 = vld [vmem:[%s0 + $0xa0] sm:$0xff]
  %v35 = vld [vmem:[%s0 + $0xa8] sm:$0xff]
  %v36 = vld [vmem:[%s0 + $0xb0] sm:$0xff]
  %v37 = vld [vmem:[%s0 + $0xb8] sm:$0xff]
  %v38 = vld [vmem:[%s0 + $0xc0] sm:$0xff]
  %v39 = vld [vmem:[%s0 + $0xc8] sm:$0xff]
  %v40 = vld [vmem:[%s0 + $0xd0] sm:$0xff]
  %v41 = vld [vmem:[%s0 + $0xd8] sm:$0xff]
  %v42 = vld [vmem:[%s0 + $0xe0] sm:$0xff]
  %v43 = vld [vmem:[%s0 + $0xe8] sm:$0xff]
  %v44 = vld [vmem:[%s0 + $0xf0] sm:$0xff]
  %v45 = vld [vmem:[%s0 + $0xf8] sm:$0xff]
  %v46 = vld [vmem:[%s1] sm:$0x3]
  %v48 = vlaneseq
  %v49 = vshrl.u32 %v48, 7
  %v50 = vsub.s32 0, %v49
  %v51 = vrot.slane %v46, %v50
  %v52 = vlaneseq
  %v53 = vshrl.u32 %v52, 7
  %v54 = vsub.s32 1, %v53
  %v55 = vrot.slane %v46, %v54
  %v58 = vmul.f32 %v14, %v51
  %v59 = vmul.f32 %v15, %v55
  %v60 = vmul.f32 %v16, %v51
  %v61 = vmul.f32 %v17, %v55
  %v62 = vmul.f32 %v18, %v51
  %v63 = vmul.f32 %v19, %v55
  %v64 = vmul.f32 %v20, %v51
  %v65 = vmul.f32 %v21, %v55
  %v66 = vmul.f32 %v22, %v51
  %v67 = vmul.f32 %v23, %v55
  %v68 = vmul.f32 %v24, %v51
  %v69 = vmul.f32 %v25, %v55
  %v70 = vmul.f32 %v26, %v51
  %v71 = vmul.f32 %v27, %v55
  %v72 = vmul.f32 %v28, %v51
  %v73 = vmul.f32 %v29, %v55
  %v74 = vmul.f32 %v30, %v51
  %v75 = vmul.f32 %v31, %v55
  %v76 = vmul.f32 %v32, %v51
  %v77 = vmul.f32 %v33, %v55
  %v78 = vmul.f32 %v34, %v51
  %v79 = vmul.f32 %v35, %v55
  %v80 = vmul.f32 %v36, %v51
  %v81 = vmul.f32 %v37, %v55
  %v82 = vmul.f32 %v38, %v51
  %v83 = vmul.f32 %v39, %v55
  %v84 = vmul.f32 %v40, %v51
  %v85 = vmul.f32 %v41, %v55
  %v86 = vmul.f32 %v42, %v51
  %v87 = vmul.f32 %v43, %v55
  %v88 = vmul.f32 %v44, %v51
  %v89 = vmul.f32 %v45, %v55
  %v90 = vld [vmem:[%s2] sm:$0x3]
  %v92 = vlaneseq
  %v93 = vshrl.u32 %v92, 7
  %v94 = vsub.s32 0, %v93
  %v95 = vrot.slane %v90, %v94
  %v96 = vlaneseq
  %v97 = vshrl.u32 %v96, 7
  %v98 = vsub.s32 1, %v97
  %v99 = vrot.slane %v90, %v98
  %v102 = vadd.f32 %v58, %v95
  %v103 = vadd.f32 %v59, %v99
  %v104 = vadd.f32 %v60, %v95
  %v105 = vadd.f32 %v61, %v99
  %v106 = vadd.f32 %v62, %v95
  %v107 = vadd.f32 %v63, %v99
  %v108 = vadd.f32 %v64, %v95
  %v109 = vadd.f32 %v65, %v99
  %v110 = vadd.f32 %v66, %v95
  %v111 = vadd.f32 %v67, %v99
  %v112 = vadd.f32 %v68, %v95
  %v113 = vadd.f32 %v69, %v99
  %v114 = vadd.f32 %v70, %v95
  %v115 = vadd.f32 %v71, %v99
  %v116 = vadd.f32 %v72, %v95
  %v117 = vadd.f32 %v73, %v99
  %v118 = vadd.f32 %v74, %v95
  %v119 = vadd.f32 %v75, %v99
  %v120 = vadd.f32 %v76, %v95
  %v121 = vadd.f32 %v77, %v99
  %v122 = vadd.f32 %v78, %v95
  %v123 = vadd.f32 %v79, %v99
  %v124 = vadd.f32 %v80, %v95
  %v125 = vadd.f32 %v81, %v99
  %v126 = vadd.f32 %v82, %v95
  %v127 = vadd.f32 %v83, %v99
  %v128 = vadd.f32 %v84, %v95
  %v129 = vadd.f32 %v85, %v99
  %v130 = vadd.f32 %v86, %v95
  %v131 = vadd.f32 %v87, %v99
  %v132 = vadd.f32 %v88, %v95
  %v133 = vadd.f32 %v89, %v99
  %vm134 = vcmp.ge.f32.partialorder %v102, 0.0
  %vm135 = vcmp.ge.f32.partialorder %v103, 0.0
  %vm136 = vcmp.ge.f32.partialorder %v104, 0.0
  %vm137 = vcmp.ge.f32.partialorder %v105, 0.0
  %vm138 = vcmp.ge.f32.partialorder %v106, 0.0
  %vm139 = vcmp.ge.f32.partialorder %v107, 0.0
  %vm140 = vcmp.ge.f32.partialorder %v108, 0.0
  %vm141 = vcmp.ge.f32.partialorder %v109, 0.0
  %vm142 = vcmp.ge.f32.partialorder %v110, 0.0
  %vm143 = vcmp.ge.f32.partialorder %v111, 0.0
  %vm144 = vcmp.ge.f32.partialorder %v112, 0.0
  %vm145 = vcmp.ge.f32.partialorder %v113, 0.0
  %vm146 = vcmp.ge.f32.partialorder %v114, 0.0
  %vm147 = vcmp.ge.f32.partialorder %v115, 0.0
  %vm148 = vcmp.ge.f32.partialorder %v116, 0.0
  %vm149 = vcmp.ge.f32.partialorder %v117, 0.0
  %vm150 = vcmp.ge.f32.partialorder %v118, 0.0
  %vm151 = vcmp.ge.f32.partialorder %v119, 0.0
  %vm152 = vcmp.ge.f32.partialorder %v120, 0.0
  %vm153 = vcmp.ge.f32.partialorder %v121, 0.0
  %vm154 = vcmp.ge.f32.partialorder %v122, 0.0
  %vm155 = vcmp.ge.f32.partialorder %v123, 0.0
  %vm156 = vcmp.ge.f32.partialorder %v124, 0.0
  %vm157 = vcmp.ge.f32.partialorder %v125, 0.0
  %vm158 = vcmp.ge.f32.partialorder %v126, 0.0
  %vm159 = vcmp.ge.f32.partialorder %v127, 0.0
  %vm160 = vcmp.ge.f32.partialorder %v128, 0.0
  %vm161 = vcmp.ge.f32.partialorder %v129, 0.0
  %vm162 = vcmp.ge.f32.partialorder %v130, 0.0
  %vm163 = vcmp.ge.f32.partialorder %v131, 0.0
  %vm164 = vcmp.ge.f32.partialorder %v132, 0.0
  %vm165 = vcmp.ge.f32.partialorder %v133, 0.0
  %v166 = vmul.f32 %v102, 0.1
  %v167 = vmul.f32 %v103, 0.1
  %v168 = vmul.f32 %v104, 0.1
  %v169 = vmul.f32 %v105, 0.1
  %v170 = vmul.f32 %v106, 0.1
  %v171 = vmul.f32 %v107, 0.1
  %v172 = vmul.f32 %v108, 0.1
  %v173 = vmul.f32 %v109, 0.1
  %v174 = vmul.f32 %v110, 0.1
  %v175 = vmul.f32 %v111, 0.1
  %v176 = vmul.f32 %v112, 0.1
  %v177 = vmul.f32 %v113, 0.1
  %v178 = vmul.f32 %v114, 0.1
  %v179 = vmul.f32 %v115, 0.1
  %v180 = vmul.f32 %v116, 0.1
  %v181 = vmul.f32 %v117, 0.1
  %v182 = vmul.f32 %v118, 0.1
  %v183 = vmul.f32 %v119, 0.1
  %v184 = vmul.f32 %v120, 0.1
  %v185 = vmul.f32 %v121, 0.1
  %v186 = vmul.f32 %v122, 0.1
  %v187 = vmul.f32 %v123, 0.1
  %v188 = vmul.f32 %v124, 0.1
  %v189 = vmul.f32 %v125, 0.1
  %v190 = vmul.f32 %v126, 0.1
  %v191 = vmul.f32 %v127, 0.1
  %v192 = vmul.f32 %v128, 0.1
  %v193 = vmul.f32 %v129, 0.1
  %v194 = vmul.f32 %v130, 0.1
  %v195 = vmul.f32 %v131, 0.1
  %v196 = vmul.f32 %v132, 0.1
  %v197 = vmul.f32 %v133, 0.1
  %v198 = vsel %vm134, %v102, %v166
  %v199 = vsel %vm135, %v103, %v167
  %v200 = vsel %vm136, %v104, %v168
  %v201 = vsel %vm137, %v105, %v169
  %v202 = vsel %vm138, %v106, %v170
  %v203 = vsel %vm139, %v107, %v171
  %v204 = vsel %vm140, %v108, %v172
  %v205 = vsel %vm141, %v109, %v173
  %v206 = vsel %vm142, %v110, %v174
  %v207 = vsel %vm143, %v111, %v175
  %v208 = vsel %vm144, %v112, %v176
  %v209 = vsel %vm145, %v113, %v177
  %v210 = vsel %vm146, %v114, %v178
  %v211 = vsel %vm147, %v115, %v179
  %v212 = vsel %vm148, %v116, %v180
  %v213 = vsel %vm149, %v117, %v181
  %v214 = vsel %vm150, %v118, %v182
  %v215 = vsel %vm151, %v119, %v183
  %v216 = vsel %vm152, %v120, %v184
  %v217 = vsel %vm153, %v121, %v185
  %v218 = vsel %vm154, %v122, %v186
  %v219 = vsel %vm155, %v123, %v187
  %v220 = vsel %vm156, %v124, %v188
  %v221 = vsel %vm157, %v125, %v189
  %v222 = vsel %vm158, %v126, %v190
  %v223 = vsel %vm159, %v127, %v191
  %v224 = vsel %vm160, %v128, %v192
  %v225 = vsel %vm161, %v129, %v193
  %v226 = vsel %vm162, %v130, %v194
  %v227 = vsel %vm163, %v131, %v195
  %v228 = vsel %vm164, %v132, %v196
  %v229 = vsel %vm165, %v133, %v197
  %v230 = vpack.c.bf16 %v200, %v198
  %v231 = vpack.c.bf16 %v201, %v199
  %v232 = vpack.c.bf16 %v204, %v202
  %v233 = vpack.c.bf16 %v205, %v203
  %v234 = vpack.c.bf16 %v208, %v206
  %v235 = vpack.c.bf16 %v209, %v207
  %v236 = vpack.c.bf16 %v212, %v210
  %v237 = vpack.c.bf16 %v213, %v211
  %v238 = vpack.c.bf16 %v216, %v214
  %v239 = vpack.c.bf16 %v217, %v215
  %v240 = vpack.c.bf16 %v220, %v218
  %v241 = vpack.c.bf16 %v221, %v219
  %v242 = vpack.c.bf16 %v224, %v222
  %v243 = vpack.c.bf16 %v225, %v223
  %v244 = vpack.c.bf16 %v228, %v226
  %v245 = vpack.c.bf16 %v229, %v227
  %v262 = vunpack.c.l.b16 %v230
  %v263 = vunpack.c.l.b16 %v231
  %v264 = vunpack.c.h.b16 %v230
  %v265 = vunpack.c.h.b16 %v231
  %v266 = vunpack.c.l.b16 %v232
  %v267 = vunpack.c.l.b16 %v233
  %v268 = vunpack.c.h.b16 %v232
  %v269 = vunpack.c.h.b16 %v233
  %v270 = vunpack.c.l.b16 %v234
  %v271 = vunpack.c.l.b16 %v235
  %v272 = vunpack.c.h.b16 %v234
  %v273 = vunpack.c.h.b16 %v235
  %v274 = vunpack.c.l.b16 %v236
  %v275 = vunpack.c.l.b16 %v237
  %v276 = vunpack.c.h.b16 %v236
  %v277 = vunpack.c.h.b16 %v237
  %v278 = vunpack.c.l.b16 %v238
  %v279 = vunpack.c.l.b16 %v239
  %v280 = vunpack.c.h.b16 %v238
  %v281 = vunpack.c.h.b16 %v239
  %v282 = vunpack.c.l.b16 %v240
  %v283 = vunpack.c.l.b16 %v241
  %v284 = vunpack.c.h.b16 %v240
  %v285 = vunpack.c.h.b16 %v241
  %v286 = vunpack.c.l.b16 %v242
  %v287 = vunpack.c.l.b16 %v243
  %v288 = vunpack.c.h.b16 %v242
  %v289 = vunpack.c.h.b16 %v243
  %v290 = vunpack.c.l.b16 %v244
  %v291 = vunpack.c.l.b16 %v245
  %v292 = vunpack.c.h.b16 %v244
  %v293 = vunpack.c.h.b16 %v245
  %v294 = vpack.c.b16 %v263, %v262
  %v295 = vpack.c.b16 %v265, %v264
  %v296 = vpack.c.b16 %v267, %v266
  %v297 = vpack.c.b16 %v269, %v268
  %v298 = vpack.c.b16 %v271, %v270
  %v299 = vpack.c.b16 %v273, %v272
  %v300 = vpack.c.b16 %v275, %v274
  %v301 = vpack.c.b16 %v277, %v276
  %v302 = vpack.c.b16 %v279, %v278
  %v303 = vpack.c.b16 %v281, %v280
  %v304 = vpack.c.b16 %v283, %v282
  %v305 = vpack.c.b16 %v285, %v284
  %v306 = vpack.c.b16 %v287, %v286
  %v307 = vpack.c.b16 %v289, %v288
  %v308 = vpack.c.b16 %v291, %v290
  %v309 = vpack.c.b16 %v293, %v292
  %326 = vst [vmem:[%s3] sm:$0xff] %v294
  %327 = vst [vmem:[%s3 + $0x8] sm:$0xff] %v295
  %328 = vst [vmem:[%s3 + $0x10] sm:$0xff] %v296
  %329 = vst [vmem:[%s3 + $0x18] sm:$0xff] %v297
  %330 = vst [vmem:[%s3 + $0x20] sm:$0xff] %v298
  %331 = vst [vmem:[%s3 + $0x28] sm:$0xff] %v299
  %332 = vst [vmem:[%s3 + $0x30] sm:$0xff] %v300
  %333 = vst [vmem:[%s3 + $0x38] sm:$0xff] %v301
  %334 = vst [vmem:[%s3 + $0x40] sm:$0xff] %v302
  %335 = vst [vmem:[%s3 + $0x48] sm:$0xff] %v303
  %336 = vst [vmem:[%s3 + $0x50] sm:$0xff] %v304
  %337 = vst [vmem:[%s3 + $0x58] sm:$0xff] %v305
  %338 = vst [vmem:[%s3 + $0x60] sm:$0xff] %v306
  %339 = vst [vmem:[%s3 + $0x68] sm:$0xff] %v307
  %340 = vst [vmem:[%s3 + $0x70] sm:$0xff] %v308
  %341 = vst [vmem:[%s3 + $0x78] sm:$0xff] %v309
  // Predicated region
  $region14: #{cnn_autoencoder_forward.22} parent=0 // pred_check
    _
  $region15: #{cnn_autoencoder_forward.22} parent=0 // pred_check_branch
    %343 = sbr.rel (0) target = $region17
  $region16: #{cnn_autoencoder_forward.22} parent=0 // pred_region
    _
  $region17: #{cnn_autoencoder_forward.22} parent=0 // pred_fallthru
    _
  // Predicated region
  $region18: #{cnn_autoencoder_forward.22} parent=0 // pred_check
    _
  $region19: #{cnn_autoencoder_forward.22} parent=0 // pred_check_branch
    %345 = sbr.rel (0) target = $region21
  $region20: #{cnn_autoencoder_forward.22} parent=0 // pred_region
    _
  $region21: #{cnn_autoencoder_forward.22} parent=0 // pred_fallthru
    _

// kernel: cnn_autoencoder_forward.21
$region0: #{cnn_autoencoder_forward.21}
  #allocation0 [shape = 'u32[]', space=smem, size = 0x4, offset = 0x4, fixed_abs, tag = 'smem constant byte address 0x4 - core index']
  #allocation1 [shape = 'u32[144,128]{1,0:T(1,128)}', space=vmem, size = 0x12000, scoped, tag = 'internal scratch']
  %s0 = inlined_call_operand.vmem [shape: bf16[128,1152], index: 0, kind: input, shape index: {}]
  %s1 = inlined_call_operand.vmem [shape: bf16[1152,256], index: 1, kind: input, shape index: {}]
  %s2 = inlined_call_operand.vmem [shape: f32[128,256], index: 2, kind: output, shape index: {0}]
  %s3 = inlined_call_operand.vmem [shape: f32[8,256], index: 3, kind: output, shape index: {1}]
  %4 = xla_tuple %s2, %s3
  %s5 = sld [smem:[#allocation0]]
  $region26: #{cnn_autoencoder_forward.21} parent=0
    _
  %s7 = ssub.s32 1, %s5
  %s8 = scalar_select 0, %s7, %s5
  // Predicated region
  $region2: #{cnn_autoencoder_forward.21} parent=0 // pred_check
    _
  $region3: #{cnn_autoencoder_forward.21} parent=0 // pred_check_branch
    %10 = sbr.rel (0) target = $region5
  $region4: #{cnn_autoencoder_forward.21} parent=0 // pred_region
    _
  $region5: #{cnn_autoencoder_forward.21} parent=0 // pred_fallthru
    _
  // Predicated region
  $region6: #{cnn_autoencoder_forward.21} parent=0 // pred_check
    _
  $region7: #{cnn_autoencoder_forward.21} parent=0 // pred_check_branch
    %12 = sbr.rel (0) target = $region9
  $region8: #{cnn_autoencoder_forward.21} parent=0 // pred_region
    _
  $region9: #{cnn_autoencoder_forward.21} parent=0 // pred_fallthru
    _
  %v14 = vld [vmem:[%s0] sm:$0xff]
  %v15 = vld [vmem:[%s0 + $0x8] sm:$0xff]
  %v16 = vld [vmem:[%s0 + $0x10] sm:$0xff]
  %v17 = vld [vmem:[%s0 + $0x18] sm:$0xff]
  %v18 = vld [vmem:[%s0 + $0x20] sm:$0xf]
  %v19 = vld [vmem:[%s0 + $0x24] sm:$0xff]
  %v20 = vld [vmem:[%s0 + $0x2c] sm:$0xff]
  %v21 = vld [vmem:[%s0 + $0x34] sm:$0xff]
  %v22 = vld [vmem:[%s0 + $0x3c] sm:$0xff]
  %v23 = vld [vmem:[%s0 + $0x44] sm:$0xf]
  %v24 = vld [vmem:[%s0 + $0x48] sm:$0xff]
  %v25 = vld [vmem:[%s0 + $0x50] sm:$0xff]
  %v26 = vld [vmem:[%s0 + $0x58] sm:$0xff]
  %v27 = vld [vmem:[%s0 + $0x60] sm:$0xff]
  %v28 = vld [vmem:[%s0 + $0x68] sm:$0xf]
  %v29 = vld [vmem:[%s0 + $0x6c] sm:$0xff]
  %v30 = vld [vmem:[%s0 + $0x74] sm:$0xff]
  %v31 = vld [vmem:[%s0 + $0x7c] sm:$0xff]
  %v32 = vld [vmem:[%s0 + $0x84] sm:$0xff]
  %v33 = vld [vmem:[%s0 + $0x8c] sm:$0xf]
  %v34 = vld [vmem:[%s0 + $0x90] sm:$0xff]
  %v35 = vld [vmem:[%s0 + $0x98] sm:$0xff]
  %v36 = vld [vmem:[%s0 + $0xa0] sm:$0xff]
  %v37 = vld [vmem:[%s0 + $0xa8] sm:$0xff]
  %v38 = vld [vmem:[%s0 + $0xb0] sm:$0xf]
  %v39 = vld [vmem:[%s0 + $0xb4] sm:$0xff]
  %v40 = vld [vmem:[%s0 + $0xbc] sm:$0xff]
  %v41 = vld [vmem:[%s0 + $0xc4] sm:$0xff]
  %v42 = vld [vmem:[%s0 + $0xcc] sm:$0xff]
  %v43 = vld [vmem:[%s0 + $0xd4] sm:$0xf]
  %v44 = vld [vmem:[%s0 + $0xd8] sm:$0xff]
  %v45 = vld [vmem:[%s0 + $0xe0] sm:$0xff]
  %v46 = vld [vmem:[%s0 + $0xe8] sm:$0xff]
  %v47 = vld [vmem:[%s0 + $0xf0] sm:$0xff]
  %v48 = vld [vmem:[%s0 + $0xf8] sm:$0xf]
  %v49 = vld [vmem:[%s0 + $0xfc] sm:$0xff]
  %v50 = vld [vmem:[%s0 + $0x104] sm:$0xff]
  %v51 = vld [vmem:[%s0 + $0x10c] sm:$0xff]
  %v52 = vld [vmem:[%s0 + $0x114] sm:$0xff]
  %v53 = vld [vmem:[%s0 + $0x11c] sm:$0xf]
  %v54 = vld [vmem:[%s0 + $0x120] sm:$0xff]
  %v55 = vld [vmem:[%s0 + $0x128] sm:$0xff]
  %v56 = vld [vmem:[%s0 + $0x130] sm:$0xff]
  %v57 = vld [vmem:[%s0 + $0x138] sm:$0xff]
  %v58 = vld [vmem:[%s0 + $0x140] sm:$0xf]
  %v59 = vld [vmem:[%s0 + $0x144] sm:$0xff]
  %v60 = vld [vmem:[%s0 + $0x14c] sm:$0xff]
  %v61 = vld [vmem:[%s0 + $0x154] sm:$0xff]
  %v62 = vld [vmem:[%s0 + $0x15c] sm:$0xff]
  %v63 = vld [vmem:[%s0 + $0x164] sm:$0xf]
  %v64 = vld [vmem:[%s0 + $0x168] sm:$0xff]
  %v65 = vld [vmem:[%s0 + $0x170] sm:$0xff]
  %v66 = vld [vmem:[%s0 + $0x178] sm:$0xff]
  %v67 = vld [vmem:[%s0 + $0x180] sm:$0xff]
  %v68 = vld [vmem:[%s0 + $0x188] sm:$0xf]
  %v69 = vld [vmem:[%s0 + $0x18c] sm:$0xff]
  %v70 = vld [vmem:[%s0 + $0x194] sm:$0xff]
  %v71 = vld [vmem:[%s0 + $0x19c] sm:$0xff]
  %v72 = vld [vmem:[%s0 + $0x1a4] sm:$0xff]
  %v73 = vld [vmem:[%s0 + $0x1ac] sm:$0xf]
  %v74 = vld [vmem:[%s0 + $0x1b0] sm:$0xff]
  %v75 = vld [vmem:[%s0 + $0x1b8] sm:$0xff]
  %v76 = vld [vmem:[%s0 + $0x1c0] sm:$0xff]
  %v77 = vld [vmem:[%s0 + $0x1c8] sm:$0xff]
  %v78 = vld [vmem:[%s0 + $0x1d0] sm:$0xf]
  %v79 = vld [vmem:[%s0 + $0x1d4] sm:$0xff]
  %v80 = vld [vmem:[%s0 + $0x1dc] sm:$0xff]
  %v81 = vld [vmem:[%s0 + $0x1e4] sm:$0xff]
  %v82 = vld [vmem:[%s0 + $0x1ec] sm:$0xff]
  %v83 = vld [vmem:[%s0 + $0x1f4] sm:$0xf]
  %v84 = vld [vmem:[%s0 + $0x1f8] sm:$0xff]
  %v85 = vld [vmem:[%s0 + $0x200] sm:$0xff]
  %v86 = vld [vmem:[%s0 + $0x208] sm:$0xff]
  %v87 = vld [vmem:[%s0 + $0x210] sm:$0xff]
  %v88 = vld [vmem:[%s0 + $0x218] sm:$0xf]
  %v89 = vld [vmem:[%s0 + $0x21c] sm:$0xff]
  %v90 = vld [vmem:[%s0 + $0x224] sm:$0xff]
  %v91 = vld [vmem:[%s0 + $0x22c] sm:$0xff]
  %v92 = vld [vmem:[%s0 + $0x234] sm:$0xff]
  %v93 = vld [vmem:[%s0 + $0x23c] sm:$0xf]
  %v94 = vld [vmem:[%s1] sm:$0xff]
  %v95 = vld [vmem:[%s1 + $0x8] sm:$0xff]
  %v96 = vld [vmem:[%s1 + $0x10] sm:$0xff]
  %v97 = vld [vmem:[%s1 + $0x18] sm:$0xff]
  %v98 = vld [vmem:[%s1 + $0x20] sm:$0xff]
  %v99 = vld [vmem:[%s1 + $0x28] sm:$0xff]
  %v100 = vld [vmem:[%s1 + $0x30] sm:$0xff]
  %v101 = vld [vmem:[%s1 + $0x38] sm:$0xff]
  %v102 = vld [vmem:[%s1 + $0x40] sm:$0xff]
  %v103 = vld [vmem:[%s1 + $0x48] sm:$0xff]
  %v104 = vld [vmem:[%s1 + $0x50] sm:$0xff]
  %v105 = vld [vmem:[%s1 + $0x58] sm:$0xff]
  %v106 = vld [vmem:[%s1 + $0x60] sm:$0xff]
  %v107 = vld [vmem:[%s1 + $0x68] sm:$0xff]
  %v108 = vld [vmem:[%s1 + $0x70] sm:$0xff]
  %v109 = vld [vmem:[%s1 + $0x78] sm:$0xff]
  %v110 = vld [vmem:[%s1 + $0x80] sm:$0xff]
  %v111 = vld [vmem:[%s1 + $0x88] sm:$0xff]
  %v112 = vld [vmem:[%s1 + $0x90] sm:$0xff]
  %v113 = vld [vmem:[%s1 + $0x98] sm:$0xff]
  %v114 = vld [vmem:[%s1 + $0xa0] sm:$0xff]
  %v115 = vld [vmem:[%s1 + $0xa8] sm:$0xff]
  %v116 = vld [vmem:[%s1 + $0xb0] sm:$0xff]
  %v117 = vld [vmem:[%s1 + $0xb8] sm:$0xff]
  %v118 = vld [vmem:[%s1 + $0xc0] sm:$0xff]
  %v119 = vld [vmem:[%s1 + $0xc8] sm:$0xff]
  %v120 = vld [vmem:[%s1 + $0xd0] sm:$0xff]
  %v121 = vld [vmem:[%s1 + $0xd8] sm:$0xff]
  %v122 = vld [vmem:[%s1 + $0xe0] sm:$0xff]
  %v123 = vld [vmem:[%s1 + $0xe8] sm:$0xff]
  %v124 = vld [vmem:[%s1 + $0xf0] sm:$0xff]
  %v125 = vld [vmem:[%s1 + $0xf8] sm:$0xff]
  %v126 = vld [vmem:[%s1 + $0x100] sm:$0xff]
  %v127 = vld [vmem:[%s1 + $0x108] sm:$0xff]
  %v128 = vld [vmem:[%s1 + $0x110] sm:$0xff]
  %v129 = vld [vmem:[%s1 + $0x118] sm:$0xff]
  %v130 = vld [vmem:[%s1 + $0x120] sm:$0xff]
  %v131 = vld [vmem:[%s1 + $0x128] sm:$0xff]
  %v132 = vld [vmem:[%s1 + $0x130] sm:$0xff]
  %v133 = vld [vmem:[%s1 + $0x138] sm:$0xff]
  %v134 = vld [vmem:[%s1 + $0x140] sm:$0xff]
  %v135 = vld [vmem:[%s1 + $0x148] sm:$0xff]
  %v136 = vld [vmem:[%s1 + $0x150] sm:$0xff]
  %v137 = vld [vmem:[%s1 + $0x158] sm:$0xff]
  %v138 = vld [vmem:[%s1 + $0x160] sm:$0xff]
  %v139 = vld [vmem:[%s1 + $0x168] sm:$0xff]
  %v140 = vld [vmem:[%s1 + $0x170] sm:$0xff]
  %v141 = vld [vmem:[%s1 + $0x178] sm:$0xff]
  %v142 = vld [vmem:[%s1 + $0x180] sm:$0xff]
  %v143 = vld [vmem:[%s1 + $0x188] sm:$0xff]
  %v144 = vld [vmem:[%s1 + $0x190] sm:$0xff]
  %v145 = vld [vmem:[%s1 + $0x198] sm:$0xff]
  %v146 = vld [vmem:[%s1 + $0x1a0] sm:$0xff]
  %v147 = vld [vmem:[%s1 + $0x1a8] sm:$0xff]
  %v148 = vld [vmem:[%s1 + $0x1b0] sm:$0xff]
  %v149 = vld [vmem:[%s1 + $0x1b8] sm:$0xff]
  %v150 = vld [vmem:[%s1 + $0x1c0] sm:$0xff]
  %v151 = vld [vmem:[%s1 + $0x1c8] sm:$0xff]
  %v152 = vld [vmem:[%s1 + $0x1d0] sm:$0xff]
  %v153 = vld [vmem:[%s1 + $0x1d8] sm:$0xff]
  %v154 = vld [vmem:[%s1 + $0x1e0] sm:$0xff]
  %v155 = vld [vmem:[%s1 + $0x1e8] sm:$0xff]
  %v156 = vld [vmem:[%s1 + $0x1f0] sm:$0xff]
  %v157 = vld [vmem:[%s1 + $0x1f8] sm:$0xff]
  %v158 = vld [vmem:[%s1 + $0x200] sm:$0xff]
  %v159 = vld [vmem:[%s1 + $0x208] sm:$0xff]
  %v160 = vld [vmem:[%s1 + $0x210] sm:$0xff]
  %v161 = vld [vmem:[%s1 + $0x218] sm:$0xff]
  %v162 = vld [vmem:[%s1 + $0x220] sm:$0xff]
  %v163 = vld [vmem:[%s1 + $0x228] sm:$0xff]
  %v164 = vld [vmem:[%s1 + $0x230] sm:$0xff]
  %v165 = vld [vmem:[%s1 + $0x238] sm:$0xff]
  %v166 = vld [vmem:[%s1 + $0x240] sm:$0xff]
  %v167 = vld [vmem:[%s1 + $0x248] sm:$0xff]
  %v168 = vld [vmem:[%s1 + $0x250] sm:$0xff]
  %v169 = vld [vmem:[%s1 + $0x258] sm:$0xff]
  %v170 = vld [vmem:[%s1 + $0x260] sm:$0xff]
  %v171 = vld [vmem:[%s1 + $0x268] sm:$0xff]
  %v172 = vld [vmem:[%s1 + $0x270] sm:$0xff]
  %v173 = vld [vmem:[%s1 + $0x278] sm:$0xff]
  %v174 = vld [vmem:[%s1 + $0x280] sm:$0xff]
  %v175 = vld [vmem:[%s1 + $0x288] sm:$0xff]
  %v176 = vld [vmem:[%s1 + $0x290] sm:$0xff]
  %v177 = vld [vmem:[%s1 + $0x298] sm:$0xff]
  %v178 = vld [vmem:[%s1 + $0x2a0] sm:$0xff]
  %v179 = vld [vmem:[%s1 + $0x2a8] sm:$0xff]
  %v180 = vld [vmem:[%s1 + $0x2b0] sm:$0xff]
  %v181 = vld [vmem:[%s1 + $0x2b8] sm:$0xff]
  %v182 = vld [vmem:[%s1 + $0x2c0] sm:$0xff]
  %v183 = vld [vmem:[%s1 + $0x2c8] sm:$0xff]
  %v184 = vld [vmem:[%s1 + $0x2d0] sm:$0xff]
  %v185 = vld [vmem:[%s1 + $0x2d8] sm:$0xff]
  %v186 = vld [vmem:[%s1 + $0x2e0] sm:$0xff]
  %v187 = vld [vmem:[%s1 + $0x2e8] sm:$0xff]
  %v188 = vld [vmem:[%s1 + $0x2f0] sm:$0xff]
  %v189 = vld [vmem:[%s1 + $0x2f8] sm:$0xff]
  %v190 = vld [vmem:[%s1 + $0x300] sm:$0xff]
  %v191 = vld [vmem:[%s1 + $0x308] sm:$0xff]
  %v192 = vld [vmem:[%s1 + $0x310] sm:$0xff]
  %v193 = vld [vmem:[%s1 + $0x318] sm:$0xff]
  %v194 = vld [vmem:[%s1 + $0x320] sm:$0xff]
  %v195 = vld [vmem:[%s1 + $0x328] sm:$0xff]
  %v196 = vld [vmem:[%s1 + $0x330] sm:$0xff]
  %v197 = vld [vmem:[%s1 + $0x338] sm:$0xff]
  %v198 = vld [vmem:[%s1 + $0x340] sm:$0xff]
  %v199 = vld [vmem:[%s1 + $0x348] sm:$0xff]
  %v200 = vld [vmem:[%s1 + $0x350] sm:$0xff]
  %v201 = vld [vmem:[%s1 + $0x358] sm:$0xff]
  %v202 = vld [vmem:[%s1 + $0x360] sm:$0xff]
  %v203 = vld [vmem:[%s1 + $0x368] sm:$0xff]
  %v204 = vld [vmem:[%s1 + $0x370] sm:$0xff]
  %v205 = vld [vmem:[%s1 + $0x378] sm:$0xff]
  %v206 = vld [vmem:[%s1 + $0x380] sm:$0xff]
  %v207 = vld [vmem:[%s1 + $0x388] sm:$0xff]
  %v208 = vld [vmem:[%s1 + $0x390] sm:$0xff]
  %v209 = vld [vmem:[%s1 + $0x398] sm:$0xff]
  %v210 = vld [vmem:[%s1 + $0x3a0] sm:$0xff]
  %v211 = vld [vmem:[%s1 + $0x3a8] sm:$0xff]
  %v212 = vld [vmem:[%s1 + $0x3b0] sm:$0xff]
  %v213 = vld [vmem:[%s1 + $0x3b8] sm:$0xff]
  %v214 = vld [vmem:[%s1 + $0x3c0] sm:$0xff]
  %v215 = vld [vmem:[%s1 + $0x3c8] sm:$0xff]
  %v216 = vld [vmem:[%s1 + $0x3d0] sm:$0xff]
  %v217 = vld [vmem:[%s1 + $0x3d8] sm:$0xff]
  %v218 = vld [vmem:[%s1 + $0x3e0] sm:$0xff]
  %v219 = vld [vmem:[%s1 + $0x3e8] sm:$0xff]
  %v220 = vld [vmem:[%s1 + $0x3f0] sm:$0xff]
  %v221 = vld [vmem:[%s1 + $0x3f8] sm:$0xff]
  %v222 = vld [vmem:[%s1 + $0x400] sm:$0xff]
  %v223 = vld [vmem:[%s1 + $0x408] sm:$0xff]
  %v224 = vld [vmem:[%s1 + $0x410] sm:$0xff]
  %v225 = vld [vmem:[%s1 + $0x418] sm:$0xff]
  %v226 = vld [vmem:[%s1 + $0x420] sm:$0xff]
  %v227 = vld [vmem:[%s1 + $0x428] sm:$0xff]
  %v228 = vld [vmem:[%s1 + $0x430] sm:$0xff]
  %v229 = vld [vmem:[%s1 + $0x438] sm:$0xff]
  %v230 = vld [vmem:[%s1 + $0x440] sm:$0xff]
  %v231 = vld [vmem:[%s1 + $0x448] sm:$0xff]
  %v232 = vld [vmem:[%s1 + $0x450] sm:$0xff]
  %v233 = vld [vmem:[%s1 + $0x458] sm:$0xff]
  %v234 = vld [vmem:[%s1 + $0x460] sm:$0xff]
  %v235 = vld [vmem:[%s1 + $0x468] sm:$0xff]
  %v236 = vld [vmem:[%s1 + $0x470] sm:$0xff]
  %v237 = vld [vmem:[%s1 + $0x478] sm:$0xff]
  %v318 = vunpack.c.l.b16 %v14
  %v319 = vunpack.c.h.b16 %v14
  %v320 = vunpack.c.l.b16 %v15
  %v321 = vunpack.c.h.b16 %v15
  %v322 = vunpack.c.l.b16 %v16
  %v323 = vunpack.c.h.b16 %v16
  %v324 = vunpack.c.l.b16 %v17
  %v325 = vunpack.c.h.b16 %v17
  %v326 = vunpack.c.l.b16 %v18
  %v327 = vunpack.c.l.b16 %v19
  %v328 = vunpack.c.h.b16 %v19
  %v329 = vunpack.c.l.b16 %v20
  %v330 = vunpack.c.h.b16 %v20
  %v331 = vunpack.c.l.b16 %v21
  %v332 = vunpack.c.h.b16 %v21
  %v333 = vunpack.c.l.b16 %v22
  %v334 = vunpack.c.h.b16 %v22
  %v335 = vunpack.c.l.b16 %v23
  %v336 = vunpack.c.l.b16 %v24
  %v337 = vunpack.c.h.b16 %v24
  %v338 = vunpack.c.l.b16 %v25
  %v339 = vunpack.c.h.b16 %v25
  %v340 = vunpack.c.l.b16 %v26
  %v341 = vunpack.c.h.b16 %v26
  %v342 = vunpack.c.l.b16 %v27
  %v343 = vunpack.c.h.b16 %v27
  %v344 = vunpack.c.l.b16 %v28
  %v345 = vunpack.c.l.b16 %v29
  %v346 = vunpack.c.h.b16 %v29
  %v347 = vunpack.c.l.b16 %v30
  %v348 = vunpack.c.h.b16 %v30
  %v349 = vunpack.c.l.b16 %v31
  %v350 = vunpack.c.h.b16 %v31
  %v351 = vunpack.c.l.b16 %v32
  %v352 = vunpack.c.h.b16 %v32
  %v353 = vunpack.c.l.b16 %v33
  %v354 = vunpack.c.l.b16 %v34
  %v355 = vunpack.c.h.b16 %v34
  %v356 = vunpack.c.l.b16 %v35
  %v357 = vunpack.c.h.b16 %v35
  %v358 = vunpack.c.l.b16 %v36
  %v359 = vunpack.c.h.b16 %v36
  %v360 = vunpack.c.l.b16 %v37
  %v361 = vunpack.c.h.b16 %v37
  %v362 = vunpack.c.l.b16 %v38
  %v363 = vunpack.c.l.b16 %v39
  %v364 = vunpack.c.h.b16 %v39
  %v365 = vunpack.c.l.b16 %v40
  %v366 = vunpack.c.h.b16 %v40
  %v367 = vunpack.c.l.b16 %v41
  %v368 = vunpack.c.h.b16 %v41
  %v369 = vunpack.c.l.b16 %v42
  %v370 = vunpack.c.h.b16 %v42
  %v371 = vunpack.c.l.b16 %v43
  %v372 = vunpack.c.l.b16 %v44
  %v373 = vunpack.c.h.b16 %v44
  %v374 = vunpack.c.l.b16 %v45
  %v375 = vunpack.c.h.b16 %v45
  %v376 = vunpack.c.l.b16 %v46
  %v377 = vunpack.c.h.b16 %v46
  %v378 = vunpack.c.l.b16 %v47
  %v379 = vunpack.c.h.b16 %v47
  %v380 = vunpack.c.l.b16 %v48
  %v381 = vunpack.c.l.b16 %v49
  %v382 = vunpack.c.h.b16 %v49
  %v383 = vunpack.c.l.b16 %v50
  %v384 = vunpack.c.h.b16 %v50
  %v385 = vunpack.c.l.b16 %v51
  %v386 = vunpack.c.h.b16 %v51
  %v387 = vunpack.c.l.b16 %v52
  %v388 = vunpack.c.h.b16 %v52
  %v389 = vunpack.c.l.b16 %v53
  %v390 = vunpack.c.l.b16 %v54
  %v391 = vunpack.c.h.b16 %v54
  %v392 = vunpack.c.l.b16 %v55
  %v393 = vunpack.c.h.b16 %v55
  %v394 = vunpack.c.l.b16 %v56
  %v395 = vunpack.c.h.b16 %v56
  %v396 = vunpack.c.l.b16 %v57
  %v397 = vunpack.c.h.b16 %v57
  %v398 = vunpack.c.l.b16 %v58
  %v399 = vunpack.c.l.b16 %v59
  %v400 = vunpack.c.h.b16 %v59
  %v401 = vunpack.c.l.b16 %v60
  %v402 = vunpack.c.h.b16 %v60
  %v403 = vunpack.c.l.b16 %v61
  %v404 = vunpack.c.h.b16 %v61
  %v405 = vunpack.c.l.b16 %v62
  %v406 = vunpack.c.h.b16 %v62
  %v407 = vunpack.c.l.b16 %v63
  %v408 = vunpack.c.l.b16 %v64
  %v409 = vunpack.c.h.b16 %v64
  %v410 = vunpack.c.l.b16 %v65
  %v411 = vunpack.c.h.b16 %v65
  %v412 = vunpack.c.l.b16 %v66
  %v413 = vunpack.c.h.b16 %v66
  %v414 = vunpack.c.l.b16 %v67
  %v415 = vunpack.c.h.b16 %v67
  %v416 = vunpack.c.l.b16 %v68
  %v417 = vunpack.c.l.b16 %v69
  %v418 = vunpack.c.h.b16 %v69
  %v419 = vunpack.c.l.b16 %v70
  %v420 = vunpack.c.h.b16 %v70
  %v421 = vunpack.c.l.b16 %v71
  %v422 = vunpack.c.h.b16 %v71
  %v423 = vunpack.c.l.b16 %v72
  %v424 = vunpack.c.h.b16 %v72
  %v425 = vunpack.c.l.b16 %v73
  %v426 = vunpack.c.l.b16 %v74
  %v427 = vunpack.c.h.b16 %v74
  %v428 = vunpack.c.l.b16 %v75
  %v429 = vunpack.c.h.b16 %v75
  %v430 = vunpack.c.l.b16 %v76
  %v431 = vunpack.c.h.b16 %v76
  %v432 = vunpack.c.l.b16 %v77
  %v433 = vunpack.c.h.b16 %v77
  %v434 = vunpack.c.l.b16 %v78
  %v435 = vunpack.c.l.b16 %v79
  %v436 = vunpack.c.h.b16 %v79
  %v437 = vunpack.c.l.b16 %v80
  %v438 = vunpack.c.h.b16 %v80
  %v439 = vunpack.c.l.b16 %v81
  %v440 = vunpack.c.h.b16 %v81
  %v441 = vunpack.c.l.b16 %v82
  %v442 = vunpack.c.h.b16 %v82
  %v443 = vunpack.c.l.b16 %v83
  %v444 = vunpack.c.l.b16 %v84
  %v445 = vunpack.c.h.b16 %v84
  %v446 = vunpack.c.l.b16 %v85
  %v447 = vunpack.c.h.b16 %v85
  %v448 = vunpack.c.l.b16 %v86
  %v449 = vunpack.c.h.b16 %v86
  %v450 = vunpack.c.l.b16 %v87
  %v451 = vunpack.c.h.b16 %v87
  %v452 = vunpack.c.l.b16 %v88
  %v453 = vunpack.c.l.b16 %v89
  %v454 = vunpack.c.h.b16 %v89
  %v455 = vunpack.c.l.b16 %v90
  %v456 = vunpack.c.h.b16 %v90
  %v457 = vunpack.c.l.b16 %v91
  %v458 = vunpack.c.h.b16 %v91
  %v459 = vunpack.c.l.b16 %v92
  %v460 = vunpack.c.h.b16 %v92
  %v461 = vunpack.c.l.b16 %v93
  %v462 = vpack.c.b16 %v327, %v318
  %v463 = vpack.c.b16 %v328, %v319
  %v464 = vpack.c.b16 %v329, %v320
  %v465 = vpack.c.b16 %v330, %v321
  %v466 = vpack.c.b16 %v331, %v322
  %v467 = vpack.c.b16 %v332, %v323
  %v468 = vpack.c.b16 %v333, %v324
  %v469 = vpack.c.b16 %v334, %v325
  %v470 = vpack.c.b16 %v335, %v326
  %v471 = vpack.c.b16 %v345, %v336
  %v472 = vpack.c.b16 %v346, %v337
  %v473 = vpack.c.b16 %v347, %v338
  %v474 = vpack.c.b16 %v348, %v339
  %v475 = vpack.c.b16 %v349, %v340
  %v476 = vpack.c.b16 %v350, %v341
  %v477 = vpack.c.b16 %v351, %v342
  %v478 = vpack.c.b16 %v352, %v343
  %v479 = vpack.c.b16 %v353, %v344
  %v480 = vpack.c.b16 %v363, %v354
  %v481 = vpack.c.b16 %v364, %v355
  %v482 = vpack.c.b16 %v365, %v356
  %v483 = vpack.c.b16 %v366, %v357
  %v484 = vpack.c.b16 %v367, %v358
  %v485 = vpack.c.b16 %v368, %v359
  %v486 = vpack.c.b16 %v369, %v360
  %v487 = vpack.c.b16 %v370, %v361
  %v488 = vpack.c.b16 %v371, %v362
  %v489 = vpack.c.b16 %v381, %v372
  %v490 = vpack.c.b16 %v382, %v373
  %v491 = vpack.c.b16 %v383, %v374
  %v492 = vpack.c.b16 %v384, %v375
  %v493 = vpack.c.b16 %v385, %v376
  %v494 = vpack.c.b16 %v386, %v377
  %v495 = vpack.c.b16 %v387, %v378
  %v496 = vpack.c.b16 %v388, %v379
  %v497 = vpack.c.b16 %v389, %v380
  %v498 = vpack.c.b16 %v399, %v390
  %v499 = vpack.c.b16 %v400, %v391
  %v500 = vpack.c.b16 %v401, %v392
  %v501 = vpack.c.b16 %v402, %v393
  %v502 = vpack.c.b16 %v403, %v394
  %v503 = vpack.c.b16 %v404, %v395
  %v504 = vpack.c.b16 %v405, %v396
  %v505 = vpack.c.b16 %v406, %v397
  %v506 = vpack.c.b16 %v407, %v398
  %v507 = vpack.c.b16 %v417, %v408
  %v508 = vpack.c.b16 %v418, %v409
  %v509 = vpack.c.b16 %v419, %v410
  %v510 = vpack.c.b16 %v420, %v411
  %v511 = vpack.c.b16 %v421, %v412
  %v512 = vpack.c.b16 %v422, %v413
  %v513 = vpack.c.b16 %v423, %v414
  %v514 = vpack.c.b16 %v424, %v415
  %v515 = vpack.c.b16 %v425, %v416
  %v516 = vpack.c.b16 %v435, %v426
  %v517 = vpack.c.b16 %v436, %v427
  %v518 = vpack.c.b16 %v437, %v428
  %v519 = vpack.c.b16 %v438, %v429
  %v520 = vpack.c.b16 %v439, %v430
  %v521 = vpack.c.b16 %v440, %v431
  %v522 = vpack.c.b16 %v441, %v432
  %v523 = vpack.c.b16 %v442, %v433
  %v524 = vpack.c.b16 %v443, %v434
  %v525 = vpack.c.b16 %v453, %v444
  %v526 = vpack.c.b16 %v454, %v445
  %v527 = vpack.c.b16 %v455, %v446
  %v528 = vpack.c.b16 %v456, %v447
  %v529 = vpack.c.b16 %v457, %v448
  %v530 = vpack.c.b16 %v458, %v449
  %v531 = vpack.c.b16 %v459, %v450
  %v532 = vpack.c.b16 %v460, %v451
  %v533 = vpack.c.b16 %v461, %v452
  %v750 = vunpack.c.l.b16 %v94
  %v751 = vunpack.c.h.b16 %v94
  %v752 = vunpack.c.l.b16 %v95
  %v753 = vunpack.c.h.b16 %v95
  %v754 = vunpack.c.l.b16 %v96
  %v755 = vunpack.c.h.b16 %v96
  %v756 = vunpack.c.l.b16 %v97
  %v757 = vunpack.c.h.b16 %v97
  %v758 = vunpack.c.l.b16 %v98
  %v759 = vunpack.c.h.b16 %v98
  %v760 = vunpack.c.l.b16 %v99
  %v761 = vunpack.c.h.b16 %v99
  %v762 = vunpack.c.l.b16 %v100
  %v763 = vunpack.c.h.b16 %v100
  %v764 = vunpack.c.l.b16 %v101
  %v765 = vunpack.c.h.b16 %v101
  %v766 = vunpack.c.l.b16 %v102
  %v767 = vunpack.c.h.b16 %v102
  %v768 = vunpack.c.l.b16 %v103
  %v769 = vunpack.c.h.b16 %v103
  %v770 = vunpack.c.l.b16 %v104
  %v771 = vunpack.c.h.b16 %v104
  %v772 = vunpack.c.l.b16 %v105
  %v773 = vunpack.c.h.b16 %v105
  %v774 = vunpack.c.l.b16 %v106
  %v775 = vunpack.c.h.b16 %v106
  %v776 = vunpack.c.l.b16 %v107
  %v777 = vunpack.c.h.b16 %v107
  %v778 = vunpack.c.l.b16 %v108
  %v779 = vunpack.c.h.b16 %v108
  %v780 = vunpack.c.l.b16 %v109
  %v781 = vunpack.c.h.b16 %v109
  %v782 = vunpack.c.l.b16 %v110
  %v783 = vunpack.c.h.b16 %v110
  %v784 = vunpack.c.l.b16 %v111
  %v785 = vunpack.c.h.b16 %v111
  %v786 = vunpack.c.l.b16 %v112
  %v787 = vunpack.c.h.b16 %v112
  %v788 = vunpack.c.l.b16 %v113
  %v789 = vunpack.c.h.b16 %v113
  %v790 = vunpack.c.l.b16 %v114
  %v791 = vunpack.c.h.b16 %v114
  %v792 = vunpack.c.l.b16 %v115
  %v793 = vunpack.c.h.b16 %v115
  %v794 = vunpack.c.l.b16 %v116
  %v795 = vunpack.c.h.b16 %v116
  %v796 = vunpack.c.l.b16 %v117
  %v797 = vunpack.c.h.b16 %v117
  %v798 = vunpack.c.l.b16 %v118
  %v799 = vunpack.c.h.b16 %v118
  %v800 = vunpack.c.l.b16 %v119
  %v801 = vunpack.c.h.b16 %v119
  %v802 = vunpack.c.l.b16 %v120
  %v803 = vunpack.c.h.b16 %v120
  %v804 = vunpack.c.l.b16 %v121
  %v805 = vunpack.c.h.b16 %v121
  %v806 = vunpack.c.l.b16 %v122
  %v807 = vunpack.c.h.b16 %v122
  %v808 = vunpack.c.l.b16 %v123
  %v809 = vunpack.c.h.b16 %v123
  %v810 = vunpack.c.l.b16 %v124
  %v811 = vunpack.c.h.b16 %v124
  %v812 = vunpack.c.l.b16 %v125
  %v813 = vunpack.c.h.b16 %v125
  %v814 = vunpack.c.l.b16 %v126
  %v815 = vunpack.c.h.b16 %v126
  %v816 = vunpack.c.l.b16 %v127
  %v817 = vunpack.c.h.b16 %v127
  %v818 = vunpack.c.l.b16 %v128
  %v819 = vunpack.c.h.b16 %v128
  %v820 = vunpack.c.l.b16 %v129
  %v821 = vunpack.c.h.b16 %v129
  %v822 = vunpack.c.l.b16 %v130
  %v823 = vunpack.c.h.b16 %v130
  %v824 = vunpack.c.l.b16 %v131
  %v825 = vunpack.c.h.b16 %v131
  %v826 = vunpack.c.l.b16 %v132
  %v827 = vunpack.c.h.b16 %v132
  %v828 = vunpack.c.l.b16 %v133
  %v829 = vunpack.c.h.b16 %v133
  %v830 = vunpack.c.l.b16 %v134
  %v831 = vunpack.c.h.b16 %v134
  %v832 = vunpack.c.l.b16 %v135
  %v833 = vunpack.c.h.b16 %v135
  %v834 = vunpack.c.l.b16 %v136
  %v835 = vunpack.c.h.b16 %v136
  %v836 = vunpack.c.l.b16 %v137
  %v837 = vunpack.c.h.b16 %v137
  %v838 = vunpack.c.l.b16 %v138
  %v839 = vunpack.c.h.b16 %v138
  %v840 = vunpack.c.l.b16 %v139
  %v841 = vunpack.c.h.b16 %v139
  %v842 = vunpack.c.l.b16 %v140
  %v843 = vunpack.c.h.b16 %v140
  %v844 = vunpack.c.l.b16 %v141
  %v845 = vunpack.c.h.b16 %v141
  %v846 = vunpack.c.l.b16 %v142
  %v847 = vunpack.c.h.b16 %v142
  %v848 = vunpack.c.l.b16 %v143
  %v849 = vunpack.c.h.b16 %v143
  %v850 = vunpack.c.l.b16 %v144
  %v851 = vunpack.c.h.b16 %v144
  %v852 = vunpack.c.l.b16 %v145
  %v853 = vunpack.c.h.b16 %v145
  %v854 = vunpack.c.l.b16 %v146
  %v855 = vunpack.c.h.b16 %v146
  %v856 = vunpack.c.l.b16 %v147
  %v857 = vunpack.c.h.b16 %v147
  %v858 = vunpack.c.l.b16 %v148
  %v859 = vunpack.c.h.b16 %v148
  %v860 = vunpack.c.l.b16 %v149
  %v861 = vunpack.c.h.b16 %v149
  %v862 = vunpack.c.l.b16 %v150
  %v863 = vunpack.c.h.b16 %v150
  %v864 = vunpack.c.l.b16 %v151
  %v865 = vunpack.c.h.b16 %v151
  %v866 = vunpack.c.l.b16 %v152
  %v867 = vunpack.c.h.b16 %v152
  %v868 = vunpack.c.l.b16 %v153
  %v869 = vunpack.c.h.b16 %v153
  %v870 = vunpack.c.l.b16 %v154
  %v871 = vunpack.c.h.b16 %v154
  %v872 = vunpack.c.l.b16 %v155
  %v873 = vunpack.c.h.b16 %v155
  %v874 = vunpack.c.l.b16 %v156
  %v875 = vunpack.c.h.b16 %v156
  %v876 = vunpack.c.l.b16 %v157
  %v877 = vunpack.c.h.b16 %v157
  %v878 = vunpack.c.l.b16 %v158
  %v879 = vunpack.c.h.b16 %v158
  %v880 = vunpack.c.l.b16 %v159
  %v881 = vunpack.c.h.b16 %v159
  %v882 = vunpack.c.l.b16 %v160
  %v883 = vunpack.c.h.b16 %v160
  %v884 = vunpack.c.l.b16 %v161
  %v885 = vunpack.c.h.b16 %v161
  %v886 = vunpack.c.l.b16 %v162
  %v887 = vunpack.c.h.b16 %v162
  %v888 = vunpack.c.l.b16 %v163
  %v889 = vunpack.c.h.b16 %v163
  %v890 = vunpack.c.l.b16 %v164
  %v891 = vunpack.c.h.b16 %v164
  %v892 = vunpack.c.l.b16 %v165
  %v893 = vunpack.c.h.b16 %v165
  %v894 = vunpack.c.l.b16 %v166
  %v895 = vunpack.c.h.b16 %v166
  %v896 = vunpack.c.l.b16 %v167
  %v897 = vunpack.c.h.b16 %v167
  %v898 = vunpack.c.l.b16 %v168
  %v899 = vunpack.c.h.b16 %v168
  %v900 = vunpack.c.l.b16 %v169
  %v901 = vunpack.c.h.b16 %v169
  %v902 = vunpack.c.l.b16 %v170
  %v903 = vunpack.c.h.b16 %v170
  %v904 = vunpack.c.l.b16 %v171
  %v905 = vunpack.c.h.b16 %v171
  %v906 = vunpack.c.l.b16 %v172
  %v907 = vunpack.c.h.b16 %v172
  %v908 = vunpack.c.l.b16 %v173
  %v909 = vunpack.c.h.b16 %v173
  %v910 = vunpack.c.l.b16 %v174
  %v911 = vunpack.c.h.b16 %v174
  %v912 = vunpack.c.l.b16 %v175
  %v913 = vunpack.c.h.b16 %v175
  %v914 = vunpack.c.l.b16 %v176
  %v915 = vunpack.c.h.b16 %v176
  %v916 = vunpack.c.l.b16 %v177
  %v917 = vunpack.c.h.b16 %v177
  %v918 = vunpack.c.l.b16 %v178
  %v919 = vunpack.c.h.b16 %v178
  %v920 = vunpack.c.l.b16 %v179
  %v921 = vunpack.c.h.b16 %v179
  %v922 = vunpack.c.l.b16 %v180
  %v923 = vunpack.c.h.b16 %v180
  %v924 = vunpack.c.l.b16 %v181
  %v925 = vunpack.c.h.b16 %v181
  %v926 = vunpack.c.l.b16 %v182
  %v927 = vunpack.c.h.b16 %v182
  %v928 = vunpack.c.l.b16 %v183
  %v929 = vunpack.c.h.b16 %v183
  %v930 = vunpack.c.l.b16 %v184
  %v931 = vunpack.c.h.b16 %v184
  %v932 = vunpack.c.l.b16 %v185
  %v933 = vunpack.c.h.b16 %v185
  %v934 = vunpack.c.l.b16 %v186
  %v935 = vunpack.c.h.b16 %v186
  %v936 = vunpack.c.l.b16 %v187
  %v937 = vunpack.c.h.b16 %v187
  %v938 = vunpack.c.l.b16 %v188
  %v939 = vunpack.c.h.b16 %v188
  %v940 = vunpack.c.l.b16 %v189
  %v941 = vunpack.c.h.b16 %v189
  %v942 = vunpack.c.l.b16 %v190
  %v943 = vunpack.c.h.b16 %v190
  %v944 = vunpack.c.l.b16 %v191
  %v945 = vunpack.c.h.b16 %v191
  %v946 = vunpack.c.l.b16 %v192
  %v947 = vunpack.c.h.b16 %v192
  %v948 = vunpack.c.l.b16 %v193
  %v949 = vunpack.c.h.b16 %v193
  %v950 = vunpack.c.l.b16 %v194
  %v951 = vunpack.c.h.b16 %v194
  %v952 = vunpack.c.l.b16 %v195
  %v953 = vunpack.c.h.b16 %v195
  %v954 = vunpack.c.l.b16 %v196
  %v955 = vunpack.c.h.b16 %v196
  %v956 = vunpack.c.l.b16 %v197
  %v957 = vunpack.c.h.b16 %v197
  %v958 = vunpack.c.l.b16 %v198
  %v959 = vunpack.c.h.b16 %v198
  %v960 = vunpack.c.l.b16 %v199
  %v961 = vunpack.c.h.b16 %v199
  %v962 = vunpack.c.l.b16 %v200
  %v963 = vunpack.c.h.b16 %v200
  %v964 = vunpack.c.l.b16 %v201
  %v965 = vunpack.c.h.b16 %v201
  %v966 = vunpack.c.l.b16 %v202
  %v967 = vunpack.c.h.b16 %v202
  %v968 = vunpack.c.l.b16 %v203
  %v969 = vunpack.c.h.b16 %v203
  %v970 = vunpack.c.l.b16 %v204
  %v971 = vunpack.c.h.b16 %v204
  %v972 = vunpack.c.l.b16 %v205
  %v973 = vunpack.c.h.b16 %v205
  %v974 = vunpack.c.l.b16 %v206
  %v975 = vunpack.c.h.b16 %v206
  %v976 = vunpack.c.l.b16 %v207
  %v977 = vunpack.c.h.b16 %v207
  %v978 = vunpack.c.l.b16 %v208
  %v979 = vunpack.c.h.b16 %v208
  %v980 = vunpack.c.l.b16 %v209
  %v981 = vunpack.c.h.b16 %v209
  %v982 = vunpack.c.l.b16 %v210
  %v983 = vunpack.c.h.b16 %v210
  %v984 = vunpack.c.l.b16 %v211
  %v985 = vunpack.c.h.b16 %v211
  %v986 = vunpack.c.l.b16 %v212
  %v987 = vunpack.c.h.b16 %v212
  %v988 = vunpack.c.l.b16 %v213
  %v989 = vunpack.c.h.b16 %v213
  %v990 = vunpack.c.l.b16 %v214
  %v991 = vunpack.c.h.b16 %v214
  %v992 = vunpack.c.l.b16 %v215
  %v993 = vunpack.c.h.b16 %v215
  %v994 = vunpack.c.l.b16 %v216
  %v995 = vunpack.c.h.b16 %v216
  %v996 = vunpack.c.l.b16 %v217
  %v997 = vunpack.c.h.b16 %v217
  %v998 = vunpack.c.l.b16 %v218
  %v999 = vunpack.c.h.b16 %v218
  %v1000 = vunpack.c.l.b16 %v219
  %v1001 = vunpack.c.h.b16 %v219
  %v1002 = vunpack.c.l.b16 %v220
  %v1003 = vunpack.c.h.b16 %v220
  %v1004 = vunpack.c.l.b16 %v221
  %v1005 = vunpack.c.h.b16 %v221
  %v1006 = vunpack.c.l.b16 %v222
  %v1007 = vunpack.c.h.b16 %v222
  %v1008 = vunpack.c.l.b16 %v223
  %v1009 = vunpack.c.h.b16 %v223
  %v1010 = vunpack.c.l.b16 %v224
  %v1011 = vunpack.c.h.b16 %v224
  %v1012 = vunpack.c.l.b16 %v225
  %v1013 = vunpack.c.h.b16 %v225
  %v1014 = vunpack.c.l.b16 %v226
  %v1015 = vunpack.c.h.b16 %v226
  %v1016 = vunpack.c.l.b16 %v227
  %v1017 = vunpack.c.h.b16 %v227
  %v1018 = vunpack.c.l.b16 %v228
  %v1019 = vunpack.c.h.b16 %v228
  %v1020 = vunpack.c.l.b16 %v229
  %v1021 = vunpack.c.h.b16 %v229
  %v1022 = vunpack.c.l.b16 %v230
  %v1023 = vunpack.c.h.b16 %v230
  %v1024 = vunpack.c.l.b16 %v231
  %v1025 = vunpack.c.h.b16 %v231
  %v1026 = vunpack.c.l.b16 %v232
  %v1027 = vunpack.c.h.b16 %v232
  %v1028 = vunpack.c.l.b16 %v233
  %v1029 = vunpack.c.h.b16 %v233
  %v1030 = vunpack.c.l.b16 %v234
  %v1031 = vunpack.c.h.b16 %v234
  %v1032 = vunpack.c.l.b16 %v235
  %v1033 = vunpack.c.h.b16 %v235
  %v1034 = vunpack.c.l.b16 %v236
  %v1035 = vunpack.c.h.b16 %v236
  %v1036 = vunpack.c.l.b16 %v237
  %v1037 = vunpack.c.h.b16 %v237
  %v1038 = vpack.c.b16 %v752, %v750
  %v1039 = vpack.c.b16 %v753, %v751
  %v1040 = vpack.c.b16 %v756, %v754
  %v1041 = vpack.c.b16 %v757, %v755
  %v1042 = vpack.c.b16 %v760, %v758
  %v1043 = vpack.c.b16 %v761, %v759
  %v1044 = vpack.c.b16 %v764, %v762
  %v1045 = vpack.c.b16 %v765, %v763
  %v1046 = vpack.c.b16 %v768, %v766
  %v1047 = vpack.c.b16 %v769, %v767
  %v1048 = vpack.c.b16 %v772, %v770
  %v1049 = vpack.c.b16 %v773, %v771
  %v1050 = vpack.c.b16 %v776, %v774
  %v1051 = vpack.c.b16 %v777, %v775
  %v1052 = vpack.c.b16 %v780, %v778
  %v1053 = vpack.c.b16 %v781, %v779
  %v1054 = vpack.c.b16 %v784, %v782
  %v1055 = vpack.c.b16 %v785, %v783
  %v1056 = vpack.c.b16 %v788, %v786
  %v1057 = vpack.c.b16 %v789, %v787
  %v1058 = vpack.c.b16 %v792, %v790
  %v1059 = vpack.c.b16 %v793, %v791
  %v1060 = vpack.c.b16 %v796, %v794
  %v1061 = vpack.c.b16 %v797, %v795
  %v1062 = vpack.c.b16 %v800, %v798
  %v1063 = vpack.c.b16 %v801, %v799
  %v1064 = vpack.c.b16 %v804, %v802
  %v1065 = vpack.c.b16 %v805, %v803
  %v1066 = vpack.c.b16 %v808, %v806
  %v1067 = vpack.c.b16 %v809, %v807
  %v1068 = vpack.c.b16 %v812, %v810
  %v1069 = vpack.c.b16 %v813, %v811
  %v1070 = vpack.c.b16 %v816, %v814
  %v1071 = vpack.c.b16 %v817, %v815
  %v1072 = vpack.c.b16 %v820, %v818
  %v1073 = vpack.c.b16 %v821, %v819
  %v1074 = vpack.c.b16 %v824, %v822
  %v1075 = vpack.c.b16 %v825, %v823
  %v1076 = vpack.c.b16 %v828, %v826
  %v1077 = vpack.c.b16 %v829, %v827
  %v1078 = vpack.c.b16 %v832, %v830
  %v1079 = vpack.c.b16 %v833, %v831
  %v1080 = vpack.c.b16 %v836, %v834
  %v1081 = vpack.c.b16 %v837, %v835
  %v1082 = vpack.c.b16 %v840, %v838
  %v1083 = vpack.c.b16 %v841, %v839
  %v1084 = vpack.c.b16 %v844, %v842
  %v1085 = vpack.c.b16 %v845, %v843
  %v1086 = vpack.c.b16 %v848, %v846
  %v1087 = vpack.c.b16 %v849, %v847
  %v1088 = vpack.c.b16 %v852, %v850
  %v1089 = vpack.c.b16 %v853, %v851
  %v1090 = vpack.c.b16 %v856, %v854
  %v1091 = vpack.c.b16 %v857, %v855
  %v1092 = vpack.c.b16 %v860, %v858
  %v1093 = vpack.c.b16 %v861, %v859
  %v1094 = vpack.c.b16 %v864, %v862
  %v1095 = vpack.c.b16 %v865, %v863
  %v1096 = vpack.c.b16 %v868, %v866
  %v1097 = vpack.c.b16 %v869, %v867
  %v1098 = vpack.c.b16 %v872, %v870
  %v1099 = vpack.c.b16 %v873, %v871
  %v1100 = vpack.c.b16 %v876, %v874
  %v1101 = vpack.c.b16 %v877, %v875
  %v1102 = vpack.c.b16 %v880, %v878
  %v1103 = vpack.c.b16 %v881, %v879
  %v1104 = vpack.c.b16 %v884, %v882
  %v1105 = vpack.c.b16 %v885, %v883
  %v1106 = vpack.c.b16 %v888, %v886
  %v1107 = vpack.c.b16 %v889, %v887
  %v1108 = vpack.c.b16 %v892, %v890
  %v1109 = vpack.c.b16 %v893, %v891
  %v1110 = vpack.c.b16 %v896, %v894
  %v1111 = vpack.c.b16 %v897, %v895
  %v1112 = vpack.c.b16 %v900, %v898
  %v1113 = vpack.c.b16 %v901, %v899
  %v1114 = vpack.c.b16 %v904, %v902
  %v1115 = vpack.c.b16 %v905, %v903
  %v1116 = vpack.c.b16 %v908, %v906
  %v1117 = vpack.c.b16 %v909, %v907
  %v1118 = vpack.c.b16 %v912, %v910
  %v1119 = vpack.c.b16 %v913, %v911
  %v1120 = vpack.c.b16 %v916, %v914
  %v1121 = vpack.c.b16 %v917, %v915
  %v1122 = vpack.c.b16 %v920, %v918
  %v1123 = vpack.c.b16 %v921, %v919
  %v1124 = vpack.c.b16 %v924, %v922
  %v1125 = vpack.c.b16 %v925, %v923
  %v1126 = vpack.c.b16 %v928, %v926
  %v1127 = vpack.c.b16 %v929, %v927
  %v1128 = vpack.c.b16 %v932, %v930
  %v1129 = vpack.c.b16 %v933, %v931
  %v1130 = vpack.c.b16 %v936, %v934
  %v1131 = vpack.c.b16 %v937, %v935
  %v1132 = vpack.c.b16 %v940, %v938
  %v1133 = vpack.c.b16 %v941, %v939
  %v1134 = vpack.c.b16 %v944, %v942
  %v1135 = vpack.c.b16 %v945, %v943
  %v1136 = vpack.c.b16 %v948, %v946
  %v1137 = vpack.c.b16 %v949, %v947
  %v1138 = vpack.c.b16 %v952, %v950
  %v1139 = vpack.c.b16 %v953, %v951
  %v1140 = vpack.c.b16 %v956, %v954
  %v1141 = vpack.c.b16 %v957, %v955
  %v1142 = vpack.c.b16 %v960, %v958
  %v1143 = vpack.c.b16 %v961, %v959
  %v1144 = vpack.c.b16 %v964, %v962
  %v1145 = vpack.c.b16 %v965, %v963
  %v1146 = vpack.c.b16 %v968, %v966
  %v1147 = vpack.c.b16 %v969, %v967
  %v1148 = vpack.c.b16 %v972, %v970
  %v1149 = vpack.c.b16 %v973, %v971
  %v1150 = vpack.c.b16 %v976, %v974
  %v1151 = vpack.c.b16 %v977, %v975
  %v1152 = vpack.c.b16 %v980, %v978
  %v1153 = vpack.c.b16 %v981, %v979
  %v1154 = vpack.c.b16 %v984, %v982
  %v1155 = vpack.c.b16 %v985, %v983
  %v1156 = vpack.c.b16 %v988, %v986
  %v1157 = vpack.c.b16 %v989, %v987
  %v1158 = vpack.c.b16 %v992, %v990
  %v1159 = vpack.c.b16 %v993, %v991
  %v1160 = vpack.c.b16 %v996, %v994
  %v1161 = vpack.c.b16 %v997, %v995
  %v1162 = vpack.c.b16 %v1000, %v998
  %v1163 = vpack.c.b16 %v1001, %v999
  %v1164 = vpack.c.b16 %v1004, %v1002
  %v1165 = vpack.c.b16 %v1005, %v1003
  %v1166 = vpack.c.b16 %v1008, %v1006
  %v1167 = vpack.c.b16 %v1009, %v1007
  %v1168 = vpack.c.b16 %v1012, %v1010
  %v1169 = vpack.c.b16 %v1013, %v1011
  %v1170 = vpack.c.b16 %v1016, %v1014
  %v1171 = vpack.c.b16 %v1017, %v1015
  %v1172 = vpack.c.b16 %v1020, %v1018
  %v1173 = vpack.c.b16 %v1021, %v1019
  %v1174 = vpack.c.b16 %v1024, %v1022
  %v1175 = vpack.c.b16 %v1025, %v1023
  %v1176 = vpack.c.b16 %v1028, %v1026
  %v1177 = vpack.c.b16 %v1029, %v1027
  %v1178 = vpack.c.b16 %v1032, %v1030
  %v1179 = vpack.c.b16 %v1033, %v1031
  %v1180 = vpack.c.b16 %v1036, %v1034
  %v1181 = vpack.c.b16 %v1037, %v1035
  %1326 = vmatprep.subr.bf16.mxu0 %v1039
  %1327 = vmatpush1.bf16.msra.mxu0 %v1038
  %1328 = vmatprep.subr.bf16.mxu0 %v1041
  %1329 = vmatpush1.bf16.msra.mxu0 %v1040
  %1330 = vmatprep.subr.bf16.mxu0 %v1043
  %1331 = vmatpush1.bf16.msra.mxu0 %v1042
  %1332 = vmatprep.subr.bf16.mxu0 %v1045
  %1333 = vmatpush1.bf16.msra.mxu0 %v1044
  %1334 = vmatprep.subr.bf16.mxu0 %v1047
  %1335 = vmatpush1.bf16.msra.mxu0 %v1046
  %1336 = vmatprep.subr.bf16.mxu0 %v1049
  %1337 = vmatpush1.bf16.msra.mxu0 %v1048
  %1338 = vmatprep.subr.bf16.mxu0 %v1051
  %1339 = vmatpush1.bf16.msra.mxu0 %v1050
  %1340 = vmatprep.subr.bf16.mxu0 %v1053
  %1341 = vmatpush1.bf16.msra.mxu0 %v1052
  %1342 = vmatprep.subr.bf16.mxu0 %v1055
  %1343 = vmatpush1.bf16.msra.mxu0 %v1054
  %1344 = vmatprep.subr.bf16.mxu0 %v1057
  %1345 = vmatpush1.bf16.msra.mxu0 %v1056
  %1346 = vmatprep.subr.bf16.mxu0 %v1059
  %1347 = vmatpush1.bf16.msra.mxu0 %v1058
  %1348 = vmatprep.subr.bf16.mxu0 %v1061
  %1349 = vmatpush1.bf16.msra.mxu0 %v1060
  %1350 = vmatprep.subr.bf16.mxu0 %v1063
  %1351 = vmatpush1.bf16.msra.mxu0 %v1062
  %1352 = vmatprep.subr.bf16.mxu0 %v1065
  %1353 = vmatpush1.bf16.msra.mxu0 %v1064
  %1354 = vmatprep.subr.bf16.mxu0 %v1067
  %1355 = vmatpush1.bf16.msra.mxu0 %v1066
  %1356 = vmatprep.subr.bf16.mxu0 %v1069
  %1357 = vmatpush1.bf16.msra.mxu0 %v1068
  %1358 = vmatprep.mubr.bf16.mxu0 %v463
  %1359 = vmatmul.mubr.bf16.gmra.mrb[0].mxu0 %v462
  %v1360 = vpop.f32.mrb[0].mxu0
  %v1361 = vadd.f32 0.0, %v1360
  %v1362 = vpop.f32.mrb[0].mxu0
  %v1363 = vadd.f32 0.0, %v1362
  %v1364 = vpop.f32.mrb[0].mxu0
  %v1365 = vadd.f32 0.0, %v1364
  %v1366 = vpop.f32.mrb[0].mxu0
  %v1367 = vadd.f32 0.0, %v1366
  %1368 = vmatprep.mubr.bf16.mxu0 %v472
  %1369 = vmatmul.mubr.bf16.gmra.mrb[0].mxu0 %v471
  %v1370 = vpop.f32.mrb[0].mxu0
  %v1371 = vadd.f32 0.0, %v1370
  %v1372 = vpop.f32.mrb[0].mxu0
  %v1373 = vadd.f32 0.0, %v1372
  %v1374 = vpop.f32.mrb[0].mxu0
  %v1375 = vadd.f32 0.0, %v1374
  %v1376 = vpop.f32.mrb[0].mxu0
  %v1377 = vadd.f32 0.0, %v1376
  %1378 = vmatprep.mubr.bf16.mxu0 %v481
  %1379 = vmatmul.mubr.bf16.gmra.mrb[0].mxu0 %v480
  %v1380 = vpop.f32.mrb[0].mxu0
  %v1381 = vadd.f32 0.0, %v1380
  %v1382 = vpop.f32.mrb[0].mxu0
  %v1383 = vadd.f32 0.0, %v1382
  %v1384 = vpop.f32.mrb[0].mxu0
  %v1385 = vadd.f32 0.0, %v1384
  %v1386 = vpop.f32.mrb[0].mxu0
  %v1387 = vadd.f32 0.0, %v1386
  %1388 = vmatprep.mubr.bf16.mxu0 %v490
  %1389 = vmatmul.mubr.bf16.gmra.mrb[0].mxu0 %v489
  %v1390 = vpop.f32.mrb[0].mxu0
  %v1391 = vadd.f32 0.0, %v1390
  %v1392 = vpop.f32.mrb[0].mxu0
  %v1393 = vadd.f32 0.0, %v1392
  %v1394 = vpop.f32.mrb[0].mxu0
  %v1395 = vadd.f32 0.0, %v1394
  %v1396 = vpop.f32.mrb[0].mxu0
  %v1397 = vadd.f32 0.0, %v1396
  %1398 = vmatprep.mubr.bf16.mxu0 %v499
  %1399 = vmatmul.mubr.bf16.gmra.mrb[0].mxu0 %v498
  %v1400 = vpop.f32.mrb[0].mxu0
  %v1401 = vadd.f32 0.0, %v1400
  %v1402 = vpop.f32.mrb[0].mxu0
  %v1403 = vadd.f32 0.0, %v1402
  %v1404 = vpop.f32.mrb[0].mxu0
  %v1405 = vadd.f32 0.0, %v1404
  %v1406 = vpop.f32.mrb[0].mxu0
  %v1407 = vadd.f32 0.0, %v1406
  %1408 = vmatprep.mubr.bf16.mxu0 %v508
  %1409 = vmatmul.mubr.bf16.gmra.mrb[0].mxu0 %v507
  %v1410 = vpop.f32.mrb[0].mxu0
  %v1411 = vadd.f32 0.0, %v1410
  %v1412 = vpop.f32.mrb[0].mxu0
  %v1413 = vadd.f32 0.0, %v1412
  %v1414 = vpop.f32.mrb[0].mxu0
  %v1415 = vadd.f32 0.0, %v1414
  %v1416 = vpop.f32.mrb[0].mxu0
  %v1417 = vadd.f32 0.0, %v1416
  %1418 = vmatprep.mubr.bf16.mxu0 %v517
  %1419 = vmatmul.mubr.bf16.gmra.mrb[0].mxu0 %v516
  %v1420 = vpop.f32.mrb[0].mxu0
  %v1421 = vadd.f32 0.0, %v1420
  %v1422 = vpop.f32.mrb[0].mxu0
  %v1423 = vadd.f32 0.0, %v1422
  %v1424 = vpop.f32.mrb[0].mxu0
  %v1425 = vadd.f32 0.0, %v1424
  %v1426 = vpop.f32.mrb[0].mxu0
  %v1427 = vadd.f32 0.0, %v1426
  %1428 = vmatprep.mubr.bf16.mxu0 %v526
  %1429 = vmatmul.mubr.bf16.gmra.mrb[0].mxu0 %v525
  %v1430 = vpop.f32.mrb[0].mxu0
  %v1431 = vadd.f32 0.0, %v1430
  %v1432 = vpop.f32.mrb[0].mxu0
  %v1433 = vadd.f32 0.0, %v1432
  %v1434 = vpop.f32.mrb[0].mxu0
  %v1435 = vadd.f32 0.0, %v1434
  %v1436 = vpop.f32.mrb[0].mxu0
  %v1437 = vadd.f32 0.0, %v1436
  %1438 = vdwg.mxu0
  %1439 = vmatprep.subr.bf16.mxu0 %v1071
  %1440 = vmatpush1.bf16.msra.mxu0 %v1070
  %1441 = vmatprep.subr.bf16.mxu0 %v1073
  %1442 = vmatpush1.bf16.msra.mxu0 %v1072
  %1443 = vmatprep.subr.bf16.mxu0 %v1075
  %1444 = vmatpush1.bf16.msra.mxu0 %v1074
  %1445 = vmatprep.subr.bf16.mxu0 %v1077
  %1446 = vmatpush1.bf16.msra.mxu0 %v1076
  %1447 = vmatprep.subr.bf16.mxu0 %v1079
  %1448 = vmatpush1.bf16.msra.mxu0 %v1078
  %1449 = vmatprep.subr.bf16.mxu0 %v1081
  %1450 = vmatpush1.bf16.msra.mxu0 %v1080
  %1451 = vmatprep.subr.bf16.mxu0 %v1083
  %1452 = vmatpush1.bf16.msra.mxu0 %v1082
  %1453 = vmatprep.subr.bf16.mxu0 %v1085
  %1454 = vmatpush1.bf16.msra.mxu0 %v1084
  %1455 = vmatprep.subr.bf16.mxu0 %v1087
  %1456 = vmatpush1.bf16.msra.mxu0 %v1086
  %1457 = vmatprep.subr.bf16.mxu0 %v1089
  %1458 = vmatpush1.bf16.msra.mxu0 %v1088
  %1459 = vmatprep.subr.bf16.mxu0 %v1091
  %1460 = vmatpush1.bf16.msra.mxu0 %v1090
  %1461 = vmatprep.subr.bf16.mxu0 %v1093
  %1462 = vmatpush1.bf16.msra.mxu0 %v1092
  %1463 = vmatprep.subr.bf16.mxu0 %v1095
  %1464 = vmatpush1.bf16.msra.mxu0 %v1094
  %1465 = vmatprep.subr.bf16.mxu0 %v1097
  %1466 = vmatpush1.bf16.msra.mxu0 %v1096
  %1467 = vmatprep.subr.bf16.mxu0 %v1099
  %1468 = vmatpush1.bf16.msra.mxu0 %v1098
  %1469 = vmatprep.subr.bf16.mxu0 %v1101
  %1470 = vmatpush1.bf16.msra.mxu0 %v1100
  %1471 = vmatprep.mubr.bf16.mxu0 %v465
  %1472 = vmatmul.mubr.bf16.gmra.mrb[0].mxu0 %v464
  %v1473 = vpop.f32.mrb[0].mxu0
  %v1474 = vadd.f32 %v1361, %v1473
  %v1475 = vpop.f32.mrb[0].mxu0
  %v1476 = vadd.f32 %v1363, %v1475
  %v1477 = vpop.f32.mrb[0].mxu0
  %v1478 = vadd.f32 %v1365, %v1477
  %v1479 = vpop.f32.mrb[0].mxu0
  %v1480 = vadd.f32 %v1367, %v1479
  %1481 = vmatprep.mubr.bf16.mxu0 %v474
  %1482 = vmatmul.mubr.bf16.gmra.mrb[0].mxu0 %v473
  %v1483 = vpop.f32.mrb[0].mxu0
  %v1484 = vadd.f32 %v1371, %v1483
  %v1485 = vpop.f32.mrb[0].mxu0
  %v1486 = vadd.f32 %v1373, %v1485
  %v1487 = vpop.f32.mrb[0].mxu0
  %v1488 = vadd.f32 %v1375, %v1487
  %v1489 = vpop.f32.mrb[0].mxu0
  %v1490 = vadd.f32 %v1377, %v1489
  %1491 = vmatprep.mubr.bf16.mxu0 %v483
  %1492 = vmatmul.mubr.bf16.gmra.mrb[0].mxu0 %v482
  %v1493 = vpop.f32.mrb[0].mxu0
  %v1494 = vadd.f32 %v1381, %v1493
  %v1495 = vpop.f32.mrb[0].mxu0
  %v1496 = vadd.f32 %v1383, %v1495
  %v1497 = vpop.f32.mrb[0].mxu0
  %v1498 = vadd.f32 %v1385, %v1497
  %v1499 = vpop.f32.mrb[0].mxu0
  %v1500 = vadd.f32 %v1387, %v1499
  %1501 = vmatprep.mubr.bf16.mxu0 %v492
  %1502 = vmatmul.mubr.bf16.gmra.mrb[0].mxu0 %v491
  %v1503 = vpop.f32.mrb[0].mxu0
  %v1504 = vadd.f32 %v1391, %v1503
  %v1505 = vpop.f32.mrb[0].mxu0
  %v1506 = vadd.f32 %v1393, %v1505
  %v1507 = vpop.f32.mrb[0].mxu0
  %v1508 = vadd.f32 %v1395, %v1507
  %v1509 = vpop.f32.mrb[0].mxu0
  %v1510 = vadd.f32 %v1397, %v1509
  %1511 = vmatprep.mubr.bf16.mxu0 %v501
  %1512 = vmatmul.mubr.bf16.gmra.mrb[0].mxu0 %v500
  %v1513 = vpop.f32.mrb[0].mxu0
  %v1514 = vadd.f32 %v1401, %v1513
  %v1515 = vpop.f32.mrb[0].mxu0
  %v1516 = vadd.f32 %v1403, %v1515
  %v1517 = vpop.f32.mrb[0].mxu0
  %v1518 = vadd.f32 %v1405, %v1517
  %v1519 = vpop.f32.mrb[0].mxu0
  %v1520 = vadd.f32 %v1407, %v1519
  %1521 = vmatprep.mubr.bf16.mxu0 %v510
  %1522 = vmatmul.mubr.bf16.gmra.mrb[0].mxu0 %v509
  %v1523 = vpop.f32.mrb[0].mxu0
  %v1524 = vadd.f32 %v1411, %v1523
  %v1525 = vpop.f32.mrb[0].mxu0
  %v1526 = vadd.f32 %v1413, %v1525
  %v1527 = vpop.f32.mrb[0].mxu0
  %v1528 = vadd.f32 %v1415, %v1527
  %v1529 = vpop.f32.mrb[0].mxu0
  %v1530 = vadd.f32 %v1417, %v1529
  %1531 = vmatprep.mubr.bf16.mxu0 %v519
  %1532 = vmatmul.mubr.bf16.gmra.mrb[0].mxu0 %v518
  %v1533 = vpop.f32.mrb[0].mxu0
  %v1534 = vadd.f32 %v1421, %v1533
  %v1535 = vpop.f32.mrb[0].mxu0
  %v1536 = vadd.f32 %v1423, %v1535
  %v1537 = vpop.f32.mrb[0].mxu0
  %v1538 = vadd.f32 %v1425, %v1537
  %v1539 = vpop.f32.mrb[0].mxu0
  %v1540 = vadd.f32 %v1427, %v1539
  %1541 = vmatprep.mubr.bf16.mxu0 %v528
  %1542 = vmatmul.mubr.bf16.gmra.mrb[0].mxu0 %v527
  %v1543 = vpop.f32.mrb[0].mxu0
  %v1544 = vadd.f32 %v1431, %v1543
  %v1545 = vpop.f32.mrb[0].mxu0
  %v1546 = vadd.f32 %v1433, %v1545
  %v1547 = vpop.f32.mrb[0].mxu0
  %v1548 = vadd.f32 %v1435, %v1547
  %v1549 = vpop.f32.mrb[0].mxu0
  %v1550 = vadd.f32 %v1437, %v1549
  %1551 = vdwg.mxu0
  %1552 = vmatprep.subr.bf16.mxu0 %v1103
  %1553 = vmatpush1.bf16.msra.mxu0 %v1102
  %1554 = vmatprep.subr.bf16.mxu0 %v1105
  %1555 = vmatpush1.bf16.msra.mxu0 %v1104
  %1556 = vmatprep.subr.bf16.mxu0 %v1107
  %1557 = vmatpush1.bf16.msra.mxu0 %v1106
  %1558 = vmatprep.subr.bf16.mxu0 %v1109
  %1559 = vmatpush1.bf16.msra.mxu0 %v1108
  %1560 = vmatprep.subr.bf16.mxu0 %v1111
  %1561 = vmatpush1.bf16.msra.mxu0 %v1110
  %1562 = vmatprep.subr.bf16.mxu0 %v1113
  %1563 = vmatpush1.bf16.msra.mxu0 %v1112
  %1564 = vmatprep.subr.bf16.mxu0 %v1115
  %1565 = vmatpush1.bf16.msra.mxu0 %v1114
  %1566 = vmatprep.subr.bf16.mxu0 %v1117
  %1567 = vmatpush1.bf16.msra.mxu0 %v1116
  %1568 = vmatprep.subr.bf16.mxu0 %v1119
  %1569 = vmatpush1.bf16.msra.mxu0 %v1118
  %1570 = vmatprep.subr.bf16.mxu0 %v1121
  %1571 = vmatpush1.bf16.msra.mxu0 %v1120
  %1572 = vmatprep.subr.bf16.mxu0 %v1123
  %1573 = vmatpush1.bf16.msra.mxu0 %v1122
  %1574 = vmatprep.subr.bf16.mxu0 %v1125
  %1575 = vmatpush1.bf16.msra.mxu0 %v1124
  %1576 = vmatprep.subr.bf16.mxu0 %v1127
  %1577 = vmatpush1.bf16.msra.mxu0 %v1126
  %1578 = vmatprep.subr.bf16.mxu0 %v1129
  %1579 = vmatpush1.bf16.msra.mxu0 %v1128
  %1580 = vmatprep.subr.bf16.mxu0 %v1131
  %1581 = vmatpush1.bf16.msra.mxu0 %v1130
  %1582 = vmatprep.subr.bf16.mxu0 %v1133
  %1583 = vmatpush1.bf16.msra.mxu0 %v1132
  %1584 = vmatprep.mubr.bf16.mxu0 %v467
  %1585 = vmatmul.mubr.bf16.gmra.mrb[0].mxu0 %v466
  %v1586 = vpop.f32.mrb[0].mxu0
  %v1587 = vadd.f32 %v1474, %v1586
  %v1588 = vpop.f32.mrb[0].mxu0
  %v1589 = vadd.f32 %v1476, %v1588
  %v1590 = vpop.f32.mrb[0].mxu0
  %v1591 = vadd.f32 %v1478, %v1590
  %v1592 = vpop.f32.mrb[0].mxu0
  %v1593 = vadd.f32 %v1480, %v1592
  %1594 = vmatprep.mubr.bf16.mxu0 %v476
  %1595 = vmatmul.mubr.bf16.gmra.mrb[0].mxu0 %v475
  %v1596 = vpop.f32.mrb[0].mxu0
  %v1597 = vadd.f32 %v1484, %v1596
  %v1598 = vpop.f32.mrb[0].mxu0
  %v1599 = vadd.f32 %v1486, %v1598
  %v1600 = vpop.f32.mrb[0].mxu0
  %v1601 = vadd.f32 %v1488, %v1600
  %v1602 = vpop.f32.mrb[0].mxu0
  %v1603 = vadd.f32 %v1490, %v1602
  %1604 = vmatprep.mubr.bf16.mxu0 %v485
  %1605 = vmatmul.mubr.bf16.gmra.mrb[0].mxu0 %v484
  %v1606 = vpop.f32.mrb[0].mxu0
  %v1607 = vadd.f32 %v1494, %v1606
  %v1608 = vpop.f32.mrb[0].mxu0
  %v1609 = vadd.f32 %v1496, %v1608
  %v1610 = vpop.f32.mrb[0].mxu0
  %v1611 = vadd.f32 %v1498, %v1610
  %v1612 = vpop.f32.mrb[0].mxu0
  %v1613 = vadd.f32 %v1500, %v1612
  %1614 = vmatprep.mubr.bf16.mxu0 %v494
  %1615 = vmatmul.mubr.bf16.gmra.mrb[0].mxu0 %v493
  %v1616 = vpop.f32.mrb[0].mxu0
  %v1617 = vadd.f32 %v1504, %v1616
  %v1618 = vpop.f32.mrb[0].mxu0
  %v1619 = vadd.f32 %v1506, %v1618
  %v1620 = vpop.f32.mrb[0].mxu0
  %v1621 = vadd.f32 %v1508, %v1620
  %v1622 = vpop.f32.mrb[0].mxu0
  %v1623 = vadd.f32 %v1510, %v1622
  %1624 = vmatprep.mubr.bf16.mxu0 %v503
  %1625 = vmatmul.mubr.bf16.gmra.mrb[0].mxu0 %v502
  %v1626 = vpop.f32.mrb[0].mxu0
  %v1627 = vadd.f32 %v1514, %v1626
  %v1628 = vpop.f32.mrb[0].mxu0
  %v1629 = vadd.f32 %v1516, %v1628
  %v1630 = vpop.f32.mrb[0].mxu0
  %v1631 = vadd.f32 %v1518, %v1630
  %v1632 = vpop.f32.mrb[0].mxu0
  %v1633 = vadd.f32 %v1520, %v1632
  %1634 = vmatprep.mubr.bf16.mxu0 %v512
  %1635 = vmatmul.mubr.bf16.gmra.mrb[0].mxu0 %v511
  %v1636 = vpop.f32.mrb[0].mxu0
  %v1637 = vadd.f32 %v1524, %v1636
  %v1638 = vpop.f32.mrb[0].mxu0
  %v1639 = vadd.f32 %v1526, %v1638
  %v1640 = vpop.f32.mrb[0].mxu0
  %v1641 = vadd.f32 %v1528, %v1640
  %v1642 = vpop.f32.mrb[0].mxu0
  %v1643 = vadd.f32 %v1530, %v1642
  %1644 = vmatprep.mubr.bf16.mxu0 %v521
  %1645 = vmatmul.mubr.bf16.gmra.mrb[0].mxu0 %v520
  %v1646 = vpop.f32.mrb[0].mxu0
  %v1647 = vadd.f32 %v1534, %v1646
  %v1648 = vpop.f32.mrb[0].mxu0
  %v1649 = vadd.f32 %v1536, %v1648
  %v1650 = vpop.f32.mrb[0].mxu0
  %v1651 = vadd.f32 %v1538, %v1650
  %v1652 = vpop.f32.mrb[0].mxu0
  %v1653 = vadd.f32 %v1540, %v1652
  %1654 = vmatprep.mubr.bf16.mxu0 %v530
  %1655 = vmatmul.mubr.bf16.gmra.mrb[0].mxu0 %v529
  %v1656 = vpop.f32.mrb[0].mxu0
  %v1657 = vadd.f32 %v1544, %v1656
  %v1658 = vpop.f32.mrb[0].mxu0
  %v1659 = vadd.f32 %v1546, %v1658
  %v1660 = vpop.f32.mrb[0].mxu0
  %v1661 = vadd.f32 %v1548, %v1660
  %v1662 = vpop.f32.mrb[0].mxu0
  %v1663 = vadd.f32 %v1550, %v1662
  %1664 = vdwg.mxu0
  %1665 = vmatprep.subr.bf16.mxu0 %v1135
  %1666 = vmatpush1.bf16.msra.mxu0 %v1134
  %1667 = vmatprep.subr.bf16.mxu0 %v1137
  %1668 = vmatpush1.bf16.msra.mxu0 %v1136
  %1669 = vmatprep.subr.bf16.mxu0 %v1139
  %1670 = vmatpush1.bf16.msra.mxu0 %v1138
  %1671 = vmatprep.subr.bf16.mxu0 %v1141
  %1672 = vmatpush1.bf16.msra.mxu0 %v1140
  %1673 = vmatprep.subr.bf16.mxu0 %v1143
  %1674 = vmatpush1.bf16.msra.mxu0 %v1142
  %1675 = vmatprep.subr.bf16.mxu0 %v1145
  %1676 = vmatpush1.bf16.msra.mxu0 %v1144
  %1677 = vmatprep.subr.bf16.mxu0 %v1147
  %1678 = vmatpush1.bf16.msra.mxu0 %v1146
  %1679 = vmatprep.subr.bf16.mxu0 %v1149
  %1680 = vmatpush1.bf16.msra.mxu0 %v1148
  %1681 = vmatprep.subr.bf16.mxu0 %v1151
  %1682 = vmatpush1.bf16.msra.mxu0 %v1150
  %1683 = vmatprep.subr.bf16.mxu0 %v1153
  %1684 = vmatpush1.bf16.msra.mxu0 %v1152
  %1685 = vmatprep.subr.bf16.mxu0 %v1155
  %1686 = vmatpush1.bf16.msra.mxu0 %v1154
  %1687 = vmatprep.subr.bf16.mxu0 %v1157
  %1688 = vmatpush1.bf16.msra.mxu0 %v1156
  %1689 = vmatprep.subr.bf16.mxu0 %v1159
  %1690 = vmatpush1.bf16.msra.mxu0 %v1158
  %1691 = vmatprep.subr.bf16.mxu0 %v1161
  %1692 = vmatpush1.bf16.msra.mxu0 %v1160
  %1693 = vmatprep.subr.bf16.mxu0 %v1163
  %1694 = vmatpush1.bf16.msra.mxu0 %v1162
  %1695 = vmatprep.subr.bf16.mxu0 %v1165
  %1696 = vmatpush1.bf16.msra.mxu0 %v1164
  %1697 = vmatprep.mubr.bf16.mxu0 %v469
  %1698 = vmatmul.mubr.bf16.gmra.mrb[0].mxu0 %v468
  %v1699 = vpop.f32.mrb[0].mxu0
  %v1700 = vadd.f32 %v1587, %v1699
  %v1701 = vpop.f32.mrb[0].mxu0
  %v1702 = vadd.f32 %v1589, %v1701
  %v1703 = vpop.f32.mrb[0].mxu0
  %v1704 = vadd.f32 %v1591, %v1703
  %v1705 = vpop.f32.mrb[0].mxu0
  %v1706 = vadd.f32 %v1593, %v1705
  %1707 = vmatprep.mubr.bf16.mxu0 %v478
  %1708 = vmatmul.mubr.bf16.gmra.mrb[0].mxu0 %v477
  %v1709 = vpop.f32.mrb[0].mxu0
  %v1710 = vadd.f32 %v1597, %v1709
  %v1711 = vpop.f32.mrb[0].mxu0
  %v1712 = vadd.f32 %v1599, %v1711
  %v1713 = vpop.f32.mrb[0].mxu0
  %v1714 = vadd.f32 %v1601, %v1713
  %v1715 = vpop.f32.mrb[0].mxu0
  %v1716 = vadd.f32 %v1603, %v1715
  %1717 = vmatprep.mubr.bf16.mxu0 %v487
  %1718 = vmatmul.mubr.bf16.gmra.mrb[0].mxu0 %v486
  %v1719 = vpop.f32.mrb[0].mxu0
  %v1720 = vadd.f32 %v1607, %v1719
  %v1721 = vpop.f32.mrb[0].mxu0
  %v1722 = vadd.f32 %v1609, %v1721
  %v1723 = vpop.f32.mrb[0].mxu0
  %v1724 = vadd.f32 %v1611, %v1723
  %v1725 = vpop.f32.mrb[0].mxu0
  %v1726 = vadd.f32 %v1613, %v1725
  %1727 = vmatprep.mubr.bf16.mxu0 %v496
  %1728 = vmatmul.mubr.bf16.gmra.mrb[0].mxu0 %v495
  %v1729 = vpop.f32.mrb[0].mxu0
  %v1730 = vadd.f32 %v1617, %v1729
  %v1731 = vpop.f32.mrb[0].mxu0
  %v1732 = vadd.f32 %v1619, %v1731
  %v1733 = vpop.f32.mrb[0].mxu0
  %v1734 = vadd.f32 %v1621, %v1733
  %v1735 = vpop.f32.mrb[0].mxu0
  %v1736 = vadd.f32 %v1623, %v1735
  %1737 = vmatprep.mubr.bf16.mxu0 %v505
  %1738 = vmatmul.mubr.bf16.gmra.mrb[0].mxu0 %v504
  %v1739 = vpop.f32.mrb[0].mxu0
  %v1740 = vadd.f32 %v1627, %v1739
  %v1741 = vpop.f32.mrb[0].mxu0
  %v1742 = vadd.f32 %v1629, %v1741
  %v1743 = vpop.f32.mrb[0].mxu0
  %v1744 = vadd.f32 %v1631, %v1743
  %v1745 = vpop.f32.mrb[0].mxu0
  %v1746 = vadd.f32 %v1633, %v1745
  %1747 = vmatprep.mubr.bf16.mxu0 %v514
  %1748 = vmatmul.mubr.bf16.gmra.mrb[0].mxu0 %v513
  %v1749 = vpop.f32.mrb[0].mxu0
  %v1750 = vadd.f32 %v1637, %v1749
  %v1751 = vpop.f32.mrb[0].mxu0
  %v1752 = vadd.f32 %v1639, %v1751
  %v1753 = vpop.f32.mrb[0].mxu0
  %v1754 = vadd.f32 %v1641, %v1753
  %v1755 = vpop.f32.mrb[0].mxu0
  %v1756 = vadd.f32 %v1643, %v1755
  %1757 = vmatprep.mubr.bf16.mxu0 %v523
  %1758 = vmatmul.mubr.bf16.gmra.mrb[0].mxu0 %v522
  %v1759 = vpop.f32.mrb[0].mxu0
  %v1760 = vadd.f32 %v1647, %v1759
  %v1761 = vpop.f32.mrb[0].mxu0
  %v1762 = vadd.f32 %v1649, %v1761
  %v1763 = vpop.f32.mrb[0].mxu0
  %v1764 = vadd.f32 %v1651, %v1763
  %v1765 = vpop.f32.mrb[0].mxu0
  %v1766 = vadd.f32 %v1653, %v1765
  %1767 = vmatprep.mubr.bf16.mxu0 %v532
  %1768 = vmatmul.mubr.bf16.gmra.mrb[0].mxu0 %v531
  %v1769 = vpop.f32.mrb[0].mxu0
  %v1770 = vadd.f32 %v1657, %v1769
  %v1771 = vpop.f32.mrb[0].mxu0
  %v1772 = vadd.f32 %v1659, %v1771
  %v1773 = vpop.f32.mrb[0].mxu0
  %v1774 = vadd.f32 %v1661, %v1773
  %v1775 = vpop.f32.mrb[0].mxu0
  %v1776 = vadd.f32 %v1663, %v1775
  %1777 = vdwg.mxu0
  %1778 = vmatprep.subr.bf16.mxu0 %v1167
  %1779 = vmatpush1.bf16.msra.mxu0 %v1166
  %1780 = vmatprep.subr.bf16.mxu0 %v1169
  %1781 = vmatpush1.bf16.msra.mxu0 %v1168
  %1782 = vmatprep.subr.bf16.mxu0 %v1171
  %1783 = vmatpush1.bf16.msra.mxu0 %v1170
  %1784 = vmatprep.subr.bf16.mxu0 %v1173
  %1785 = vmatpush1.bf16.msra.mxu0 %v1172
  %1786 = vmatprep.subr.bf16.mxu0 %v1175
  %1787 = vmatpush1.bf16.msra.mxu0 %v1174
  %1788 = vmatprep.subr.bf16.mxu0 %v1177
  %1789 = vmatpush1.bf16.msra.mxu0 %v1176
  %1790 = vmatprep.subr.bf16.mxu0 %v1179
  %1791 = vmatpush1.bf16.msra.mxu0 %v1178
  %1792 = vmatprep.subr.bf16.mxu0 %v1181
  %1793 = vmatpush1.bf16.msra.mxu0 %v1180
  %1794 = vmatprep.subr.bf16.mxu0 0
  %1795 = vmatpush1.bf16.msra.mxu0 0
  %1796 = vmatprep.subr.bf16.mxu0 0
  %1797 = vmatpush1.bf16.msra.mxu0 0
  %1798 = vmatprep.subr.bf16.mxu0 0
  %1799 = vmatpush1.bf16.msra.mxu0 0
  %1800 = vmatprep.subr.bf16.mxu0 0
  %1801 = vmatpush1.bf16.msra.mxu0 0
  %1802 = vmatprep.subr.bf16.mxu0 0
  %1803 = vmatpush1.bf16.msra.mxu0 0
  %1804 = vmatprep.subr.bf16.mxu0 0
  %1805 = vmatpush1.bf16.msra.mxu0 0
  %1806 = vmatprep.subr.bf16.mxu0 0
  %1807 = vmatpush1.bf16.msra.mxu0 0
  %1808 = vmatprep.subr.bf16.mxu0 0
  %1809 = vmatpush1.bf16.msra.mxu0 0
  %1810 = vmatprep.mubr.bf16.mxu0 0
  %1811 = vmatmul.mubr.bf16.gmra.mrb[0].mxu0 %v470
  %v1812 = vpop.f32.mrb[0].mxu0
  %v1813 = vadd.f32 %v1700, %v1812
  %v1814 = vpop.f32.mrb[0].mxu0
  %v1815 = vadd.f32 %v1702, %v1814
  %v1816 = vpop.f32.mrb[0].mxu0
  %v1817 = vadd.f32 %v1704, %v1816
  %v1818 = vpop.f32.mrb[0].mxu0
  %v1819 = vadd.f32 %v1706, %v1818
  %1820 = vmatprep.mubr.bf16.mxu0 0
  %1821 = vmatmul.mubr.bf16.gmra.mrb[0].mxu0 %v479
  %v1822 = vpop.f32.mrb[0].mxu0
  %v1823 = vadd.f32 %v1710, %v1822
  %v1824 = vpop.f32.mrb[0].mxu0
  %v1825 = vadd.f32 %v1712, %v1824
  %v1826 = vpop.f32.mrb[0].mxu0
  %v1827 = vadd.f32 %v1714, %v1826
  %v1828 = vpop.f32.mrb[0].mxu0
  %v1829 = vadd.f32 %v1716, %v1828
  %1830 = vmatprep.mubr.bf16.mxu0 0
  %1831 = vmatmul.mubr.bf16.gmra.mrb[0].mxu0 %v488
  %v1832 = vpop.f32.mrb[0].mxu0
  %v1833 = vadd.f32 %v1720, %v1832
  %v1834 = vpop.f32.mrb[0].mxu0
  %v1835 = vadd.f32 %v1722, %v1834
  %v1836 = vpop.f32.mrb[0].mxu0
  %v1837 = vadd.f32 %v1724, %v1836
  %v1838 = vpop.f32.mrb[0].mxu0
  %v1839 = vadd.f32 %v1726, %v1838
  %1840 = vmatprep.mubr.bf16.mxu0 0
  %1841 = vmatmul.mubr.bf16.gmra.mrb[0].mxu0 %v497
  %v1842 = vpop.f32.mrb[0].mxu0
  %v1843 = vadd.f32 %v1730, %v1842
  %v1844 = vpop.f32.mrb[0].mxu0
  %v1845 = vadd.f32 %v1732, %v1844
  %v1846 = vpop.f32.mrb[0].mxu0
  %v1847 = vadd.f32 %v1734, %v1846
  %v1848 = vpop.f32.mrb[0].mxu0
  %v1849 = vadd.f32 %v1736, %v1848
  %1850 = vmatprep.mubr.bf16.mxu0 0
  %1851 = vmatmul.mubr.bf16.gmra.mrb[0].mxu0 %v506
  %v1852 = vpop.f32.mrb[0].mxu0
  %v1853 = vadd.f32 %v1740, %v1852
  %v1854 = vpop.f32.mrb[0].mxu0
  %v1855 = vadd.f32 %v1742, %v1854
  %v1856 = vpop.f32.mrb[0].mxu0
  %v1857 = vadd.f32 %v1744, %v1856
  %v1858 = vpop.f32.mrb[0].mxu0
  %v1859 = vadd.f32 %v1746, %v1858
  %1860 = vmatprep.mubr.bf16.mxu0 0
  %1861 = vmatmul.mubr.bf16.gmra.mrb[0].mxu0 %v515
  %v1862 = vpop.f32.mrb[0].mxu0
  %v1863 = vadd.f32 %v1750, %v1862
  %v1864 = vpop.f32.mrb[0].mxu0
  %v1865 = vadd.f32 %v1752, %v1864
  %v1866 = vpop.f32.mrb[0].mxu0
  %v1867 = vadd.f32 %v1754, %v1866
  %v1868 = vpop.f32.mrb[0].mxu0
  %v1869 = vadd.f32 %v1756, %v1868
  %1870 = vmatprep.mubr.bf16.mxu0 0
  %1871 = vmatmul.mubr.bf16.gmra.mrb[0].mxu0 %v524
  %v1872 = vpop.f32.mrb[0].mxu0
  %v1873 = vadd.f32 %v1760, %v1872
  %v1874 = vpop.f32.mrb[0].mxu0
  %v1875 = vadd.f32 %v1762, %v1874
  %v1876 = vpop.f32.mrb[0].mxu0
  %v1877 = vadd.f32 %v1764, %v1876
  %v1878 = vpop.f32.mrb[0].mxu0
  %v1879 = vadd.f32 %v1766, %v1878
  %1880 = vmatprep.mubr.bf16.mxu0 0
  %1881 = vmatmul.mubr.bf16.gmra.mrb[0].mxu0 %v533
  %v1882 = vpop.f32.mrb[0].mxu0
  %v1883 = vadd.f32 %v1770, %v1882
  %v1884 = vpop.f32.mrb[0].mxu0
  %v1885 = vadd.f32 %v1772, %v1884
  %v1886 = vpop.f32.mrb[0].mxu0
  %v1887 = vadd.f32 %v1774, %v1886
  %v1888 = vpop.f32.mrb[0].mxu0
  %v1889 = vadd.f32 %v1776, %v1888
  %1890 = vdwg.mxu0
  %1891 = vst [vmem:[%s2] sm:$0xff] %v1813
  %1892 = vst [vmem:[%s2 + $0x8] sm:$0xff] %v1815
  %1893 = vst [vmem:[%s2 + $0x10] sm:$0xff] %v1817
  %1894 = vst [vmem:[%s2 + $0x18] sm:$0xff] %v1819
  %1895 = vst [vmem:[%s2 + $0x20] sm:$0xff] %v1823
  %1896 = vst [vmem:[%s2 + $0x28] sm:$0xff] %v1825
  %1897 = vst [vmem:[%s2 + $0x30] sm:$0xff] %v1827
  %1898 = vst [vmem:[%s2 + $0x38] sm:$0xff] %v1829
  %1899 = vst [vmem:[%s2 + $0x40] sm:$0xff] %v1833
  %1900 = vst [vmem:[%s2 + $0x48] sm:$0xff] %v1835
  %1901 = vst [vmem:[%s2 + $0x50] sm:$0xff] %v1837
  %1902 = vst [vmem:[%s2 + $0x58] sm:$0xff] %v1839
  %1903 = vst [vmem:[%s2 + $0x60] sm:$0xff] %v1843
  %1904 = vst [vmem:[%s2 + $0x68] sm:$0xff] %v1845
  %1905 = vst [vmem:[%s2 + $0x70] sm:$0xff] %v1847
  %1906 = vst [vmem:[%s2 + $0x78] sm:$0xff] %v1849
  %1907 = vst [vmem:[%s2 + $0x80] sm:$0xff] %v1853
  %1908 = vst [vmem:[%s2 + $0x88] sm:$0xff] %v1855
  %1909 = vst [vmem:[%s2 + $0x90] sm:$0xff] %v1857
  %1910 = vst [vmem:[%s2 + $0x98] sm:$0xff] %v1859
  %1911 = vst [vmem:[%s2 + $0xa0] sm:$0xff] %v1863
  %1912 = vst [vmem:[%s2 + $0xa8] sm:$0xff] %v1865
  %1913 = vst [vmem:[%s2 + $0xb0] sm:$0xff] %v1867
  %1914 = vst [vmem:[%s2 + $0xb8] sm:$0xff] %v1869
  %1915 = vst [vmem:[%s2 + $0xc0] sm:$0xff] %v1873
  %1916 = vst [vmem:[%s2 + $0xc8] sm:$0xff] %v1875
  %1917 = vst [vmem:[%s2 + $0xd0] sm:$0xff] %v1877
  %1918 = vst [vmem:[%s2 + $0xd8] sm:$0xff] %v1879
  %1919 = vst [vmem:[%s2 + $0xe0] sm:$0xff] %v1883
  %1920 = vst [vmem:[%s2 + $0xe8] sm:$0xff] %v1885
  %1921 = vst [vmem:[%s2 + $0xf0] sm:$0xff] %v1887
  %1922 = vst [vmem:[%s2 + $0xf8] sm:$0xff] %v1889
  %v1923 = vadd.f32 %v1813, %v1817
  %v1924 = vadd.f32 %v1923, %v1823
  %v1925 = vadd.f32 %v1924, %v1827
  %v1926 = vadd.f32 %v1925, %v1833
  %v1927 = vadd.f32 %v1926, %v1837
  %v1928 = vadd.f32 %v1927, %v1843
  %v1929 = vadd.f32 %v1928, %v1847
  %v1930 = vadd.f32 %v1929, %v1853
  %v1931 = vadd.f32 %v1930, %v1857
  %v1932 = vadd.f32 %v1931, %v1863
  %v1933 = vadd.f32 %v1932, %v1867
  %v1934 = vadd.f32 %v1933, %v1873
  %v1935 = vadd.f32 %v1934, %v1877
  %v1936 = vadd.f32 %v1935, %v1883
  %v1937 = vadd.f32 %v1936, %v1887
  %v1938 = vrot.slane %v1937, 4
  %v1939 = vadd.f32 %v1937, %v1938
  %v1940 = vrot.slane %v1939, 2
  %v1941 = vadd.f32 %v1939, %v1940
  %v1942 = vrot.slane %v1941, 1
  %v1943 = vadd.f32 %v1941, %v1942
  %v1944 = vadd.f32 %v1815, %v1819
  %v1945 = vadd.f32 %v1944, %v1825
  %v1946 = vadd.f32 %v1945, %v1829
  %v1947 = vadd.f32 %v1946, %v1835
  %v1948 = vadd.f32 %v1947, %v1839
  %v1949 = vadd.f32 %v1948, %v1845
  %v1950 = vadd.f32 %v1949, %v1849
  %v1951 = vadd.f32 %v1950, %v1855
  %v1952 = vadd.f32 %v1951, %v1859
  %v1953 = vadd.f32 %v1952, %v1865
  %v1954 = vadd.f32 %v1953, %v1869
  %v1955 = vadd.f32 %v1954, %v1875
  %v1956 = vadd.f32 %v1955, %v1879
  %v1957 = vadd.f32 %v1956, %v1885
  %v1958 = vadd.f32 %v1957, %v1889
  %v1959 = vrot.slane %v1958, 4
  %v1960 = vadd.f32 %v1958, %v1959
  %v1961 = vrot.slane %v1960, 2
  %v1962 = vadd.f32 %v1960, %v1961
  %v1963 = vrot.slane %v1962, 1
  %v1964 = vadd.f32 %v1962, %v1963
  %v1965 = vmul.f32 %v1813, %v1813
  %v1966 = vmul.f32 %v1815, %v1815
  %v1967 = vmul.f32 %v1817, %v1817
  %v1968 = vmul.f32 %v1819, %v1819
  %v1969 = vmul.f32 %v1823, %v1823
  %v1970 = vmul.f32 %v1825, %v1825
  %v1971 = vmul.f32 %v1827, %v1827
  %v1972 = vmul.f32 %v1829, %v1829
  %v1973 = vmul.f32 %v1833, %v1833
  %v1974 = vmul.f32 %v1835, %v1835
  %v1975 = vmul.f32 %v1837, %v1837
  %v1976 = vmul.f32 %v1839, %v1839
  %v1977 = vmul.f32 %v1843, %v1843
  %v1978 = vmul.f32 %v1845, %v1845
  %v1979 = vmul.f32 %v1847, %v1847
  %v1980 = vmul.f32 %v1849, %v1849
  %v1981 = vmul.f32 %v1853, %v1853
  %v1982 = vmul.f32 %v1855, %v1855
  %v1983 = vmul.f32 %v1857, %v1857
  %v1984 = vmul.f32 %v1859, %v1859
  %v1985 = vmul.f32 %v1863, %v1863
  %v1986 = vmul.f32 %v1865, %v1865
  %v1987 = vmul.f32 %v1867, %v1867
  %v1988 = vmul.f32 %v1869, %v1869
  %v1989 = vmul.f32 %v1873, %v1873
  %v1990 = vmul.f32 %v1875, %v1875
  %v1991 = vmul.f32 %v1877, %v1877
  %v1992 = vmul.f32 %v1879, %v1879
  %v1993 = vmul.f32 %v1883, %v1883
  %v1994 = vmul.f32 %v1885, %v1885
  %v1995 = vmul.f32 %v1887, %v1887
  %v1996 = vmul.f32 %v1889, %v1889
  %v1997 = vadd.f32 %v1965, %v1967
  %v1998 = vadd.f32 %v1997, %v1969
  %v1999 = vadd.f32 %v1998, %v1971
  %v2000 = vadd.f32 %v1999, %v1973
  %v2001 = vadd.f32 %v2000, %v1975
  %v2002 = vadd.f32 %v2001, %v1977
  %v2003 = vadd.f32 %v2002, %v1979
  %v2004 = vadd.f32 %v2003, %v1981
  %v2005 = vadd.f32 %v2004, %v1983
  %v2006 = vadd.f32 %v2005, %v1985
  %v2007 = vadd.f32 %v2006, %v1987
  %v2008 = vadd.f32 %v2007, %v1989
  %v2009 = vadd.f32 %v2008, %v1991
  %v2010 = vadd.f32 %v2009, %v1993
  %v2011 = vadd.f32 %v2010, %v1995
  %v2012 = vrot.slane %v2011, 4
  %v2013 = vadd.f32 %v2011, %v2012
  %v2014 = vrot.slane %v2013, 2
  %v2015 = vadd.f32 %v2013, %v2014
  %v2016 = vrot.slane %v2015, 1
  %v2017 = vadd.f32 %v2015, %v2016
  %v2018 = vadd.f32 %v1966, %v1968
  %v2019 = vadd.f32 %v2018, %v1970
  %v2020 = vadd.f32 %v2019, %v1972
  %v2021 = vadd.f32 %v2020, %v1974
  %v2022 = vadd.f32 %v2021, %v1976
  %v2023 = vadd.f32 %v2022, %v1978
  %v2024 = vadd.f32 %v2023, %v1980
  %v2025 = vadd.f32 %v2024, %v1982
  %v2026 = vadd.f32 %v2025, %v1984
  %v2027 = vadd.f32 %v2026, %v1986
  %v2028 = vadd.f32 %v2027, %v1988
  %v2029 = vadd.f32 %v2028, %v1990
  %v2030 = vadd.f32 %v2029, %v1992
  %v2031 = vadd.f32 %v2030, %v1994
  %v2032 = vadd.f32 %v2031, %v1996
  %v2033 = vrot.slane %v2032, 4
  %v2034 = vadd.f32 %v2032, %v2033
  %v2035 = vrot.slane %v2034, 2
  %v2036 = vadd.f32 %v2034, %v2035
  %v2037 = vrot.slane %v2036, 1
  %v2038 = vadd.f32 %v2036, %v2037
  %vm2039 = vcmask 1040384
  %v2040 = vsel %vm2039, %v1943, %v2017
  %v2041 = vsel %vm2039, %v1964, %v2038
  %vm2042 = vcmask 1041408
  %v2043 = vsel %vm2042, %v2040, 0.0
  %v2044 = vsel %vm2042, %v2041, 0.0
  %2045 = vst [vmem:[%s3] sm:$0xff] %v2043
  %2046 = vst [vmem:[%s3 + $0x8] sm:$0xff] %v2044
  // Predicated region
  $region10: #{cnn_autoencoder_forward.21} parent=0 // pred_check
    _
  $region11: #{cnn_autoencoder_forward.21} parent=0 // pred_check_branch
    %2048 = sbr.rel (0) target = $region13
  $region12: #{cnn_autoencoder_forward.21} parent=0 // pred_region
    _
  $region13: #{cnn_autoencoder_forward.21} parent=0 // pred_fallthru
    _
  // Predicated region
  $region14: #{cnn_autoencoder_forward.21} parent=0 // pred_check
    _
  $region15: #{cnn_autoencoder_forward.21} parent=0 // pred_check_branch
    %2050 = sbr.rel (0) target = $region17
  $region16: #{cnn_autoencoder_forward.21} parent=0 // pred_region
    _
  $region17: #{cnn_autoencoder_forward.21} parent=0 // pred_fallthru
    _
  // Predicated region
  $region18: #{cnn_autoencoder_forward.21} parent=0 // pred_check
    _
  $region19: #{cnn_autoencoder_forward.21} parent=0 // pred_check_branch
    %2052 = sbr.rel (0) target = $region21
  $region20: #{cnn_autoencoder_forward.21} parent=0 // pred_region
    _
  $region21: #{cnn_autoencoder_forward.21} parent=0 // pred_fallthru
    _
  // Predicated region
  $region22: #{cnn_autoencoder_forward.21} parent=0 // pred_check
    _
  $region23: #{cnn_autoencoder_forward.21} parent=0 // pred_check_branch
    %2054 = sbr.rel (0) target = $region25
  $region24: #{cnn_autoencoder_forward.21} parent=0 // pred_region
    _
  $region25: #{cnn_autoencoder_forward.21} parent=0 // pred_fallthru
    _

// kernel: cnn_autoencoder_forward.23
$region0: #{cnn_autoencoder_forward.23}
  #allocation0 [shape = 'u32[]', space=smem, size = 0x4, offset = 0x4, fixed_abs, tag = 'smem constant byte address 0x4 - core index']
  #allocation1 [shape = 'u32[144,128]{1,0:T(1,128)}', space=vmem, size = 0x12000, scoped, tag = 'internal scratch']
  %s0 = inlined_call_operand.vmem [shape: bf16[128,2304], index: 0, kind: input, shape index: {}]
  %s1 = inlined_call_operand.vmem [shape: bf16[2304,128], index: 1, kind: input, shape index: {}]
  %s2 = inlined_call_operand.vmem [shape: f32[128,128], index: 2, kind: output, shape index: {0}]
  %s3 = inlined_call_operand.vmem [shape: f32[8,128], index: 3, kind: output, shape index: {1}]
  %4 = xla_tuple %s2, %s3
  %s5 = sld [smem:[#allocation0]]
  $region26: #{cnn_autoencoder_forward.23} parent=0
    _
  %s7 = ssub.s32 1, %s5
  %s8 = scalar_select 0, %s7, %s5
  // Predicated region
  $region2: #{cnn_autoencoder_forward.23} parent=0 // pred_check
    _
  $region3: #{cnn_autoencoder_forward.23} parent=0 // pred_check_branch
    %10 = sbr.rel (0) target = $region5
  $region4: #{cnn_autoencoder_forward.23} parent=0 // pred_region
    _
  $region5: #{cnn_autoencoder_forward.23} parent=0 // pred_fallthru
    _
  // Predicated region
  $region6: #{cnn_autoencoder_forward.23} parent=0 // pred_check
    _
  $region7: #{cnn_autoencoder_forward.23} parent=0 // pred_check_branch
    %12 = sbr.rel (0) target = $region9
  $region8: #{cnn_autoencoder_forward.23} parent=0 // pred_region
    _
  $region9: #{cnn_autoencoder_forward.23} parent=0 // pred_fallthru
    _
  %v14 = vld [vmem:[%s0] sm:$0xff]
  %v15 = vld [vmem:[%s0 + $0x8] sm:$0xff]
  %v16 = vld [vmem:[%s0 + $0x10] sm:$0xff]
  %v17 = vld [vmem:[%s0 + $0x18] sm:$0xff]
  %v18 = vld [vmem:[%s0 + $0x20] sm:$0xff]
  %v19 = vld [vmem:[%s0 + $0x28] sm:$0xff]
  %v20 = vld [vmem:[%s0 + $0x30] sm:$0xff]
  %v21 = vld [vmem:[%s0 + $0x38] sm:$0xff]
  %v22 = vld [vmem:[%s0 + $0x40] sm:$0xff]
  %v23 = vld [vmem:[%s0 + $0x48] sm:$0xff]
  %v24 = vld [vmem:[%s0 + $0x50] sm:$0xff]
  %v25 = vld [vmem:[%s0 + $0x58] sm:$0xff]
  %v26 = vld [vmem:[%s0 + $0x60] sm:$0xff]
  %v27 = vld [vmem:[%s0 + $0x68] sm:$0xff]
  %v28 = vld [vmem:[%s0 + $0x70] sm:$0xff]
  %v29 = vld [vmem:[%s0 + $0x78] sm:$0xff]
  %v30 = vld [vmem:[%s0 + $0x80] sm:$0xff]
  %v31 = vld [vmem:[%s0 + $0x88] sm:$0xff]
  %v32 = vld [vmem:[%s0 + $0x90] sm:$0xff]
  %v33 = vld [vmem:[%s0 + $0x98] sm:$0xff]
  %v34 = vld [vmem:[%s0 + $0xa0] sm:$0xff]
  %v35 = vld [vmem:[%s0 + $0xa8] sm:$0xff]
  %v36 = vld [vmem:[%s0 + $0xb0] sm:$0xff]
  %v37 = vld [vmem:[%s0 + $0xb8] sm:$0xff]
  %v38 = vld [vmem:[%s0 + $0xc0] sm:$0xff]
  %v39 = vld [vmem:[%s0 + $0xc8] sm:$0xff]
  %v40 = vld [vmem:[%s0 + $0xd0] sm:$0xff]
  %v41 = vld [vmem:[%s0 + $0xd8] sm:$0xff]
  %v42 = vld [vmem:[%s0 + $0xe0] sm:$0xff]
  %v43 = vld [vmem:[%s0 + $0xe8] sm:$0xff]
  %v44 = vld [vmem:[%s0 + $0xf0] sm:$0xff]
  %v45 = vld [vmem:[%s0 + $0xf8] sm:$0xff]
  %v46 = vld [vmem:[%s0 + $0x100] sm:$0xff]
  %v47 = vld [vmem:[%s0 + $0x108] sm:$0xff]
  %v48 = vld [vmem:[%s0 + $0x110] sm:$0xff]
  %v49 = vld [vmem:[%s0 + $0x118] sm:$0xff]
  %v50 = vld [vmem:[%s0 + $0x120] sm:$0xff]
  %v51 = vld [vmem:[%s0 + $0x128] sm:$0xff]
  %v52 = vld [vmem:[%s0 + $0x130] sm:$0xff]
  %v53 = vld [vmem:[%s0 + $0x138] sm:$0xff]
  %v54 = vld [vmem:[%s0 + $0x140] sm:$0xff]
  %v55 = vld [vmem:[%s0 + $0x148] sm:$0xff]
  %v56 = vld [vmem:[%s0 + $0x150] sm:$0xff]
  %v57 = vld [vmem:[%s0 + $0x158] sm:$0xff]
  %v58 = vld [vmem:[%s0 + $0x160] sm:$0xff]
  %v59 = vld [vmem:[%s0 + $0x168] sm:$0xff]
  %v60 = vld [vmem:[%s0 + $0x170] sm:$0xff]
  %v61 = vld [vmem:[%s0 + $0x178] sm:$0xff]
  %v62 = vld [vmem:[%s0 + $0x180] sm:$0xff]
  %v63 = vld [vmem:[%s0 + $0x188] sm:$0xff]
  %v64 = vld [vmem:[%s0 + $0x190] sm:$0xff]
  %v65 = vld [vmem:[%s0 + $0x198] sm:$0xff]
  %v66 = vld [vmem:[%s0 + $0x1a0] sm:$0xff]
  %v67 = vld [vmem:[%s0 + $0x1a8] sm:$0xff]
  %v68 = vld [vmem:[%s0 + $0x1b0] sm:$0xff]
  %v69 = vld [vmem:[%s0 + $0x1b8] sm:$0xff]
  %v70 = vld [vmem:[%s0 + $0x1c0] sm:$0xff]
  %v71 = vld [vmem:[%s0 + $0x1c8] sm:$0xff]
  %v72 = vld [vmem:[%s0 + $0x1d0] sm:$0xff]
  %v73 = vld [vmem:[%s0 + $0x1d8] sm:$0xff]
  %v74 = vld [vmem:[%s0 + $0x1e0] sm:$0xff]
  %v75 = vld [vmem:[%s0 + $0x1e8] sm:$0xff]
  %v76 = vld [vmem:[%s0 + $0x1f0] sm:$0xff]
  %v77 = vld [vmem:[%s0 + $0x1f8] sm:$0xff]
  %v78 = vld [vmem:[%s0 + $0x200] sm:$0xff]
  %v79 = vld [vmem:[%s0 + $0x208] sm:$0xff]
  %v80 = vld [vmem:[%s0 + $0x210] sm:$0xff]
  %v81 = vld [vmem:[%s0 + $0x218] sm:$0xff]
  %v82 = vld [vmem:[%s0 + $0x220] sm:$0xff]
  %v83 = vld [vmem:[%s0 + $0x228] sm:$0xff]
  %v84 = vld [vmem:[%s0 + $0x230] sm:$0xff]
  %v85 = vld [vmem:[%s0 + $0x238] sm:$0xff]
  %v86 = vld [vmem:[%s0 + $0x240] sm:$0xff]
  %v87 = vld [vmem:[%s0 + $0x248] sm:$0xff]
  %v88 = vld [vmem:[%s0 + $0x250] sm:$0xff]
  %v89 = vld [vmem:[%s0 + $0x258] sm:$0xff]
  %v90 = vld [vmem:[%s0 + $0x260] sm:$0xff]
  %v91 = vld [vmem:[%s0 + $0x268] sm:$0xff]
  %v92 = vld [vmem:[%s0 + $0x270] sm:$0xff]
  %v93 = vld [vmem:[%s0 + $0x278] sm:$0xff]
  %v94 = vld [vmem:[%s0 + $0x280] sm:$0xff]
  %v95 = vld [vmem:[%s0 + $0x288] sm:$0xff]
  %v96 = vld [vmem:[%s0 + $0x290] sm:$0xff]
  %v97 = vld [vmem:[%s0 + $0x298] sm:$0xff]
  %v98 = vld [vmem:[%s0 + $0x2a0] sm:$0xff]
  %v99 = vld [vmem:[%s0 + $0x2a8] sm:$0xff]
  %v100 = vld [vmem:[%s0 + $0x2b0] sm:$0xff]
  %v101 = vld [vmem:[%s0 + $0x2b8] sm:$0xff]
  %v102 = vld [vmem:[%s0 + $0x2c0] sm:$0xff]
  %v103 = vld [vmem:[%s0 + $0x2c8] sm:$0xff]
  %v104 = vld [vmem:[%s0 + $0x2d0] sm:$0xff]
  %v105 = vld [vmem:[%s0 + $0x2d8] sm:$0xff]
  %v106 = vld [vmem:[%s0 + $0x2e0] sm:$0xff]
  %v107 = vld [vmem:[%s0 + $0x2e8] sm:$0xff]
  %v108 = vld [vmem:[%s0 + $0x2f0] sm:$0xff]
  %v109 = vld [vmem:[%s0 + $0x2f8] sm:$0xff]
  %v110 = vld [vmem:[%s0 + $0x300] sm:$0xff]
  %v111 = vld [vmem:[%s0 + $0x308] sm:$0xff]
  %v112 = vld [vmem:[%s0 + $0x310] sm:$0xff]
  %v113 = vld [vmem:[%s0 + $0x318] sm:$0xff]
  %v114 = vld [vmem:[%s0 + $0x320] sm:$0xff]
  %v115 = vld [vmem:[%s0 + $0x328] sm:$0xff]
  %v116 = vld [vmem:[%s0 + $0x330] sm:$0xff]
  %v117 = vld [vmem:[%s0 + $0x338] sm:$0xff]
  %v118 = vld [vmem:[%s0 + $0x340] sm:$0xff]
  %v119 = vld [vmem:[%s0 + $0x348] sm:$0xff]
  %v120 = vld [vmem:[%s0 + $0x350] sm:$0xff]
  %v121 = vld [vmem:[%s0 + $0x358] sm:$0xff]
  %v122 = vld [vmem:[%s0 + $0x360] sm:$0xff]
  %v123 = vld [vmem:[%s0 + $0x368] sm:$0xff]
  %v124 = vld [vmem:[%s0 + $0x370] sm:$0xff]
  %v125 = vld [vmem:[%s0 + $0x378] sm:$0xff]
  %v126 = vld [vmem:[%s0 + $0x380] sm:$0xff]
  %v127 = vld [vmem:[%s0 + $0x388] sm:$0xff]
  %v128 = vld [vmem:[%s0 + $0x390] sm:$0xff]
  %v129 = vld [vmem:[%s0 + $0x398] sm:$0xff]
  %v130 = vld [vmem:[%s0 + $0x3a0] sm:$0xff]
  %v131 = vld [vmem:[%s0 + $0x3a8] sm:$0xff]
  %v132 = vld [vmem:[%s0 + $0x3b0] sm:$0xff]
  %v133 = vld [vmem:[%s0 + $0x3b8] sm:$0xff]
  %v134 = vld [vmem:[%s0 + $0x3c0] sm:$0xff]
  %v135 = vld [vmem:[%s0 + $0x3c8] sm:$0xff]
  %v136 = vld [vmem:[%s0 + $0x3d0] sm:$0xff]
  %v137 = vld [vmem:[%s0 + $0x3d8] sm:$0xff]
  %v138 = vld [vmem:[%s0 + $0x3e0] sm:$0xff]
  %v139 = vld [vmem:[%s0 + $0x3e8] sm:$0xff]
  %v140 = vld [vmem:[%s0 + $0x3f0] sm:$0xff]
  %v141 = vld [vmem:[%s0 + $0x3f8] sm:$0xff]
  %v142 = vld [vmem:[%s0 + $0x400] sm:$0xff]
  %v143 = vld [vmem:[%s0 + $0x408] sm:$0xff]
  %v144 = vld [vmem:[%s0 + $0x410] sm:$0xff]
  %v145 = vld [vmem:[%s0 + $0x418] sm:$0xff]
  %v146 = vld [vmem:[%s0 + $0x420] sm:$0xff]
  %v147 = vld [vmem:[%s0 + $0x428] sm:$0xff]
  %v148 = vld [vmem:[%s0 + $0x430] sm:$0xff]
  %v149 = vld [vmem:[%s0 + $0x438] sm:$0xff]
  %v150 = vld [vmem:[%s0 + $0x440] sm:$0xff]
  %v151 = vld [vmem:[%s0 + $0x448] sm:$0xff]
  %v152 = vld [vmem:[%s0 + $0x450] sm:$0xff]
  %v153 = vld [vmem:[%s0 + $0x458] sm:$0xff]
  %v154 = vld [vmem:[%s0 + $0x460] sm:$0xff]
  %v155 = vld [vmem:[%s0 + $0x468] sm:$0xff]
  %v156 = vld [vmem:[%s0 + $0x470] sm:$0xff]
  %v157 = vld [vmem:[%s0 + $0x478] sm:$0xff]
  %v158 = vld [vmem:[%s1] sm:$0xf]
  %v159 = vld [vmem:[%s1 + $0x4] sm:$0xf]
  %v160 = vld [vmem:[%s1 + $0x8] sm:$0xf]
  %v161 = vld [vmem:[%s1 + $0xc] sm:$0xf]
  %v162 = vld [vmem:[%s1 + $0x10] sm:$0xf]
  %v163 = vld [vmem:[%s1 + $0x14] sm:$0xf]
  %v164 = vld [vmem:[%s1 + $0x18] sm:$0xf]
  %v165 = vld [vmem:[%s1 + $0x1c] sm:$0xf]
  %v166 = vld [vmem:[%s1 + $0x20] sm:$0xf]
  %v167 = vld [vmem:[%s1 + $0x24] sm:$0xf]
  %v168 = vld [vmem:[%s1 + $0x28] sm:$0xf]
  %v169 = vld [vmem:[%s1 + $0x2c] sm:$0xf]
  %v170 = vld [vmem:[%s1 + $0x30] sm:$0xf]
  %v171 = vld [vmem:[%s1 + $0x34] sm:$0xf]
  %v172 = vld [vmem:[%s1 + $0x38] sm:$0xf]
  %v173 = vld [vmem:[%s1 + $0x3c] sm:$0xf]
  %v174 = vld [vmem:[%s1 + $0x40] sm:$0xf]
  %v175 = vld [vmem:[%s1 + $0x44] sm:$0xf]
  %v176 = vld [vmem:[%s1 + $0x48] sm:$0xf]
  %v177 = vld [vmem:[%s1 + $0x4c] sm:$0xf]
  %v178 = vld [vmem:[%s1 + $0x50] sm:$0xf]
  %v179 = vld [vmem:[%s1 + $0x54] sm:$0xf]
  %v180 = vld [vmem:[%s1 + $0x58] sm:$0xf]
  %v181 = vld [vmem:[%s1 + $0x5c] sm:$0xf]
  %v182 = vld [vmem:[%s1 + $0x60] sm:$0xf]
  %v183 = vld [vmem:[%s1 + $0x64] sm:$0xf]
  %v184 = vld [vmem:[%s1 + $0x68] sm:$0xf]
  %v185 = vld [vmem:[%s1 + $0x6c] sm:$0xf]
  %v186 = vld [vmem:[%s1 + $0x70] sm:$0xf]
  %v187 = vld [vmem:[%s1 + $0x74] sm:$0xf]
  %v188 = vld [vmem:[%s1 + $0x78] sm:$0xf]
  %v189 = vld [vmem:[%s1 + $0x7c] sm:$0xf]
  %v190 = vld [vmem:[%s1 + $0x80] sm:$0xf]
  %v191 = vld [vmem:[%s1 + $0x84] sm:$0xf]
  %v192 = vld [vmem:[%s1 + $0x88] sm:$0xf]
  %v193 = vld [vmem:[%s1 + $0x8c] sm:$0xf]
  %v194 = vld [vmem:[%s1 + $0x90] sm:$0xf]
  %v195 = vld [vmem:[%s1 + $0x94] sm:$0xf]
  %v196 = vld [vmem:[%s1 + $0x98] sm:$0xf]
  %v197 = vld [vmem:[%s1 + $0x9c] sm:$0xf]
  %v198 = vld [vmem:[%s1 + $0xa0] sm:$0xf]
  %v199 = vld [vmem:[%s1 + $0xa4] sm:$0xf]
  %v200 = vld [vmem:[%s1 + $0xa8] sm:$0xf]
  %v201 = vld [vmem:[%s1 + $0xac] sm:$0xf]
  %v202 = vld [vmem:[%s1 + $0xb0] sm:$0xf]
  %v203 = vld [vmem:[%s1 + $0xb4] sm:$0xf]
  %v204 = vld [vmem:[%s1 + $0xb8] sm:$0xf]
  %v205 = vld [vmem:[%s1 + $0xbc] sm:$0xf]
  %v206 = vld [vmem:[%s1 + $0xc0] sm:$0xf]
  %v207 = vld [vmem:[%s1 + $0xc4] sm:$0xf]
  %v208 = vld [vmem:[%s1 + $0xc8] sm:$0xf]
  %v209 = vld [vmem:[%s1 + $0xcc] sm:$0xf]
  %v210 = vld [vmem:[%s1 + $0xd0] sm:$0xf]
  %v211 = vld [vmem:[%s1 + $0xd4] sm:$0xf]
  %v212 = vld [vmem:[%s1 + $0xd8] sm:$0xf]
  %v213 = vld [vmem:[%s1 + $0xdc] sm:$0xf]
  %v214 = vld [vmem:[%s1 + $0xe0] sm:$0xf]
  %v215 = vld [vmem:[%s1 + $0xe4] sm:$0xf]
  %v216 = vld [vmem:[%s1 + $0xe8] sm:$0xf]
  %v217 = vld [vmem:[%s1 + $0xec] sm:$0xf]
  %v218 = vld [vmem:[%s1 + $0xf0] sm:$0xf]
  %v219 = vld [vmem:[%s1 + $0xf4] sm:$0xf]
  %v220 = vld [vmem:[%s1 + $0xf8] sm:$0xf]
  %v221 = vld [vmem:[%s1 + $0xfc] sm:$0xf]
  %v222 = vld [vmem:[%s1 + $0x100] sm:$0xf]
  %v223 = vld [vmem:[%s1 + $0x104] sm:$0xf]
  %v224 = vld [vmem:[%s1 + $0x108] sm:$0xf]
  %v225 = vld [vmem:[%s1 + $0x10c] sm:$0xf]
  %v226 = vld [vmem:[%s1 + $0x110] sm:$0xf]
  %v227 = vld [vmem:[%s1 + $0x114] sm:$0xf]
  %v228 = vld [vmem:[%s1 + $0x118] sm:$0xf]
  %v229 = vld [vmem:[%s1 + $0x11c] sm:$0xf]
  %v230 = vld [vmem:[%s1 + $0x120] sm:$0xf]
  %v231 = vld [vmem:[%s1 + $0x124] sm:$0xf]
  %v232 = vld [vmem:[%s1 + $0x128] sm:$0xf]
  %v233 = vld [vmem:[%s1 + $0x12c] sm:$0xf]
  %v234 = vld [vmem:[%s1 + $0x130] sm:$0xf]
  %v235 = vld [vmem:[%s1 + $0x134] sm:$0xf]
  %v236 = vld [vmem:[%s1 + $0x138] sm:$0xf]
  %v237 = vld [vmem:[%s1 + $0x13c] sm:$0xf]
  %v238 = vld [vmem:[%s1 + $0x140] sm:$0xf]
  %v239 = vld [vmem:[%s1 + $0x144] sm:$0xf]
  %v240 = vld [vmem:[%s1 + $0x148] sm:$0xf]
  %v241 = vld [vmem:[%s1 + $0x14c] sm:$0xf]
  %v242 = vld [vmem:[%s1 + $0x150] sm:$0xf]
  %v243 = vld [vmem:[%s1 + $0x154] sm:$0xf]
  %v244 = vld [vmem:[%s1 + $0x158] sm:$0xf]
  %v245 = vld [vmem:[%s1 + $0x15c] sm:$0xf]
  %v246 = vld [vmem:[%s1 + $0x160] sm:$0xf]
  %v247 = vld [vmem:[%s1 + $0x164] sm:$0xf]
  %v248 = vld [vmem:[%s1 + $0x168] sm:$0xf]
  %v249 = vld [vmem:[%s1 + $0x16c] sm:$0xf]
  %v250 = vld [vmem:[%s1 + $0x170] sm:$0xf]
  %v251 = vld [vmem:[%s1 + $0x174] sm:$0xf]
  %v252 = vld [vmem:[%s1 + $0x178] sm:$0xf]
  %v253 = vld [vmem:[%s1 + $0x17c] sm:$0xf]
  %v254 = vld [vmem:[%s1 + $0x180] sm:$0xf]
  %v255 = vld [vmem:[%s1 + $0x184] sm:$0xf]
  %v256 = vld [vmem:[%s1 + $0x188] sm:$0xf]
  %v257 = vld [vmem:[%s1 + $0x18c] sm:$0xf]
  %v258 = vld [vmem:[%s1 + $0x190] sm:$0xf]
  %v259 = vld [vmem:[%s1 + $0x194] sm:$0xf]
  %v260 = vld [vmem:[%s1 + $0x198] sm:$0xf]
  %v261 = vld [vmem:[%s1 + $0x19c] sm:$0xf]
  %v262 = vld [vmem:[%s1 + $0x1a0] sm:$0xf]
  %v263 = vld [vmem:[%s1 + $0x1a4] sm:$0xf]
  %v264 = vld [vmem:[%s1 + $0x1a8] sm:$0xf]
  %v265 = vld [vmem:[%s1 + $0x1ac] sm:$0xf]
  %v266 = vld [vmem:[%s1 + $0x1b0] sm:$0xf]
  %v267 = vld [vmem:[%s1 + $0x1b4] sm:$0xf]
  %v268 = vld [vmem:[%s1 + $0x1b8] sm:$0xf]
  %v269 = vld [vmem:[%s1 + $0x1bc] sm:$0xf]
  %v270 = vld [vmem:[%s1 + $0x1c0] sm:$0xf]
  %v271 = vld [vmem:[%s1 + $0x1c4] sm:$0xf]
  %v272 = vld [vmem:[%s1 + $0x1c8] sm:$0xf]
  %v273 = vld [vmem:[%s1 + $0x1cc] sm:$0xf]
  %v274 = vld [vmem:[%s1 + $0x1d0] sm:$0xf]
  %v275 = vld [vmem:[%s1 + $0x1d4] sm:$0xf]
  %v276 = vld [vmem:[%s1 + $0x1d8] sm:$0xf]
  %v277 = vld [vmem:[%s1 + $0x1dc] sm:$0xf]
  %v278 = vld [vmem:[%s1 + $0x1e0] sm:$0xf]
  %v279 = vld [vmem:[%s1 + $0x1e4] sm:$0xf]
  %v280 = vld [vmem:[%s1 + $0x1e8] sm:$0xf]
  %v281 = vld [vmem:[%s1 + $0x1ec] sm:$0xf]
  %v282 = vld [vmem:[%s1 + $0x1f0] sm:$0xf]
  %v283 = vld [vmem:[%s1 + $0x1f4] sm:$0xf]
  %v284 = vld [vmem:[%s1 + $0x1f8] sm:$0xf]
  %v285 = vld [vmem:[%s1 + $0x1fc] sm:$0xf]
  %v286 = vld [vmem:[%s1 + $0x200] sm:$0xf]
  %v287 = vld [vmem:[%s1 + $0x204] sm:$0xf]
  %v288 = vld [vmem:[%s1 + $0x208] sm:$0xf]
  %v289 = vld [vmem:[%s1 + $0x20c] sm:$0xf]
  %v290 = vld [vmem:[%s1 + $0x210] sm:$0xf]
  %v291 = vld [vmem:[%s1 + $0x214] sm:$0xf]
  %v292 = vld [vmem:[%s1 + $0x218] sm:$0xf]
  %v293 = vld [vmem:[%s1 + $0x21c] sm:$0xf]
  %v294 = vld [vmem:[%s1 + $0x220] sm:$0xf]
  %v295 = vld [vmem:[%s1 + $0x224] sm:$0xf]
  %v296 = vld [vmem:[%s1 + $0x228] sm:$0xf]
  %v297 = vld [vmem:[%s1 + $0x22c] sm:$0xf]
  %v298 = vld [vmem:[%s1 + $0x230] sm:$0xf]
  %v299 = vld [vmem:[%s1 + $0x234] sm:$0xf]
  %v300 = vld [vmem:[%s1 + $0x238] sm:$0xf]
  %v301 = vld [vmem:[%s1 + $0x23c] sm:$0xf]
  %v302 = vld [vmem:[%s1 + $0x240] sm:$0xf]
  %v303 = vld [vmem:[%s1 + $0x244] sm:$0xf]
  %v304 = vld [vmem:[%s1 + $0x248] sm:$0xf]
  %v305 = vld [vmem:[%s1 + $0x24c] sm:$0xf]
  %v306 = vld [vmem:[%s1 + $0x250] sm:$0xf]
  %v307 = vld [vmem:[%s1 + $0x254] sm:$0xf]
  %v308 = vld [vmem:[%s1 + $0x258] sm:$0xf]
  %v309 = vld [vmem:[%s1 + $0x25c] sm:$0xf]
  %v310 = vld [vmem:[%s1 + $0x260] sm:$0xf]
  %v311 = vld [vmem:[%s1 + $0x264] sm:$0xf]
  %v312 = vld [vmem:[%s1 + $0x268] sm:$0xf]
  %v313 = vld [vmem:[%s1 + $0x26c] sm:$0xf]
  %v314 = vld [vmem:[%s1 + $0x270] sm:$0xf]
  %v315 = vld [vmem:[%s1 + $0x274] sm:$0xf]
  %v316 = vld [vmem:[%s1 + $0x278] sm:$0xf]
  %v317 = vld [vmem:[%s1 + $0x27c] sm:$0xf]
  %v318 = vld [vmem:[%s1 + $0x280] sm:$0xf]
  %v319 = vld [vmem:[%s1 + $0x284] sm:$0xf]
  %v320 = vld [vmem:[%s1 + $0x288] sm:$0xf]
  %v321 = vld [vmem:[%s1 + $0x28c] sm:$0xf]
  %v322 = vld [vmem:[%s1 + $0x290] sm:$0xf]
  %v323 = vld [vmem:[%s1 + $0x294] sm:$0xf]
  %v324 = vld [vmem:[%s1 + $0x298] sm:$0xf]
  %v325 = vld [vmem:[%s1 + $0x29c] sm:$0xf]
  %v326 = vld [vmem:[%s1 + $0x2a0] sm:$0xf]
  %v327 = vld [vmem:[%s1 + $0x2a4] sm:$0xf]
  %v328 = vld [vmem:[%s1 + $0x2a8] sm:$0xf]
  %v329 = vld [vmem:[%s1 + $0x2ac] sm:$0xf]
  %v330 = vld [vmem:[%s1 + $0x2b0] sm:$0xf]
  %v331 = vld [vmem:[%s1 + $0x2b4] sm:$0xf]
  %v332 = vld [vmem:[%s1 + $0x2b8] sm:$0xf]
  %v333 = vld [vmem:[%s1 + $0x2bc] sm:$0xf]
  %v334 = vld [vmem:[%s1 + $0x2c0] sm:$0xf]
  %v335 = vld [vmem:[%s1 + $0x2c4] sm:$0xf]
  %v336 = vld [vmem:[%s1 + $0x2c8] sm:$0xf]
  %v337 = vld [vmem:[%s1 + $0x2cc] sm:$0xf]
  %v338 = vld [vmem:[%s1 + $0x2d0] sm:$0xf]
  %v339 = vld [vmem:[%s1 + $0x2d4] sm:$0xf]
  %v340 = vld [vmem:[%s1 + $0x2d8] sm:$0xf]
  %v341 = vld [vmem:[%s1 + $0x2dc] sm:$0xf]
  %v342 = vld [vmem:[%s1 + $0x2e0] sm:$0xf]
  %v343 = vld [vmem:[%s1 + $0x2e4] sm:$0xf]
  %v344 = vld [vmem:[%s1 + $0x2e8] sm:$0xf]
  %v345 = vld [vmem:[%s1 + $0x2ec] sm:$0xf]
  %v346 = vld [vmem:[%s1 + $0x2f0] sm:$0xf]
  %v347 = vld [vmem:[%s1 + $0x2f4] sm:$0xf]
  %v348 = vld [vmem:[%s1 + $0x2f8] sm:$0xf]
  %v349 = vld [vmem:[%s1 + $0x2fc] sm:$0xf]
  %v350 = vld [vmem:[%s1 + $0x300] sm:$0xf]
  %v351 = vld [vmem:[%s1 + $0x304] sm:$0xf]
  %v352 = vld [vmem:[%s1 + $0x308] sm:$0xf]
  %v353 = vld [vmem:[%s1 + $0x30c] sm:$0xf]
  %v354 = vld [vmem:[%s1 + $0x310] sm:$0xf]
  %v355 = vld [vmem:[%s1 + $0x314] sm:$0xf]
  %v356 = vld [vmem:[%s1 + $0x318] sm:$0xf]
  %v357 = vld [vmem:[%s1 + $0x31c] sm:$0xf]
  %v358 = vld [vmem:[%s1 + $0x320] sm:$0xf]
  %v359 = vld [vmem:[%s1 + $0x324] sm:$0xf]
  %v360 = vld [vmem:[%s1 + $0x328] sm:$0xf]
  %v361 = vld [vmem:[%s1 + $0x32c] sm:$0xf]
  %v362 = vld [vmem:[%s1 + $0x330] sm:$0xf]
  %v363 = vld [vmem:[%s1 + $0x334] sm:$0xf]
  %v364 = vld [vmem:[%s1 + $0x338] sm:$0xf]
  %v365 = vld [vmem:[%s1 + $0x33c] sm:$0xf]
  %v366 = vld [vmem:[%s1 + $0x340] sm:$0xf]
  %v367 = vld [vmem:[%s1 + $0x344] sm:$0xf]
  %v368 = vld [vmem:[%s1 + $0x348] sm:$0xf]
  %v369 = vld [vmem:[%s1 + $0x34c] sm:$0xf]
  %v370 = vld [vmem:[%s1 + $0x350] sm:$0xf]
  %v371 = vld [vmem:[%s1 + $0x354] sm:$0xf]
  %v372 = vld [vmem:[%s1 + $0x358] sm:$0xf]
  %v373 = vld [vmem:[%s1 + $0x35c] sm:$0xf]
  %v374 = vld [vmem:[%s1 + $0x360] sm:$0xf]
  %v375 = vld [vmem:[%s1 + $0x364] sm:$0xf]
  %v376 = vld [vmem:[%s1 + $0x368] sm:$0xf]
  %v377 = vld [vmem:[%s1 + $0x36c] sm:$0xf]
  %v378 = vld [vmem:[%s1 + $0x370] sm:$0xf]
  %v379 = vld [vmem:[%s1 + $0x374] sm:$0xf]
  %v380 = vld [vmem:[%s1 + $0x378] sm:$0xf]
  %v381 = vld [vmem:[%s1 + $0x37c] sm:$0xf]
  %v382 = vld [vmem:[%s1 + $0x380] sm:$0xf]
  %v383 = vld [vmem:[%s1 + $0x384] sm:$0xf]
  %v384 = vld [vmem:[%s1 + $0x388] sm:$0xf]
  %v385 = vld [vmem:[%s1 + $0x38c] sm:$0xf]
  %v386 = vld [vmem:[%s1 + $0x390] sm:$0xf]
  %v387 = vld [vmem:[%s1 + $0x394] sm:$0xf]
  %v388 = vld [vmem:[%s1 + $0x398] sm:$0xf]
  %v389 = vld [vmem:[%s1 + $0x39c] sm:$0xf]
  %v390 = vld [vmem:[%s1 + $0x3a0] sm:$0xf]
  %v391 = vld [vmem:[%s1 + $0x3a4] sm:$0xf]
  %v392 = vld [vmem:[%s1 + $0x3a8] sm:$0xf]
  %v393 = vld [vmem:[%s1 + $0x3ac] sm:$0xf]
  %v394 = vld [vmem:[%s1 + $0x3b0] sm:$0xf]
  %v395 = vld [vmem:[%s1 + $0x3b4] sm:$0xf]
  %v396 = vld [vmem:[%s1 + $0x3b8] sm:$0xf]
  %v397 = vld [vmem:[%s1 + $0x3bc] sm:$0xf]
  %v398 = vld [vmem:[%s1 + $0x3c0] sm:$0xf]
  %v399 = vld [vmem:[%s1 + $0x3c4] sm:$0xf]
  %v400 = vld [vmem:[%s1 + $0x3c8] sm:$0xf]
  %v401 = vld [vmem:[%s1 + $0x3cc] sm:$0xf]
  %v402 = vld [vmem:[%s1 + $0x3d0] sm:$0xf]
  %v403 = vld [vmem:[%s1 + $0x3d4] sm:$0xf]
  %v404 = vld [vmem:[%s1 + $0x3d8] sm:$0xf]
  %v405 = vld [vmem:[%s1 + $0x3dc] sm:$0xf]
  %v406 = vld [vmem:[%s1 + $0x3e0] sm:$0xf]
  %v407 = vld [vmem:[%s1 + $0x3e4] sm:$0xf]
  %v408 = vld [vmem:[%s1 + $0x3e8] sm:$0xf]
  %v409 = vld [vmem:[%s1 + $0x3ec] sm:$0xf]
  %v410 = vld [vmem:[%s1 + $0x3f0] sm:$0xf]
  %v411 = vld [vmem:[%s1 + $0x3f4] sm:$0xf]
  %v412 = vld [vmem:[%s1 + $0x3f8] sm:$0xf]
  %v413 = vld [vmem:[%s1 + $0x3fc] sm:$0xf]
  %v414 = vld [vmem:[%s1 + $0x400] sm:$0xf]
  %v415 = vld [vmem:[%s1 + $0x404] sm:$0xf]
  %v416 = vld [vmem:[%s1 + $0x408] sm:$0xf]
  %v417 = vld [vmem:[%s1 + $0x40c] sm:$0xf]
  %v418 = vld [vmem:[%s1 + $0x410] sm:$0xf]
  %v419 = vld [vmem:[%s1 + $0x414] sm:$0xf]
  %v420 = vld [vmem:[%s1 + $0x418] sm:$0xf]
  %v421 = vld [vmem:[%s1 + $0x41c] sm:$0xf]
  %v422 = vld [vmem:[%s1 + $0x420] sm:$0xf]
  %v423 = vld [vmem:[%s1 + $0x424] sm:$0xf]
  %v424 = vld [vmem:[%s1 + $0x428] sm:$0xf]
  %v425 = vld [vmem:[%s1 + $0x42c] sm:$0xf]
  %v426 = vld [vmem:[%s1 + $0x430] sm:$0xf]
  %v427 = vld [vmem:[%s1 + $0x434] sm:$0xf]
  %v428 = vld [vmem:[%s1 + $0x438] sm:$0xf]
  %v429 = vld [vmem:[%s1 + $0x43c] sm:$0xf]
  %v430 = vld [vmem:[%s1 + $0x440] sm:$0xf]
  %v431 = vld [vmem:[%s1 + $0x444] sm:$0xf]
  %v432 = vld [vmem:[%s1 + $0x448] sm:$0xf]
  %v433 = vld [vmem:[%s1 + $0x44c] sm:$0xf]
  %v434 = vld [vmem:[%s1 + $0x450] sm:$0xf]
  %v435 = vld [vmem:[%s1 + $0x454] sm:$0xf]
  %v436 = vld [vmem:[%s1 + $0x458] sm:$0xf]
  %v437 = vld [vmem:[%s1 + $0x45c] sm:$0xf]
  %v438 = vld [vmem:[%s1 + $0x460] sm:$0xf]
  %v439 = vld [vmem:[%s1 + $0x464] sm:$0xf]
  %v440 = vld [vmem:[%s1 + $0x468] sm:$0xf]
  %v441 = vld [vmem:[%s1 + $0x46c] sm:$0xf]
  %v442 = vld [vmem:[%s1 + $0x470] sm:$0xf]
  %v443 = vld [vmem:[%s1 + $0x474] sm:$0xf]
  %v444 = vld [vmem:[%s1 + $0x478] sm:$0xf]
  %v445 = vld [vmem:[%s1 + $0x47c] sm:$0xf]
  %v590 = vunpack.c.l.b16 %v14
  %v591 = vunpack.c.h.b16 %v14
  %v592 = vunpack.c.l.b16 %v15
  %v593 = vunpack.c.h.b16 %v15
  %v594 = vunpack.c.l.b16 %v16
  %v595 = vunpack.c.h.b16 %v16
  %v596 = vunpack.c.l.b16 %v17
  %v597 = vunpack.c.h.b16 %v17
  %v598 = vunpack.c.l.b16 %v18
  %v599 = vunpack.c.h.b16 %v18
  %v600 = vunpack.c.l.b16 %v19
  %v601 = vunpack.c.h.b16 %v19
  %v602 = vunpack.c.l.b16 %v20
  %v603 = vunpack.c.h.b16 %v20
  %v604 = vunpack.c.l.b16 %v21
  %v605 = vunpack.c.h.b16 %v21
  %v606 = vunpack.c.l.b16 %v22
  %v607 = vunpack.c.h.b16 %v22
  %v608 = vunpack.c.l.b16 %v23
  %v609 = vunpack.c.h.b16 %v23
  %v610 = vunpack.c.l.b16 %v24
  %v611 = vunpack.c.h.b16 %v24
  %v612 = vunpack.c.l.b16 %v25
  %v613 = vunpack.c.h.b16 %v25
  %v614 = vunpack.c.l.b16 %v26
  %v615 = vunpack.c.h.b16 %v26
  %v616 = vunpack.c.l.b16 %v27
  %v617 = vunpack.c.h.b16 %v27
  %v618 = vunpack.c.l.b16 %v28
  %v619 = vunpack.c.h.b16 %v28
  %v620 = vunpack.c.l.b16 %v29
  %v621 = vunpack.c.h.b16 %v29
  %v622 = vunpack.c.l.b16 %v30
  %v623 = vunpack.c.h.b16 %v30
  %v624 = vunpack.c.l.b16 %v31
  %v625 = vunpack.c.h.b16 %v31
  %v626 = vunpack.c.l.b16 %v32
  %v627 = vunpack.c.h.b16 %v32
  %v628 = vunpack.c.l.b16 %v33
  %v629 = vunpack.c.h.b16 %v33
  %v630 = vunpack.c.l.b16 %v34
  %v631 = vunpack.c.h.b16 %v34
  %v632 = vunpack.c.l.b16 %v35
  %v633 = vunpack.c.h.b16 %v35
  %v634 = vunpack.c.l.b16 %v36
  %v635 = vunpack.c.h.b16 %v36
  %v636 = vunpack.c.l.b16 %v37
  %v637 = vunpack.c.h.b16 %v37
  %v638 = vunpack.c.l.b16 %v38
  %v639 = vunpack.c.h.b16 %v38
  %v640 = vunpack.c.l.b16 %v39
  %v641 = vunpack.c.h.b16 %v39
  %v642 = vunpack.c.l.b16 %v40
  %v643 = vunpack.c.h.b16 %v40
  %v644 = vunpack.c.l.b16 %v41
  %v645 = vunpack.c.h.b16 %v41
  %v646 = vunpack.c.l.b16 %v42
  %v647 = vunpack.c.h.b16 %v42
  %v648 = vunpack.c.l.b16 %v43
  %v649 = vunpack.c.h.b16 %v43
  %v650 = vunpack.c.l.b16 %v44
  %v651 = vunpack.c.h.b16 %v44
  %v652 = vunpack.c.l.b16 %v45
  %v653 = vunpack.c.h.b16 %v45
  %v654 = vunpack.c.l.b16 %v46
  %v655 = vunpack.c.h.b16 %v46
  %v656 = vunpack.c.l.b16 %v47
  %v657 = vunpack.c.h.b16 %v47
  %v658 = vunpack.c.l.b16 %v48
  %v659 = vunpack.c.h.b16 %v48
  %v660 = vunpack.c.l.b16 %v49
  %v661 = vunpack.c.h.b16 %v49
  %v662 = vunpack.c.l.b16 %v50
  %v663 = vunpack.c.h.b16 %v50
  %v664 = vunpack.c.l.b16 %v51
  %v665 = vunpack.c.h.b16 %v51
  %v666 = vunpack.c.l.b16 %v52
  %v667 = vunpack.c.h.b16 %v52
  %v668 = vunpack.c.l.b16 %v53
  %v669 = vunpack.c.h.b16 %v53
  %v670 = vunpack.c.l.b16 %v54
  %v671 = vunpack.c.h.b16 %v54
  %v672 = vunpack.c.l.b16 %v55
  %v673 = vunpack.c.h.b16 %v55
  %v674 = vunpack.c.l.b16 %v56
  %v675 = vunpack.c.h.b16 %v56
  %v676 = vunpack.c.l.b16 %v57
  %v677 = vunpack.c.h.b16 %v57
  %v678 = vunpack.c.l.b16 %v58
  %v679 = vunpack.c.h.b16 %v58
  %v680 = vunpack.c.l.b16 %v59
  %v681 = vunpack.c.h.b16 %v59
  %v682 = vunpack.c.l.b16 %v60
  %v683 = vunpack.c.h.b16 %v60
  %v684 = vunpack.c.l.b16 %v61
  %v685 = vunpack.c.h.b16 %v61
  %v686 = vunpack.c.l.b16 %v62
  %v687 = vunpack.c.h.b16 %v62
  %v688 = vunpack.c.l.b16 %v63
  %v689 = vunpack.c.h.b16 %v63
  %v690 = vunpack.c.l.b16 %v64
  %v691 = vunpack.c.h.b16 %v64
  %v692 = vunpack.c.l.b16 %v65
  %v693 = vunpack.c.h.b16 %v65
  %v694 = vunpack.c.l.b16 %v66
  %v695 = vunpack.c.h.b16 %v66
  %v696 = vunpack.c.l.b16 %v67
  %v697 = vunpack.c.h.b16 %v67
  %v698 = vunpack.c.l.b16 %v68
  %v699 = vunpack.c.h.b16 %v68
  %v700 = vunpack.c.l.b16 %v69
  %v701 = vunpack.c.h.b16 %v69
  %v702 = vunpack.c.l.b16 %v70
  %v703 = vunpack.c.h.b16 %v70
  %v704 = vunpack.c.l.b16 %v71
  %v705 = vunpack.c.h.b16 %v71
  %v706 = vunpack.c.l.b16 %v72
  %v707 = vunpack.c.h.b16 %v72
  %v708 = vunpack.c.l.b16 %v73
  %v709 = vunpack.c.h.b16 %v73
  %v710 = vunpack.c.l.b16 %v74
  %v711 = vunpack.c.h.b16 %v74
  %v712 = vunpack.c.l.b16 %v75
  %v713 = vunpack.c.h.b16 %v75
  %v714 = vunpack.c.l.b16 %v76
  %v715 = vunpack.c.h.b16 %v76
  %v716 = vunpack.c.l.b16 %v77
  %v717 = vunpack.c.h.b16 %v77
  %v718 = vunpack.c.l.b16 %v78
  %v719 = vunpack.c.h.b16 %v78
  %v720 = vunpack.c.l.b16 %v79
  %v721 = vunpack.c.h.b16 %v79
  %v722 = vunpack.c.l.b16 %v80
  %v723 = vunpack.c.h.b16 %v80
  %v724 = vunpack.c.l.b16 %v81
  %v725 = vunpack.c.h.b16 %v81
  %v726 = vunpack.c.l.b16 %v82
  %v727 = vunpack.c.h.b16 %v82
  %v728 = vunpack.c.l.b16 %v83
  %v729 = vunpack.c.h.b16 %v83
  %v730 = vunpack.c.l.b16 %v84
  %v731 = vunpack.c.h.b16 %v84
  %v732 = vunpack.c.l.b16 %v85
  %v733 = vunpack.c.h.b16 %v85
  %v734 = vunpack.c.l.b16 %v86
  %v735 = vunpack.c.h.b16 %v86
  %v736 = vunpack.c.l.b16 %v87
  %v737 = vunpack.c.h.b16 %v87
  %v738 = vunpack.c.l.b16 %v88
  %v739 = vunpack.c.h.b16 %v88
  %v740 = vunpack.c.l.b16 %v89
  %v741 = vunpack.c.h.b16 %v89
  %v742 = vunpack.c.l.b16 %v90
  %v743 = vunpack.c.h.b16 %v90
  %v744 = vunpack.c.l.b16 %v91
  %v745 = vunpack.c.h.b16 %v91
  %v746 = vunpack.c.l.b16 %v92
  %v747 = vunpack.c.h.b16 %v92
  %v748 = vunpack.c.l.b16 %v93
  %v749 = vunpack.c.h.b16 %v93
  %v750 = vunpack.c.l.b16 %v94
  %v751 = vunpack.c.h.b16 %v94
  %v752 = vunpack.c.l.b16 %v95
  %v753 = vunpack.c.h.b16 %v95
  %v754 = vunpack.c.l.b16 %v96
  %v755 = vunpack.c.h.b16 %v96
  %v756 = vunpack.c.l.b16 %v97
  %v757 = vunpack.c.h.b16 %v97
  %v758 = vunpack.c.l.b16 %v98
  %v759 = vunpack.c.h.b16 %v98
  %v760 = vunpack.c.l.b16 %v99
  %v761 = vunpack.c.h.b16 %v99
  %v762 = vunpack.c.l.b16 %v100
  %v763 = vunpack.c.h.b16 %v100
  %v764 = vunpack.c.l.b16 %v101
  %v765 = vunpack.c.h.b16 %v101
  %v766 = vunpack.c.l.b16 %v102
  %v767 = vunpack.c.h.b16 %v102
  %v768 = vunpack.c.l.b16 %v103
  %v769 = vunpack.c.h.b16 %v103
  %v770 = vunpack.c.l.b16 %v104
  %v771 = vunpack.c.h.b16 %v104
  %v772 = vunpack.c.l.b16 %v105
  %v773 = vunpack.c.h.b16 %v105
  %v774 = vunpack.c.l.b16 %v106
  %v775 = vunpack.c.h.b16 %v106
  %v776 = vunpack.c.l.b16 %v107
  %v777 = vunpack.c.h.b16 %v107
  %v778 = vunpack.c.l.b16 %v108
  %v779 = vunpack.c.h.b16 %v108
  %v780 = vunpack.c.l.b16 %v109
  %v781 = vunpack.c.h.b16 %v109
  %v782 = vunpack.c.l.b16 %v110
  %v783 = vunpack.c.h.b16 %v110
  %v784 = vunpack.c.l.b16 %v111
  %v785 = vunpack.c.h.b16 %v111
  %v786 = vunpack.c.l.b16 %v112
  %v787 = vunpack.c.h.b16 %v112
  %v788 = vunpack.c.l.b16 %v113
  %v789 = vunpack.c.h.b16 %v113
  %v790 = vunpack.c.l.b16 %v114
  %v791 = vunpack.c.h.b16 %v114
  %v792 = vunpack.c.l.b16 %v115
  %v793 = vunpack.c.h.b16 %v115
  %v794 = vunpack.c.l.b16 %v116
  %v795 = vunpack.c.h.b16 %v116
  %v796 = vunpack.c.l.b16 %v117
  %v797 = vunpack.c.h.b16 %v117
  %v798 = vunpack.c.l.b16 %v118
  %v799 = vunpack.c.h.b16 %v118
  %v800 = vunpack.c.l.b16 %v119
  %v801 = vunpack.c.h.b16 %v119
  %v802 = vunpack.c.l.b16 %v120
  %v803 = vunpack.c.h.b16 %v120
  %v804 = vunpack.c.l.b16 %v121
  %v805 = vunpack.c.h.b16 %v121
  %v806 = vunpack.c.l.b16 %v122
  %v807 = vunpack.c.h.b16 %v122
  %v808 = vunpack.c.l.b16 %v123
  %v809 = vunpack.c.h.b16 %v123
  %v810 = vunpack.c.l.b16 %v124
  %v811 = vunpack.c.h.b16 %v124
  %v812 = vunpack.c.l.b16 %v125
  %v813 = vunpack.c.h.b16 %v125
  %v814 = vunpack.c.l.b16 %v126
  %v815 = vunpack.c.h.b16 %v126
  %v816 = vunpack.c.l.b16 %v127
  %v817 = vunpack.c.h.b16 %v127
  %v818 = vunpack.c.l.b16 %v128
  %v819 = vunpack.c.h.b16 %v128
  %v820 = vunpack.c.l.b16 %v129
  %v821 = vunpack.c.h.b16 %v129
  %v822 = vunpack.c.l.b16 %v130
  %v823 = vunpack.c.h.b16 %v130
  %v824 = vunpack.c.l.b16 %v131
  %v825 = vunpack.c.h.b16 %v131
  %v826 = vunpack.c.l.b16 %v132
  %v827 = vunpack.c.h.b16 %v132
  %v828 = vunpack.c.l.b16 %v133
  %v829 = vunpack.c.h.b16 %v133
  %v830 = vunpack.c.l.b16 %v134
  %v831 = vunpack.c.h.b16 %v134
  %v832 = vunpack.c.l.b16 %v135
  %v833 = vunpack.c.h.b16 %v135
  %v834 = vunpack.c.l.b16 %v136
  %v835 = vunpack.c.h.b16 %v136
  %v836 = vunpack.c.l.b16 %v137
  %v837 = vunpack.c.h.b16 %v137
  %v838 = vunpack.c.l.b16 %v138
  %v839 = vunpack.c.h.b16 %v138
  %v840 = vunpack.c.l.b16 %v139
  %v841 = vunpack.c.h.b16 %v139
  %v842 = vunpack.c.l.b16 %v140
  %v843 = vunpack.c.h.b16 %v140
  %v844 = vunpack.c.l.b16 %v141
  %v845 = vunpack.c.h.b16 %v141
  %v846 = vunpack.c.l.b16 %v142
  %v847 = vunpack.c.h.b16 %v142
  %v848 = vunpack.c.l.b16 %v143
  %v849 = vunpack.c.h.b16 %v143
  %v850 = vunpack.c.l.b16 %v144
  %v851 = vunpack.c.h.b16 %v144
  %v852 = vunpack.c.l.b16 %v145
  %v853 = vunpack.c.h.b16 %v145
  %v854 = vunpack.c.l.b16 %v146
  %v855 = vunpack.c.h.b16 %v146
  %v856 = vunpack.c.l.b16 %v147
  %v857 = vunpack.c.h.b16 %v147
  %v858 = vunpack.c.l.b16 %v148
  %v859 = vunpack.c.h.b16 %v148
  %v860 = vunpack.c.l.b16 %v149
  %v861 = vunpack.c.h.b16 %v149
  %v862 = vunpack.c.l.b16 %v150
  %v863 = vunpack.c.h.b16 %v150
  %v864 = vunpack.c.l.b16 %v151
  %v865 = vunpack.c.h.b16 %v151
  %v866 = vunpack.c.l.b16 %v152
  %v867 = vunpack.c.h.b16 %v152
  %v868 = vunpack.c.l.b16 %v153
  %v869 = vunpack.c.h.b16 %v153
  %v870 = vunpack.c.l.b16 %v154
  %v871 = vunpack.c.h.b16 %v154
  %v872 = vunpack.c.l.b16 %v155
  %v873 = vunpack.c.h.b16 %v155
  %v874 = vunpack.c.l.b16 %v156
  %v875 = vunpack.c.h.b16 %v156
  %v876 = vunpack.c.l.b16 %v157
  %v877 = vunpack.c.h.b16 %v157
  %v878 = vpack.c.b16 %v608, %v590
  %v879 = vpack.c.b16 %v609, %v591
  %v880 = vpack.c.b16 %v610, %v592
  %v881 = vpack.c.b16 %v611, %v593
  %v882 = vpack.c.b16 %v612, %v594
  %v883 = vpack.c.b16 %v613, %v595
  %v884 = vpack.c.b16 %v614, %v596
  %v885 = vpack.c.b16 %v615, %v597
  %v886 = vpack.c.b16 %v616, %v598
  %v887 = vpack.c.b16 %v617, %v599
  %v888 = vpack.c.b16 %v618, %v600
  %v889 = vpack.c.b16 %v619, %v601
  %v890 = vpack.c.b16 %v620, %v602
  %v891 = vpack.c.b16 %v621, %v603
  %v892 = vpack.c.b16 %v622, %v604
  %v893 = vpack.c.b16 %v623, %v605
  %v894 = vpack.c.b16 %v624, %v606
  %v895 = vpack.c.b16 %v625, %v607
  %v896 = vpack.c.b16 %v644, %v626
  %v897 = vpack.c.b16 %v645, %v627
  %v898 = vpack.c.b16 %v646, %v628
  %v899 = vpack.c.b16 %v647, %v629
  %v900 = vpack.c.b16 %v648, %v630
  %v901 = vpack.c.b16 %v649, %v631
  %v902 = vpack.c.b16 %v650, %v632
  %v903 = vpack.c.b16 %v651, %v633
  %v904 = vpack.c.b16 %v652, %v634
  %v905 = vpack.c.b16 %v653, %v635
  %v906 = vpack.c.b16 %v654, %v636
  %v907 = vpack.c.b16 %v655, %v637
  %v908 = vpack.c.b16 %v656, %v638
  %v909 = vpack.c.b16 %v657, %v639
  %v910 = vpack.c.b16 %v658, %v640
  %v911 = vpack.c.b16 %v659, %v641
  %v912 = vpack.c.b16 %v660, %v642
  %v913 = vpack.c.b16 %v661, %v643
  %v914 = vpack.c.b16 %v680, %v662
  %v915 = vpack.c.b16 %v681, %v663
  %v916 = vpack.c.b16 %v682, %v664
  %v917 = vpack.c.b16 %v683, %v665
  %v918 = vpack.c.b16 %v684, %v666
  %v919 = vpack.c.b16 %v685, %v667
  %v920 = vpack.c.b16 %v686, %v668
  %v921 = vpack.c.b16 %v687, %v669
  %v922 = vpack.c.b16 %v688, %v670
  %v923 = vpack.c.b16 %v689, %v671
  %v924 = vpack.c.b16 %v690, %v672
  %v925 = vpack.c.b16 %v691, %v673
  %v926 = vpack.c.b16 %v692, %v674
  %v927 = vpack.c.b16 %v693, %v675
  %v928 = vpack.c.b16 %v694, %v676
  %v929 = vpack.c.b16 %v695, %v677
  %v930 = vpack.c.b16 %v696, %v678
  %v931 = vpack.c.b16 %v697, %v679
  %v932 = vpack.c.b16 %v716, %v698
  %v933 = vpack.c.b16 %v717, %v699
  %v934 = vpack.c.b16 %v718, %v700
  %v935 = vpack.c.b16 %v719, %v701
  %v936 = vpack.c.b16 %v720, %v702
  %v937 = vpack.c.b16 %v721, %v703
  %v938 = vpack.c.b16 %v722, %v704
  %v939 = vpack.c.b16 %v723, %v705
  %v940 = vpack.c.b16 %v724, %v706
  %v941 = vpack.c.b16 %v725, %v707
  %v942 = vpack.c.b16 %v726, %v708
  %v943 = vpack.c.b16 %v727, %v709
  %v944 = vpack.c.b16 %v728, %v710
  %v945 = vpack.c.b16 %v729, %v711
  %v946 = vpack.c.b16 %v730, %v712
  %v947 = vpack.c.b16 %v731, %v713
  %v948 = vpack.c.b16 %v732, %v714
  %v949 = vpack.c.b16 %v733, %v715
  %v950 = vpack.c.b16 %v752, %v734
  %v951 = vpack.c.b16 %v753, %v735
  %v952 = vpack.c.b16 %v754, %v736
  %v953 = vpack.c.b16 %v755, %v737
  %v954 = vpack.c.b16 %v756, %v738
  %v955 = vpack.c.b16 %v757, %v739
  %v956 = vpack.c.b16 %v758, %v740
  %v957 = vpack.c.b16 %v759, %v741
  %v958 = vpack.c.b16 %v760, %v742
  %v959 = vpack.c.b16 %v761, %v743
  %v960 = vpack.c.b16 %v762, %v744
  %v961 = vpack.c.b16 %v763, %v745
  %v962 = vpack.c.b16 %v764, %v746
  %v963 = vpack.c.b16 %v765, %v747
  %v964 = vpack.c.b16 %v766, %v748
  %v965 = vpack.c.b16 %v767, %v749
  %v966 = vpack.c.b16 %v768, %v750
  %v967 = vpack.c.b16 %v769, %v751
  %v968 = vpack.c.b16 %v788, %v770
  %v969 = vpack.c.b16 %v789, %v771
  %v970 = vpack.c.b16 %v790, %v772
  %v971 = vpack.c.b16 %v791, %v773
  %v972 = vpack.c.b16 %v792, %v774
  %v973 = vpack.c.b16 %v793, %v775
  %v974 = vpack.c.b16 %v794, %v776
  %v975 = vpack.c.b16 %v795, %v777
  %v976 = vpack.c.b16 %v796, %v778
  %v977 = vpack.c.b16 %v797, %v779
  %v978 = vpack.c.b16 %v798, %v780
  %v979 = vpack.c.b16 %v799, %v781
  %v980 = vpack.c.b16 %v800, %v782
  %v981 = vpack.c.b16 %v801, %v783
  %v982 = vpack.c.b16 %v802, %v784
  %v983 = vpack.c.b16 %v803, %v785
  %v984 = vpack.c.b16 %v804, %v786
  %v985 = vpack.c.b16 %v805, %v787
  %v986 = vpack.c.b16 %v824, %v806
  %v987 = vpack.c.b16 %v825, %v807
  %v988 = vpack.c.b16 %v826, %v808
  %v989 = vpack.c.b16 %v827, %v809
  %v990 = vpack.c.b16 %v828, %v810
  %v991 = vpack.c.b16 %v829, %v811
  %v992 = vpack.c.b16 %v830, %v812
  %v993 = vpack.c.b16 %v831, %v813
  %v994 = vpack.c.b16 %v832, %v814
  %v995 = vpack.c.b16 %v833, %v815
  %v996 = vpack.c.b16 %v834, %v816
  %v997 = vpack.c.b16 %v835, %v817
  %v998 = vpack.c.b16 %v836, %v818
  %v999 = vpack.c.b16 %v837, %v819
  %v1000 = vpack.c.b16 %v838, %v820
  %v1001 = vpack.c.b16 %v839, %v821
  %v1002 = vpack.c.b16 %v840, %v822
  %v1003 = vpack.c.b16 %v841, %v823
  %v1004 = vpack.c.b16 %v860, %v842
  %v1005 = vpack.c.b16 %v861, %v843
  %v1006 = vpack.c.b16 %v862, %v844
  %v1007 = vpack.c.b16 %v863, %v845
  %v1008 = vpack.c.b16 %v864, %v846
  %v1009 = vpack.c.b16 %v865, %v847
  %v1010 = vpack.c.b16 %v866, %v848
  %v1011 = vpack.c.b16 %v867, %v849
  %v1012 = vpack.c.b16 %v868, %v850
  %v1013 = vpack.c.b16 %v869, %v851
  %v1014 = vpack.c.b16 %v870, %v852
  %v1015 = vpack.c.b16 %v871, %v853
  %v1016 = vpack.c.b16 %v872, %v854
  %v1017 = vpack.c.b16 %v873, %v855
  %v1018 = vpack.c.b16 %v874, %v856
  %v1019 = vpack.c.b16 %v875, %v857
  %v1020 = vpack.c.b16 %v876, %v858
  %v1021 = vpack.c.b16 %v877, %v859
  %v1454 = vunpack.c.l.b16 %v158
  %v1455 = vunpack.c.l.b16 %v159
  %v1456 = vunpack.c.l.b16 %v160
  %v1457 = vunpack.c.l.b16 %v161
  %v1458 = vunpack.c.l.b16 %v162
  %v1459 = vunpack.c.l.b16 %v163
  %v1460 = vunpack.c.l.b16 %v164
  %v1461 = vunpack.c.l.b16 %v165
  %v1462 = vunpack.c.l.b16 %v166
  %v1463 = vunpack.c.l.b16 %v167
  %v1464 = vunpack.c.l.b16 %v168
  %v1465 = vunpack.c.l.b16 %v169
  %v1466 = vunpack.c.l.b16 %v170
  %v1467 = vunpack.c.l.b16 %v171
  %v1468 = vunpack.c.l.b16 %v172
  %v1469 = vunpack.c.l.b16 %v173
  %v1470 = vunpack.c.l.b16 %v174
  %v1471 = vunpack.c.l.b16 %v175
  %v1472 = vunpack.c.l.b16 %v176
  %v1473 = vunpack.c.l.b16 %v177
  %v1474 = vunpack.c.l.b16 %v178
  %v1475 = vunpack.c.l.b16 %v179
  %v1476 = vunpack.c.l.b16 %v180
  %v1477 = vunpack.c.l.b16 %v181
  %v1478 = vunpack.c.l.b16 %v182
  %v1479 = vunpack.c.l.b16 %v183
  %v1480 = vunpack.c.l.b16 %v184
  %v1481 = vunpack.c.l.b16 %v185
  %v1482 = vunpack.c.l.b16 %v186
  %v1483 = vunpack.c.l.b16 %v187
  %v1484 = vunpack.c.l.b16 %v188
  %v1485 = vunpack.c.l.b16 %v189
  %v1486 = vunpack.c.l.b16 %v190
  %v1487 = vunpack.c.l.b16 %v191
  %v1488 = vunpack.c.l.b16 %v192
  %v1489 = vunpack.c.l.b16 %v193
  %v1490 = vunpack.c.l.b16 %v194
  %v1491 = vunpack.c.l.b16 %v195
  %v1492 = vunpack.c.l.b16 %v196
  %v1493 = vunpack.c.l.b16 %v197
  %v1494 = vunpack.c.l.b16 %v198
  %v1495 = vunpack.c.l.b16 %v199
  %v1496 = vunpack.c.l.b16 %v200
  %v1497 = vunpack.c.l.b16 %v201
  %v1498 = vunpack.c.l.b16 %v202
  %v1499 = vunpack.c.l.b16 %v203
  %v1500 = vunpack.c.l.b16 %v204
  %v1501 = vunpack.c.l.b16 %v205
  %v1502 = vunpack.c.l.b16 %v206
  %v1503 = vunpack.c.l.b16 %v207
  %v1504 = vunpack.c.l.b16 %v208
  %v1505 = vunpack.c.l.b16 %v209
  %v1506 = vunpack.c.l.b16 %v210
  %v1507 = vunpack.c.l.b16 %v211
  %v1508 = vunpack.c.l.b16 %v212
  %v1509 = vunpack.c.l.b16 %v213
  %v1510 = vunpack.c.l.b16 %v214
  %v1511 = vunpack.c.l.b16 %v215
  %v1512 = vunpack.c.l.b16 %v216
  %v1513 = vunpack.c.l.b16 %v217
  %v1514 = vunpack.c.l.b16 %v218
  %v1515 = vunpack.c.l.b16 %v219
  %v1516 = vunpack.c.l.b16 %v220
  %v1517 = vunpack.c.l.b16 %v221
  %v1518 = vunpack.c.l.b16 %v222
  %v1519 = vunpack.c.l.b16 %v223
  %v1520 = vunpack.c.l.b16 %v224
  %v1521 = vunpack.c.l.b16 %v225
  %v1522 = vunpack.c.l.b16 %v226
  %v1523 = vunpack.c.l.b16 %v227
  %v1524 = vunpack.c.l.b16 %v228
  %v1525 = vunpack.c.l.b16 %v229
  %v1526 = vunpack.c.l.b16 %v230
  %v1527 = vunpack.c.l.b16 %v231
  %v1528 = vunpack.c.l.b16 %v232
  %v1529 = vunpack.c.l.b16 %v233
  %v1530 = vunpack.c.l.b16 %v234
  %v1531 = vunpack.c.l.b16 %v235
  %v1532 = vunpack.c.l.b16 %v236
  %v1533 = vunpack.c.l.b16 %v237
  %v1534 = vunpack.c.l.b16 %v238
  %v1535 = vunpack.c.l.b16 %v239
  %v1536 = vunpack.c.l.b16 %v240
  %v1537 = vunpack.c.l.b16 %v241
  %v1538 = vunpack.c.l.b16 %v242
  %v1539 = vunpack.c.l.b16 %v243
  %v1540 = vunpack.c.l.b16 %v244
  %v1541 = vunpack.c.l.b16 %v245
  %v1542 = vunpack.c.l.b16 %v246
  %v1543 = vunpack.c.l.b16 %v247
  %v1544 = vunpack.c.l.b16 %v248
  %v1545 = vunpack.c.l.b16 %v249
  %v1546 = vunpack.c.l.b16 %v250
  %v1547 = vunpack.c.l.b16 %v251
  %v1548 = vunpack.c.l.b16 %v252
  %v1549 = vunpack.c.l.b16 %v253
  %v1550 = vunpack.c.l.b16 %v254
  %v1551 = vunpack.c.l.b16 %v255
  %v1552 = vunpack.c.l.b16 %v256
  %v1553 = vunpack.c.l.b16 %v257
  %v1554 = vunpack.c.l.b16 %v258
  %v1555 = vunpack.c.l.b16 %v259
  %v1556 = vunpack.c.l.b16 %v260
  %v1557 = vunpack.c.l.b16 %v261
  %v1558 = vunpack.c.l.b16 %v262
  %v1559 = vunpack.c.l.b16 %v263
  %v1560 = vunpack.c.l.b16 %v264
  %v1561 = vunpack.c.l.b16 %v265
  %v1562 = vunpack.c.l.b16 %v266
  %v1563 = vunpack.c.l.b16 %v267
  %v1564 = vunpack.c.l.b16 %v268
  %v1565 = vunpack.c.l.b16 %v269
  %v1566 = vunpack.c.l.b16 %v270
  %v1567 = vunpack.c.l.b16 %v271
  %v1568 = vunpack.c.l.b16 %v272
  %v1569 = vunpack.c.l.b16 %v273
  %v1570 = vunpack.c.l.b16 %v274
  %v1571 = vunpack.c.l.b16 %v275
  %v1572 = vunpack.c.l.b16 %v276
  %v1573 = vunpack.c.l.b16 %v277
  %v1574 = vunpack.c.l.b16 %v278
  %v1575 = vunpack.c.l.b16 %v279
  %v1576 = vunpack.c.l.b16 %v280
  %v1577 = vunpack.c.l.b16 %v281
  %v1578 = vunpack.c.l.b16 %v282
  %v1579 = vunpack.c.l.b16 %v283
  %v1580 = vunpack.c.l.b16 %v284
  %v1581 = vunpack.c.l.b16 %v285
  %v1582 = vunpack.c.l.b16 %v286
  %v1583 = vunpack.c.l.b16 %v287
  %v1584 = vunpack.c.l.b16 %v288
  %v1585 = vunpack.c.l.b16 %v289
  %v1586 = vunpack.c.l.b16 %v290
  %v1587 = vunpack.c.l.b16 %v291
  %v1588 = vunpack.c.l.b16 %v292
  %v1589 = vunpack.c.l.b16 %v293
  %v1590 = vunpack.c.l.b16 %v294
  %v1591 = vunpack.c.l.b16 %v295
  %v1592 = vunpack.c.l.b16 %v296
  %v1593 = vunpack.c.l.b16 %v297
  %v1594 = vunpack.c.l.b16 %v298
  %v1595 = vunpack.c.l.b16 %v299
  %v1596 = vunpack.c.l.b16 %v300
  %v1597 = vunpack.c.l.b16 %v301
  %v1598 = vunpack.c.l.b16 %v302
  %v1599 = vunpack.c.l.b16 %v303
  %v1600 = vunpack.c.l.b16 %v304
  %v1601 = vunpack.c.l.b16 %v305
  %v1602 = vunpack.c.l.b16 %v306
  %v1603 = vunpack.c.l.b16 %v307
  %v1604 = vunpack.c.l.b16 %v308
  %v1605 = vunpack.c.l.b16 %v309
  %v1606 = vunpack.c.l.b16 %v310
  %v1607 = vunpack.c.l.b16 %v311
  %v1608 = vunpack.c.l.b16 %v312
  %v1609 = vunpack.c.l.b16 %v313
  %v1610 = vunpack.c.l.b16 %v314
  %v1611 = vunpack.c.l.b16 %v315
  %v1612 = vunpack.c.l.b16 %v316
  %v1613 = vunpack.c.l.b16 %v317
  %v1614 = vunpack.c.l.b16 %v318
  %v1615 = vunpack.c.l.b16 %v319
  %v1616 = vunpack.c.l.b16 %v320
  %v1617 = vunpack.c.l.b16 %v321
  %v1618 = vunpack.c.l.b16 %v322
  %v1619 = vunpack.c.l.b16 %v323
  %v1620 = vunpack.c.l.b16 %v324
  %v1621 = vunpack.c.l.b16 %v325
  %v1622 = vunpack.c.l.b16 %v326
  %v1623 = vunpack.c.l.b16 %v327
  %v1624 = vunpack.c.l.b16 %v328
  %v1625 = vunpack.c.l.b16 %v329
  %v1626 = vunpack.c.l.b16 %v330
  %v1627 = vunpack.c.l.b16 %v331
  %v1628 = vunpack.c.l.b16 %v332
  %v1629 = vunpack.c.l.b16 %v333
  %v1630 = vunpack.c.l.b16 %v334
  %v1631 = vunpack.c.l.b16 %v335
  %v1632 = vunpack.c.l.b16 %v336
  %v1633 = vunpack.c.l.b16 %v337
  %v1634 = vunpack.c.l.b16 %v338
  %v1635 = vunpack.c.l.b16 %v339
  %v1636 = vunpack.c.l.b16 %v340
  %v1637 = vunpack.c.l.b16 %v341
  %v1638 = vunpack.c.l.b16 %v342
  %v1639 = vunpack.c.l.b16 %v343
  %v1640 = vunpack.c.l.b16 %v344
  %v1641 = vunpack.c.l.b16 %v345
  %v1642 = vunpack.c.l.b16 %v346
  %v1643 = vunpack.c.l.b16 %v347
  %v1644 = vunpack.c.l.b16 %v348
  %v1645 = vunpack.c.l.b16 %v349
  %v1646 = vunpack.c.l.b16 %v350
  %v1647 = vunpack.c.l.b16 %v351
  %v1648 = vunpack.c.l.b16 %v352
  %v1649 = vunpack.c.l.b16 %v353
  %v1650 = vunpack.c.l.b16 %v354
  %v1651 = vunpack.c.l.b16 %v355
  %v1652 = vunpack.c.l.b16 %v356
  %v1653 = vunpack.c.l.b16 %v357
  %v1654 = vunpack.c.l.b16 %v358
  %v1655 = vunpack.c.l.b16 %v359
  %v1656 = vunpack.c.l.b16 %v360
  %v1657 = vunpack.c.l.b16 %v361
  %v1658 = vunpack.c.l.b16 %v362
  %v1659 = vunpack.c.l.b16 %v363
  %v1660 = vunpack.c.l.b16 %v364
  %v1661 = vunpack.c.l.b16 %v365
  %v1662 = vunpack.c.l.b16 %v366
  %v1663 = vunpack.c.l.b16 %v367
  %v1664 = vunpack.c.l.b16 %v368
  %v1665 = vunpack.c.l.b16 %v369
  %v1666 = vunpack.c.l.b16 %v370
  %v1667 = vunpack.c.l.b16 %v371
  %v1668 = vunpack.c.l.b16 %v372
  %v1669 = vunpack.c.l.b16 %v373
  %v1670 = vunpack.c.l.b16 %v374
  %v1671 = vunpack.c.l.b16 %v375
  %v1672 = vunpack.c.l.b16 %v376
  %v1673 = vunpack.c.l.b16 %v377
  %v1674 = vunpack.c.l.b16 %v378
  %v1675 = vunpack.c.l.b16 %v379
  %v1676 = vunpack.c.l.b16 %v380
  %v1677 = vunpack.c.l.b16 %v381
  %v1678 = vunpack.c.l.b16 %v382
  %v1679 = vunpack.c.l.b16 %v383
  %v1680 = vunpack.c.l.b16 %v384
  %v1681 = vunpack.c.l.b16 %v385
  %v1682 = vunpack.c.l.b16 %v386
  %v1683 = vunpack.c.l.b16 %v387
  %v1684 = vunpack.c.l.b16 %v388
  %v1685 = vunpack.c.l.b16 %v389
  %v1686 = vunpack.c.l.b16 %v390
  %v1687 = vunpack.c.l.b16 %v391
  %v1688 = vunpack.c.l.b16 %v392
  %v1689 = vunpack.c.l.b16 %v393
  %v1690 = vunpack.c.l.b16 %v394
  %v1691 = vunpack.c.l.b16 %v395
  %v1692 = vunpack.c.l.b16 %v396
  %v1693 = vunpack.c.l.b16 %v397
  %v1694 = vunpack.c.l.b16 %v398
  %v1695 = vunpack.c.l.b16 %v399
  %v1696 = vunpack.c.l.b16 %v400
  %v1697 = vunpack.c.l.b16 %v401
  %v1698 = vunpack.c.l.b16 %v402
  %v1699 = vunpack.c.l.b16 %v403
  %v1700 = vunpack.c.l.b16 %v404
  %v1701 = vunpack.c.l.b16 %v405
  %v1702 = vunpack.c.l.b16 %v406
  %v1703 = vunpack.c.l.b16 %v407
  %v1704 = vunpack.c.l.b16 %v408
  %v1705 = vunpack.c.l.b16 %v409
  %v1706 = vunpack.c.l.b16 %v410
  %v1707 = vunpack.c.l.b16 %v411
  %v1708 = vunpack.c.l.b16 %v412
  %v1709 = vunpack.c.l.b16 %v413
  %v1710 = vunpack.c.l.b16 %v414
  %v1711 = vunpack.c.l.b16 %v415
  %v1712 = vunpack.c.l.b16 %v416
  %v1713 = vunpack.c.l.b16 %v417
  %v1714 = vunpack.c.l.b16 %v418
  %v1715 = vunpack.c.l.b16 %v419
  %v1716 = vunpack.c.l.b16 %v420
  %v1717 = vunpack.c.l.b16 %v421
  %v1718 = vunpack.c.l.b16 %v422
  %v1719 = vunpack.c.l.b16 %v423
  %v1720 = vunpack.c.l.b16 %v424
  %v1721 = vunpack.c.l.b16 %v425
  %v1722 = vunpack.c.l.b16 %v426
  %v1723 = vunpack.c.l.b16 %v427
  %v1724 = vunpack.c.l.b16 %v428
  %v1725 = vunpack.c.l.b16 %v429
  %v1726 = vunpack.c.l.b16 %v430
  %v1727 = vunpack.c.l.b16 %v431
  %v1728 = vunpack.c.l.b16 %v432
  %v1729 = vunpack.c.l.b16 %v433
  %v1730 = vunpack.c.l.b16 %v434
  %v1731 = vunpack.c.l.b16 %v435
  %v1732 = vunpack.c.l.b16 %v436
  %v1733 = vunpack.c.l.b16 %v437
  %v1734 = vunpack.c.l.b16 %v438
  %v1735 = vunpack.c.l.b16 %v439
  %v1736 = vunpack.c.l.b16 %v440
  %v1737 = vunpack.c.l.b16 %v441
  %v1738 = vunpack.c.l.b16 %v442
  %v1739 = vunpack.c.l.b16 %v443
  %v1740 = vunpack.c.l.b16 %v444
  %v1741 = vunpack.c.l.b16 %v445
  %v1742 = vpack.c.b16 %v1455, %v1454
  %v1743 = vpack.c.b16 %v1457, %v1456
  %v1744 = vpack.c.b16 %v1459, %v1458
  %v1745 = vpack.c.b16 %v1461, %v1460
  %v1746 = vpack.c.b16 %v1463, %v1462
  %v1747 = vpack.c.b16 %v1465, %v1464
  %v1748 = vpack.c.b16 %v1467, %v1466
  %v1749 = vpack.c.b16 %v1469, %v1468
  %v1750 = vpack.c.b16 %v1471, %v1470
  %v1751 = vpack.c.b16 %v1473, %v1472
  %v1752 = vpack.c.b16 %v1475, %v1474
  %v1753 = vpack.c.b16 %v1477, %v1476
  %v1754 = vpack.c.b16 %v1479, %v1478
  %v1755 = vpack.c.b16 %v1481, %v1480
  %v1756 = vpack.c.b16 %v1483, %v1482
  %v1757 = vpack.c.b16 %v1485, %v1484
  %v1758 = vpack.c.b16 %v1487, %v1486
  %v1759 = vpack.c.b16 %v1489, %v1488
  %v1760 = vpack.c.b16 %v1491, %v1490
  %v1761 = vpack.c.b16 %v1493, %v1492
  %v1762 = vpack.c.b16 %v1495, %v1494
  %v1763 = vpack.c.b16 %v1497, %v1496
  %v1764 = vpack.c.b16 %v1499, %v1498
  %v1765 = vpack.c.b16 %v1501, %v1500
  %v1766 = vpack.c.b16 %v1503, %v1502
  %v1767 = vpack.c.b16 %v1505, %v1504
  %v1768 = vpack.c.b16 %v1507, %v1506
  %v1769 = vpack.c.b16 %v1509, %v1508
  %v1770 = vpack.c.b16 %v1511, %v1510
  %v1771 = vpack.c.b16 %v1513, %v1512
  %v1772 = vpack.c.b16 %v1515, %v1514
  %v1773 = vpack.c.b16 %v1517, %v1516
  %v1774 = vpack.c.b16 %v1519, %v1518
  %v1775 = vpack.c.b16 %v1521, %v1520
  %v1776 = vpack.c.b16 %v1523, %v1522
  %v1777 = vpack.c.b16 %v1525, %v1524
  %v1778 = vpack.c.b16 %v1527, %v1526
  %v1779 = vpack.c.b16 %v1529, %v1528
  %v1780 = vpack.c.b16 %v1531, %v1530
  %v1781 = vpack.c.b16 %v1533, %v1532
  %v1782 = vpack.c.b16 %v1535, %v1534
  %v1783 = vpack.c.b16 %v1537, %v1536
  %v1784 = vpack.c.b16 %v1539, %v1538
  %v1785 = vpack.c.b16 %v1541, %v1540
  %v1786 = vpack.c.b16 %v1543, %v1542
  %v1787 = vpack.c.b16 %v1545, %v1544
  %v1788 = vpack.c.b16 %v1547, %v1546
  %v1789 = vpack.c.b16 %v1549, %v1548
  %v1790 = vpack.c.b16 %v1551, %v1550
  %v1791 = vpack.c.b16 %v1553, %v1552
  %v1792 = vpack.c.b16 %v1555, %v1554
  %v1793 = vpack.c.b16 %v1557, %v1556
  %v1794 = vpack.c.b16 %v1559, %v1558
  %v1795 = vpack.c.b16 %v1561, %v1560
  %v1796 = vpack.c.b16 %v1563, %v1562
  %v1797 = vpack.c.b16 %v1565, %v1564
  %v1798 = vpack.c.b16 %v1567, %v1566
  %v1799 = vpack.c.b16 %v1569, %v1568
  %v1800 = vpack.c.b16 %v1571, %v1570
  %v1801 = vpack.c.b16 %v1573, %v1572
  %v1802 = vpack.c.b16 %v1575, %v1574
  %v1803 = vpack.c.b16 %v1577, %v1576
  %v1804 = vpack.c.b16 %v1579, %v1578
  %v1805 = vpack.c.b16 %v1581, %v1580
  %v1806 = vpack.c.b16 %v1583, %v1582
  %v1807 = vpack.c.b16 %v1585, %v1584
  %v1808 = vpack.c.b16 %v1587, %v1586
  %v1809 = vpack.c.b16 %v1589, %v1588
  %v1810 = vpack.c.b16 %v1591, %v1590
  %v1811 = vpack.c.b16 %v1593, %v1592
  %v1812 = vpack.c.b16 %v1595, %v1594
  %v1813 = vpack.c.b16 %v1597, %v1596
  %v1814 = vpack.c.b16 %v1599, %v1598
  %v1815 = vpack.c.b16 %v1601, %v1600
  %v1816 = vpack.c.b16 %v1603, %v1602
  %v1817 = vpack.c.b16 %v1605, %v1604
  %v1818 = vpack.c.b16 %v1607, %v1606
  %v1819 = vpack.c.b16 %v1609, %v1608
  %v1820 = vpack.c.b16 %v1611, %v1610
  %v1821 = vpack.c.b16 %v1613, %v1612
  %v1822 = vpack.c.b16 %v1615, %v1614
  %v1823 = vpack.c.b16 %v1617, %v1616
  %v1824 = vpack.c.b16 %v1619, %v1618
  %v1825 = vpack.c.b16 %v1621, %v1620
  %v1826 = vpack.c.b16 %v1623, %v1622
  %v1827 = vpack.c.b16 %v1625, %v1624
  %v1828 = vpack.c.b16 %v1627, %v1626
  %v1829 = vpack.c.b16 %v1629, %v1628
  %v1830 = vpack.c.b16 %v1631, %v1630
  %v1831 = vpack.c.b16 %v1633, %v1632
  %v1832 = vpack.c.b16 %v1635, %v1634
  %v1833 = vpack.c.b16 %v1637, %v1636
  %v1834 = vpack.c.b16 %v1639, %v1638
  %v1835 = vpack.c.b16 %v1641, %v1640
  %v1836 = vpack.c.b16 %v1643, %v1642
  %v1837 = vpack.c.b16 %v1645, %v1644
  %v1838 = vpack.c.b16 %v1647, %v1646
  %v1839 = vpack.c.b16 %v1649, %v1648
  %v1840 = vpack.c.b16 %v1651, %v1650
  %v1841 = vpack.c.b16 %v1653, %v1652
  %v1842 = vpack.c.b16 %v1655, %v1654
  %v1843 = vpack.c.b16 %v1657, %v1656
  %v1844 = vpack.c.b16 %v1659, %v1658
  %v1845 = vpack.c.b16 %v1661, %v1660
  %v1846 = vpack.c.b16 %v1663, %v1662
  %v1847 = vpack.c.b16 %v1665, %v1664
  %v1848 = vpack.c.b16 %v1667, %v1666
  %v1849 = vpack.c.b16 %v1669, %v1668
  %v1850 = vpack.c.b16 %v1671, %v1670
  %v1851 = vpack.c.b16 %v1673, %v1672
  %v1852 = vpack.c.b16 %v1675, %v1674
  %v1853 = vpack.c.b16 %v1677, %v1676
  %v1854 = vpack.c.b16 %v1679, %v1678
  %v1855 = vpack.c.b16 %v1681, %v1680
  %v1856 = vpack.c.b16 %v1683, %v1682
  %v1857 = vpack.c.b16 %v1685, %v1684
  %v1858 = vpack.c.b16 %v1687, %v1686
  %v1859 = vpack.c.b16 %v1689, %v1688
  %v1860 = vpack.c.b16 %v1691, %v1690
  %v1861 = vpack.c.b16 %v1693, %v1692
  %v1862 = vpack.c.b16 %v1695, %v1694
  %v1863 = vpack.c.b16 %v1697, %v1696
  %v1864 = vpack.c.b16 %v1699, %v1698
  %v1865 = vpack.c.b16 %v1701, %v1700
  %v1866 = vpack.c.b16 %v1703, %v1702
  %v1867 = vpack.c.b16 %v1705, %v1704
  %v1868 = vpack.c.b16 %v1707, %v1706
  %v1869 = vpack.c.b16 %v1709, %v1708
  %v1870 = vpack.c.b16 %v1711, %v1710
  %v1871 = vpack.c.b16 %v1713, %v1712
  %v1872 = vpack.c.b16 %v1715, %v1714
  %v1873 = vpack.c.b16 %v1717, %v1716
  %v1874 = vpack.c.b16 %v1719, %v1718
  %v1875 = vpack.c.b16 %v1721, %v1720
  %v1876 = vpack.c.b16 %v1723, %v1722
  %v1877 = vpack.c.b16 %v1725, %v1724
  %v1878 = vpack.c.b16 %v1727, %v1726
  %v1879 = vpack.c.b16 %v1729, %v1728
  %v1880 = vpack.c.b16 %v1731, %v1730
  %v1881 = vpack.c.b16 %v1733, %v1732
  %v1882 = vpack.c.b16 %v1735, %v1734
  %v1883 = vpack.c.b16 %v1737, %v1736
  %v1884 = vpack.c.b16 %v1739, %v1738
  %v1885 = vpack.c.b16 %v1741, %v1740
  %2030 = vmatprep.subr.bf16.mxu0 0
  %2031 = vmatpush1.bf16.msra.mxu0 %v1742
  %2032 = vmatprep.subr.bf16.mxu0 0
  %2033 = vmatpush1.bf16.msra.mxu0 %v1743
  %2034 = vmatprep.subr.bf16.mxu0 0
  %2035 = vmatpush1.bf16.msra.mxu0 %v1744
  %2036 = vmatprep.subr.bf16.mxu0 0
  %2037 = vmatpush1.bf16.msra.mxu0 %v1745
  %2038 = vmatprep.subr.bf16.mxu0 0
  %2039 = vmatpush1.bf16.msra.mxu0 %v1746
  %2040 = vmatprep.subr.bf16.mxu0 0
  %2041 = vmatpush1.bf16.msra.mxu0 %v1747
  %2042 = vmatprep.subr.bf16.mxu0 0
  %2043 = vmatpush1.bf16.msra.mxu0 %v1748
  %2044 = vmatprep.subr.bf16.mxu0 0
  %2045 = vmatpush1.bf16.msra.mxu0 %v1749
  %2046 = vmatprep.subr.bf16.mxu0 0
  %2047 = vmatpush1.bf16.msra.mxu0 %v1750
  %2048 = vmatprep.subr.bf16.mxu0 0
  %2049 = vmatpush1.bf16.msra.mxu0 %v1751
  %2050 = vmatprep.subr.bf16.mxu0 0
  %2051 = vmatpush1.bf16.msra.mxu0 %v1752
  %2052 = vmatprep.subr.bf16.mxu0 0
  %2053 = vmatpush1.bf16.msra.mxu0 %v1753
  %2054 = vmatprep.subr.bf16.mxu0 0
  %2055 = vmatpush1.bf16.msra.mxu0 %v1754
  %2056 = vmatprep.subr.bf16.mxu0 0
  %2057 = vmatpush1.bf16.msra.mxu0 %v1755
  %2058 = vmatprep.subr.bf16.mxu0 0
  %2059 = vmatpush1.bf16.msra.mxu0 %v1756
  %2060 = vmatprep.subr.bf16.mxu0 0
  %2061 = vmatpush1.bf16.msra.mxu0 %v1757
  %2062 = vmatprep.mubr.bf16.mxu0 %v879
  %2063 = vmatmul.mubr.bf16.gmra.mrb[0].mxu0 %v878
  %v2064 = vpop.f32.mrb[0].mxu0
  %v2065 = vadd.f32 0.0, %v2064
  %v2066 = vpop.f32.mrb[0].mxu0
  %v2067 = vpop.f32.mrb[0].mxu0
  %v2068 = vadd.f32 0.0, %v2067
  %v2069 = vpop.f32.mrb[0].mxu0
  %2070 = vmatprep.mubr.bf16.mxu0 %v897
  %2071 = vmatmul.mubr.bf16.gmra.mrb[0].mxu0 %v896
  %v2072 = vpop.f32.mrb[0].mxu0
  %v2073 = vadd.f32 0.0, %v2072
  %v2074 = vpop.f32.mrb[0].mxu0
  %v2075 = vpop.f32.mrb[0].mxu0
  %v2076 = vadd.f32 0.0, %v2075
  %v2077 = vpop.f32.mrb[0].mxu0
  %2078 = vmatprep.mubr.bf16.mxu0 %v915
  %2079 = vmatmul.mubr.bf16.gmra.mrb[0].mxu0 %v914
  %v2080 = vpop.f32.mrb[0].mxu0
  %v2081 = vadd.f32 0.0, %v2080
  %v2082 = vpop.f32.mrb[0].mxu0
  %v2083 = vpop.f32.mrb[0].mxu0
  %v2084 = vadd.f32 0.0, %v2083
  %v2085 = vpop.f32.mrb[0].mxu0
  %2086 = vmatprep.mubr.bf16.mxu0 %v933
  %2087 = vmatmul.mubr.bf16.gmra.mrb[0].mxu0 %v932
  %v2088 = vpop.f32.mrb[0].mxu0
  %v2089 = vadd.f32 0.0, %v2088
  %v2090 = vpop.f32.mrb[0].mxu0
  %v2091 = vpop.f32.mrb[0].mxu0
  %v2092 = vadd.f32 0.0, %v2091
  %v2093 = vpop.f32.mrb[0].mxu0
  %2094 = vmatprep.mubr.bf16.mxu0 %v951
  %2095 = vmatmul.mubr.bf16.gmra.mrb[0].mxu0 %v950
  %v2096 = vpop.f32.mrb[0].mxu0
  %v2097 = vadd.f32 0.0, %v2096
  %v2098 = vpop.f32.mrb[0].mxu0
  %v2099 = vpop.f32.mrb[0].mxu0
  %v2100 = vadd.f32 0.0, %v2099
  %v2101 = vpop.f32.mrb[0].mxu0
  %2102 = vmatprep.mubr.bf16.mxu0 %v969
  %2103 = vmatmul.mubr.bf16.gmra.mrb[0].mxu0 %v968
  %v2104 = vpop.f32.mrb[0].mxu0
  %v2105 = vadd.f32 0.0, %v2104
  %v2106 = vpop.f32.mrb[0].mxu0
  %v2107 = vpop.f32.mrb[0].mxu0
  %v2108 = vadd.f32 0.0, %v2107
  %v2109 = vpop.f32.mrb[0].mxu0
  %2110 = vmatprep.mubr.bf16.mxu0 %v987
  %2111 = vmatmul.mubr.bf16.gmra.mrb[0].mxu0 %v986
  %v2112 = vpop.f32.mrb[0].mxu0
  %v2113 = vadd.f32 0.0, %v2112
  %v2114 = vpop.f32.mrb[0].mxu0
  %v2115 = vpop.f32.mrb[0].mxu0
  %v2116 = vadd.f32 0.0, %v2115
  %v2117 = vpop.f32.mrb[0].mxu0
  %2118 = vmatprep.mubr.bf16.mxu0 %v1005
  %2119 = vmatmul.mubr.bf16.gmra.mrb[0].mxu0 %v1004
  %v2120 = vpop.f32.mrb[0].mxu0
  %v2121 = vadd.f32 0.0, %v2120
  %v2122 = vpop.f32.mrb[0].mxu0
  %v2123 = vpop.f32.mrb[0].mxu0
  %v2124 = vadd.f32 0.0, %v2123
  %v2125 = vpop.f32.mrb[0].mxu0
  %2126 = vdwg.mxu0
  %2127 = vmatprep.subr.bf16.mxu0 0
  %2128 = vmatpush1.bf16.msra.mxu0 %v1758
  %2129 = vmatprep.subr.bf16.mxu0 0
  %2130 = vmatpush1.bf16.msra.mxu0 %v1759
  %2131 = vmatprep.subr.bf16.mxu0 0
  %2132 = vmatpush1.bf16.msra.mxu0 %v1760
  %2133 = vmatprep.subr.bf16.mxu0 0
  %2134 = vmatpush1.bf16.msra.mxu0 %v1761
  %2135 = vmatprep.subr.bf16.mxu0 0
  %2136 = vmatpush1.bf16.msra.mxu0 %v1762
  %2137 = vmatprep.subr.bf16.mxu0 0
  %2138 = vmatpush1.bf16.msra.mxu0 %v1763
  %2139 = vmatprep.subr.bf16.mxu0 0
  %2140 = vmatpush1.bf16.msra.mxu0 %v1764
  %2141 = vmatprep.subr.bf16.mxu0 0
  %2142 = vmatpush1.bf16.msra.mxu0 %v1765
  %2143 = vmatprep.subr.bf16.mxu0 0
  %2144 = vmatpush1.bf16.msra.mxu0 %v1766
  %2145 = vmatprep.subr.bf16.mxu0 0
  %2146 = vmatpush1.bf16.msra.mxu0 %v1767
  %2147 = vmatprep.subr.bf16.mxu0 0
  %2148 = vmatpush1.bf16.msra.mxu0 %v1768
  %2149 = vmatprep.subr.bf16.mxu0 0
  %2150 = vmatpush1.bf16.msra.mxu0 %v1769
  %2151 = vmatprep.subr.bf16.mxu0 0
  %2152 = vmatpush1.bf16.msra.mxu0 %v1770
  %2153 = vmatprep.subr.bf16.mxu0 0
  %2154 = vmatpush1.bf16.msra.mxu0 %v1771
  %2155 = vmatprep.subr.bf16.mxu0 0
  %2156 = vmatpush1.bf16.msra.mxu0 %v1772
  %2157 = vmatprep.subr.bf16.mxu0 0
  %2158 = vmatpush1.bf16.msra.mxu0 %v1773
  %2159 = vmatprep.mubr.bf16.mxu0 %v881
  %2160 = vmatmul.mubr.bf16.gmra.mrb[0].mxu0 %v880
  %v2161 = vpop.f32.mrb[0].mxu0
  %v2162 = vadd.f32 %v2065, %v2161
  %v2163 = vpop.f32.mrb[0].mxu0
  %v2164 = vpop.f32.mrb[0].mxu0
  %v2165 = vadd.f32 %v2068, %v2164
  %v2166 = vpop.f32.mrb[0].mxu0
  %2167 = vmatprep.mubr.bf16.mxu0 %v899
  %2168 = vmatmul.mubr.bf16.gmra.mrb[0].mxu0 %v898
  %v2169 = vpop.f32.mrb[0].mxu0
  %v2170 = vadd.f32 %v2073, %v2169
  %v2171 = vpop.f32.mrb[0].mxu0
  %v2172 = vpop.f32.mrb[0].mxu0
  %v2173 = vadd.f32 %v2076, %v2172
  %v2174 = vpop.f32.mrb[0].mxu0
  %2175 = vmatprep.mubr.bf16.mxu0 %v917
  %2176 = vmatmul.mubr.bf16.gmra.mrb[0].mxu0 %v916
  %v2177 = vpop.f32.mrb[0].mxu0
  %v2178 = vadd.f32 %v2081, %v2177
  %v2179 = vpop.f32.mrb[0].mxu0
  %v2180 = vpop.f32.mrb[0].mxu0
  %v2181 = vadd.f32 %v2084, %v2180
  %v2182 = vpop.f32.mrb[0].mxu0
  %2183 = vmatprep.mubr.bf16.mxu0 %v935
  %2184 = vmatmul.mubr.bf16.gmra.mrb[0].mxu0 %v934
  %v2185 = vpop.f32.mrb[0].mxu0
  %v2186 = vadd.f32 %v2089, %v2185
  %v2187 = vpop.f32.mrb[0].mxu0
  %v2188 = vpop.f32.mrb[0].mxu0
  %v2189 = vadd.f32 %v2092, %v2188
  %v2190 = vpop.f32.mrb[0].mxu0
  %2191 = vmatprep.mubr.bf16.mxu0 %v953
  %2192 = vmatmul.mubr.bf16.gmra.mrb[0].mxu0 %v952
  %v2193 = vpop.f32.mrb[0].mxu0
  %v2194 = vadd.f32 %v2097, %v2193
  %v2195 = vpop.f32.mrb[0].mxu0
  %v2196 = vpop.f32.mrb[0].mxu0
  %v2197 = vadd.f32 %v2100, %v2196
  %v2198 = vpop.f32.mrb[0].mxu0
  %2199 = vmatprep.mubr.bf16.mxu0 %v971
  %2200 = vmatmul.mubr.bf16.gmra.mrb[0].mxu0 %v970
  %v2201 = vpop.f32.mrb[0].mxu0
  %v2202 = vadd.f32 %v2105, %v2201
  %v2203 = vpop.f32.mrb[0].mxu0
  %v2204 = vpop.f32.mrb[0].mxu0
  %v2205 = vadd.f32 %v2108, %v2204
  %v2206 = vpop.f32.mrb[0].mxu0
  %2207 = vmatprep.mubr.bf16.mxu0 %v989
  %2208 = vmatmul.mubr.bf16.gmra.mrb[0].mxu0 %v988
  %v2209 = vpop.f32.mrb[0].mxu0
  %v2210 = vadd.f32 %v2113, %v2209
  %v2211 = vpop.f32.mrb[0].mxu0
  %v2212 = vpop.f32.mrb[0].mxu0
  %v2213 = vadd.f32 %v2116, %v2212
  %v2214 = vpop.f32.mrb[0].mxu0
  %2215 = vmatprep.mubr.bf16.mxu0 %v1007
  %2216 = vmatmul.mubr.bf16.gmra.mrb[0].mxu0 %v1006
  %v2217 = vpop.f32.mrb[0].mxu0
  %v2218 = vadd.f32 %v2121, %v2217
  %v2219 = vpop.f32.mrb[0].mxu0
  %v2220 = vpop.f32.mrb[0].mxu0
  %v2221 = vadd.f32 %v2124, %v2220
  %v2222 = vpop.f32.mrb[0].mxu0
  %2223 = vdwg.mxu0
  %2224 = vmatprep.subr.bf16.mxu0 0
  %2225 = vmatpush1.bf16.msra.mxu0 %v1774
  %2226 = vmatprep.subr.bf16.mxu0 0
  %2227 = vmatpush1.bf16.msra.mxu0 %v1775
  %2228 = vmatprep.subr.bf16.mxu0 0
  %2229 = vmatpush1.bf16.msra.mxu0 %v1776
  %2230 = vmatprep.subr.bf16.mxu0 0
  %2231 = vmatpush1.bf16.msra.mxu0 %v1777
  %2232 = vmatprep.subr.bf16.mxu0 0
  %2233 = vmatpush1.bf16.msra.mxu0 %v1778
  %2234 = vmatprep.subr.bf16.mxu0 0
  %2235 = vmatpush1.bf16.msra.mxu0 %v1779
  %2236 = vmatprep.subr.bf16.mxu0 0
  %2237 = vmatpush1.bf16.msra.mxu0 %v1780
  %2238 = vmatprep.subr.bf16.mxu0 0
  %2239 = vmatpush1.bf16.msra.mxu0 %v1781
  %2240 = vmatprep.subr.bf16.mxu0 0
  %2241 = vmatpush1.bf16.msra.mxu0 %v1782
  %2242 = vmatprep.subr.bf16.mxu0 0
  %2243 = vmatpush1.bf16.msra.mxu0 %v1783
  %2244 = vmatprep.subr.bf16.mxu0 0
  %2245 = vmatpush1.bf16.msra.mxu0 %v1784
  %2246 = vmatprep.subr.bf16.mxu0 0
  %2247 = vmatpush1.bf16.msra.mxu0 %v1785
  %2248 = vmatprep.subr.bf16.mxu0 0
  %2249 = vmatpush1.bf16.msra.mxu0 %v1786
  %2250 = vmatprep.subr.bf16.mxu0 0
  %2251 = vmatpush1.bf16.msra.mxu0 %v1787
  %2252 = vmatprep.subr.bf16.mxu0 0
  %2253 = vmatpush1.bf16.msra.mxu0 %v1788
  %2254 = vmatprep.subr.bf16.mxu0 0
  %2255 = vmatpush1.bf16.msra.mxu0 %v1789
  %2256 = vmatprep.mubr.bf16.mxu0 %v883
  %2257 = vmatmul.mubr.bf16.gmra.mrb[0].mxu0 %v882
  %v2258 = vpop.f32.mrb[0].mxu0
  %v2259 = vadd.f32 %v2162, %v2258
  %v2260 = vpop.f32.mrb[0].mxu0
  %v2261 = vpop.f32.mrb[0].mxu0
  %v2262 = vadd.f32 %v2165, %v2261
  %v2263 = vpop.f32.mrb[0].mxu0
  %2264 = vmatprep.mubr.bf16.mxu0 %v901
  %2265 = vmatmul.mubr.bf16.gmra.mrb[0].mxu0 %v900
  %v2266 = vpop.f32.mrb[0].mxu0
  %v2267 = vadd.f32 %v2170, %v2266
  %v2268 = vpop.f32.mrb[0].mxu0
  %v2269 = vpop.f32.mrb[0].mxu0
  %v2270 = vadd.f32 %v2173, %v2269
  %v2271 = vpop.f32.mrb[0].mxu0
  %2272 = vmatprep.mubr.bf16.mxu0 %v919
  %2273 = vmatmul.mubr.bf16.gmra.mrb[0].mxu0 %v918
  %v2274 = vpop.f32.mrb[0].mxu0
  %v2275 = vadd.f32 %v2178, %v2274
  %v2276 = vpop.f32.mrb[0].mxu0
  %v2277 = vpop.f32.mrb[0].mxu0
  %v2278 = vadd.f32 %v2181, %v2277
  %v2279 = vpop.f32.mrb[0].mxu0
  %2280 = vmatprep.mubr.bf16.mxu0 %v937
  %2281 = vmatmul.mubr.bf16.gmra.mrb[0].mxu0 %v936
  %v2282 = vpop.f32.mrb[0].mxu0
  %v2283 = vadd.f32 %v2186, %v2282
  %v2284 = vpop.f32.mrb[0].mxu0
  %v2285 = vpop.f32.mrb[0].mxu0
  %v2286 = vadd.f32 %v2189, %v2285
  %v2287 = vpop.f32.mrb[0].mxu0
  %2288 = vmatprep.mubr.bf16.mxu0 %v955
  %2289 = vmatmul.mubr.bf16.gmra.mrb[0].mxu0 %v954
  %v2290 = vpop.f32.mrb[0].mxu0
  %v2291 = vadd.f32 %v2194, %v2290
  %v2292 = vpop.f32.mrb[0].mxu0
  %v2293 = vpop.f32.mrb[0].mxu0
  %v2294 = vadd.f32 %v2197, %v2293
  %v2295 = vpop.f32.mrb[0].mxu0
  %2296 = vmatprep.mubr.bf16.mxu0 %v973
  %2297 = vmatmul.mubr.bf16.gmra.mrb[0].mxu0 %v972
  %v2298 = vpop.f32.mrb[0].mxu0
  %v2299 = vadd.f32 %v2202, %v2298
  %v2300 = vpop.f32.mrb[0].mxu0
  %v2301 = vpop.f32.mrb[0].mxu0
  %v2302 = vadd.f32 %v2205, %v2301
  %v2303 = vpop.f32.mrb[0].mxu0
  %2304 = vmatprep.mubr.bf16.mxu0 %v991
  %2305 = vmatmul.mubr.bf16.gmra.mrb[0].mxu0 %v990
  %v2306 = vpop.f32.mrb[0].mxu0
  %v2307 = vadd.f32 %v2210, %v2306
  %v2308 = vpop.f32.mrb[0].mxu0
  %v2309 = vpop.f32.mrb[0].mxu0
  %v2310 = vadd.f32 %v2213, %v2309
  %v2311 = vpop.f32.mrb[0].mxu0
  %2312 = vmatprep.mubr.bf16.mxu0 %v1009
  %2313 = vmatmul.mubr.bf16.gmra.mrb[0].mxu0 %v1008
  %v2314 = vpop.f32.mrb[0].mxu0
  %v2315 = vadd.f32 %v2218, %v2314
  %v2316 = vpop.f32.mrb[0].mxu0
  %v2317 = vpop.f32.mrb[0].mxu0
  %v2318 = vadd.f32 %v2221, %v2317
  %v2319 = vpop.f32.mrb[0].mxu0
  %2320 = vdwg.mxu0
  %2321 = vmatprep.subr.bf16.mxu0 0
  %2322 = vmatpush1.bf16.msra.mxu0 %v1790
  %2323 = vmatprep.subr.bf16.mxu0 0
  %2324 = vmatpush1.bf16.msra.mxu0 %v1791
  %2325 = vmatprep.subr.bf16.mxu0 0
  %2326 = vmatpush1.bf16.msra.mxu0 %v1792
  %2327 = vmatprep.subr.bf16.mxu0 0
  %2328 = vmatpush1.bf16.msra.mxu0 %v1793
  %2329 = vmatprep.subr.bf16.mxu0 0
  %2330 = vmatpush1.bf16.msra.mxu0 %v1794
  %2331 = vmatprep.subr.bf16.mxu0 0
  %2332 = vmatpush1.bf16.msra.mxu0 %v1795
  %2333 = vmatprep.subr.bf16.mxu0 0
  %2334 = vmatpush1.bf16.msra.mxu0 %v1796
  %2335 = vmatprep.subr.bf16.mxu0 0
  %2336 = vmatpush1.bf16.msra.mxu0 %v1797
  %2337 = vmatprep.subr.bf16.mxu0 0
  %2338 = vmatpush1.bf16.msra.mxu0 %v1798
  %2339 = vmatprep.subr.bf16.mxu0 0
  %2340 = vmatpush1.bf16.msra.mxu0 %v1799
  %2341 = vmatprep.subr.bf16.mxu0 0
  %2342 = vmatpush1.bf16.msra.mxu0 %v1800
  %2343 = vmatprep.subr.bf16.mxu0 0
  %2344 = vmatpush1.bf16.msra.mxu0 %v1801
  %2345 = vmatprep.subr.bf16.mxu0 0
  %2346 = vmatpush1.bf16.msra.mxu0 %v1802
  %2347 = vmatprep.subr.bf16.mxu0 0
  %2348 = vmatpush1.bf16.msra.mxu0 %v1803
  %2349 = vmatprep.subr.bf16.mxu0 0
  %2350 = vmatpush1.bf16.msra.mxu0 %v1804
  %2351 = vmatprep.subr.bf16.mxu0 0
  %2352 = vmatpush1.bf16.msra.mxu0 %v1805
  %2353 = vmatprep.mubr.bf16.mxu0 %v885
  %2354 = vmatmul.mubr.bf16.gmra.mrb[0].mxu0 %v884
  %v2355 = vpop.f32.mrb[0].mxu0
  %v2356 = vadd.f32 %v2259, %v2355
  %v2357 = vpop.f32.mrb[0].mxu0
  %v2358 = vpop.f32.mrb[0].mxu0
  %v2359 = vadd.f32 %v2262, %v2358
  %v2360 = vpop.f32.mrb[0].mxu0
  %2361 = vmatprep.mubr.bf16.mxu0 %v903
  %2362 = vmatmul.mubr.bf16.gmra.mrb[0].mxu0 %v902
  %v2363 = vpop.f32.mrb[0].mxu0
  %v2364 = vadd.f32 %v2267, %v2363
  %v2365 = vpop.f32.mrb[0].mxu0
  %v2366 = vpop.f32.mrb[0].mxu0
  %v2367 = vadd.f32 %v2270, %v2366
  %v2368 = vpop.f32.mrb[0].mxu0
  %2369 = vmatprep.mubr.bf16.mxu0 %v921
  %2370 = vmatmul.mubr.bf16.gmra.mrb[0].mxu0 %v920
  %v2371 = vpop.f32.mrb[0].mxu0
  %v2372 = vadd.f32 %v2275, %v2371
  %v2373 = vpop.f32.mrb[0].mxu0
  %v2374 = vpop.f32.mrb[0].mxu0
  %v2375 = vadd.f32 %v2278, %v2374
  %v2376 = vpop.f32.mrb[0].mxu0
  %2377 = vmatprep.mubr.bf16.mxu0 %v939
  %2378 = vmatmul.mubr.bf16.gmra.mrb[0].mxu0 %v938
  %v2379 = vpop.f32.mrb[0].mxu0
  %v2380 = vadd.f32 %v2283, %v2379
  %v2381 = vpop.f32.mrb[0].mxu0
  %v2382 = vpop.f32.mrb[0].mxu0
  %v2383 = vadd.f32 %v2286, %v2382
  %v2384 = vpop.f32.mrb[0].mxu0
  %2385 = vmatprep.mubr.bf16.mxu0 %v957
  %2386 = vmatmul.mubr.bf16.gmra.mrb[0].mxu0 %v956
  %v2387 = vpop.f32.mrb[0].mxu0
  %v2388 = vadd.f32 %v2291, %v2387
  %v2389 = vpop.f32.mrb[0].mxu0
  %v2390 = vpop.f32.mrb[0].mxu0
  %v2391 = vadd.f32 %v2294, %v2390
  %v2392 = vpop.f32.mrb[0].mxu0
  %2393 = vmatprep.mubr.bf16.mxu0 %v975
  %2394 = vmatmul.mubr.bf16.gmra.mrb[0].mxu0 %v974
  %v2395 = vpop.f32.mrb[0].mxu0
  %v2396 = vadd.f32 %v2299, %v2395
  %v2397 = vpop.f32.mrb[0].mxu0
  %v2398 = vpop.f32.mrb[0].mxu0
  %v2399 = vadd.f32 %v2302, %v2398
  %v2400 = vpop.f32.mrb[0].mxu0
  %2401 = vmatprep.mubr.bf16.mxu0 %v993
  %2402 = vmatmul.mubr.bf16.gmra.mrb[0].mxu0 %v992
  %v2403 = vpop.f32.mrb[0].mxu0
  %v2404 = vadd.f32 %v2307, %v2403
  %v2405 = vpop.f32.mrb[0].mxu0
  %v2406 = vpop.f32.mrb[0].mxu0
  %v2407 = vadd.f32 %v2310, %v2406
  %v2408 = vpop.f32.mrb[0].mxu0
  %2409 = vmatprep.mubr.bf16.mxu0 %v1011
  %2410 = vmatmul.mubr.bf16.gmra.mrb[0].mxu0 %v1010
  %v2411 = vpop.f32.mrb[0].mxu0
  %v2412 = vadd.f32 %v2315, %v2411
  %v2413 = vpop.f32.mrb[0].mxu0
  %v2414 = vpop.f32.mrb[0].mxu0
  %v2415 = vadd.f32 %v2318, %v2414
  %v2416 = vpop.f32.mrb[0].mxu0
  %2417 = vdwg.mxu0
  %2418 = vmatprep.subr.bf16.mxu0 0
  %2419 = vmatpush1.bf16.msra.mxu0 %v1806
  %2420 = vmatprep.subr.bf16.mxu0 0
  %2421 = vmatpush1.bf16.msra.mxu0 %v1807
  %2422 = vmatprep.subr.bf16.mxu0 0
  %2423 = vmatpush1.bf16.msra.mxu0 %v1808
  %2424 = vmatprep.subr.bf16.mxu0 0
  %2425 = vmatpush1.bf16.msra.mxu0 %v1809
  %2426 = vmatprep.subr.bf16.mxu0 0
  %2427 = vmatpush1.bf16.msra.mxu0 %v1810
  %2428 = vmatprep.subr.bf16.mxu0 0
  %2429 = vmatpush1.bf16.msra.mxu0 %v1811
  %2430 = vmatprep.subr.bf16.mxu0 0
  %2431 = vmatpush1.bf16.msra.mxu0 %v1812
  %2432 = vmatprep.subr.bf16.mxu0 0
  %2433 = vmatpush1.bf16.msra.mxu0 %v1813
  %2434 = vmatprep.subr.bf16.mxu0 0
  %2435 = vmatpush1.bf16.msra.mxu0 %v1814
  %2436 = vmatprep.subr.bf16.mxu0 0
  %2437 = vmatpush1.bf16.msra.mxu0 %v1815
  %2438 = vmatprep.subr.bf16.mxu0 0
  %2439 = vmatpush1.bf16.msra.mxu0 %v1816
  %2440 = vmatprep.subr.bf16.mxu0 0
  %2441 = vmatpush1.bf16.msra.mxu0 %v1817
  %2442 = vmatprep.subr.bf16.mxu0 0
  %2443 = vmatpush1.bf16.msra.mxu0 %v1818
  %2444 = vmatprep.subr.bf16.mxu0 0
  %2445 = vmatpush1.bf16.msra.mxu0 %v1819
  %2446 = vmatprep.subr.bf16.mxu0 0
  %2447 = vmatpush1.bf16.msra.mxu0 %v1820
  %2448 = vmatprep.subr.bf16.mxu0 0
  %2449 = vmatpush1.bf16.msra.mxu0 %v1821
  %2450 = vmatprep.mubr.bf16.mxu0 %v887
  %2451 = vmatmul.mubr.bf16.gmra.mrb[0].mxu0 %v886
  %v2452 = vpop.f32.mrb[0].mxu0
  %v2453 = vadd.f32 %v2356, %v2452
  %v2454 = vpop.f32.mrb[0].mxu0
  %v2455 = vpop.f32.mrb[0].mxu0
  %v2456 = vadd.f32 %v2359, %v2455
  %v2457 = vpop.f32.mrb[0].mxu0
  %2458 = vmatprep.mubr.bf16.mxu0 %v905
  %2459 = vmatmul.mubr.bf16.gmra.mrb[0].mxu0 %v904
  %v2460 = vpop.f32.mrb[0].mxu0
  %v2461 = vadd.f32 %v2364, %v2460
  %v2462 = vpop.f32.mrb[0].mxu0
  %v2463 = vpop.f32.mrb[0].mxu0
  %v2464 = vadd.f32 %v2367, %v2463
  %v2465 = vpop.f32.mrb[0].mxu0
  %2466 = vmatprep.mubr.bf16.mxu0 %v923
  %2467 = vmatmul.mubr.bf16.gmra.mrb[0].mxu0 %v922
  %v2468 = vpop.f32.mrb[0].mxu0
  %v2469 = vadd.f32 %v2372, %v2468
  %v2470 = vpop.f32.mrb[0].mxu0
  %v2471 = vpop.f32.mrb[0].mxu0
  %v2472 = vadd.f32 %v2375, %v2471
  %v2473 = vpop.f32.mrb[0].mxu0
  %2474 = vmatprep.mubr.bf16.mxu0 %v941
  %2475 = vmatmul.mubr.bf16.gmra.mrb[0].mxu0 %v940
  %v2476 = vpop.f32.mrb[0].mxu0
  %v2477 = vadd.f32 %v2380, %v2476
  %v2478 = vpop.f32.mrb[0].mxu0
  %v2479 = vpop.f32.mrb[0].mxu0
  %v2480 = vadd.f32 %v2383, %v2479
  %v2481 = vpop.f32.mrb[0].mxu0
  %2482 = vmatprep.mubr.bf16.mxu0 %v959
  %2483 = vmatmul.mubr.bf16.gmra.mrb[0].mxu0 %v958
  %v2484 = vpop.f32.mrb[0].mxu0
  %v2485 = vadd.f32 %v2388, %v2484
  %v2486 = vpop.f32.mrb[0].mxu0
  %v2487 = vpop.f32.mrb[0].mxu0
  %v2488 = vadd.f32 %v2391, %v2487
  %v2489 = vpop.f32.mrb[0].mxu0
  %2490 = vmatprep.mubr.bf16.mxu0 %v977
  %2491 = vmatmul.mubr.bf16.gmra.mrb[0].mxu0 %v976
  %v2492 = vpop.f32.mrb[0].mxu0
  %v2493 = vadd.f32 %v2396, %v2492
  %v2494 = vpop.f32.mrb[0].mxu0
  %v2495 = vpop.f32.mrb[0].mxu0
  %v2496 = vadd.f32 %v2399, %v2495
  %v2497 = vpop.f32.mrb[0].mxu0
  %2498 = vmatprep.mubr.bf16.mxu0 %v995
  %2499 = vmatmul.mubr.bf16.gmra.mrb[0].mxu0 %v994
  %v2500 = vpop.f32.mrb[0].mxu0
  %v2501 = vadd.f32 %v2404, %v2500
  %v2502 = vpop.f32.mrb[0].mxu0
  %v2503 = vpop.f32.mrb[0].mxu0
  %v2504 = vadd.f32 %v2407, %v2503
  %v2505 = vpop.f32.mrb[0].mxu0
  %2506 = vmatprep.mubr.bf16.mxu0 %v1013
  %2507 = vmatmul.mubr.bf16.gmra.mrb[0].mxu0 %v1012
  %v2508 = vpop.f32.mrb[0].mxu0
  %v2509 = vadd.f32 %v2412, %v2508
  %v2510 = vpop.f32.mrb[0].mxu0
  %v2511 = vpop.f32.mrb[0].mxu0
  %v2512 = vadd.f32 %v2415, %v2511
  %v2513 = vpop.f32.mrb[0].mxu0
  %2514 = vdwg.mxu0
  %2515 = vmatprep.subr.bf16.mxu0 0
  %2516 = vmatpush1.bf16.msra.mxu0 %v1822
  %2517 = vmatprep.subr.bf16.mxu0 0
  %2518 = vmatpush1.bf16.msra.mxu0 %v1823
  %2519 = vmatprep.subr.bf16.mxu0 0
  %2520 = vmatpush1.bf16.msra.mxu0 %v1824
  %2521 = vmatprep.subr.bf16.mxu0 0
  %2522 = vmatpush1.bf16.msra.mxu0 %v1825
  %2523 = vmatprep.subr.bf16.mxu0 0
  %2524 = vmatpush1.bf16.msra.mxu0 %v1826
  %2525 = vmatprep.subr.bf16.mxu0 0
  %2526 = vmatpush1.bf16.msra.mxu0 %v1827
  %2527 = vmatprep.subr.bf16.mxu0 0
  %2528 = vmatpush1.bf16.msra.mxu0 %v1828
  %2529 = vmatprep.subr.bf16.mxu0 0
  %2530 = vmatpush1.bf16.msra.mxu0 %v1829
  %2531 = vmatprep.subr.bf16.mxu0 0
  %2532 = vmatpush1.bf16.msra.mxu0 %v1830
  %2533 = vmatprep.subr.bf16.mxu0 0
  %2534 = vmatpush1.bf16.msra.mxu0 %v1831
  %2535 = vmatprep.subr.bf16.mxu0 0
  %2536 = vmatpush1.bf16.msra.mxu0 %v1832
  %2537 = vmatprep.subr.bf16.mxu0 0
  %2538 = vmatpush1.bf16.msra.mxu0 %v1833
  %2539 = vmatprep.subr.bf16.mxu0 0
  %2540 = vmatpush1.bf16.msra.mxu0 %v1834
  %2541 = vmatprep.subr.bf16.mxu0 0
  %2542 = vmatpush1.bf16.msra.mxu0 %v1835
  %2543 = vmatprep.subr.bf16.mxu0 0
  %2544 = vmatpush1.bf16.msra.mxu0 %v1836
  %2545 = vmatprep.subr.bf16.mxu0 0
  %2546 = vmatpush1.bf16.msra.mxu0 %v1837
  %2547 = vmatprep.mubr.bf16.mxu0 %v889
  %2548 = vmatmul.mubr.bf16.gmra.mrb[0].mxu0 %v888
  %v2549 = vpop.f32.mrb[0].mxu0
  %v2550 = vadd.f32 %v2453, %v2549
  %v2551 = vpop.f32.mrb[0].mxu0
  %v2552 = vpop.f32.mrb[0].mxu0
  %v2553 = vadd.f32 %v2456, %v2552
  %v2554 = vpop.f32.mrb[0].mxu0
  %2555 = vmatprep.mubr.bf16.mxu0 %v907
  %2556 = vmatmul.mubr.bf16.gmra.mrb[0].mxu0 %v906
  %v2557 = vpop.f32.mrb[0].mxu0
  %v2558 = vadd.f32 %v2461, %v2557
  %v2559 = vpop.f32.mrb[0].mxu0
  %v2560 = vpop.f32.mrb[0].mxu0
  %v2561 = vadd.f32 %v2464, %v2560
  %v2562 = vpop.f32.mrb[0].mxu0
  %2563 = vmatprep.mubr.bf16.mxu0 %v925
  %2564 = vmatmul.mubr.bf16.gmra.mrb[0].mxu0 %v924
  %v2565 = vpop.f32.mrb[0].mxu0
  %v2566 = vadd.f32 %v2469, %v2565
  %v2567 = vpop.f32.mrb[0].mxu0
  %v2568 = vpop.f32.mrb[0].mxu0
  %v2569 = vadd.f32 %v2472, %v2568
  %v2570 = vpop.f32.mrb[0].mxu0
  %2571 = vmatprep.mubr.bf16.mxu0 %v943
  %2572 = vmatmul.mubr.bf16.gmra.mrb[0].mxu0 %v942
  %v2573 = vpop.f32.mrb[0].mxu0
  %v2574 = vadd.f32 %v2477, %v2573
  %v2575 = vpop.f32.mrb[0].mxu0
  %v2576 = vpop.f32.mrb[0].mxu0
  %v2577 = vadd.f32 %v2480, %v2576
  %v2578 = vpop.f32.mrb[0].mxu0
  %2579 = vmatprep.mubr.bf16.mxu0 %v961
  %2580 = vmatmul.mubr.bf16.gmra.mrb[0].mxu0 %v960
  %v2581 = vpop.f32.mrb[0].mxu0
  %v2582 = vadd.f32 %v2485, %v2581
  %v2583 = vpop.f32.mrb[0].mxu0
  %v2584 = vpop.f32.mrb[0].mxu0
  %v2585 = vadd.f32 %v2488, %v2584
  %v2586 = vpop.f32.mrb[0].mxu0
  %2587 = vmatprep.mubr.bf16.mxu0 %v979
  %2588 = vmatmul.mubr.bf16.gmra.mrb[0].mxu0 %v978
  %v2589 = vpop.f32.mrb[0].mxu0
  %v2590 = vadd.f32 %v2493, %v2589
  %v2591 = vpop.f32.mrb[0].mxu0
  %v2592 = vpop.f32.mrb[0].mxu0
  %v2593 = vadd.f32 %v2496, %v2592
  %v2594 = vpop.f32.mrb[0].mxu0
  %2595 = vmatprep.mubr.bf16.mxu0 %v997
  %2596 = vmatmul.mubr.bf16.gmra.mrb[0].mxu0 %v996
  %v2597 = vpop.f32.mrb[0].mxu0
  %v2598 = vadd.f32 %v2501, %v2597
  %v2599 = vpop.f32.mrb[0].mxu0
  %v2600 = vpop.f32.mrb[0].mxu0
  %v2601 = vadd.f32 %v2504, %v2600
  %v2602 = vpop.f32.mrb[0].mxu0
  %2603 = vmatprep.mubr.bf16.mxu0 %v1015
  %2604 = vmatmul.mubr.bf16.gmra.mrb[0].mxu0 %v1014
  %v2605 = vpop.f32.mrb[0].mxu0
  %v2606 = vadd.f32 %v2509, %v2605
  %v2607 = vpop.f32.mrb[0].mxu0
  %v2608 = vpop.f32.mrb[0].mxu0
  %v2609 = vadd.f32 %v2512, %v2608
  %v2610 = vpop.f32.mrb[0].mxu0
  %2611 = vdwg.mxu0
  %2612 = vmatprep.subr.bf16.mxu0 0
  %2613 = vmatpush1.bf16.msra.mxu0 %v1838
  %2614 = vmatprep.subr.bf16.mxu0 0
  %2615 = vmatpush1.bf16.msra.mxu0 %v1839
  %2616 = vmatprep.subr.bf16.mxu0 0
  %2617 = vmatpush1.bf16.msra.mxu0 %v1840
  %2618 = vmatprep.subr.bf16.mxu0 0
  %2619 = vmatpush1.bf16.msra.mxu0 %v1841
  %2620 = vmatprep.subr.bf16.mxu0 0
  %2621 = vmatpush1.bf16.msra.mxu0 %v1842
  %2622 = vmatprep.subr.bf16.mxu0 0
  %2623 = vmatpush1.bf16.msra.mxu0 %v1843
  %2624 = vmatprep.subr.bf16.mxu0 0
  %2625 = vmatpush1.bf16.msra.mxu0 %v1844
  %2626 = vmatprep.subr.bf16.mxu0 0
  %2627 = vmatpush1.bf16.msra.mxu0 %v1845
  %2628 = vmatprep.subr.bf16.mxu0 0
  %2629 = vmatpush1.bf16.msra.mxu0 %v1846
  %2630 = vmatprep.subr.bf16.mxu0 0
  %2631 = vmatpush1.bf16.msra.mxu0 %v1847
  %2632 = vmatprep.subr.bf16.mxu0 0
  %2633 = vmatpush1.bf16.msra.mxu0 %v1848
  %2634 = vmatprep.subr.bf16.mxu0 0
  %2635 = vmatpush1.bf16.msra.mxu0 %v1849
  %2636 = vmatprep.subr.bf16.mxu0 0
  %2637 = vmatpush1.bf16.msra.mxu0 %v1850
  %2638 = vmatprep.subr.bf16.mxu0 0
  %2639 = vmatpush1.bf16.msra.mxu0 %v1851
  %2640 = vmatprep.subr.bf16.mxu0 0
  %2641 = vmatpush1.bf16.msra.mxu0 %v1852
  %2642 = vmatprep.subr.bf16.mxu0 0
  %2643 = vmatpush1.bf16.msra.mxu0 %v1853
  %2644 = vmatprep.mubr.bf16.mxu0 %v891
  %2645 = vmatmul.mubr.bf16.gmra.mrb[0].mxu0 %v890
  %v2646 = vpop.f32.mrb[0].mxu0
  %v2647 = vadd.f32 %v2550, %v2646
  %v2648 = vpop.f32.mrb[0].mxu0
  %v2649 = vpop.f32.mrb[0].mxu0
  %v2650 = vadd.f32 %v2553, %v2649
  %v2651 = vpop.f32.mrb[0].mxu0
  %2652 = vmatprep.mubr.bf16.mxu0 %v909
  %2653 = vmatmul.mubr.bf16.gmra.mrb[0].mxu0 %v908
  %v2654 = vpop.f32.mrb[0].mxu0
  %v2655 = vadd.f32 %v2558, %v2654
  %v2656 = vpop.f32.mrb[0].mxu0
  %v2657 = vpop.f32.mrb[0].mxu0
  %v2658 = vadd.f32 %v2561, %v2657
  %v2659 = vpop.f32.mrb[0].mxu0
  %2660 = vmatprep.mubr.bf16.mxu0 %v927
  %2661 = vmatmul.mubr.bf16.gmra.mrb[0].mxu0 %v926
  %v2662 = vpop.f32.mrb[0].mxu0
  %v2663 = vadd.f32 %v2566, %v2662
  %v2664 = vpop.f32.mrb[0].mxu0
  %v2665 = vpop.f32.mrb[0].mxu0
  %v2666 = vadd.f32 %v2569, %v2665
  %v2667 = vpop.f32.mrb[0].mxu0
  %2668 = vmatprep.mubr.bf16.mxu0 %v945
  %2669 = vmatmul.mubr.bf16.gmra.mrb[0].mxu0 %v944
  %v2670 = vpop.f32.mrb[0].mxu0
  %v2671 = vadd.f32 %v2574, %v2670
  %v2672 = vpop.f32.mrb[0].mxu0
  %v2673 = vpop.f32.mrb[0].mxu0
  %v2674 = vadd.f32 %v2577, %v2673
  %v2675 = vpop.f32.mrb[0].mxu0
  %2676 = vmatprep.mubr.bf16.mxu0 %v963
  %2677 = vmatmul.mubr.bf16.gmra.mrb[0].mxu0 %v962
  %v2678 = vpop.f32.mrb[0].mxu0
  %v2679 = vadd.f32 %v2582, %v2678
  %v2680 = vpop.f32.mrb[0].mxu0
  %v2681 = vpop.f32.mrb[0].mxu0
  %v2682 = vadd.f32 %v2585, %v2681
  %v2683 = vpop.f32.mrb[0].mxu0
  %2684 = vmatprep.mubr.bf16.mxu0 %v981
  %2685 = vmatmul.mubr.bf16.gmra.mrb[0].mxu0 %v980
  %v2686 = vpop.f32.mrb[0].mxu0
  %v2687 = vadd.f32 %v2590, %v2686
  %v2688 = vpop.f32.mrb[0].mxu0
  %v2689 = vpop.f32.mrb[0].mxu0
  %v2690 = vadd.f32 %v2593, %v2689
  %v2691 = vpop.f32.mrb[0].mxu0
  %2692 = vmatprep.mubr.bf16.mxu0 %v999
  %2693 = vmatmul.mubr.bf16.gmra.mrb[0].mxu0 %v998
  %v2694 = vpop.f32.mrb[0].mxu0
  %v2695 = vadd.f32 %v2598, %v2694
  %v2696 = vpop.f32.mrb[0].mxu0
  %v2697 = vpop.f32.mrb[0].mxu0
  %v2698 = vadd.f32 %v2601, %v2697
  %v2699 = vpop.f32.mrb[0].mxu0
  %2700 = vmatprep.mubr.bf16.mxu0 %v1017
  %2701 = vmatmul.mubr.bf16.gmra.mrb[0].mxu0 %v1016
  %v2702 = vpop.f32.mrb[0].mxu0
  %v2703 = vadd.f32 %v2606, %v2702
  %v2704 = vpop.f32.mrb[0].mxu0
  %v2705 = vpop.f32.mrb[0].mxu0
  %v2706 = vadd.f32 %v2609, %v2705
  %v2707 = vpop.f32.mrb[0].mxu0
  %2708 = vdwg.mxu0
  %2709 = vmatprep.subr.bf16.mxu0 0
  %2710 = vmatpush1.bf16.msra.mxu0 %v1854
  %2711 = vmatprep.subr.bf16.mxu0 0
  %2712 = vmatpush1.bf16.msra.mxu0 %v1855
  %2713 = vmatprep.subr.bf16.mxu0 0
  %2714 = vmatpush1.bf16.msra.mxu0 %v1856
  %2715 = vmatprep.subr.bf16.mxu0 0
  %2716 = vmatpush1.bf16.msra.mxu0 %v1857
  %2717 = vmatprep.subr.bf16.mxu0 0
  %2718 = vmatpush1.bf16.msra.mxu0 %v1858
  %2719 = vmatprep.subr.bf16.mxu0 0
  %2720 = vmatpush1.bf16.msra.mxu0 %v1859
  %2721 = vmatprep.subr.bf16.mxu0 0
  %2722 = vmatpush1.bf16.msra.mxu0 %v1860
  %2723 = vmatprep.subr.bf16.mxu0 0
  %2724 = vmatpush1.bf16.msra.mxu0 %v1861
  %2725 = vmatprep.subr.bf16.mxu0 0
  %2726 = vmatpush1.bf16.msra.mxu0 %v1862
  %2727 = vmatprep.subr.bf16.mxu0 0
  %2728 = vmatpush1.bf16.msra.mxu0 %v1863
  %2729 = vmatprep.subr.bf16.mxu0 0
  %2730 = vmatpush1.bf16.msra.mxu0 %v1864
  %2731 = vmatprep.subr.bf16.mxu0 0
  %2732 = vmatpush1.bf16.msra.mxu0 %v1865
  %2733 = vmatprep.subr.bf16.mxu0 0
  %2734 = vmatpush1.bf16.msra.mxu0 %v1866
  %2735 = vmatprep.subr.bf16.mxu0 0
  %2736 = vmatpush1.bf16.msra.mxu0 %v1867
  %2737 = vmatprep.subr.bf16.mxu0 0
  %2738 = vmatpush1.bf16.msra.mxu0 %v1868
  %2739 = vmatprep.subr.bf16.mxu0 0
  %2740 = vmatpush1.bf16.msra.mxu0 %v1869
  %2741 = vmatprep.mubr.bf16.mxu0 %v893
  %2742 = vmatmul.mubr.bf16.gmra.mrb[0].mxu0 %v892
  %v2743 = vpop.f32.mrb[0].mxu0
  %v2744 = vadd.f32 %v2647, %v2743
  %v2745 = vpop.f32.mrb[0].mxu0
  %v2746 = vpop.f32.mrb[0].mxu0
  %v2747 = vadd.f32 %v2650, %v2746
  %v2748 = vpop.f32.mrb[0].mxu0
  %2749 = vmatprep.mubr.bf16.mxu0 %v911
  %2750 = vmatmul.mubr.bf16.gmra.mrb[0].mxu0 %v910
  %v2751 = vpop.f32.mrb[0].mxu0
  %v2752 = vadd.f32 %v2655, %v2751
  %v2753 = vpop.f32.mrb[0].mxu0
  %v2754 = vpop.f32.mrb[0].mxu0
  %v2755 = vadd.f32 %v2658, %v2754
  %v2756 = vpop.f32.mrb[0].mxu0
  %2757 = vmatprep.mubr.bf16.mxu0 %v929
  %2758 = vmatmul.mubr.bf16.gmra.mrb[0].mxu0 %v928
  %v2759 = vpop.f32.mrb[0].mxu0
  %v2760 = vadd.f32 %v2663, %v2759
  %v2761 = vpop.f32.mrb[0].mxu0
  %v2762 = vpop.f32.mrb[0].mxu0
  %v2763 = vadd.f32 %v2666, %v2762
  %v2764 = vpop.f32.mrb[0].mxu0
  %2765 = vmatprep.mubr.bf16.mxu0 %v947
  %2766 = vmatmul.mubr.bf16.gmra.mrb[0].mxu0 %v946
  %v2767 = vpop.f32.mrb[0].mxu0
  %v2768 = vadd.f32 %v2671, %v2767
  %v2769 = vpop.f32.mrb[0].mxu0
  %v2770 = vpop.f32.mrb[0].mxu0
  %v2771 = vadd.f32 %v2674, %v2770
  %v2772 = vpop.f32.mrb[0].mxu0
  %2773 = vmatprep.mubr.bf16.mxu0 %v965
  %2774 = vmatmul.mubr.bf16.gmra.mrb[0].mxu0 %v964
  %v2775 = vpop.f32.mrb[0].mxu0
  %v2776 = vadd.f32 %v2679, %v2775
  %v2777 = vpop.f32.mrb[0].mxu0
  %v2778 = vpop.f32.mrb[0].mxu0
  %v2779 = vadd.f32 %v2682, %v2778
  %v2780 = vpop.f32.mrb[0].mxu0
  %2781 = vmatprep.mubr.bf16.mxu0 %v983
  %2782 = vmatmul.mubr.bf16.gmra.mrb[0].mxu0 %v982
  %v2783 = vpop.f32.mrb[0].mxu0
  %v2784 = vadd.f32 %v2687, %v2783
  %v2785 = vpop.f32.mrb[0].mxu0
  %v2786 = vpop.f32.mrb[0].mxu0
  %v2787 = vadd.f32 %v2690, %v2786
  %v2788 = vpop.f32.mrb[0].mxu0
  %2789 = vmatprep.mubr.bf16.mxu0 %v1001
  %2790 = vmatmul.mubr.bf16.gmra.mrb[0].mxu0 %v1000
  %v2791 = vpop.f32.mrb[0].mxu0
  %v2792 = vadd.f32 %v2695, %v2791
  %v2793 = vpop.f32.mrb[0].mxu0
  %v2794 = vpop.f32.mrb[0].mxu0
  %v2795 = vadd.f32 %v2698, %v2794
  %v2796 = vpop.f32.mrb[0].mxu0
  %2797 = vmatprep.mubr.bf16.mxu0 %v1019
  %2798 = vmatmul.mubr.bf16.gmra.mrb[0].mxu0 %v1018
  %v2799 = vpop.f32.mrb[0].mxu0
  %v2800 = vadd.f32 %v2703, %v2799
  %v2801 = vpop.f32.mrb[0].mxu0
  %v2802 = vpop.f32.mrb[0].mxu0
  %v2803 = vadd.f32 %v2706, %v2802
  %v2804 = vpop.f32.mrb[0].mxu0
  %2805 = vdwg.mxu0
  %2806 = vmatprep.subr.bf16.mxu0 0
  %2807 = vmatpush1.bf16.msra.mxu0 %v1870
  %2808 = vmatprep.subr.bf16.mxu0 0
  %2809 = vmatpush1.bf16.msra.mxu0 %v1871
  %2810 = vmatprep.subr.bf16.mxu0 0
  %2811 = vmatpush1.bf16.msra.mxu0 %v1872
  %2812 = vmatprep.subr.bf16.mxu0 0
  %2813 = vmatpush1.bf16.msra.mxu0 %v1873
  %2814 = vmatprep.subr.bf16.mxu0 0
  %2815 = vmatpush1.bf16.msra.mxu0 %v1874
  %2816 = vmatprep.subr.bf16.mxu0 0
  %2817 = vmatpush1.bf16.msra.mxu0 %v1875
  %2818 = vmatprep.subr.bf16.mxu0 0
  %2819 = vmatpush1.bf16.msra.mxu0 %v1876
  %2820 = vmatprep.subr.bf16.mxu0 0
  %2821 = vmatpush1.bf16.msra.mxu0 %v1877
  %2822 = vmatprep.subr.bf16.mxu0 0
  %2823 = vmatpush1.bf16.msra.mxu0 %v1878
  %2824 = vmatprep.subr.bf16.mxu0 0
  %2825 = vmatpush1.bf16.msra.mxu0 %v1879
  %2826 = vmatprep.subr.bf16.mxu0 0
  %2827 = vmatpush1.bf16.msra.mxu0 %v1880
  %2828 = vmatprep.subr.bf16.mxu0 0
  %2829 = vmatpush1.bf16.msra.mxu0 %v1881
  %2830 = vmatprep.subr.bf16.mxu0 0
  %2831 = vmatpush1.bf16.msra.mxu0 %v1882
  %2832 = vmatprep.subr.bf16.mxu0 0
  %2833 = vmatpush1.bf16.msra.mxu0 %v1883
  %2834 = vmatprep.subr.bf16.mxu0 0
  %2835 = vmatpush1.bf16.msra.mxu0 %v1884
  %2836 = vmatprep.subr.bf16.mxu0 0
  %2837 = vmatpush1.bf16.msra.mxu0 %v1885
  %2838 = vmatprep.mubr.bf16.mxu0 %v895
  %2839 = vmatmul.mubr.bf16.gmra.mrb[0].mxu0 %v894
  %v2840 = vpop.f32.mrb[0].mxu0
  %v2841 = vadd.f32 %v2744, %v2840
  %v2842 = vpop.f32.mrb[0].mxu0
  %v2843 = vpop.f32.mrb[0].mxu0
  %v2844 = vadd.f32 %v2747, %v2843
  %v2845 = vpop.f32.mrb[0].mxu0
  %2846 = vmatprep.mubr.bf16.mxu0 %v913
  %2847 = vmatmul.mubr.bf16.gmra.mrb[0].mxu0 %v912
  %v2848 = vpop.f32.mrb[0].mxu0
  %v2849 = vadd.f32 %v2752, %v2848
  %v2850 = vpop.f32.mrb[0].mxu0
  %v2851 = vpop.f32.mrb[0].mxu0
  %v2852 = vadd.f32 %v2755, %v2851
  %v2853 = vpop.f32.mrb[0].mxu0
  %2854 = vmatprep.mubr.bf16.mxu0 %v931
  %2855 = vmatmul.mubr.bf16.gmra.mrb[0].mxu0 %v930
  %v2856 = vpop.f32.mrb[0].mxu0
  %v2857 = vadd.f32 %v2760, %v2856
  %v2858 = vpop.f32.mrb[0].mxu0
  %v2859 = vpop.f32.mrb[0].mxu0
  %v2860 = vadd.f32 %v2763, %v2859
  %v2861 = vpop.f32.mrb[0].mxu0
  %2862 = vmatprep.mubr.bf16.mxu0 %v949
  %2863 = vmatmul.mubr.bf16.gmra.mrb[0].mxu0 %v948
  %v2864 = vpop.f32.mrb[0].mxu0
  %v2865 = vadd.f32 %v2768, %v2864
  %v2866 = vpop.f32.mrb[0].mxu0
  %v2867 = vpop.f32.mrb[0].mxu0
  %v2868 = vadd.f32 %v2771, %v2867
  %v2869 = vpop.f32.mrb[0].mxu0
  %2870 = vmatprep.mubr.bf16.mxu0 %v967
  %2871 = vmatmul.mubr.bf16.gmra.mrb[0].mxu0 %v966
  %v2872 = vpop.f32.mrb[0].mxu0
  %v2873 = vadd.f32 %v2776, %v2872
  %v2874 = vpop.f32.mrb[0].mxu0
  %v2875 = vpop.f32.mrb[0].mxu0
  %v2876 = vadd.f32 %v2779, %v2875
  %v2877 = vpop.f32.mrb[0].mxu0
  %2878 = vmatprep.mubr.bf16.mxu0 %v985
  %2879 = vmatmul.mubr.bf16.gmra.mrb[0].mxu0 %v984
  %v2880 = vpop.f32.mrb[0].mxu0
  %v2881 = vadd.f32 %v2784, %v2880
  %v2882 = vpop.f32.mrb[0].mxu0
  %v2883 = vpop.f32.mrb[0].mxu0
  %v2884 = vadd.f32 %v2787, %v2883
  %v2885 = vpop.f32.mrb[0].mxu0
  %2886 = vmatprep.mubr.bf16.mxu0 %v1003
  %2887 = vmatmul.mubr.bf16.gmra.mrb[0].mxu0 %v1002
  %v2888 = vpop.f32.mrb[0].mxu0
  %v2889 = vadd.f32 %v2792, %v2888
  %v2890 = vpop.f32.mrb[0].mxu0
  %v2891 = vpop.f32.mrb[0].mxu0
  %v2892 = vadd.f32 %v2795, %v2891
  %v2893 = vpop.f32.mrb[0].mxu0
  %2894 = vmatprep.mubr.bf16.mxu0 %v1021
  %2895 = vmatmul.mubr.bf16.gmra.mrb[0].mxu0 %v1020
  %v2896 = vpop.f32.mrb[0].mxu0
  %v2897 = vadd.f32 %v2800, %v2896
  %v2898 = vpop.f32.mrb[0].mxu0
  %v2899 = vpop.f32.mrb[0].mxu0
  %v2900 = vadd.f32 %v2803, %v2899
  %v2901 = vpop.f32.mrb[0].mxu0
  %2902 = vdwg.mxu0
  %2903 = vst [vmem:[%s2] sm:$0xff] %v2841
  %2904 = vst [vmem:[%s2 + $0x8] sm:$0xff] %v2844
  %2905 = vst [vmem:[%s2 + $0x10] sm:$0xff] %v2849
  %2906 = vst [vmem:[%s2 + $0x18] sm:$0xff] %v2852
  %2907 = vst [vmem:[%s2 + $0x20] sm:$0xff] %v2857
  %2908 = vst [vmem:[%s2 + $0x28] sm:$0xff] %v2860
  %2909 = vst [vmem:[%s2 + $0x30] sm:$0xff] %v2865
  %2910 = vst [vmem:[%s2 + $0x38] sm:$0xff] %v2868
  %2911 = vst [vmem:[%s2 + $0x40] sm:$0xff] %v2873
  %2912 = vst [vmem:[%s2 + $0x48] sm:$0xff] %v2876
  %2913 = vst [vmem:[%s2 + $0x50] sm:$0xff] %v2881
  %2914 = vst [vmem:[%s2 + $0x58] sm:$0xff] %v2884
  %2915 = vst [vmem:[%s2 + $0x60] sm:$0xff] %v2889
  %2916 = vst [vmem:[%s2 + $0x68] sm:$0xff] %v2892
  %2917 = vst [vmem:[%s2 + $0x70] sm:$0xff] %v2897
  %2918 = vst [vmem:[%s2 + $0x78] sm:$0xff] %v2900
  %v2919 = vadd.f32 %v2841, %v2844
  %v2920 = vadd.f32 %v2919, %v2849
  %v2921 = vadd.f32 %v2920, %v2852
  %v2922 = vadd.f32 %v2921, %v2857
  %v2923 = vadd.f32 %v2922, %v2860
  %v2924 = vadd.f32 %v2923, %v2865
  %v2925 = vadd.f32 %v2924, %v2868
  %v2926 = vadd.f32 %v2925, %v2873
  %v2927 = vadd.f32 %v2926, %v2876
  %v2928 = vadd.f32 %v2927, %v2881
  %v2929 = vadd.f32 %v2928, %v2884
  %v2930 = vadd.f32 %v2929, %v2889
  %v2931 = vadd.f32 %v2930, %v2892
  %v2932 = vadd.f32 %v2931, %v2897
  %v2933 = vadd.f32 %v2932, %v2900
  %v2934 = vrot.slane %v2933, 4
  %v2935 = vadd.f32 %v2933, %v2934
  %v2936 = vrot.slane %v2935, 2
  %v2937 = vadd.f32 %v2935, %v2936
  %v2938 = vrot.slane %v2937, 1
  %v2939 = vadd.f32 %v2937, %v2938
  %v2940 = vmul.f32 %v2841, %v2841
  %v2941 = vmul.f32 %v2844, %v2844
  %v2942 = vmul.f32 %v2849, %v2849
  %v2943 = vmul.f32 %v2852, %v2852
  %v2944 = vmul.f32 %v2857, %v2857
  %v2945 = vmul.f32 %v2860, %v2860
  %v2946 = vmul.f32 %v2865, %v2865
  %v2947 = vmul.f32 %v2868, %v2868
  %v2948 = vmul.f32 %v2873, %v2873
  %v2949 = vmul.f32 %v2876, %v2876
  %v2950 = vmul.f32 %v2881, %v2881
  %v2951 = vmul.f32 %v2884, %v2884
  %v2952 = vmul.f32 %v2889, %v2889
  %v2953 = vmul.f32 %v2892, %v2892
  %v2954 = vmul.f32 %v2897, %v2897
  %v2955 = vmul.f32 %v2900, %v2900
  %v2956 = vadd.f32 %v2940, %v2941
  %v2957 = vadd.f32 %v2956, %v2942
  %v2958 = vadd.f32 %v2957, %v2943
  %v2959 = vadd.f32 %v2958, %v2944
  %v2960 = vadd.f32 %v2959, %v2945
  %v2961 = vadd.f32 %v2960, %v2946
  %v2962 = vadd.f32 %v2961, %v2947
  %v2963 = vadd.f32 %v2962, %v2948
  %v2964 = vadd.f32 %v2963, %v2949
  %v2965 = vadd.f32 %v2964, %v2950
  %v2966 = vadd.f32 %v2965, %v2951
  %v2967 = vadd.f32 %v2966, %v2952
  %v2968 = vadd.f32 %v2967, %v2953
  %v2969 = vadd.f32 %v2968, %v2954
  %v2970 = vadd.f32 %v2969, %v2955
  %v2971 = vrot.slane %v2970, 4
  %v2972 = vadd.f32 %v2970, %v2971
  %v2973 = vrot.slane %v2972, 2
  %v2974 = vadd.f32 %v2972, %v2973
  %v2975 = vrot.slane %v2974, 1
  %v2976 = vadd.f32 %v2974, %v2975
  %vm2977 = vcmask 1040384
  %v2978 = vsel %vm2977, %v2939, %v2976
  %vm2979 = vcmask 1041408
  %v2980 = vsel %vm2979, %v2978, 0.0
  %2981 = vst [vmem:[%s3] sm:$0xff] %v2980
  // Predicated region
  $region10: #{cnn_autoencoder_forward.23} parent=0 // pred_check
    _
  $region11: #{cnn_autoencoder_forward.23} parent=0 // pred_check_branch
    %2983 = sbr.rel (0) target = $region13
  $region12: #{cnn_autoencoder_forward.23} parent=0 // pred_region
    _
  $region13: #{cnn_autoencoder_forward.23} parent=0 // pred_fallthru
    _
  // Predicated region
  $region14: #{cnn_autoencoder_forward.23} parent=0 // pred_check
    _
  $region15: #{cnn_autoencoder_forward.23} parent=0 // pred_check_branch
    %2985 = sbr.rel (0) target = $region17
  $region16: #{cnn_autoencoder_forward.23} parent=0 // pred_region
    _
  $region17: #{cnn_autoencoder_forward.23} parent=0 // pred_fallthru
    _
  // Predicated region
  $region18: #{cnn_autoencoder_forward.23} parent=0 // pred_check
    _
  $region19: #{cnn_autoencoder_forward.23} parent=0 // pred_check_branch
    %2987 = sbr.rel (0) target = $region21
  $region20: #{cnn_autoencoder_forward.23} parent=0 // pred_region
    _
  $region21: #{cnn_autoencoder_forward.23} parent=0 // pred_fallthru
    _
  // Predicated region
  $region22: #{cnn_autoencoder_forward.23} parent=0 // pred_check
    _
  $region23: #{cnn_autoencoder_forward.23} parent=0 // pred_check_branch
    %2989 = sbr.rel (0) target = $region25
  $region24: #{cnn_autoencoder_forward.23} parent=0 // pred_region
    _
  $region25: #{cnn_autoencoder_forward.23} parent=0 // pred_fallthru
    _

// kernel: cnn_autoencoder_forward.25
$region0: #{cnn_autoencoder_forward.25}
  #allocation0 [shape = 'u32[]', space=smem, size = 0x4, offset = 0x4, fixed_abs, tag = 'smem constant byte address 0x4 - core index']
  #allocation1 [shape = 'u32[144,128]{1,0:T(1,128)}', space=vmem, size = 0x12000, scoped, tag = 'internal scratch']
  %s0 = inlined_call_operand.vmem [shape: bf16[128,1152], index: 0, kind: input, shape index: {}]
  %s1 = inlined_call_operand.vmem [shape: bf16[1152,128], index: 1, kind: input, shape index: {}]
  %s2 = inlined_call_operand.vmem [shape: f32[128,128], index: 2, kind: output, shape index: {0}]
  %s3 = inlined_call_operand.vmem [shape: f32[8,128], index: 3, kind: output, shape index: {1}]
  %4 = xla_tuple %s2, %s3
  %s5 = sld [smem:[#allocation0]]
  $region26: #{cnn_autoencoder_forward.25} parent=0
    _
  %s7 = ssub.s32 1, %s5
  %s8 = scalar_select 0, %s7, %s5
  // Predicated region
  $region2: #{cnn_autoencoder_forward.25} parent=0 // pred_check
    _
  $region3: #{cnn_autoencoder_forward.25} parent=0 // pred_check_branch
    %10 = sbr.rel (0) target = $region5
  $region4: #{cnn_autoencoder_forward.25} parent=0 // pred_region
    _
  $region5: #{cnn_autoencoder_forward.25} parent=0 // pred_fallthru
    _
  // Predicated region
  $region6: #{cnn_autoencoder_forward.25} parent=0 // pred_check
    _
  $region7: #{cnn_autoencoder_forward.25} parent=0 // pred_check_branch
    %12 = sbr.rel (0) target = $region9
  $region8: #{cnn_autoencoder_forward.25} parent=0 // pred_region
    _
  $region9: #{cnn_autoencoder_forward.25} parent=0 // pred_fallthru
    _
  %v14 = vld [vmem:[%s0] sm:$0xff]
  %v15 = vld [vmem:[%s0 + $0x8] sm:$0xff]
  %v16 = vld [vmem:[%s0 + $0x10] sm:$0xff]
  %v17 = vld [vmem:[%s0 + $0x18] sm:$0xff]
  %v18 = vld [vmem:[%s0 + $0x20] sm:$0xf]
  %v19 = vld [vmem:[%s0 + $0x24] sm:$0xff]
  %v20 = vld [vmem:[%s0 + $0x2c] sm:$0xff]
  %v21 = vld [vmem:[%s0 + $0x34] sm:$0xff]
  %v22 = vld [vmem:[%s0 + $0x3c] sm:$0xff]
  %v23 = vld [vmem:[%s0 + $0x44] sm:$0xf]
  %v24 = vld [vmem:[%s0 + $0x48] sm:$0xff]
  %v25 = vld [vmem:[%s0 + $0x50] sm:$0xff]
  %v26 = vld [vmem:[%s0 + $0x58] sm:$0xff]
  %v27 = vld [vmem:[%s0 + $0x60] sm:$0xff]
  %v28 = vld [vmem:[%s0 + $0x68] sm:$0xf]
  %v29 = vld [vmem:[%s0 + $0x6c] sm:$0xff]
  %v30 = vld [vmem:[%s0 + $0x74] sm:$0xff]
  %v31 = vld [vmem:[%s0 + $0x7c] sm:$0xff]
  %v32 = vld [vmem:[%s0 + $0x84] sm:$0xff]
  %v33 = vld [vmem:[%s0 + $0x8c] sm:$0xf]
  %v34 = vld [vmem:[%s0 + $0x90] sm:$0xff]
  %v35 = vld [vmem:[%s0 + $0x98] sm:$0xff]
  %v36 = vld [vmem:[%s0 + $0xa0] sm:$0xff]
  %v37 = vld [vmem:[%s0 + $0xa8] sm:$0xff]
  %v38 = vld [vmem:[%s0 + $0xb0] sm:$0xf]
  %v39 = vld [vmem:[%s0 + $0xb4] sm:$0xff]
  %v40 = vld [vmem:[%s0 + $0xbc] sm:$0xff]
  %v41 = vld [vmem:[%s0 + $0xc4] sm:$0xff]
  %v42 = vld [vmem:[%s0 + $0xcc] sm:$0xff]
  %v43 = vld [vmem:[%s0 + $0xd4] sm:$0xf]
  %v44 = vld [vmem:[%s0 + $0xd8] sm:$0xff]
  %v45 = vld [vmem:[%s0 + $0xe0] sm:$0xff]
  %v46 = vld [vmem:[%s0 + $0xe8] sm:$0xff]
  %v47 = vld [vmem:[%s0 + $0xf0] sm:$0xff]
  %v48 = vld [vmem:[%s0 + $0xf8] sm:$0xf]
  %v49 = vld [vmem:[%s0 + $0xfc] sm:$0xff]
  %v50 = vld [vmem:[%s0 + $0x104] sm:$0xff]
  %v51 = vld [vmem:[%s0 + $0x10c] sm:$0xff]
  %v52 = vld [vmem:[%s0 + $0x114] sm:$0xff]
  %v53 = vld [vmem:[%s0 + $0x11c] sm:$0xf]
  %v54 = vld [vmem:[%s0 + $0x120] sm:$0xff]
  %v55 = vld [vmem:[%s0 + $0x128] sm:$0xff]
  %v56 = vld [vmem:[%s0 + $0x130] sm:$0xff]
  %v57 = vld [vmem:[%s0 + $0x138] sm:$0xff]
  %v58 = vld [vmem:[%s0 + $0x140] sm:$0xf]
  %v59 = vld [vmem:[%s0 + $0x144] sm:$0xff]
  %v60 = vld [vmem:[%s0 + $0x14c] sm:$0xff]
  %v61 = vld [vmem:[%s0 + $0x154] sm:$0xff]
  %v62 = vld [vmem:[%s0 + $0x15c] sm:$0xff]
  %v63 = vld [vmem:[%s0 + $0x164] sm:$0xf]
  %v64 = vld [vmem:[%s0 + $0x168] sm:$0xff]
  %v65 = vld [vmem:[%s0 + $0x170] sm:$0xff]
  %v66 = vld [vmem:[%s0 + $0x178] sm:$0xff]
  %v67 = vld [vmem:[%s0 + $0x180] sm:$0xff]
  %v68 = vld [vmem:[%s0 + $0x188] sm:$0xf]
  %v69 = vld [vmem:[%s0 + $0x18c] sm:$0xff]
  %v70 = vld [vmem:[%s0 + $0x194] sm:$0xff]
  %v71 = vld [vmem:[%s0 + $0x19c] sm:$0xff]
  %v72 = vld [vmem:[%s0 + $0x1a4] sm:$0xff]
  %v73 = vld [vmem:[%s0 + $0x1ac] sm:$0xf]
  %v74 = vld [vmem:[%s0 + $0x1b0] sm:$0xff]
  %v75 = vld [vmem:[%s0 + $0x1b8] sm:$0xff]
  %v76 = vld [vmem:[%s0 + $0x1c0] sm:$0xff]
  %v77 = vld [vmem:[%s0 + $0x1c8] sm:$0xff]
  %v78 = vld [vmem:[%s0 + $0x1d0] sm:$0xf]
  %v79 = vld [vmem:[%s0 + $0x1d4] sm:$0xff]
  %v80 = vld [vmem:[%s0 + $0x1dc] sm:$0xff]
  %v81 = vld [vmem:[%s0 + $0x1e4] sm:$0xff]
  %v82 = vld [vmem:[%s0 + $0x1ec] sm:$0xff]
  %v83 = vld [vmem:[%s0 + $0x1f4] sm:$0xf]
  %v84 = vld [vmem:[%s0 + $0x1f8] sm:$0xff]
  %v85 = vld [vmem:[%s0 + $0x200] sm:$0xff]
  %v86 = vld [vmem:[%s0 + $0x208] sm:$0xff]
  %v87 = vld [vmem:[%s0 + $0x210] sm:$0xff]
  %v88 = vld [vmem:[%s0 + $0x218] sm:$0xf]
  %v89 = vld [vmem:[%s0 + $0x21c] sm:$0xff]
  %v90 = vld [vmem:[%s0 + $0x224] sm:$0xff]
  %v91 = vld [vmem:[%s0 + $0x22c] sm:$0xff]
  %v92 = vld [vmem:[%s0 + $0x234] sm:$0xff]
  %v93 = vld [vmem:[%s0 + $0x23c] sm:$0xf]
  %v94 = vld [vmem:[%s1] sm:$0xf]
  %v95 = vld [vmem:[%s1 + $0x4] sm:$0xf]
  %v96 = vld [vmem:[%s1 + $0x8] sm:$0xf]
  %v97 = vld [vmem:[%s1 + $0xc] sm:$0xf]
  %v98 = vld [vmem:[%s1 + $0x10] sm:$0xf]
  %v99 = vld [vmem:[%s1 + $0x14] sm:$0xf]
  %v100 = vld [vmem:[%s1 + $0x18] sm:$0xf]
  %v101 = vld [vmem:[%s1 + $0x1c] sm:$0xf]
  %v102 = vld [vmem:[%s1 + $0x20] sm:$0xf]
  %v103 = vld [vmem:[%s1 + $0x24] sm:$0xf]
  %v104 = vld [vmem:[%s1 + $0x28] sm:$0xf]
  %v105 = vld [vmem:[%s1 + $0x2c] sm:$0xf]
  %v106 = vld [vmem:[%s1 + $0x30] sm:$0xf]
  %v107 = vld [vmem:[%s1 + $0x34] sm:$0xf]
  %v108 = vld [vmem:[%s1 + $0x38] sm:$0xf]
  %v109 = vld [vmem:[%s1 + $0x3c] sm:$0xf]
  %v110 = vld [vmem:[%s1 + $0x40] sm:$0xf]
  %v111 = vld [vmem:[%s1 + $0x44] sm:$0xf]
  %v112 = vld [vmem:[%s1 + $0x48] sm:$0xf]
  %v113 = vld [vmem:[%s1 + $0x4c] sm:$0xf]
  %v114 = vld [vmem:[%s1 + $0x50] sm:$0xf]
  %v115 = vld [vmem:[%s1 + $0x54] sm:$0xf]
  %v116 = vld [vmem:[%s1 + $0x58] sm:$0xf]
  %v117 = vld [vmem:[%s1 + $0x5c] sm:$0xf]
  %v118 = vld [vmem:[%s1 + $0x60] sm:$0xf]
  %v119 = vld [vmem:[%s1 + $0x64] sm:$0xf]
  %v120 = vld [vmem:[%s1 + $0x68] sm:$0xf]
  %v121 = vld [vmem:[%s1 + $0x6c] sm:$0xf]
  %v122 = vld [vmem:[%s1 + $0x70] sm:$0xf]
  %v123 = vld [vmem:[%s1 + $0x74] sm:$0xf]
  %v124 = vld [vmem:[%s1 + $0x78] sm:$0xf]
  %v125 = vld [vmem:[%s1 + $0x7c] sm:$0xf]
  %v126 = vld [vmem:[%s1 + $0x80] sm:$0xf]
  %v127 = vld [vmem:[%s1 + $0x84] sm:$0xf]
  %v128 = vld [vmem:[%s1 + $0x88] sm:$0xf]
  %v129 = vld [vmem:[%s1 + $0x8c] sm:$0xf]
  %v130 = vld [vmem:[%s1 + $0x90] sm:$0xf]
  %v131 = vld [vmem:[%s1 + $0x94] sm:$0xf]
  %v132 = vld [vmem:[%s1 + $0x98] sm:$0xf]
  %v133 = vld [vmem:[%s1 + $0x9c] sm:$0xf]
  %v134 = vld [vmem:[%s1 + $0xa0] sm:$0xf]
  %v135 = vld [vmem:[%s1 + $0xa4] sm:$0xf]
  %v136 = vld [vmem:[%s1 + $0xa8] sm:$0xf]
  %v137 = vld [vmem:[%s1 + $0xac] sm:$0xf]
  %v138 = vld [vmem:[%s1 + $0xb0] sm:$0xf]
  %v139 = vld [vmem:[%s1 + $0xb4] sm:$0xf]
  %v140 = vld [vmem:[%s1 + $0xb8] sm:$0xf]
  %v141 = vld [vmem:[%s1 + $0xbc] sm:$0xf]
  %v142 = vld [vmem:[%s1 + $0xc0] sm:$0xf]
  %v143 = vld [vmem:[%s1 + $0xc4] sm:$0xf]
  %v144 = vld [vmem:[%s1 + $0xc8] sm:$0xf]
  %v145 = vld [vmem:[%s1 + $0xcc] sm:$0xf]
  %v146 = vld [vmem:[%s1 + $0xd0] sm:$0xf]
  %v147 = vld [vmem:[%s1 + $0xd4] sm:$0xf]
  %v148 = vld [vmem:[%s1 + $0xd8] sm:$0xf]
  %v149 = vld [vmem:[%s1 + $0xdc] sm:$0xf]
  %v150 = vld [vmem:[%s1 + $0xe0] sm:$0xf]
  %v151 = vld [vmem:[%s1 + $0xe4] sm:$0xf]
  %v152 = vld [vmem:[%s1 + $0xe8] sm:$0xf]
  %v153 = vld [vmem:[%s1 + $0xec] sm:$0xf]
  %v154 = vld [vmem:[%s1 + $0xf0] sm:$0xf]
  %v155 = vld [vmem:[%s1 + $0xf4] sm:$0xf]
  %v156 = vld [vmem:[%s1 + $0xf8] sm:$0xf]
  %v157 = vld [vmem:[%s1 + $0xfc] sm:$0xf]
  %v158 = vld [vmem:[%s1 + $0x100] sm:$0xf]
  %v159 = vld [vmem:[%s1 + $0x104] sm:$0xf]
  %v160 = vld [vmem:[%s1 + $0x108] sm:$0xf]
  %v161 = vld [vmem:[%s1 + $0x10c] sm:$0xf]
  %v162 = vld [vmem:[%s1 + $0x110] sm:$0xf]
  %v163 = vld [vmem:[%s1 + $0x114] sm:$0xf]
  %v164 = vld [vmem:[%s1 + $0x118] sm:$0xf]
  %v165 = vld [vmem:[%s1 + $0x11c] sm:$0xf]
  %v166 = vld [vmem:[%s1 + $0x120] sm:$0xf]
  %v167 = vld [vmem:[%s1 + $0x124] sm:$0xf]
  %v168 = vld [vmem:[%s1 + $0x128] sm:$0xf]
  %v169 = vld [vmem:[%s1 + $0x12c] sm:$0xf]
  %v170 = vld [vmem:[%s1 + $0x130] sm:$0xf]
  %v171 = vld [vmem:[%s1 + $0x134] sm:$0xf]
  %v172 = vld [vmem:[%s1 + $0x138] sm:$0xf]
  %v173 = vld [vmem:[%s1 + $0x13c] sm:$0xf]
  %v174 = vld [vmem:[%s1 + $0x140] sm:$0xf]
  %v175 = vld [vmem:[%s1 + $0x144] sm:$0xf]
  %v176 = vld [vmem:[%s1 + $0x148] sm:$0xf]
  %v177 = vld [vmem:[%s1 + $0x14c] sm:$0xf]
  %v178 = vld [vmem:[%s1 + $0x150] sm:$0xf]
  %v179 = vld [vmem:[%s1 + $0x154] sm:$0xf]
  %v180 = vld [vmem:[%s1 + $0x158] sm:$0xf]
  %v181 = vld [vmem:[%s1 + $0x15c] sm:$0xf]
  %v182 = vld [vmem:[%s1 + $0x160] sm:$0xf]
  %v183 = vld [vmem:[%s1 + $0x164] sm:$0xf]
  %v184 = vld [vmem:[%s1 + $0x168] sm:$0xf]
  %v185 = vld [vmem:[%s1 + $0x16c] sm:$0xf]
  %v186 = vld [vmem:[%s1 + $0x170] sm:$0xf]
  %v187 = vld [vmem:[%s1 + $0x174] sm:$0xf]
  %v188 = vld [vmem:[%s1 + $0x178] sm:$0xf]
  %v189 = vld [vmem:[%s1 + $0x17c] sm:$0xf]
  %v190 = vld [vmem:[%s1 + $0x180] sm:$0xf]
  %v191 = vld [vmem:[%s1 + $0x184] sm:$0xf]
  %v192 = vld [vmem:[%s1 + $0x188] sm:$0xf]
  %v193 = vld [vmem:[%s1 + $0x18c] sm:$0xf]
  %v194 = vld [vmem:[%s1 + $0x190] sm:$0xf]
  %v195 = vld [vmem:[%s1 + $0x194] sm:$0xf]
  %v196 = vld [vmem:[%s1 + $0x198] sm:$0xf]
  %v197 = vld [vmem:[%s1 + $0x19c] sm:$0xf]
  %v198 = vld [vmem:[%s1 + $0x1a0] sm:$0xf]
  %v199 = vld [vmem:[%s1 + $0x1a4] sm:$0xf]
  %v200 = vld [vmem:[%s1 + $0x1a8] sm:$0xf]
  %v201 = vld [vmem:[%s1 + $0x1ac] sm:$0xf]
  %v202 = vld [vmem:[%s1 + $0x1b0] sm:$0xf]
  %v203 = vld [vmem:[%s1 + $0x1b4] sm:$0xf]
  %v204 = vld [vmem:[%s1 + $0x1b8] sm:$0xf]
  %v205 = vld [vmem:[%s1 + $0x1bc] sm:$0xf]
  %v206 = vld [vmem:[%s1 + $0x1c0] sm:$0xf]
  %v207 = vld [vmem:[%s1 + $0x1c4] sm:$0xf]
  %v208 = vld [vmem:[%s1 + $0x1c8] sm:$0xf]
  %v209 = vld [vmem:[%s1 + $0x1cc] sm:$0xf]
  %v210 = vld [vmem:[%s1 + $0x1d0] sm:$0xf]
  %v211 = vld [vmem:[%s1 + $0x1d4] sm:$0xf]
  %v212 = vld [vmem:[%s1 + $0x1d8] sm:$0xf]
  %v213 = vld [vmem:[%s1 + $0x1dc] sm:$0xf]
  %v214 = vld [vmem:[%s1 + $0x1e0] sm:$0xf]
  %v215 = vld [vmem:[%s1 + $0x1e4] sm:$0xf]
  %v216 = vld [vmem:[%s1 + $0x1e8] sm:$0xf]
  %v217 = vld [vmem:[%s1 + $0x1ec] sm:$0xf]
  %v218 = vld [vmem:[%s1 + $0x1f0] sm:$0xf]
  %v219 = vld [vmem:[%s1 + $0x1f4] sm:$0xf]
  %v220 = vld [vmem:[%s1 + $0x1f8] sm:$0xf]
  %v221 = vld [vmem:[%s1 + $0x1fc] sm:$0xf]
  %v222 = vld [vmem:[%s1 + $0x200] sm:$0xf]
  %v223 = vld [vmem:[%s1 + $0x204] sm:$0xf]
  %v224 = vld [vmem:[%s1 + $0x208] sm:$0xf]
  %v225 = vld [vmem:[%s1 + $0x20c] sm:$0xf]
  %v226 = vld [vmem:[%s1 + $0x210] sm:$0xf]
  %v227 = vld [vmem:[%s1 + $0x214] sm:$0xf]
  %v228 = vld [vmem:[%s1 + $0x218] sm:$0xf]
  %v229 = vld [vmem:[%s1 + $0x21c] sm:$0xf]
  %v230 = vld [vmem:[%s1 + $0x220] sm:$0xf]
  %v231 = vld [vmem:[%s1 + $0x224] sm:$0xf]
  %v232 = vld [vmem:[%s1 + $0x228] sm:$0xf]
  %v233 = vld [vmem:[%s1 + $0x22c] sm:$0xf]
  %v234 = vld [vmem:[%s1 + $0x230] sm:$0xf]
  %v235 = vld [vmem:[%s1 + $0x234] sm:$0xf]
  %v236 = vld [vmem:[%s1 + $0x238] sm:$0xf]
  %v237 = vld [vmem:[%s1 + $0x23c] sm:$0xf]
  %v318 = vunpack.c.l.b16 %v14
  %v319 = vunpack.c.h.b16 %v14
  %v320 = vunpack.c.l.b16 %v15
  %v321 = vunpack.c.h.b16 %v15
  %v322 = vunpack.c.l.b16 %v16
  %v323 = vunpack.c.h.b16 %v16
  %v324 = vunpack.c.l.b16 %v17
  %v325 = vunpack.c.h.b16 %v17
  %v326 = vunpack.c.l.b16 %v18
  %v327 = vunpack.c.l.b16 %v19
  %v328 = vunpack.c.h.b16 %v19
  %v329 = vunpack.c.l.b16 %v20
  %v330 = vunpack.c.h.b16 %v20
  %v331 = vunpack.c.l.b16 %v21
  %v332 = vunpack.c.h.b16 %v21
  %v333 = vunpack.c.l.b16 %v22
  %v334 = vunpack.c.h.b16 %v22
  %v335 = vunpack.c.l.b16 %v23
  %v336 = vunpack.c.l.b16 %v24
  %v337 = vunpack.c.h.b16 %v24
  %v338 = vunpack.c.l.b16 %v25
  %v339 = vunpack.c.h.b16 %v25
  %v340 = vunpack.c.l.b16 %v26
  %v341 = vunpack.c.h.b16 %v26
  %v342 = vunpack.c.l.b16 %v27
  %v343 = vunpack.c.h.b16 %v27
  %v344 = vunpack.c.l.b16 %v28
  %v345 = vunpack.c.l.b16 %v29
  %v346 = vunpack.c.h.b16 %v29
  %v347 = vunpack.c.l.b16 %v30
  %v348 = vunpack.c.h.b16 %v30
  %v349 = vunpack.c.l.b16 %v31
  %v350 = vunpack.c.h.b16 %v31
  %v351 = vunpack.c.l.b16 %v32
  %v352 = vunpack.c.h.b16 %v32
  %v353 = vunpack.c.l.b16 %v33
  %v354 = vunpack.c.l.b16 %v34
  %v355 = vunpack.c.h.b16 %v34
  %v356 = vunpack.c.l.b16 %v35
  %v357 = vunpack.c.h.b16 %v35
  %v358 = vunpack.c.l.b16 %v36
  %v359 = vunpack.c.h.b16 %v36
  %v360 = vunpack.c.l.b16 %v37
  %v361 = vunpack.c.h.b16 %v37
  %v362 = vunpack.c.l.b16 %v38
  %v363 = vunpack.c.l.b16 %v39
  %v364 = vunpack.c.h.b16 %v39
  %v365 = vunpack.c.l.b16 %v40
  %v366 = vunpack.c.h.b16 %v40
  %v367 = vunpack.c.l.b16 %v41
  %v368 = vunpack.c.h.b16 %v41
  %v369 = vunpack.c.l.b16 %v42
  %v370 = vunpack.c.h.b16 %v42
  %v371 = vunpack.c.l.b16 %v43
  %v372 = vunpack.c.l.b16 %v44
  %v373 = vunpack.c.h.b16 %v44
  %v374 = vunpack.c.l.b16 %v45
  %v375 = vunpack.c.h.b16 %v45
  %v376 = vunpack.c.l.b16 %v46
  %v377 = vunpack.c.h.b16 %v46
  %v378 = vunpack.c.l.b16 %v47
  %v379 = vunpack.c.h.b16 %v47
  %v380 = vunpack.c.l.b16 %v48
  %v381 = vunpack.c.l.b16 %v49
  %v382 = vunpack.c.h.b16 %v49
  %v383 = vunpack.c.l.b16 %v50
  %v384 = vunpack.c.h.b16 %v50
  %v385 = vunpack.c.l.b16 %v51
  %v386 = vunpack.c.h.b16 %v51
  %v387 = vunpack.c.l.b16 %v52
  %v388 = vunpack.c.h.b16 %v52
  %v389 = vunpack.c.l.b16 %v53
  %v390 = vunpack.c.l.b16 %v54
  %v391 = vunpack.c.h.b16 %v54
  %v392 = vunpack.c.l.b16 %v55
  %v393 = vunpack.c.h.b16 %v55
  %v394 = vunpack.c.l.b16 %v56
  %v395 = vunpack.c.h.b16 %v56
  %v396 = vunpack.c.l.b16 %v57
  %v397 = vunpack.c.h.b16 %v57
  %v398 = vunpack.c.l.b16 %v58
  %v399 = vunpack.c.l.b16 %v59
  %v400 = vunpack.c.h.b16 %v59
  %v401 = vunpack.c.l.b16 %v60
  %v402 = vunpack.c.h.b16 %v60
  %v403 = vunpack.c.l.b16 %v61
  %v404 = vunpack.c.h.b16 %v61
  %v405 = vunpack.c.l.b16 %v62
  %v406 = vunpack.c.h.b16 %v62
  %v407 = vunpack.c.l.b16 %v63
  %v408 = vunpack.c.l.b16 %v64
  %v409 = vunpack.c.h.b16 %v64
  %v410 = vunpack.c.l.b16 %v65
  %v411 = vunpack.c.h.b16 %v65
  %v412 = vunpack.c.l.b16 %v66
  %v413 = vunpack.c.h.b16 %v66
  %v414 = vunpack.c.l.b16 %v67
  %v415 = vunpack.c.h.b16 %v67
  %v416 = vunpack.c.l.b16 %v68
  %v417 = vunpack.c.l.b16 %v69
  %v418 = vunpack.c.h.b16 %v69
  %v419 = vunpack.c.l.b16 %v70
  %v420 = vunpack.c.h.b16 %v70
  %v421 = vunpack.c.l.b16 %v71
  %v422 = vunpack.c.h.b16 %v71
  %v423 = vunpack.c.l.b16 %v72
  %v424 = vunpack.c.h.b16 %v72
  %v425 = vunpack.c.l.b16 %v73
  %v426 = vunpack.c.l.b16 %v74
  %v427 = vunpack.c.h.b16 %v74
  %v428 = vunpack.c.l.b16 %v75
  %v429 = vunpack.c.h.b16 %v75
  %v430 = vunpack.c.l.b16 %v76
  %v431 = vunpack.c.h.b16 %v76
  %v432 = vunpack.c.l.b16 %v77
  %v433 = vunpack.c.h.b16 %v77
  %v434 = vunpack.c.l.b16 %v78
  %v435 = vunpack.c.l.b16 %v79
  %v436 = vunpack.c.h.b16 %v79
  %v437 = vunpack.c.l.b16 %v80
  %v438 = vunpack.c.h.b16 %v80
  %v439 = vunpack.c.l.b16 %v81
  %v440 = vunpack.c.h.b16 %v81
  %v441 = vunpack.c.l.b16 %v82
  %v442 = vunpack.c.h.b16 %v82
  %v443 = vunpack.c.l.b16 %v83
  %v444 = vunpack.c.l.b16 %v84
  %v445 = vunpack.c.h.b16 %v84
  %v446 = vunpack.c.l.b16 %v85
  %v447 = vunpack.c.h.b16 %v85
  %v448 = vunpack.c.l.b16 %v86
  %v449 = vunpack.c.h.b16 %v86
  %v450 = vunpack.c.l.b16 %v87
  %v451 = vunpack.c.h.b16 %v87
  %v452 = vunpack.c.l.b16 %v88
  %v453 = vunpack.c.l.b16 %v89
  %v454 = vunpack.c.h.b16 %v89
  %v455 = vunpack.c.l.b16 %v90
  %v456 = vunpack.c.h.b16 %v90
  %v457 = vunpack.c.l.b16 %v91
  %v458 = vunpack.c.h.b16 %v91
  %v459 = vunpack.c.l.b16 %v92
  %v460 = vunpack.c.h.b16 %v92
  %v461 = vunpack.c.l.b16 %v93
  %v462 = vpack.c.b16 %v327, %v318
  %v463 = vpack.c.b16 %v328, %v319
  %v464 = vpack.c.b16 %v329, %v320
  %v465 = vpack.c.b16 %v330, %v321
  %v466 = vpack.c.b16 %v331, %v322
  %v467 = vpack.c.b16 %v332, %v323
  %v468 = vpack.c.b16 %v333, %v324
  %v469 = vpack.c.b16 %v334, %v325
  %v470 = vpack.c.b16 %v335, %v326
  %v471 = vpack.c.b16 %v345, %v336
  %v472 = vpack.c.b16 %v346, %v337
  %v473 = vpack.c.b16 %v347, %v338
  %v474 = vpack.c.b16 %v348, %v339
  %v475 = vpack.c.b16 %v349, %v340
  %v476 = vpack.c.b16 %v350, %v341
  %v477 = vpack.c.b16 %v351, %v342
  %v478 = vpack.c.b16 %v352, %v343
  %v479 = vpack.c.b16 %v353, %v344
  %v480 = vpack.c.b16 %v363, %v354
  %v481 = vpack.c.b16 %v364, %v355
  %v482 = vpack.c.b16 %v365, %v356
  %v483 = vpack.c.b16 %v366, %v357
  %v484 = vpack.c.b16 %v367, %v358
  %v485 = vpack.c.b16 %v368, %v359
  %v486 = vpack.c.b16 %v369, %v360
  %v487 = vpack.c.b16 %v370, %v361
  %v488 = vpack.c.b16 %v371, %v362
  %v489 = vpack.c.b16 %v381, %v372
  %v490 = vpack.c.b16 %v382, %v373
  %v491 = vpack.c.b16 %v383, %v374
  %v492 = vpack.c.b16 %v384, %v375
  %v493 = vpack.c.b16 %v385, %v376
  %v494 = vpack.c.b16 %v386, %v377
  %v495 = vpack.c.b16 %v387, %v378
  %v496 = vpack.c.b16 %v388, %v379
  %v497 = vpack.c.b16 %v389, %v380
  %v498 = vpack.c.b16 %v399, %v390
  %v499 = vpack.c.b16 %v400, %v391
  %v500 = vpack.c.b16 %v401, %v392
  %v501 = vpack.c.b16 %v402, %v393
  %v502 = vpack.c.b16 %v403, %v394
  %v503 = vpack.c.b16 %v404, %v395
  %v504 = vpack.c.b16 %v405, %v396
  %v505 = vpack.c.b16 %v406, %v397
  %v506 = vpack.c.b16 %v407, %v398
  %v507 = vpack.c.b16 %v417, %v408
  %v508 = vpack.c.b16 %v418, %v409
  %v509 = vpack.c.b16 %v419, %v410
  %v510 = vpack.c.b16 %v420, %v411
  %v511 = vpack.c.b16 %v421, %v412
  %v512 = vpack.c.b16 %v422, %v413
  %v513 = vpack.c.b16 %v423, %v414
  %v514 = vpack.c.b16 %v424, %v415
  %v515 = vpack.c.b16 %v425, %v416
  %v516 = vpack.c.b16 %v435, %v426
  %v517 = vpack.c.b16 %v436, %v427
  %v518 = vpack.c.b16 %v437, %v428
  %v519 = vpack.c.b16 %v438, %v429
  %v520 = vpack.c.b16 %v439, %v430
  %v521 = vpack.c.b16 %v440, %v431
  %v522 = vpack.c.b16 %v441, %v432
  %v523 = vpack.c.b16 %v442, %v433
  %v524 = vpack.c.b16 %v443, %v434
  %v525 = vpack.c.b16 %v453, %v444
  %v526 = vpack.c.b16 %v454, %v445
  %v527 = vpack.c.b16 %v455, %v446
  %v528 = vpack.c.b16 %v456, %v447
  %v529 = vpack.c.b16 %v457, %v448
  %v530 = vpack.c.b16 %v458, %v449
  %v531 = vpack.c.b16 %v459, %v450
  %v532 = vpack.c.b16 %v460, %v451
  %v533 = vpack.c.b16 %v461, %v452
  %v750 = vunpack.c.l.b16 %v94
  %v751 = vunpack.c.l.b16 %v95
  %v752 = vunpack.c.l.b16 %v96
  %v753 = vunpack.c.l.b16 %v97
  %v754 = vunpack.c.l.b16 %v98
  %v755 = vunpack.c.l.b16 %v99
  %v756 = vunpack.c.l.b16 %v100
  %v757 = vunpack.c.l.b16 %v101
  %v758 = vunpack.c.l.b16 %v102
  %v759 = vunpack.c.l.b16 %v103
  %v760 = vunpack.c.l.b16 %v104
  %v761 = vunpack.c.l.b16 %v105
  %v762 = vunpack.c.l.b16 %v106
  %v763 = vunpack.c.l.b16 %v107
  %v764 = vunpack.c.l.b16 %v108
  %v765 = vunpack.c.l.b16 %v109
  %v766 = vunpack.c.l.b16 %v110
  %v767 = vunpack.c.l.b16 %v111
  %v768 = vunpack.c.l.b16 %v112
  %v769 = vunpack.c.l.b16 %v113
  %v770 = vunpack.c.l.b16 %v114
  %v771 = vunpack.c.l.b16 %v115
  %v772 = vunpack.c.l.b16 %v116
  %v773 = vunpack.c.l.b16 %v117
  %v774 = vunpack.c.l.b16 %v118
  %v775 = vunpack.c.l.b16 %v119
  %v776 = vunpack.c.l.b16 %v120
  %v777 = vunpack.c.l.b16 %v121
  %v778 = vunpack.c.l.b16 %v122
  %v779 = vunpack.c.l.b16 %v123
  %v780 = vunpack.c.l.b16 %v124
  %v781 = vunpack.c.l.b16 %v125
  %v782 = vunpack.c.l.b16 %v126
  %v783 = vunpack.c.l.b16 %v127
  %v784 = vunpack.c.l.b16 %v128
  %v785 = vunpack.c.l.b16 %v129
  %v786 = vunpack.c.l.b16 %v130
  %v787 = vunpack.c.l.b16 %v131
  %v788 = vunpack.c.l.b16 %v132
  %v789 = vunpack.c.l.b16 %v133
  %v790 = vunpack.c.l.b16 %v134
  %v791 = vunpack.c.l.b16 %v135
  %v792 = vunpack.c.l.b16 %v136
  %v793 = vunpack.c.l.b16 %v137
  %v794 = vunpack.c.l.b16 %v138
  %v795 = vunpack.c.l.b16 %v139
  %v796 = vunpack.c.l.b16 %v140
  %v797 = vunpack.c.l.b16 %v141
  %v798 = vunpack.c.l.b16 %v142
  %v799 = vunpack.c.l.b16 %v143
  %v800 = vunpack.c.l.b16 %v144
  %v801 = vunpack.c.l.b16 %v145
  %v802 = vunpack.c.l.b16 %v146
  %v803 = vunpack.c.l.b16 %v147
  %v804 = vunpack.c.l.b16 %v148
  %v805 = vunpack.c.l.b16 %v149
  %v806 = vunpack.c.l.b16 %v150
  %v807 = vunpack.c.l.b16 %v151
  %v808 = vunpack.c.l.b16 %v152
  %v809 = vunpack.c.l.b16 %v153
  %v810 = vunpack.c.l.b16 %v154
  %v811 = vunpack.c.l.b16 %v155
  %v812 = vunpack.c.l.b16 %v156
  %v813 = vunpack.c.l.b16 %v157
  %v814 = vunpack.c.l.b16 %v158
  %v815 = vunpack.c.l.b16 %v159
  %v816 = vunpack.c.l.b16 %v160
  %v817 = vunpack.c.l.b16 %v161
  %v818 = vunpack.c.l.b16 %v162
  %v819 = vunpack.c.l.b16 %v163
  %v820 = vunpack.c.l.b16 %v164
  %v821 = vunpack.c.l.b16 %v165
  %v822 = vunpack.c.l.b16 %v166
  %v823 = vunpack.c.l.b16 %v167
  %v824 = vunpack.c.l.b16 %v168
  %v825 = vunpack.c.l.b16 %v169
  %v826 = vunpack.c.l.b16 %v170
  %v827 = vunpack.c.l.b16 %v171
  %v828 = vunpack.c.l.b16 %v172
  %v829 = vunpack.c.l.b16 %v173
  %v830 = vunpack.c.l.b16 %v174
  %v831 = vunpack.c.l.b16 %v175
  %v832 = vunpack.c.l.b16 %v176
  %v833 = vunpack.c.l.b16 %v177
  %v834 = vunpack.c.l.b16 %v178
  %v835 = vunpack.c.l.b16 %v179
  %v836 = vunpack.c.l.b16 %v180
  %v837 = vunpack.c.l.b16 %v181
  %v838 = vunpack.c.l.b16 %v182
  %v839 = vunpack.c.l.b16 %v183
  %v840 = vunpack.c.l.b16 %v184
  %v841 = vunpack.c.l.b16 %v185
  %v842 = vunpack.c.l.b16 %v186
  %v843 = vunpack.c.l.b16 %v187
  %v844 = vunpack.c.l.b16 %v188
  %v845 = vunpack.c.l.b16 %v189
  %v846 = vunpack.c.l.b16 %v190
  %v847 = vunpack.c.l.b16 %v191
  %v848 = vunpack.c.l.b16 %v192
  %v849 = vunpack.c.l.b16 %v193
  %v850 = vunpack.c.l.b16 %v194
  %v851 = vunpack.c.l.b16 %v195
  %v852 = vunpack.c.l.b16 %v196
  %v853 = vunpack.c.l.b16 %v197
  %v854 = vunpack.c.l.b16 %v198
  %v855 = vunpack.c.l.b16 %v199
  %v856 = vunpack.c.l.b16 %v200
  %v857 = vunpack.c.l.b16 %v201
  %v858 = vunpack.c.l.b16 %v202
  %v859 = vunpack.c.l.b16 %v203
  %v860 = vunpack.c.l.b16 %v204
  %v861 = vunpack.c.l.b16 %v205
  %v862 = vunpack.c.l.b16 %v206
  %v863 = vunpack.c.l.b16 %v207
  %v864 = vunpack.c.l.b16 %v208
  %v865 = vunpack.c.l.b16 %v209
  %v866 = vunpack.c.l.b16 %v210
  %v867 = vunpack.c.l.b16 %v211
  %v868 = vunpack.c.l.b16 %v212
  %v869 = vunpack.c.l.b16 %v213
  %v870 = vunpack.c.l.b16 %v214
  %v871 = vunpack.c.l.b16 %v215
  %v872 = vunpack.c.l.b16 %v216
  %v873 = vunpack.c.l.b16 %v217
  %v874 = vunpack.c.l.b16 %v218
  %v875 = vunpack.c.l.b16 %v219
  %v876 = vunpack.c.l.b16 %v220
  %v877 = vunpack.c.l.b16 %v221
  %v878 = vunpack.c.l.b16 %v222
  %v879 = vunpack.c.l.b16 %v223
  %v880 = vunpack.c.l.b16 %v224
  %v881 = vunpack.c.l.b16 %v225
  %v882 = vunpack.c.l.b16 %v226
  %v883 = vunpack.c.l.b16 %v227
  %v884 = vunpack.c.l.b16 %v228
  %v885 = vunpack.c.l.b16 %v229
  %v886 = vunpack.c.l.b16 %v230
  %v887 = vunpack.c.l.b16 %v231
  %v888 = vunpack.c.l.b16 %v232
  %v889 = vunpack.c.l.b16 %v233
  %v890 = vunpack.c.l.b16 %v234
  %v891 = vunpack.c.l.b16 %v235
  %v892 = vunpack.c.l.b16 %v236
  %v893 = vunpack.c.l.b16 %v237
  %v894 = vpack.c.b16 %v751, %v750
  %v895 = vpack.c.b16 %v753, %v752
  %v896 = vpack.c.b16 %v755, %v754
  %v897 = vpack.c.b16 %v757, %v756
  %v898 = vpack.c.b16 %v759, %v758
  %v899 = vpack.c.b16 %v761, %v760
  %v900 = vpack.c.b16 %v763, %v762
  %v901 = vpack.c.b16 %v765, %v764
  %v902 = vpack.c.b16 %v767, %v766
  %v903 = vpack.c.b16 %v769, %v768
  %v904 = vpack.c.b16 %v771, %v770
  %v905 = vpack.c.b16 %v773, %v772
  %v906 = vpack.c.b16 %v775, %v774
  %v907 = vpack.c.b16 %v777, %v776
  %v908 = vpack.c.b16 %v779, %v778
  %v909 = vpack.c.b16 %v781, %v780
  %v910 = vpack.c.b16 %v783, %v782
  %v911 = vpack.c.b16 %v785, %v784
  %v912 = vpack.c.b16 %v787, %v786
  %v913 = vpack.c.b16 %v789, %v788
  %v914 = vpack.c.b16 %v791, %v790
  %v915 = vpack.c.b16 %v793, %v792
  %v916 = vpack.c.b16 %v795, %v794
  %v917 = vpack.c.b16 %v797, %v796
  %v918 = vpack.c.b16 %v799, %v798
  %v919 = vpack.c.b16 %v801, %v800
  %v920 = vpack.c.b16 %v803, %v802
  %v921 = vpack.c.b16 %v805, %v804
  %v922 = vpack.c.b16 %v807, %v806
  %v923 = vpack.c.b16 %v809, %v808
  %v924 = vpack.c.b16 %v811, %v810
  %v925 = vpack.c.b16 %v813, %v812
  %v926 = vpack.c.b16 %v815, %v814
  %v927 = vpack.c.b16 %v817, %v816
  %v928 = vpack.c.b16 %v819, %v818
  %v929 = vpack.c.b16 %v821, %v820
  %v930 = vpack.c.b16 %v823, %v822
  %v931 = vpack.c.b16 %v825, %v824
  %v932 = vpack.c.b16 %v827, %v826
  %v933 = vpack.c.b16 %v829, %v828
  %v934 = vpack.c.b16 %v831, %v830
  %v935 = vpack.c.b16 %v833, %v832
  %v936 = vpack.c.b16 %v835, %v834
  %v937 = vpack.c.b16 %v837, %v836
  %v938 = vpack.c.b16 %v839, %v838
  %v939 = vpack.c.b16 %v841, %v840
  %v940 = vpack.c.b16 %v843, %v842
  %v941 = vpack.c.b16 %v845, %v844
  %v942 = vpack.c.b16 %v847, %v846
  %v943 = vpack.c.b16 %v849, %v848
  %v944 = vpack.c.b16 %v851, %v850
  %v945 = vpack.c.b16 %v853, %v852
  %v946 = vpack.c.b16 %v855, %v854
  %v947 = vpack.c.b16 %v857, %v856
  %v948 = vpack.c.b16 %v859, %v858
  %v949 = vpack.c.b16 %v861, %v860
  %v950 = vpack.c.b16 %v863, %v862
  %v951 = vpack.c.b16 %v865, %v864
  %v952 = vpack.c.b16 %v867, %v866
  %v953 = vpack.c.b16 %v869, %v868
  %v954 = vpack.c.b16 %v871, %v870
  %v955 = vpack.c.b16 %v873, %v872
  %v956 = vpack.c.b16 %v875, %v874
  %v957 = vpack.c.b16 %v877, %v876
  %v958 = vpack.c.b16 %v879, %v878
  %v959 = vpack.c.b16 %v881, %v880
  %v960 = vpack.c.b16 %v883, %v882
  %v961 = vpack.c.b16 %v885, %v884
  %v962 = vpack.c.b16 %v887, %v886
  %v963 = vpack.c.b16 %v889, %v888
  %v964 = vpack.c.b16 %v891, %v890
  %v965 = vpack.c.b16 %v893, %v892
  %1038 = vmatprep.subr.bf16.mxu0 0
  %1039 = vmatpush1.bf16.msra.mxu0 %v894
  %1040 = vmatprep.subr.bf16.mxu0 0
  %1041 = vmatpush1.bf16.msra.mxu0 %v895
  %1042 = vmatprep.subr.bf16.mxu0 0
  %1043 = vmatpush1.bf16.msra.mxu0 %v896
  %1044 = vmatprep.subr.bf16.mxu0 0
  %1045 = vmatpush1.bf16.msra.mxu0 %v897
  %1046 = vmatprep.subr.bf16.mxu0 0
  %1047 = vmatpush1.bf16.msra.mxu0 %v898
  %1048 = vmatprep.subr.bf16.mxu0 0
  %1049 = vmatpush1.bf16.msra.mxu0 %v899
  %1050 = vmatprep.subr.bf16.mxu0 0
  %1051 = vmatpush1.bf16.msra.mxu0 %v900
  %1052 = vmatprep.subr.bf16.mxu0 0
  %1053 = vmatpush1.bf16.msra.mxu0 %v901
  %1054 = vmatprep.subr.bf16.mxu0 0
  %1055 = vmatpush1.bf16.msra.mxu0 %v902
  %1056 = vmatprep.subr.bf16.mxu0 0
  %1057 = vmatpush1.bf16.msra.mxu0 %v903
  %1058 = vmatprep.subr.bf16.mxu0 0
  %1059 = vmatpush1.bf16.msra.mxu0 %v904
  %1060 = vmatprep.subr.bf16.mxu0 0
  %1061 = vmatpush1.bf16.msra.mxu0 %v905
  %1062 = vmatprep.subr.bf16.mxu0 0
  %1063 = vmatpush1.bf16.msra.mxu0 %v906
  %1064 = vmatprep.subr.bf16.mxu0 0
  %1065 = vmatpush1.bf16.msra.mxu0 %v907
  %1066 = vmatprep.subr.bf16.mxu0 0
  %1067 = vmatpush1.bf16.msra.mxu0 %v908
  %1068 = vmatprep.subr.bf16.mxu0 0
  %1069 = vmatpush1.bf16.msra.mxu0 %v909
  %1070 = vmatprep.mubr.bf16.mxu0 %v463
  %1071 = vmatmul.mubr.bf16.gmra.mrb[0].mxu0 %v462
  %v1072 = vpop.f32.mrb[0].mxu0
  %v1073 = vadd.f32 0.0, %v1072
  %v1074 = vpop.f32.mrb[0].mxu0
  %v1075 = vpop.f32.mrb[0].mxu0
  %v1076 = vadd.f32 0.0, %v1075
  %v1077 = vpop.f32.mrb[0].mxu0
  %1078 = vmatprep.mubr.bf16.mxu0 %v472
  %1079 = vmatmul.mubr.bf16.gmra.mrb[0].mxu0 %v471
  %v1080 = vpop.f32.mrb[0].mxu0
  %v1081 = vadd.f32 0.0, %v1080
  %v1082 = vpop.f32.mrb[0].mxu0
  %v1083 = vpop.f32.mrb[0].mxu0
  %v1084 = vadd.f32 0.0, %v1083
  %v1085 = vpop.f32.mrb[0].mxu0
  %1086 = vmatprep.mubr.bf16.mxu0 %v481
  %1087 = vmatmul.mubr.bf16.gmra.mrb[0].mxu0 %v480
  %v1088 = vpop.f32.mrb[0].mxu0
  %v1089 = vadd.f32 0.0, %v1088
  %v1090 = vpop.f32.mrb[0].mxu0
  %v1091 = vpop.f32.mrb[0].mxu0
  %v1092 = vadd.f32 0.0, %v1091
  %v1093 = vpop.f32.mrb[0].mxu0
  %1094 = vmatprep.mubr.bf16.mxu0 %v490
  %1095 = vmatmul.mubr.bf16.gmra.mrb[0].mxu0 %v489
  %v1096 = vpop.f32.mrb[0].mxu0
  %v1097 = vadd.f32 0.0, %v1096
  %v1098 = vpop.f32.mrb[0].mxu0
  %v1099 = vpop.f32.mrb[0].mxu0
  %v1100 = vadd.f32 0.0, %v1099
  %v1101 = vpop.f32.mrb[0].mxu0
  %1102 = vmatprep.mubr.bf16.mxu0 %v499
  %1103 = vmatmul.mubr.bf16.gmra.mrb[0].mxu0 %v498
  %v1104 = vpop.f32.mrb[0].mxu0
  %v1105 = vadd.f32 0.0, %v1104
  %v1106 = vpop.f32.mrb[0].mxu0
  %v1107 = vpop.f32.mrb[0].mxu0
  %v1108 = vadd.f32 0.0, %v1107
  %v1109 = vpop.f32.mrb[0].mxu0
  %1110 = vmatprep.mubr.bf16.mxu0 %v508
  %1111 = vmatmul.mubr.bf16.gmra.mrb[0].mxu0 %v507
  %v1112 = vpop.f32.mrb[0].mxu0
  %v1113 = vadd.f32 0.0, %v1112
  %v1114 = vpop.f32.mrb[0].mxu0
  %v1115 = vpop.f32.mrb[0].mxu0
  %v1116 = vadd.f32 0.0, %v1115
  %v1117 = vpop.f32.mrb[0].mxu0
  %1118 = vmatprep.mubr.bf16.mxu0 %v517
  %1119 = vmatmul.mubr.bf16.gmra.mrb[0].mxu0 %v516
  %v1120 = vpop.f32.mrb[0].mxu0
  %v1121 = vadd.f32 0.0, %v1120
  %v1122 = vpop.f32.mrb[0].mxu0
  %v1123 = vpop.f32.mrb[0].mxu0
  %v1124 = vadd.f32 0.0, %v1123
  %v1125 = vpop.f32.mrb[0].mxu0
  %1126 = vmatprep.mubr.bf16.mxu0 %v526
  %1127 = vmatmul.mubr.bf16.gmra.mrb[0].mxu0 %v525
  %v1128 = vpop.f32.mrb[0].mxu0
  %v1129 = vadd.f32 0.0, %v1128
  %v1130 = vpop.f32.mrb[0].mxu0
  %v1131 = vpop.f32.mrb[0].mxu0
  %v1132 = vadd.f32 0.0, %v1131
  %v1133 = vpop.f32.mrb[0].mxu0
  %1134 = vdwg.mxu0
  %1135 = vmatprep.subr.bf16.mxu0 0
  %1136 = vmatpush1.bf16.msra.mxu0 %v910
  %1137 = vmatprep.subr.bf16.mxu0 0
  %1138 = vmatpush1.bf16.msra.mxu0 %v911
  %1139 = vmatprep.subr.bf16.mxu0 0
  %1140 = vmatpush1.bf16.msra.mxu0 %v912
  %1141 = vmatprep.subr.bf16.mxu0 0
  %1142 = vmatpush1.bf16.msra.mxu0 %v913
  %1143 = vmatprep.subr.bf16.mxu0 0
  %1144 = vmatpush1.bf16.msra.mxu0 %v914
  %1145 = vmatprep.subr.bf16.mxu0 0
  %1146 = vmatpush1.bf16.msra.mxu0 %v915
  %1147 = vmatprep.subr.bf16.mxu0 0
  %1148 = vmatpush1.bf16.msra.mxu0 %v916
  %1149 = vmatprep.subr.bf16.mxu0 0
  %1150 = vmatpush1.bf16.msra.mxu0 %v917
  %1151 = vmatprep.subr.bf16.mxu0 0
  %1152 = vmatpush1.bf16.msra.mxu0 %v918
  %1153 = vmatprep.subr.bf16.mxu0 0
  %1154 = vmatpush1.bf16.msra.mxu0 %v919
  %1155 = vmatprep.subr.bf16.mxu0 0
  %1156 = vmatpush1.bf16.msra.mxu0 %v920
  %1157 = vmatprep.subr.bf16.mxu0 0
  %1158 = vmatpush1.bf16.msra.mxu0 %v921
  %1159 = vmatprep.subr.bf16.mxu0 0
  %1160 = vmatpush1.bf16.msra.mxu0 %v922
  %1161 = vmatprep.subr.bf16.mxu0 0
  %1162 = vmatpush1.bf16.msra.mxu0 %v923
  %1163 = vmatprep.subr.bf16.mxu0 0
  %1164 = vmatpush1.bf16.msra.mxu0 %v924
  %1165 = vmatprep.subr.bf16.mxu0 0
  %1166 = vmatpush1.bf16.msra.mxu0 %v925
  %1167 = vmatprep.mubr.bf16.mxu0 %v465
  %1168 = vmatmul.mubr.bf16.gmra.mrb[0].mxu0 %v464
  %v1169 = vpop.f32.mrb[0].mxu0
  %v1170 = vadd.f32 %v1073, %v1169
  %v1171 = vpop.f32.mrb[0].mxu0
  %v1172 = vpop.f32.mrb[0].mxu0
  %v1173 = vadd.f32 %v1076, %v1172
  %v1174 = vpop.f32.mrb[0].mxu0
  %1175 = vmatprep.mubr.bf16.mxu0 %v474
  %1176 = vmatmul.mubr.bf16.gmra.mrb[0].mxu0 %v473
  %v1177 = vpop.f32.mrb[0].mxu0
  %v1178 = vadd.f32 %v1081, %v1177
  %v1179 = vpop.f32.mrb[0].mxu0
  %v1180 = vpop.f32.mrb[0].mxu0
  %v1181 = vadd.f32 %v1084, %v1180
  %v1182 = vpop.f32.mrb[0].mxu0
  %1183 = vmatprep.mubr.bf16.mxu0 %v483
  %1184 = vmatmul.mubr.bf16.gmra.mrb[0].mxu0 %v482
  %v1185 = vpop.f32.mrb[0].mxu0
  %v1186 = vadd.f32 %v1089, %v1185
  %v1187 = vpop.f32.mrb[0].mxu0
  %v1188 = vpop.f32.mrb[0].mxu0
  %v1189 = vadd.f32 %v1092, %v1188
  %v1190 = vpop.f32.mrb[0].mxu0
  %1191 = vmatprep.mubr.bf16.mxu0 %v492
  %1192 = vmatmul.mubr.bf16.gmra.mrb[0].mxu0 %v491
  %v1193 = vpop.f32.mrb[0].mxu0
  %v1194 = vadd.f32 %v1097, %v1193
  %v1195 = vpop.f32.mrb[0].mxu0
  %v1196 = vpop.f32.mrb[0].mxu0
  %v1197 = vadd.f32 %v1100, %v1196
  %v1198 = vpop.f32.mrb[0].mxu0
  %1199 = vmatprep.mubr.bf16.mxu0 %v501
  %1200 = vmatmul.mubr.bf16.gmra.mrb[0].mxu0 %v500
  %v1201 = vpop.f32.mrb[0].mxu0
  %v1202 = vadd.f32 %v1105, %v1201
  %v1203 = vpop.f32.mrb[0].mxu0
  %v1204 = vpop.f32.mrb[0].mxu0
  %v1205 = vadd.f32 %v1108, %v1204
  %v1206 = vpop.f32.mrb[0].mxu0
  %1207 = vmatprep.mubr.bf16.mxu0 %v510
  %1208 = vmatmul.mubr.bf16.gmra.mrb[0].mxu0 %v509
  %v1209 = vpop.f32.mrb[0].mxu0
  %v1210 = vadd.f32 %v1113, %v1209
  %v1211 = vpop.f32.mrb[0].mxu0
  %v1212 = vpop.f32.mrb[0].mxu0
  %v1213 = vadd.f32 %v1116, %v1212
  %v1214 = vpop.f32.mrb[0].mxu0
  %1215 = vmatprep.mubr.bf16.mxu0 %v519
  %1216 = vmatmul.mubr.bf16.gmra.mrb[0].mxu0 %v518
  %v1217 = vpop.f32.mrb[0].mxu0
  %v1218 = vadd.f32 %v1121, %v1217
  %v1219 = vpop.f32.mrb[0].mxu0
  %v1220 = vpop.f32.mrb[0].mxu0
  %v1221 = vadd.f32 %v1124, %v1220
  %v1222 = vpop.f32.mrb[0].mxu0
  %1223 = vmatprep.mubr.bf16.mxu0 %v528
  %1224 = vmatmul.mubr.bf16.gmra.mrb[0].mxu0 %v527
  %v1225 = vpop.f32.mrb[0].mxu0
  %v1226 = vadd.f32 %v1129, %v1225
  %v1227 = vpop.f32.mrb[0].mxu0
  %v1228 = vpop.f32.mrb[0].mxu0
  %v1229 = vadd.f32 %v1132, %v1228
  %v1230 = vpop.f32.mrb[0].mxu0
  %1231 = vdwg.mxu0
  %1232 = vmatprep.subr.bf16.mxu0 0
  %1233 = vmatpush1.bf16.msra.mxu0 %v926
  %1234 = vmatprep.subr.bf16.mxu0 0
  %1235 = vmatpush1.bf16.msra.mxu0 %v927
  %1236 = vmatprep.subr.bf16.mxu0 0
  %1237 = vmatpush1.bf16.msra.mxu0 %v928
  %1238 = vmatprep.subr.bf16.mxu0 0
  %1239 = vmatpush1.bf16.msra.mxu0 %v929
  %1240 = vmatprep.subr.bf16.mxu0 0
  %1241 = vmatpush1.bf16.msra.mxu0 %v930
  %1242 = vmatprep.subr.bf16.mxu0 0
  %1243 = vmatpush1.bf16.msra.mxu0 %v931
  %1244 = vmatprep.subr.bf16.mxu0 0
  %1245 = vmatpush1.bf16.msra.mxu0 %v932
  %1246 = vmatprep.subr.bf16.mxu0 0
  %1247 = vmatpush1.bf16.msra.mxu0 %v933
  %1248 = vmatprep.subr.bf16.mxu0 0
  %1249 = vmatpush1.bf16.msra.mxu0 %v934
  %1250 = vmatprep.subr.bf16.mxu0 0
  %1251 = vmatpush1.bf16.msra.mxu0 %v935
  %1252 = vmatprep.subr.bf16.mxu0 0
  %1253 = vmatpush1.bf16.msra.mxu0 %v936
  %1254 = vmatprep.subr.bf16.mxu0 0
  %1255 = vmatpush1.bf16.msra.mxu0 %v937
  %1256 = vmatprep.subr.bf16.mxu0 0
  %1257 = vmatpush1.bf16.msra.mxu0 %v938
  %1258 = vmatprep.subr.bf16.mxu0 0
  %1259 = vmatpush1.bf16.msra.mxu0 %v939
  %1260 = vmatprep.subr.bf16.mxu0 0
  %1261 = vmatpush1.bf16.msra.mxu0 %v940
  %1262 = vmatprep.subr.bf16.mxu0 0
  %1263 = vmatpush1.bf16.msra.mxu0 %v941
  %1264 = vmatprep.mubr.bf16.mxu0 %v467
  %1265 = vmatmul.mubr.bf16.gmra.mrb[0].mxu0 %v466
  %v1266 = vpop.f32.mrb[0].mxu0
  %v1267 = vadd.f32 %v1170, %v1266
  %v1268 = vpop.f32.mrb[0].mxu0
  %v1269 = vpop.f32.mrb[0].mxu0
  %v1270 = vadd.f32 %v1173, %v1269
  %v1271 = vpop.f32.mrb[0].mxu0
  %1272 = vmatprep.mubr.bf16.mxu0 %v476
  %1273 = vmatmul.mubr.bf16.gmra.mrb[0].mxu0 %v475
  %v1274 = vpop.f32.mrb[0].mxu0
  %v1275 = vadd.f32 %v1178, %v1274
  %v1276 = vpop.f32.mrb[0].mxu0
  %v1277 = vpop.f32.mrb[0].mxu0
  %v1278 = vadd.f32 %v1181, %v1277
  %v1279 = vpop.f32.mrb[0].mxu0
  %1280 = vmatprep.mubr.bf16.mxu0 %v485
  %1281 = vmatmul.mubr.bf16.gmra.mrb[0].mxu0 %v484
  %v1282 = vpop.f32.mrb[0].mxu0
  %v1283 = vadd.f32 %v1186, %v1282
  %v1284 = vpop.f32.mrb[0].mxu0
  %v1285 = vpop.f32.mrb[0].mxu0
  %v1286 = vadd.f32 %v1189, %v1285
  %v1287 = vpop.f32.mrb[0].mxu0
  %1288 = vmatprep.mubr.bf16.mxu0 %v494
  %1289 = vmatmul.mubr.bf16.gmra.mrb[0].mxu0 %v493
  %v1290 = vpop.f32.mrb[0].mxu0
  %v1291 = vadd.f32 %v1194, %v1290
  %v1292 = vpop.f32.mrb[0].mxu0
  %v1293 = vpop.f32.mrb[0].mxu0
  %v1294 = vadd.f32 %v1197, %v1293
  %v1295 = vpop.f32.mrb[0].mxu0
  %1296 = vmatprep.mubr.bf16.mxu0 %v503
  %1297 = vmatmul.mubr.bf16.gmra.mrb[0].mxu0 %v502
  %v1298 = vpop.f32.mrb[0].mxu0
  %v1299 = vadd.f32 %v1202, %v1298
  %v1300 = vpop.f32.mrb[0].mxu0
  %v1301 = vpop.f32.mrb[0].mxu0
  %v1302 = vadd.f32 %v1205, %v1301
  %v1303 = vpop.f32.mrb[0].mxu0
  %1304 = vmatprep.mubr.bf16.mxu0 %v512
  %1305 = vmatmul.mubr.bf16.gmra.mrb[0].mxu0 %v511
  %v1306 = vpop.f32.mrb[0].mxu0
  %v1307 = vadd.f32 %v1210, %v1306
  %v1308 = vpop.f32.mrb[0].mxu0
  %v1309 = vpop.f32.mrb[0].mxu0
  %v1310 = vadd.f32 %v1213, %v1309
  %v1311 = vpop.f32.mrb[0].mxu0
  %1312 = vmatprep.mubr.bf16.mxu0 %v521
  %1313 = vmatmul.mubr.bf16.gmra.mrb[0].mxu0 %v520
  %v1314 = vpop.f32.mrb[0].mxu0
  %v1315 = vadd.f32 %v1218, %v1314
  %v1316 = vpop.f32.mrb[0].mxu0
  %v1317 = vpop.f32.mrb[0].mxu0
  %v1318 = vadd.f32 %v1221, %v1317
  %v1319 = vpop.f32.mrb[0].mxu0
  %1320 = vmatprep.mubr.bf16.mxu0 %v530
  %1321 = vmatmul.mubr.bf16.gmra.mrb[0].mxu0 %v529
  %v1322 = vpop.f32.mrb[0].mxu0
  %v1323 = vadd.f32 %v1226, %v1322
  %v1324 = vpop.f32.mrb[0].mxu0
  %v1325 = vpop.f32.mrb[0].mxu0
  %v1326 = vadd.f32 %v1229, %v1325
  %v1327 = vpop.f32.mrb[0].mxu0
  %1328 = vdwg.mxu0
  %1329 = vmatprep.subr.bf16.mxu0 0
  %1330 = vmatpush1.bf16.msra.mxu0 %v942
  %1331 = vmatprep.subr.bf16.mxu0 0
  %1332 = vmatpush1.bf16.msra.mxu0 %v943
  %1333 = vmatprep.subr.bf16.mxu0 0
  %1334 = vmatpush1.bf16.msra.mxu0 %v944
  %1335 = vmatprep.subr.bf16.mxu0 0
  %1336 = vmatpush1.bf16.msra.mxu0 %v945
  %1337 = vmatprep.subr.bf16.mxu0 0
  %1338 = vmatpush1.bf16.msra.mxu0 %v946
  %1339 = vmatprep.subr.bf16.mxu0 0
  %1340 = vmatpush1.bf16.msra.mxu0 %v947
  %1341 = vmatprep.subr.bf16.mxu0 0
  %1342 = vmatpush1.bf16.msra.mxu0 %v948
  %1343 = vmatprep.subr.bf16.mxu0 0
  %1344 = vmatpush1.bf16.msra.mxu0 %v949
  %1345 = vmatprep.subr.bf16.mxu0 0
  %1346 = vmatpush1.bf16.msra.mxu0 %v950
  %1347 = vmatprep.subr.bf16.mxu0 0
  %1348 = vmatpush1.bf16.msra.mxu0 %v951
  %1349 = vmatprep.subr.bf16.mxu0 0
  %1350 = vmatpush1.bf16.msra.mxu0 %v952
  %1351 = vmatprep.subr.bf16.mxu0 0
  %1352 = vmatpush1.bf16.msra.mxu0 %v953
  %1353 = vmatprep.subr.bf16.mxu0 0
  %1354 = vmatpush1.bf16.msra.mxu0 %v954
  %1355 = vmatprep.subr.bf16.mxu0 0
  %1356 = vmatpush1.bf16.msra.mxu0 %v955
  %1357 = vmatprep.subr.bf16.mxu0 0
  %1358 = vmatpush1.bf16.msra.mxu0 %v956
  %1359 = vmatprep.subr.bf16.mxu0 0
  %1360 = vmatpush1.bf16.msra.mxu0 %v957
  %1361 = vmatprep.mubr.bf16.mxu0 %v469
  %1362 = vmatmul.mubr.bf16.gmra.mrb[0].mxu0 %v468
  %v1363 = vpop.f32.mrb[0].mxu0
  %v1364 = vadd.f32 %v1267, %v1363
  %v1365 = vpop.f32.mrb[0].mxu0
  %v1366 = vpop.f32.mrb[0].mxu0
  %v1367 = vadd.f32 %v1270, %v1366
  %v1368 = vpop.f32.mrb[0].mxu0
  %1369 = vmatprep.mubr.bf16.mxu0 %v478
  %1370 = vmatmul.mubr.bf16.gmra.mrb[0].mxu0 %v477
  %v1371 = vpop.f32.mrb[0].mxu0
  %v1372 = vadd.f32 %v1275, %v1371
  %v1373 = vpop.f32.mrb[0].mxu0
  %v1374 = vpop.f32.mrb[0].mxu0
  %v1375 = vadd.f32 %v1278, %v1374
  %v1376 = vpop.f32.mrb[0].mxu0
  %1377 = vmatprep.mubr.bf16.mxu0 %v487
  %1378 = vmatmul.mubr.bf16.gmra.mrb[0].mxu0 %v486
  %v1379 = vpop.f32.mrb[0].mxu0
  %v1380 = vadd.f32 %v1283, %v1379
  %v1381 = vpop.f32.mrb[0].mxu0
  %v1382 = vpop.f32.mrb[0].mxu0
  %v1383 = vadd.f32 %v1286, %v1382
  %v1384 = vpop.f32.mrb[0].mxu0
  %1385 = vmatprep.mubr.bf16.mxu0 %v496
  %1386 = vmatmul.mubr.bf16.gmra.mrb[0].mxu0 %v495
  %v1387 = vpop.f32.mrb[0].mxu0
  %v1388 = vadd.f32 %v1291, %v1387
  %v1389 = vpop.f32.mrb[0].mxu0
  %v1390 = vpop.f32.mrb[0].mxu0
  %v1391 = vadd.f32 %v1294, %v1390
  %v1392 = vpop.f32.mrb[0].mxu0
  %1393 = vmatprep.mubr.bf16.mxu0 %v505
  %1394 = vmatmul.mubr.bf16.gmra.mrb[0].mxu0 %v504
  %v1395 = vpop.f32.mrb[0].mxu0
  %v1396 = vadd.f32 %v1299, %v1395
  %v1397 = vpop.f32.mrb[0].mxu0
  %v1398 = vpop.f32.mrb[0].mxu0
  %v1399 = vadd.f32 %v1302, %v1398
  %v1400 = vpop.f32.mrb[0].mxu0
  %1401 = vmatprep.mubr.bf16.mxu0 %v514
  %1402 = vmatmul.mubr.bf16.gmra.mrb[0].mxu0 %v513
  %v1403 = vpop.f32.mrb[0].mxu0
  %v1404 = vadd.f32 %v1307, %v1403
  %v1405 = vpop.f32.mrb[0].mxu0
  %v1406 = vpop.f32.mrb[0].mxu0
  %v1407 = vadd.f32 %v1310, %v1406
  %v1408 = vpop.f32.mrb[0].mxu0
  %1409 = vmatprep.mubr.bf16.mxu0 %v523
  %1410 = vmatmul.mubr.bf16.gmra.mrb[0].mxu0 %v522
  %v1411 = vpop.f32.mrb[0].mxu0
  %v1412 = vadd.f32 %v1315, %v1411
  %v1413 = vpop.f32.mrb[0].mxu0
  %v1414 = vpop.f32.mrb[0].mxu0
  %v1415 = vadd.f32 %v1318, %v1414
  %v1416 = vpop.f32.mrb[0].mxu0
  %1417 = vmatprep.mubr.bf16.mxu0 %v532
  %1418 = vmatmul.mubr.bf16.gmra.mrb[0].mxu0 %v531
  %v1419 = vpop.f32.mrb[0].mxu0
  %v1420 = vadd.f32 %v1323, %v1419
  %v1421 = vpop.f32.mrb[0].mxu0
  %v1422 = vpop.f32.mrb[0].mxu0
  %v1423 = vadd.f32 %v1326, %v1422
  %v1424 = vpop.f32.mrb[0].mxu0
  %1425 = vdwg.mxu0
  %1426 = vmatprep.subr.bf16.mxu0 0
  %1427 = vmatpush1.bf16.msra.mxu0 %v958
  %1428 = vmatprep.subr.bf16.mxu0 0
  %1429 = vmatpush1.bf16.msra.mxu0 %v959
  %1430 = vmatprep.subr.bf16.mxu0 0
  %1431 = vmatpush1.bf16.msra.mxu0 %v960
  %1432 = vmatprep.subr.bf16.mxu0 0
  %1433 = vmatpush1.bf16.msra.mxu0 %v961
  %1434 = vmatprep.subr.bf16.mxu0 0
  %1435 = vmatpush1.bf16.msra.mxu0 %v962
  %1436 = vmatprep.subr.bf16.mxu0 0
  %1437 = vmatpush1.bf16.msra.mxu0 %v963
  %1438 = vmatprep.subr.bf16.mxu0 0
  %1439 = vmatpush1.bf16.msra.mxu0 %v964
  %1440 = vmatprep.subr.bf16.mxu0 0
  %1441 = vmatpush1.bf16.msra.mxu0 %v965
  %1442 = vmatprep.subr.bf16.mxu0 0
  %1443 = vmatpush1.bf16.msra.mxu0 0
  %1444 = vmatprep.subr.bf16.mxu0 0
  %1445 = vmatpush1.bf16.msra.mxu0 0
  %1446 = vmatprep.subr.bf16.mxu0 0
  %1447 = vmatpush1.bf16.msra.mxu0 0
  %1448 = vmatprep.subr.bf16.mxu0 0
  %1449 = vmatpush1.bf16.msra.mxu0 0
  %1450 = vmatprep.subr.bf16.mxu0 0
  %1451 = vmatpush1.bf16.msra.mxu0 0
  %1452 = vmatprep.subr.bf16.mxu0 0
  %1453 = vmatpush1.bf16.msra.mxu0 0
  %1454 = vmatprep.subr.bf16.mxu0 0
  %1455 = vmatpush1.bf16.msra.mxu0 0
  %1456 = vmatprep.subr.bf16.mxu0 0
  %1457 = vmatpush1.bf16.msra.mxu0 0
  %1458 = vmatprep.mubr.bf16.mxu0 0
  %1459 = vmatmul.mubr.bf16.gmra.mrb[0].mxu0 %v470
  %v1460 = vpop.f32.mrb[0].mxu0
  %v1461 = vadd.f32 %v1364, %v1460
  %v1462 = vpop.f32.mrb[0].mxu0
  %v1463 = vpop.f32.mrb[0].mxu0
  %v1464 = vadd.f32 %v1367, %v1463
  %v1465 = vpop.f32.mrb[0].mxu0
  %1466 = vmatprep.mubr.bf16.mxu0 0
  %1467 = vmatmul.mubr.bf16.gmra.mrb[0].mxu0 %v479
  %v1468 = vpop.f32.mrb[0].mxu0
  %v1469 = vadd.f32 %v1372, %v1468
  %v1470 = vpop.f32.mrb[0].mxu0
  %v1471 = vpop.f32.mrb[0].mxu0
  %v1472 = vadd.f32 %v1375, %v1471
  %v1473 = vpop.f32.mrb[0].mxu0
  %1474 = vmatprep.mubr.bf16.mxu0 0
  %1475 = vmatmul.mubr.bf16.gmra.mrb[0].mxu0 %v488
  %v1476 = vpop.f32.mrb[0].mxu0
  %v1477 = vadd.f32 %v1380, %v1476
  %v1478 = vpop.f32.mrb[0].mxu0
  %v1479 = vpop.f32.mrb[0].mxu0
  %v1480 = vadd.f32 %v1383, %v1479
  %v1481 = vpop.f32.mrb[0].mxu0
  %1482 = vmatprep.mubr.bf16.mxu0 0
  %1483 = vmatmul.mubr.bf16.gmra.mrb[0].mxu0 %v497
  %v1484 = vpop.f32.mrb[0].mxu0
  %v1485 = vadd.f32 %v1388, %v1484
  %v1486 = vpop.f32.mrb[0].mxu0
  %v1487 = vpop.f32.mrb[0].mxu0
  %v1488 = vadd.f32 %v1391, %v1487
  %v1489 = vpop.f32.mrb[0].mxu0
  %1490 = vmatprep.mubr.bf16.mxu0 0
  %1491 = vmatmul.mubr.bf16.gmra.mrb[0].mxu0 %v506
  %v1492 = vpop.f32.mrb[0].mxu0
  %v1493 = vadd.f32 %v1396, %v1492
  %v1494 = vpop.f32.mrb[0].mxu0
  %v1495 = vpop.f32.mrb[0].mxu0
  %v1496 = vadd.f32 %v1399, %v1495
  %v1497 = vpop.f32.mrb[0].mxu0
  %1498 = vmatprep.mubr.bf16.mxu0 0
  %1499 = vmatmul.mubr.bf16.gmra.mrb[0].mxu0 %v515
  %v1500 = vpop.f32.mrb[0].mxu0
  %v1501 = vadd.f32 %v1404, %v1500
  %v1502 = vpop.f32.mrb[0].mxu0
  %v1503 = vpop.f32.mrb[0].mxu0
  %v1504 = vadd.f32 %v1407, %v1503
  %v1505 = vpop.f32.mrb[0].mxu0
  %1506 = vmatprep.mubr.bf16.mxu0 0
  %1507 = vmatmul.mubr.bf16.gmra.mrb[0].mxu0 %v524
  %v1508 = vpop.f32.mrb[0].mxu0
  %v1509 = vadd.f32 %v1412, %v1508
  %v1510 = vpop.f32.mrb[0].mxu0
  %v1511 = vpop.f32.mrb[0].mxu0
  %v1512 = vadd.f32 %v1415, %v1511
  %v1513 = vpop.f32.mrb[0].mxu0
  %1514 = vmatprep.mubr.bf16.mxu0 0
  %1515 = vmatmul.mubr.bf16.gmra.mrb[0].mxu0 %v533
  %v1516 = vpop.f32.mrb[0].mxu0
  %v1517 = vadd.f32 %v1420, %v1516
  %v1518 = vpop.f32.mrb[0].mxu0
  %v1519 = vpop.f32.mrb[0].mxu0
  %v1520 = vadd.f32 %v1423, %v1519
  %v1521 = vpop.f32.mrb[0].mxu0
  %1522 = vdwg.mxu0
  %1523 = vst [vmem:[%s2] sm:$0xff] %v1461
  %1524 = vst [vmem:[%s2 + $0x8] sm:$0xff] %v1464
  %1525 = vst [vmem:[%s2 + $0x10] sm:$0xff] %v1469
  %1526 = vst [vmem:[%s2 + $0x18] sm:$0xff] %v1472
  %1527 = vst [vmem:[%s2 + $0x20] sm:$0xff] %v1477
  %1528 = vst [vmem:[%s2 + $0x28] sm:$0xff] %v1480
  %1529 = vst [vmem:[%s2 + $0x30] sm:$0xff] %v1485
  %1530 = vst [vmem:[%s2 + $0x38] sm:$0xff] %v1488
  %1531 = vst [vmem:[%s2 + $0x40] sm:$0xff] %v1493
  %1532 = vst [vmem:[%s2 + $0x48] sm:$0xff] %v1496
  %1533 = vst [vmem:[%s2 + $0x50] sm:$0xff] %v1501
  %1534 = vst [vmem:[%s2 + $0x58] sm:$0xff] %v1504
  %1535 = vst [vmem:[%s2 + $0x60] sm:$0xff] %v1509
  %1536 = vst [vmem:[%s2 + $0x68] sm:$0xff] %v1512
  %1537 = vst [vmem:[%s2 + $0x70] sm:$0xff] %v1517
  %1538 = vst [vmem:[%s2 + $0x78] sm:$0xff] %v1520
  %v1539 = vadd.f32 %v1461, %v1464
  %v1540 = vadd.f32 %v1539, %v1469
  %v1541 = vadd.f32 %v1540, %v1472
  %v1542 = vadd.f32 %v1541, %v1477
  %v1543 = vadd.f32 %v1542, %v1480
  %v1544 = vadd.f32 %v1543, %v1485
  %v1545 = vadd.f32 %v1544, %v1488
  %v1546 = vadd.f32 %v1545, %v1493
  %v1547 = vadd.f32 %v1546, %v1496
  %v1548 = vadd.f32 %v1547, %v1501
  %v1549 = vadd.f32 %v1548, %v1504
  %v1550 = vadd.f32 %v1549, %v1509
  %v1551 = vadd.f32 %v1550, %v1512
  %v1552 = vadd.f32 %v1551, %v1517
  %v1553 = vadd.f32 %v1552, %v1520
  %v1554 = vrot.slane %v1553, 4
  %v1555 = vadd.f32 %v1553, %v1554
  %v1556 = vrot.slane %v1555, 2
  %v1557 = vadd.f32 %v1555, %v1556
  %v1558 = vrot.slane %v1557, 1
  %v1559 = vadd.f32 %v1557, %v1558
  %v1560 = vmul.f32 %v1461, %v1461
  %v1561 = vmul.f32 %v1464, %v1464
  %v1562 = vmul.f32 %v1469, %v1469
  %v1563 = vmul.f32 %v1472, %v1472
  %v1564 = vmul.f32 %v1477, %v1477
  %v1565 = vmul.f32 %v1480, %v1480
  %v1566 = vmul.f32 %v1485, %v1485
  %v1567 = vmul.f32 %v1488, %v1488
  %v1568 = vmul.f32 %v1493, %v1493
  %v1569 = vmul.f32 %v1496, %v1496
  %v1570 = vmul.f32 %v1501, %v1501
  %v1571 = vmul.f32 %v1504, %v1504
  %v1572 = vmul.f32 %v1509, %v1509
  %v1573 = vmul.f32 %v1512, %v1512
  %v1574 = vmul.f32 %v1517, %v1517
  %v1575 = vmul.f32 %v1520, %v1520
  %v1576 = vadd.f32 %v1560, %v1561
  %v1577 = vadd.f32 %v1576, %v1562
  %v1578 = vadd.f32 %v1577, %v1563
  %v1579 = vadd.f32 %v1578, %v1564
  %v1580 = vadd.f32 %v1579, %v1565
  %v1581 = vadd.f32 %v1580, %v1566
  %v1582 = vadd.f32 %v1581, %v1567
  %v1583 = vadd.f32 %v1582, %v1568
  %v1584 = vadd.f32 %v1583, %v1569
  %v1585 = vadd.f32 %v1584, %v1570
  %v1586 = vadd.f32 %v1585, %v1571
  %v1587 = vadd.f32 %v1586, %v1572
  %v1588 = vadd.f32 %v1587, %v1573
  %v1589 = vadd.f32 %v1588, %v1574
  %v1590 = vadd.f32 %v1589, %v1575
  %v1591 = vrot.slane %v1590, 4
  %v1592 = vadd.f32 %v1590, %v1591
  %v1593 = vrot.slane %v1592, 2
  %v1594 = vadd.f32 %v1592, %v1593
  %v1595 = vrot.slane %v1594, 1
  %v1596 = vadd.f32 %v1594, %v1595
  %vm1597 = vcmask 1040384
  %v1598 = vsel %vm1597, %v1559, %v1596
  %vm1599 = vcmask 1041408
  %v1600 = vsel %vm1599, %v1598, 0.0
  %1601 = vst [vmem:[%s3] sm:$0xff] %v1600
  // Predicated region
  $region10: #{cnn_autoencoder_forward.25} parent=0 // pred_check
    _
  $region11: #{cnn_autoencoder_forward.25} parent=0 // pred_check_branch
    %1603 = sbr.rel (0) target = $region13
  $region12: #{cnn_autoencoder_forward.25} parent=0 // pred_region
    _
  $region13: #{cnn_autoencoder_forward.25} parent=0 // pred_fallthru
    _
  // Predicated region
  $region14: #{cnn_autoencoder_forward.25} parent=0 // pred_check
    _
  $region15: #{cnn_autoencoder_forward.25} parent=0 // pred_check_branch
    %1605 = sbr.rel (0) target = $region17
  $region16: #{cnn_autoencoder_forward.25} parent=0 // pred_region
    _
  $region17: #{cnn_autoencoder_forward.25} parent=0 // pred_fallthru
    _
  // Predicated region
  $region18: #{cnn_autoencoder_forward.25} parent=0 // pred_check
    _
  $region19: #{cnn_autoencoder_forward.25} parent=0 // pred_check_branch
    %1607 = sbr.rel (0) target = $region21
  $region20: #{cnn_autoencoder_forward.25} parent=0 // pred_region
    _
  $region21: #{cnn_autoencoder_forward.25} parent=0 // pred_fallthru
    _
  // Predicated region
  $region22: #{cnn_autoencoder_forward.25} parent=0 // pred_check
    _
  $region23: #{cnn_autoencoder_forward.25} parent=0 // pred_check_branch
    %1609 = sbr.rel (0) target = $region25
  $region24: #{cnn_autoencoder_forward.25} parent=0 // pred_region
    _
  $region25: #{cnn_autoencoder_forward.25} parent=0 // pred_fallthru
    _

// kernel: cnn_autoencoder_forward.29
$region0: #{cnn_autoencoder_forward.29}
  #allocation0 [shape = 'u32[]', space=smem, size = 0x4, offset = 0x4, fixed_abs, tag = 'smem constant byte address 0x4 - core index']
  #allocation1 [shape = 'u32[144,128]{1,0:T(1,128)}', space=vmem, size = 0x12000, scoped, tag = 'internal scratch']
  %s0 = inlined_call_operand.vmem [shape: bf16[512,384], index: 0, kind: input, shape index: {}]
  %s1 = inlined_call_operand.vmem [shape: bf16[384,128], index: 1, kind: input, shape index: {}]
  %s2 = inlined_call_operand.vmem [shape: f32[512,128], index: 2, kind: output, shape index: {}]
  %s3 = sld [smem:[#allocation0]]
  $region18: #{cnn_autoencoder_forward.29} parent=0
    _
  %s5 = ssub.s32 1, %s3
  %s6 = scalar_select 0, %s5, %s3
  // Predicated region
  $region2: #{cnn_autoencoder_forward.29} parent=0 // pred_check
    _
  $region3: #{cnn_autoencoder_forward.29} parent=0 // pred_check_branch
    %8 = sbr.rel (0) target = $region5
  $region4: #{cnn_autoencoder_forward.29} parent=0 // pred_region
    _
  $region5: #{cnn_autoencoder_forward.29} parent=0 // pred_fallthru
    _
  // Predicated region
  $region6: #{cnn_autoencoder_forward.29} parent=0 // pred_check
    _
  $region7: #{cnn_autoencoder_forward.29} parent=0 // pred_check_branch
    %10 = sbr.rel (0) target = $region9
  $region8: #{cnn_autoencoder_forward.29} parent=0 // pred_region
    _
  $region9: #{cnn_autoencoder_forward.29} parent=0 // pred_fallthru
    _
  %v12 = vld [vmem:[%s0] sm:$0xff]
  %v13 = vld [vmem:[%s0 + $0x8] sm:$0xf]
  %v14 = vld [vmem:[%s0 + $0xc] sm:$0xff]
  %v15 = vld [vmem:[%s0 + $0x14] sm:$0xf]
  %v16 = vld [vmem:[%s0 + $0x18] sm:$0xff]
  %v17 = vld [vmem:[%s0 + $0x20] sm:$0xf]
  %v18 = vld [vmem:[%s0 + $0x24] sm:$0xff]
  %v19 = vld [vmem:[%s0 + $0x2c] sm:$0xf]
  %v20 = vld [vmem:[%s0 + $0x30] sm:$0xff]
  %v21 = vld [vmem:[%s0 + $0x38] sm:$0xf]
  %v22 = vld [vmem:[%s0 + $0x3c] sm:$0xff]
  %v23 = vld [vmem:[%s0 + $0x44] sm:$0xf]
  %v24 = vld [vmem:[%s0 + $0x48] sm:$0xff]
  %v25 = vld [vmem:[%s0 + $0x50] sm:$0xf]
  %v26 = vld [vmem:[%s0 + $0x54] sm:$0xff]
  %v27 = vld [vmem:[%s0 + $0x5c] sm:$0xf]
  %v28 = vld [vmem:[%s0 + $0x60] sm:$0xff]
  %v29 = vld [vmem:[%s0 + $0x68] sm:$0xf]
  %v30 = vld [vmem:[%s0 + $0x6c] sm:$0xff]
  %v31 = vld [vmem:[%s0 + $0x74] sm:$0xf]
  %v32 = vld [vmem:[%s0 + $0x78] sm:$0xff]
  %v33 = vld [vmem:[%s0 + $0x80] sm:$0xf]
  %v34 = vld [vmem:[%s0 + $0x84] sm:$0xff]
  %v35 = vld [vmem:[%s0 + $0x8c] sm:$0xf]
  %v36 = vld [vmem:[%s0 + $0x90] sm:$0xff]
  %v37 = vld [vmem:[%s0 + $0x98] sm:$0xf]
  %v38 = vld [vmem:[%s0 + $0x9c] sm:$0xff]
  %v39 = vld [vmem:[%s0 + $0xa4] sm:$0xf]
  %v40 = vld [vmem:[%s0 + $0xa8] sm:$0xff]
  %v41 = vld [vmem:[%s0 + $0xb0] sm:$0xf]
  %v42 = vld [vmem:[%s0 + $0xb4] sm:$0xff]
  %v43 = vld [vmem:[%s0 + $0xbc] sm:$0xf]
  %v44 = vld [vmem:[%s0 + $0xc0] sm:$0xff]
  %v45 = vld [vmem:[%s0 + $0xc8] sm:$0xf]
  %v46 = vld [vmem:[%s0 + $0xcc] sm:$0xff]
  %v47 = vld [vmem:[%s0 + $0xd4] sm:$0xf]
  %v48 = vld [vmem:[%s0 + $0xd8] sm:$0xff]
  %v49 = vld [vmem:[%s0 + $0xe0] sm:$0xf]
  %v50 = vld [vmem:[%s0 + $0xe4] sm:$0xff]
  %v51 = vld [vmem:[%s0 + $0xec] sm:$0xf]
  %v52 = vld [vmem:[%s0 + $0xf0] sm:$0xff]
  %v53 = vld [vmem:[%s0 + $0xf8] sm:$0xf]
  %v54 = vld [vmem:[%s0 + $0xfc] sm:$0xff]
  %v55 = vld [vmem:[%s0 + $0x104] sm:$0xf]
  %v56 = vld [vmem:[%s0 + $0x108] sm:$0xff]
  %v57 = vld [vmem:[%s0 + $0x110] sm:$0xf]
  %v58 = vld [vmem:[%s0 + $0x114] sm:$0xff]
  %v59 = vld [vmem:[%s0 + $0x11c] sm:$0xf]
  %v60 = vld [vmem:[%s0 + $0x120] sm:$0xff]
  %v61 = vld [vmem:[%s0 + $0x128] sm:$0xf]
  %v62 = vld [vmem:[%s0 + $0x12c] sm:$0xff]
  %v63 = vld [vmem:[%s0 + $0x134] sm:$0xf]
  %v64 = vld [vmem:[%s0 + $0x138] sm:$0xff]
  %v65 = vld [vmem:[%s0 + $0x140] sm:$0xf]
  %v66 = vld [vmem:[%s0 + $0x144] sm:$0xff]
  %v67 = vld [vmem:[%s0 + $0x14c] sm:$0xf]
  %v68 = vld [vmem:[%s0 + $0x150] sm:$0xff]
  %v69 = vld [vmem:[%s0 + $0x158] sm:$0xf]
  %v70 = vld [vmem:[%s0 + $0x15c] sm:$0xff]
  %v71 = vld [vmem:[%s0 + $0x164] sm:$0xf]
  %v72 = vld [vmem:[%s0 + $0x168] sm:$0xff]
  %v73 = vld [vmem:[%s0 + $0x170] sm:$0xf]
  %v74 = vld [vmem:[%s0 + $0x174] sm:$0xff]
  %v75 = vld [vmem:[%s0 + $0x17c] sm:$0xf]
  %v76 = vld [vmem:[%s0 + $0x180] sm:$0xff]
  %v77 = vld [vmem:[%s0 + $0x188] sm:$0xf]
  %v78 = vld [vmem:[%s0 + $0x18c] sm:$0xff]
  %v79 = vld [vmem:[%s0 + $0x194] sm:$0xf]
  %v80 = vld [vmem:[%s0 + $0x198] sm:$0xff]
  %v81 = vld [vmem:[%s0 + $0x1a0] sm:$0xf]
  %v82 = vld [vmem:[%s0 + $0x1a4] sm:$0xff]
  %v83 = vld [vmem:[%s0 + $0x1ac] sm:$0xf]
  %v84 = vld [vmem:[%s0 + $0x1b0] sm:$0xff]
  %v85 = vld [vmem:[%s0 + $0x1b8] sm:$0xf]
  %v86 = vld [vmem:[%s0 + $0x1bc] sm:$0xff]
  %v87 = vld [vmem:[%s0 + $0x1c4] sm:$0xf]
  %v88 = vld [vmem:[%s0 + $0x1c8] sm:$0xff]
  %v89 = vld [vmem:[%s0 + $0x1d0] sm:$0xf]
  %v90 = vld [vmem:[%s0 + $0x1d4] sm:$0xff]
  %v91 = vld [vmem:[%s0 + $0x1dc] sm:$0xf]
  %v92 = vld [vmem:[%s0 + $0x1e0] sm:$0xff]
  %v93 = vld [vmem:[%s0 + $0x1e8] sm:$0xf]
  %v94 = vld [vmem:[%s0 + $0x1ec] sm:$0xff]
  %v95 = vld [vmem:[%s0 + $0x1f4] sm:$0xf]
  %v96 = vld [vmem:[%s0 + $0x1f8] sm:$0xff]
  %v97 = vld [vmem:[%s0 + $0x200] sm:$0xf]
  %v98 = vld [vmem:[%s0 + $0x204] sm:$0xff]
  %v99 = vld [vmem:[%s0 + $0x20c] sm:$0xf]
  %v100 = vld [vmem:[%s0 + $0x210] sm:$0xff]
  %v101 = vld [vmem:[%s0 + $0x218] sm:$0xf]
  %v102 = vld [vmem:[%s0 + $0x21c] sm:$0xff]
  %v103 = vld [vmem:[%s0 + $0x224] sm:$0xf]
  %v104 = vld [vmem:[%s0 + $0x228] sm:$0xff]
  %v105 = vld [vmem:[%s0 + $0x230] sm:$0xf]
  %v106 = vld [vmem:[%s0 + $0x234] sm:$0xff]
  %v107 = vld [vmem:[%s0 + $0x23c] sm:$0xf]
  %v108 = vld [vmem:[%s0 + $0x240] sm:$0xff]
  %v109 = vld [vmem:[%s0 + $0x248] sm:$0xf]
  %v110 = vld [vmem:[%s0 + $0x24c] sm:$0xff]
  %v111 = vld [vmem:[%s0 + $0x254] sm:$0xf]
  %v112 = vld [vmem:[%s0 + $0x258] sm:$0xff]
  %v113 = vld [vmem:[%s0 + $0x260] sm:$0xf]
  %v114 = vld [vmem:[%s0 + $0x264] sm:$0xff]
  %v115 = vld [vmem:[%s0 + $0x26c] sm:$0xf]
  %v116 = vld [vmem:[%s0 + $0x270] sm:$0xff]
  %v117 = vld [vmem:[%s0 + $0x278] sm:$0xf]
  %v118 = vld [vmem:[%s0 + $0x27c] sm:$0xff]
  %v119 = vld [vmem:[%s0 + $0x284] sm:$0xf]
  %v120 = vld [vmem:[%s0 + $0x288] sm:$0xff]
  %v121 = vld [vmem:[%s0 + $0x290] sm:$0xf]
  %v122 = vld [vmem:[%s0 + $0x294] sm:$0xff]
  %v123 = vld [vmem:[%s0 + $0x29c] sm:$0xf]
  %v124 = vld [vmem:[%s0 + $0x2a0] sm:$0xff]
  %v125 = vld [vmem:[%s0 + $0x2a8] sm:$0xf]
  %v126 = vld [vmem:[%s0 + $0x2ac] sm:$0xff]
  %v127 = vld [vmem:[%s0 + $0x2b4] sm:$0xf]
  %v128 = vld [vmem:[%s0 + $0x2b8] sm:$0xff]
  %v129 = vld [vmem:[%s0 + $0x2c0] sm:$0xf]
  %v130 = vld [vmem:[%s0 + $0x2c4] sm:$0xff]
  %v131 = vld [vmem:[%s0 + $0x2cc] sm:$0xf]
  %v132 = vld [vmem:[%s0 + $0x2d0] sm:$0xff]
  %v133 = vld [vmem:[%s0 + $0x2d8] sm:$0xf]
  %v134 = vld [vmem:[%s0 + $0x2dc] sm:$0xff]
  %v135 = vld [vmem:[%s0 + $0x2e4] sm:$0xf]
  %v136 = vld [vmem:[%s0 + $0x2e8] sm:$0xff]
  %v137 = vld [vmem:[%s0 + $0x2f0] sm:$0xf]
  %v138 = vld [vmem:[%s0 + $0x2f4] sm:$0xff]
  %v139 = vld [vmem:[%s0 + $0x2fc] sm:$0xf]
  %v140 = vld [vmem:[%s1] sm:$0xf]
  %v141 = vld [vmem:[%s1 + $0x4] sm:$0xf]
  %v142 = vld [vmem:[%s1 + $0x8] sm:$0xf]
  %v143 = vld [vmem:[%s1 + $0xc] sm:$0xf]
  %v144 = vld [vmem:[%s1 + $0x10] sm:$0xf]
  %v145 = vld [vmem:[%s1 + $0x14] sm:$0xf]
  %v146 = vld [vmem:[%s1 + $0x18] sm:$0xf]
  %v147 = vld [vmem:[%s1 + $0x1c] sm:$0xf]
  %v148 = vld [vmem:[%s1 + $0x20] sm:$0xf]
  %v149 = vld [vmem:[%s1 + $0x24] sm:$0xf]
  %v150 = vld [vmem:[%s1 + $0x28] sm:$0xf]
  %v151 = vld [vmem:[%s1 + $0x2c] sm:$0xf]
  %v152 = vld [vmem:[%s1 + $0x30] sm:$0xf]
  %v153 = vld [vmem:[%s1 + $0x34] sm:$0xf]
  %v154 = vld [vmem:[%s1 + $0x38] sm:$0xf]
  %v155 = vld [vmem:[%s1 + $0x3c] sm:$0xf]
  %v156 = vld [vmem:[%s1 + $0x40] sm:$0xf]
  %v157 = vld [vmem:[%s1 + $0x44] sm:$0xf]
  %v158 = vld [vmem:[%s1 + $0x48] sm:$0xf]
  %v159 = vld [vmem:[%s1 + $0x4c] sm:$0xf]
  %v160 = vld [vmem:[%s1 + $0x50] sm:$0xf]
  %v161 = vld [vmem:[%s1 + $0x54] sm:$0xf]
  %v162 = vld [vmem:[%s1 + $0x58] sm:$0xf]
  %v163 = vld [vmem:[%s1 + $0x5c] sm:$0xf]
  %v164 = vld [vmem:[%s1 + $0x60] sm:$0xf]
  %v165 = vld [vmem:[%s1 + $0x64] sm:$0xf]
  %v166 = vld [vmem:[%s1 + $0x68] sm:$0xf]
  %v167 = vld [vmem:[%s1 + $0x6c] sm:$0xf]
  %v168 = vld [vmem:[%s1 + $0x70] sm:$0xf]
  %v169 = vld [vmem:[%s1 + $0x74] sm:$0xf]
  %v170 = vld [vmem:[%s1 + $0x78] sm:$0xf]
  %v171 = vld [vmem:[%s1 + $0x7c] sm:$0xf]
  %v172 = vld [vmem:[%s1 + $0x80] sm:$0xf]
  %v173 = vld [vmem:[%s1 + $0x84] sm:$0xf]
  %v174 = vld [vmem:[%s1 + $0x88] sm:$0xf]
  %v175 = vld [vmem:[%s1 + $0x8c] sm:$0xf]
  %v176 = vld [vmem:[%s1 + $0x90] sm:$0xf]
  %v177 = vld [vmem:[%s1 + $0x94] sm:$0xf]
  %v178 = vld [vmem:[%s1 + $0x98] sm:$0xf]
  %v179 = vld [vmem:[%s1 + $0x9c] sm:$0xf]
  %v180 = vld [vmem:[%s1 + $0xa0] sm:$0xf]
  %v181 = vld [vmem:[%s1 + $0xa4] sm:$0xf]
  %v182 = vld [vmem:[%s1 + $0xa8] sm:$0xf]
  %v183 = vld [vmem:[%s1 + $0xac] sm:$0xf]
  %v184 = vld [vmem:[%s1 + $0xb0] sm:$0xf]
  %v185 = vld [vmem:[%s1 + $0xb4] sm:$0xf]
  %v186 = vld [vmem:[%s1 + $0xb8] sm:$0xf]
  %v187 = vld [vmem:[%s1 + $0xbc] sm:$0xf]
  %v316 = vunpack.c.l.b16 %v12
  %v317 = vunpack.c.h.b16 %v12
  %v318 = vunpack.c.l.b16 %v13
  %v319 = vunpack.c.l.b16 %v14
  %v320 = vunpack.c.h.b16 %v14
  %v321 = vunpack.c.l.b16 %v15
  %v322 = vunpack.c.l.b16 %v16
  %v323 = vunpack.c.h.b16 %v16
  %v324 = vunpack.c.l.b16 %v17
  %v325 = vunpack.c.l.b16 %v18
  %v326 = vunpack.c.h.b16 %v18
  %v327 = vunpack.c.l.b16 %v19
  %v328 = vunpack.c.l.b16 %v20
  %v329 = vunpack.c.h.b16 %v20
  %v330 = vunpack.c.l.b16 %v21
  %v331 = vunpack.c.l.b16 %v22
  %v332 = vunpack.c.h.b16 %v22
  %v333 = vunpack.c.l.b16 %v23
  %v334 = vunpack.c.l.b16 %v24
  %v335 = vunpack.c.h.b16 %v24
  %v336 = vunpack.c.l.b16 %v25
  %v337 = vunpack.c.l.b16 %v26
  %v338 = vunpack.c.h.b16 %v26
  %v339 = vunpack.c.l.b16 %v27
  %v340 = vunpack.c.l.b16 %v28
  %v341 = vunpack.c.h.b16 %v28
  %v342 = vunpack.c.l.b16 %v29
  %v343 = vunpack.c.l.b16 %v30
  %v344 = vunpack.c.h.b16 %v30
  %v345 = vunpack.c.l.b16 %v31
  %v346 = vunpack.c.l.b16 %v32
  %v347 = vunpack.c.h.b16 %v32
  %v348 = vunpack.c.l.b16 %v33
  %v349 = vunpack.c.l.b16 %v34
  %v350 = vunpack.c.h.b16 %v34
  %v351 = vunpack.c.l.b16 %v35
  %v352 = vunpack.c.l.b16 %v36
  %v353 = vunpack.c.h.b16 %v36
  %v354 = vunpack.c.l.b16 %v37
  %v355 = vunpack.c.l.b16 %v38
  %v356 = vunpack.c.h.b16 %v38
  %v357 = vunpack.c.l.b16 %v39
  %v358 = vunpack.c.l.b16 %v40
  %v359 = vunpack.c.h.b16 %v40
  %v360 = vunpack.c.l.b16 %v41
  %v361 = vunpack.c.l.b16 %v42
  %v362 = vunpack.c.h.b16 %v42
  %v363 = vunpack.c.l.b16 %v43
  %v364 = vunpack.c.l.b16 %v44
  %v365 = vunpack.c.h.b16 %v44
  %v366 = vunpack.c.l.b16 %v45
  %v367 = vunpack.c.l.b16 %v46
  %v368 = vunpack.c.h.b16 %v46
  %v369 = vunpack.c.l.b16 %v47
  %v370 = vunpack.c.l.b16 %v48
  %v371 = vunpack.c.h.b16 %v48
  %v372 = vunpack.c.l.b16 %v49
  %v373 = vunpack.c.l.b16 %v50
  %v374 = vunpack.c.h.b16 %v50
  %v375 = vunpack.c.l.b16 %v51
  %v376 = vunpack.c.l.b16 %v52
  %v377 = vunpack.c.h.b16 %v52
  %v378 = vunpack.c.l.b16 %v53
  %v379 = vunpack.c.l.b16 %v54
  %v380 = vunpack.c.h.b16 %v54
  %v381 = vunpack.c.l.b16 %v55
  %v382 = vunpack.c.l.b16 %v56
  %v383 = vunpack.c.h.b16 %v56
  %v384 = vunpack.c.l.b16 %v57
  %v385 = vunpack.c.l.b16 %v58
  %v386 = vunpack.c.h.b16 %v58
  %v387 = vunpack.c.l.b16 %v59
  %v388 = vunpack.c.l.b16 %v60
  %v389 = vunpack.c.h.b16 %v60
  %v390 = vunpack.c.l.b16 %v61
  %v391 = vunpack.c.l.b16 %v62
  %v392 = vunpack.c.h.b16 %v62
  %v393 = vunpack.c.l.b16 %v63
  %v394 = vunpack.c.l.b16 %v64
  %v395 = vunpack.c.h.b16 %v64
  %v396 = vunpack.c.l.b16 %v65
  %v397 = vunpack.c.l.b16 %v66
  %v398 = vunpack.c.h.b16 %v66
  %v399 = vunpack.c.l.b16 %v67
  %v400 = vunpack.c.l.b16 %v68
  %v401 = vunpack.c.h.b16 %v68
  %v402 = vunpack.c.l.b16 %v69
  %v403 = vunpack.c.l.b16 %v70
  %v404 = vunpack.c.h.b16 %v70
  %v405 = vunpack.c.l.b16 %v71
  %v406 = vunpack.c.l.b16 %v72
  %v407 = vunpack.c.h.b16 %v72
  %v408 = vunpack.c.l.b16 %v73
  %v409 = vunpack.c.l.b16 %v74
  %v410 = vunpack.c.h.b16 %v74
  %v411 = vunpack.c.l.b16 %v75
  %v412 = vunpack.c.l.b16 %v76
  %v413 = vunpack.c.h.b16 %v76
  %v414 = vunpack.c.l.b16 %v77
  %v415 = vunpack.c.l.b16 %v78
  %v416 = vunpack.c.h.b16 %v78
  %v417 = vunpack.c.l.b16 %v79
  %v418 = vunpack.c.l.b16 %v80
  %v419 = vunpack.c.h.b16 %v80
  %v420 = vunpack.c.l.b16 %v81
  %v421 = vunpack.c.l.b16 %v82
  %v422 = vunpack.c.h.b16 %v82
  %v423 = vunpack.c.l.b16 %v83
  %v424 = vunpack.c.l.b16 %v84
  %v425 = vunpack.c.h.b16 %v84
  %v426 = vunpack.c.l.b16 %v85
  %v427 = vunpack.c.l.b16 %v86
  %v428 = vunpack.c.h.b16 %v86
  %v429 = vunpack.c.l.b16 %v87
  %v430 = vunpack.c.l.b16 %v88
  %v431 = vunpack.c.h.b16 %v88
  %v432 = vunpack.c.l.b16 %v89
  %v433 = vunpack.c.l.b16 %v90
  %v434 = vunpack.c.h.b16 %v90
  %v435 = vunpack.c.l.b16 %v91
  %v436 = vunpack.c.l.b16 %v92
  %v437 = vunpack.c.h.b16 %v92
  %v438 = vunpack.c.l.b16 %v93
  %v439 = vunpack.c.l.b16 %v94
  %v440 = vunpack.c.h.b16 %v94
  %v441 = vunpack.c.l.b16 %v95
  %v442 = vunpack.c.l.b16 %v96
  %v443 = vunpack.c.h.b16 %v96
  %v444 = vunpack.c.l.b16 %v97
  %v445 = vunpack.c.l.b16 %v98
  %v446 = vunpack.c.h.b16 %v98
  %v447 = vunpack.c.l.b16 %v99
  %v448 = vunpack.c.l.b16 %v100
  %v449 = vunpack.c.h.b16 %v100
  %v450 = vunpack.c.l.b16 %v101
  %v451 = vunpack.c.l.b16 %v102
  %v452 = vunpack.c.h.b16 %v102
  %v453 = vunpack.c.l.b16 %v103
  %v454 = vunpack.c.l.b16 %v104
  %v455 = vunpack.c.h.b16 %v104
  %v456 = vunpack.c.l.b16 %v105
  %v457 = vunpack.c.l.b16 %v106
  %v458 = vunpack.c.h.b16 %v106
  %v459 = vunpack.c.l.b16 %v107
  %v460 = vunpack.c.l.b16 %v108
  %v461 = vunpack.c.h.b16 %v108
  %v462 = vunpack.c.l.b16 %v109
  %v463 = vunpack.c.l.b16 %v110
  %v464 = vunpack.c.h.b16 %v110
  %v465 = vunpack.c.l.b16 %v111
  %v466 = vunpack.c.l.b16 %v112
  %v467 = vunpack.c.h.b16 %v112
  %v468 = vunpack.c.l.b16 %v113
  %v469 = vunpack.c.l.b16 %v114
  %v470 = vunpack.c.h.b16 %v114
  %v471 = vunpack.c.l.b16 %v115
  %v472 = vunpack.c.l.b16 %v116
  %v473 = vunpack.c.h.b16 %v116
  %v474 = vunpack.c.l.b16 %v117
  %v475 = vunpack.c.l.b16 %v118
  %v476 = vunpack.c.h.b16 %v118
  %v477 = vunpack.c.l.b16 %v119
  %v478 = vunpack.c.l.b16 %v120
  %v479 = vunpack.c.h.b16 %v120
  %v480 = vunpack.c.l.b16 %v121
  %v481 = vunpack.c.l.b16 %v122
  %v482 = vunpack.c.h.b16 %v122
  %v483 = vunpack.c.l.b16 %v123
  %v484 = vunpack.c.l.b16 %v124
  %v485 = vunpack.c.h.b16 %v124
  %v486 = vunpack.c.l.b16 %v125
  %v487 = vunpack.c.l.b16 %v126
  %v488 = vunpack.c.h.b16 %v126
  %v489 = vunpack.c.l.b16 %v127
  %v490 = vunpack.c.l.b16 %v128
  %v491 = vunpack.c.h.b16 %v128
  %v492 = vunpack.c.l.b16 %v129
  %v493 = vunpack.c.l.b16 %v130
  %v494 = vunpack.c.h.b16 %v130
  %v495 = vunpack.c.l.b16 %v131
  %v496 = vunpack.c.l.b16 %v132
  %v497 = vunpack.c.h.b16 %v132
  %v498 = vunpack.c.l.b16 %v133
  %v499 = vunpack.c.l.b16 %v134
  %v500 = vunpack.c.h.b16 %v134
  %v501 = vunpack.c.l.b16 %v135
  %v502 = vunpack.c.l.b16 %v136
  %v503 = vunpack.c.h.b16 %v136
  %v504 = vunpack.c.l.b16 %v137
  %v505 = vunpack.c.l.b16 %v138
  %v506 = vunpack.c.h.b16 %v138
  %v507 = vunpack.c.l.b16 %v139
  %v508 = vpack.c.b16 %v319, %v316
  %v509 = vpack.c.b16 %v320, %v317
  %v510 = vpack.c.b16 %v321, %v318
  %v511 = vpack.c.b16 %v325, %v322
  %v512 = vpack.c.b16 %v326, %v323
  %v513 = vpack.c.b16 %v327, %v324
  %v514 = vpack.c.b16 %v331, %v328
  %v515 = vpack.c.b16 %v332, %v329
  %v516 = vpack.c.b16 %v333, %v330
  %v517 = vpack.c.b16 %v337, %v334
  %v518 = vpack.c.b16 %v338, %v335
  %v519 = vpack.c.b16 %v339, %v336
  %v520 = vpack.c.b16 %v343, %v340
  %v521 = vpack.c.b16 %v344, %v341
  %v522 = vpack.c.b16 %v345, %v342
  %v523 = vpack.c.b16 %v349, %v346
  %v524 = vpack.c.b16 %v350, %v347
  %v525 = vpack.c.b16 %v351, %v348
  %v526 = vpack.c.b16 %v355, %v352
  %v527 = vpack.c.b16 %v356, %v353
  %v528 = vpack.c.b16 %v357, %v354
  %v529 = vpack.c.b16 %v361, %v358
  %v530 = vpack.c.b16 %v362, %v359
  %v531 = vpack.c.b16 %v363, %v360
  %v532 = vpack.c.b16 %v367, %v364
  %v533 = vpack.c.b16 %v368, %v365
  %v534 = vpack.c.b16 %v369, %v366
  %v535 = vpack.c.b16 %v373, %v370
  %v536 = vpack.c.b16 %v374, %v371
  %v537 = vpack.c.b16 %v375, %v372
  %v538 = vpack.c.b16 %v379, %v376
  %v539 = vpack.c.b16 %v380, %v377
  %v540 = vpack.c.b16 %v381, %v378
  %v541 = vpack.c.b16 %v385, %v382
  %v542 = vpack.c.b16 %v386, %v383
  %v543 = vpack.c.b16 %v387, %v384
  %v544 = vpack.c.b16 %v391, %v388
  %v545 = vpack.c.b16 %v392, %v389
  %v546 = vpack.c.b16 %v393, %v390
  %v547 = vpack.c.b16 %v397, %v394
  %v548 = vpack.c.b16 %v398, %v395
  %v549 = vpack.c.b16 %v399, %v396
  %v550 = vpack.c.b16 %v403, %v400
  %v551 = vpack.c.b16 %v404, %v401
  %v552 = vpack.c.b16 %v405, %v402
  %v553 = vpack.c.b16 %v409, %v406
  %v554 = vpack.c.b16 %v410, %v407
  %v555 = vpack.c.b16 %v411, %v408
  %v556 = vpack.c.b16 %v415, %v412
  %v557 = vpack.c.b16 %v416, %v413
  %v558 = vpack.c.b16 %v417, %v414
  %v559 = vpack.c.b16 %v421, %v418
  %v560 = vpack.c.b16 %v422, %v419
  %v561 = vpack.c.b16 %v423, %v420
  %v562 = vpack.c.b16 %v427, %v424
  %v563 = vpack.c.b16 %v428, %v425
  %v564 = vpack.c.b16 %v429, %v426
  %v565 = vpack.c.b16 %v433, %v430
  %v566 = vpack.c.b16 %v434, %v431
  %v567 = vpack.c.b16 %v435, %v432
  %v568 = vpack.c.b16 %v439, %v436
  %v569 = vpack.c.b16 %v440, %v437
  %v570 = vpack.c.b16 %v441, %v438
  %v571 = vpack.c.b16 %v445, %v442
  %v572 = vpack.c.b16 %v446, %v443
  %v573 = vpack.c.b16 %v447, %v444
  %v574 = vpack.c.b16 %v451, %v448
  %v575 = vpack.c.b16 %v452, %v449
  %v576 = vpack.c.b16 %v453, %v450
  %v577 = vpack.c.b16 %v457, %v454
  %v578 = vpack.c.b16 %v458, %v455
  %v579 = vpack.c.b16 %v459, %v456
  %v580 = vpack.c.b16 %v463, %v460
  %v581 = vpack.c.b16 %v464, %v461
  %v582 = vpack.c.b16 %v465, %v462
  %v583 = vpack.c.b16 %v469, %v466
  %v584 = vpack.c.b16 %v470, %v467
  %v585 = vpack.c.b16 %v471, %v468
  %v586 = vpack.c.b16 %v475, %v472
  %v587 = vpack.c.b16 %v476, %v473
  %v588 = vpack.c.b16 %v477, %v474
  %v589 = vpack.c.b16 %v481, %v478
  %v590 = vpack.c.b16 %v482, %v479
  %v591 = vpack.c.b16 %v483, %v480
  %v592 = vpack.c.b16 %v487, %v484
  %v593 = vpack.c.b16 %v488, %v485
  %v594 = vpack.c.b16 %v489, %v486
  %v595 = vpack.c.b16 %v493, %v490
  %v596 = vpack.c.b16 %v494, %v491
  %v597 = vpack.c.b16 %v495, %v492
  %v598 = vpack.c.b16 %v499, %v496
  %v599 = vpack.c.b16 %v500, %v497
  %v600 = vpack.c.b16 %v501, %v498
  %v601 = vpack.c.b16 %v505, %v502
  %v602 = vpack.c.b16 %v506, %v503
  %v603 = vpack.c.b16 %v507, %v504
  %v748 = vunpack.c.l.b16 %v140
  %v749 = vunpack.c.l.b16 %v141
  %v750 = vunpack.c.l.b16 %v142
  %v751 = vunpack.c.l.b16 %v143
  %v752 = vunpack.c.l.b16 %v144
  %v753 = vunpack.c.l.b16 %v145
  %v754 = vunpack.c.l.b16 %v146
  %v755 = vunpack.c.l.b16 %v147
  %v756 = vunpack.c.l.b16 %v148
  %v757 = vunpack.c.l.b16 %v149
  %v758 = vunpack.c.l.b16 %v150
  %v759 = vunpack.c.l.b16 %v151
  %v760 = vunpack.c.l.b16 %v152
  %v761 = vunpack.c.l.b16 %v153
  %v762 = vunpack.c.l.b16 %v154
  %v763 = vunpack.c.l.b16 %v155
  %v764 = vunpack.c.l.b16 %v156
  %v765 = vunpack.c.l.b16 %v157
  %v766 = vunpack.c.l.b16 %v158
  %v767 = vunpack.c.l.b16 %v159
  %v768 = vunpack.c.l.b16 %v160
  %v769 = vunpack.c.l.b16 %v161
  %v770 = vunpack.c.l.b16 %v162
  %v771 = vunpack.c.l.b16 %v163
  %v772 = vunpack.c.l.b16 %v164
  %v773 = vunpack.c.l.b16 %v165
  %v774 = vunpack.c.l.b16 %v166
  %v775 = vunpack.c.l.b16 %v167
  %v776 = vunpack.c.l.b16 %v168
  %v777 = vunpack.c.l.b16 %v169
  %v778 = vunpack.c.l.b16 %v170
  %v779 = vunpack.c.l.b16 %v171
  %v780 = vunpack.c.l.b16 %v172
  %v781 = vunpack.c.l.b16 %v173
  %v782 = vunpack.c.l.b16 %v174
  %v783 = vunpack.c.l.b16 %v175
  %v784 = vunpack.c.l.b16 %v176
  %v785 = vunpack.c.l.b16 %v177
  %v786 = vunpack.c.l.b16 %v178
  %v787 = vunpack.c.l.b16 %v179
  %v788 = vunpack.c.l.b16 %v180
  %v789 = vunpack.c.l.b16 %v181
  %v790 = vunpack.c.l.b16 %v182
  %v791 = vunpack.c.l.b16 %v183
  %v792 = vunpack.c.l.b16 %v184
  %v793 = vunpack.c.l.b16 %v185
  %v794 = vunpack.c.l.b16 %v186
  %v795 = vunpack.c.l.b16 %v187
  %v796 = vpack.c.b16 %v749, %v748
  %v797 = vpack.c.b16 %v751, %v750
  %v798 = vpack.c.b16 %v753, %v752
  %v799 = vpack.c.b16 %v755, %v754
  %v800 = vpack.c.b16 %v757, %v756
  %v801 = vpack.c.b16 %v759, %v758
  %v802 = vpack.c.b16 %v761, %v760
  %v803 = vpack.c.b16 %v763, %v762
  %v804 = vpack.c.b16 %v765, %v764
  %v805 = vpack.c.b16 %v767, %v766
  %v806 = vpack.c.b16 %v769, %v768
  %v807 = vpack.c.b16 %v771, %v770
  %v808 = vpack.c.b16 %v773, %v772
  %v809 = vpack.c.b16 %v775, %v774
  %v810 = vpack.c.b16 %v777, %v776
  %v811 = vpack.c.b16 %v779, %v778
  %v812 = vpack.c.b16 %v781, %v780
  %v813 = vpack.c.b16 %v783, %v782
  %v814 = vpack.c.b16 %v785, %v784
  %v815 = vpack.c.b16 %v787, %v786
  %v816 = vpack.c.b16 %v789, %v788
  %v817 = vpack.c.b16 %v791, %v790
  %v818 = vpack.c.b16 %v793, %v792
  %v819 = vpack.c.b16 %v795, %v794
  %844 = vmatprep.subr.bf16.mxu0 0
  %845 = vmatpush1.bf16.msra.mxu0 %v796
  %846 = vmatprep.subr.bf16.mxu0 0
  %847 = vmatpush1.bf16.msra.mxu0 %v797
  %848 = vmatprep.subr.bf16.mxu0 0
  %849 = vmatpush1.bf16.msra.mxu0 %v798
  %850 = vmatprep.subr.bf16.mxu0 0
  %851 = vmatpush1.bf16.msra.mxu0 %v799
  %852 = vmatprep.subr.bf16.mxu0 0
  %853 = vmatpush1.bf16.msra.mxu0 %v800
  %854 = vmatprep.subr.bf16.mxu0 0
  %855 = vmatpush1.bf16.msra.mxu0 %v801
  %856 = vmatprep.subr.bf16.mxu0 0
  %857 = vmatpush1.bf16.msra.mxu0 %v802
  %858 = vmatprep.subr.bf16.mxu0 0
  %859 = vmatpush1.bf16.msra.mxu0 %v803
  %860 = vmatprep.subr.bf16.mxu0 0
  %861 = vmatpush1.bf16.msra.mxu0 %v804
  %862 = vmatprep.subr.bf16.mxu0 0
  %863 = vmatpush1.bf16.msra.mxu0 %v805
  %864 = vmatprep.subr.bf16.mxu0 0
  %865 = vmatpush1.bf16.msra.mxu0 %v806
  %866 = vmatprep.subr.bf16.mxu0 0
  %867 = vmatpush1.bf16.msra.mxu0 %v807
  %868 = vmatprep.subr.bf16.mxu0 0
  %869 = vmatpush1.bf16.msra.mxu0 %v808
  %870 = vmatprep.subr.bf16.mxu0 0
  %871 = vmatpush1.bf16.msra.mxu0 %v809
  %872 = vmatprep.subr.bf16.mxu0 0
  %873 = vmatpush1.bf16.msra.mxu0 %v810
  %874 = vmatprep.subr.bf16.mxu0 0
  %875 = vmatpush1.bf16.msra.mxu0 %v811
  %876 = vmatprep.mubr.bf16.mxu0 %v509
  %877 = vmatmul.mubr.bf16.gmra.mrb[0].mxu0 %v508
  %v878 = vpop.f32.mrb[0].mxu0
  %v879 = vadd.f32 0.0, %v878
  %v880 = vpop.f32.mrb[0].mxu0
  %v881 = vpop.f32.mrb[0].mxu0
  %v882 = vadd.f32 0.0, %v881
  %v883 = vpop.f32.mrb[0].mxu0
  %884 = vmatprep.mubr.bf16.mxu0 %v512
  %885 = vmatmul.mubr.bf16.gmra.mrb[0].mxu0 %v511
  %v886 = vpop.f32.mrb[0].mxu0
  %v887 = vadd.f32 0.0, %v886
  %v888 = vpop.f32.mrb[0].mxu0
  %v889 = vpop.f32.mrb[0].mxu0
  %v890 = vadd.f32 0.0, %v889
  %v891 = vpop.f32.mrb[0].mxu0
  %892 = vmatprep.mubr.bf16.mxu0 %v515
  %893 = vmatmul.mubr.bf16.gmra.mrb[0].mxu0 %v514
  %v894 = vpop.f32.mrb[0].mxu0
  %v895 = vadd.f32 0.0, %v894
  %v896 = vpop.f32.mrb[0].mxu0
  %v897 = vpop.f32.mrb[0].mxu0
  %v898 = vadd.f32 0.0, %v897
  %v899 = vpop.f32.mrb[0].mxu0
  %900 = vmatprep.mubr.bf16.mxu0 %v518
  %901 = vmatmul.mubr.bf16.gmra.mrb[0].mxu0 %v517
  %v902 = vpop.f32.mrb[0].mxu0
  %v903 = vadd.f32 0.0, %v902
  %v904 = vpop.f32.mrb[0].mxu0
  %v905 = vpop.f32.mrb[0].mxu0
  %v906 = vadd.f32 0.0, %v905
  %v907 = vpop.f32.mrb[0].mxu0
  %908 = vmatprep.mubr.bf16.mxu0 %v521
  %909 = vmatmul.mubr.bf16.gmra.mrb[0].mxu0 %v520
  %v910 = vpop.f32.mrb[0].mxu0
  %v911 = vadd.f32 0.0, %v910
  %v912 = vpop.f32.mrb[0].mxu0
  %v913 = vpop.f32.mrb[0].mxu0
  %v914 = vadd.f32 0.0, %v913
  %v915 = vpop.f32.mrb[0].mxu0
  %916 = vmatprep.mubr.bf16.mxu0 %v524
  %917 = vmatmul.mubr.bf16.gmra.mrb[0].mxu0 %v523
  %v918 = vpop.f32.mrb[0].mxu0
  %v919 = vadd.f32 0.0, %v918
  %v920 = vpop.f32.mrb[0].mxu0
  %v921 = vpop.f32.mrb[0].mxu0
  %v922 = vadd.f32 0.0, %v921
  %v923 = vpop.f32.mrb[0].mxu0
  %924 = vmatprep.mubr.bf16.mxu0 %v527
  %925 = vmatmul.mubr.bf16.gmra.mrb[0].mxu0 %v526
  %v926 = vpop.f32.mrb[0].mxu0
  %v927 = vadd.f32 0.0, %v926
  %v928 = vpop.f32.mrb[0].mxu0
  %v929 = vpop.f32.mrb[0].mxu0
  %v930 = vadd.f32 0.0, %v929
  %v931 = vpop.f32.mrb[0].mxu0
  %932 = vmatprep.mubr.bf16.mxu0 %v530
  %933 = vmatmul.mubr.bf16.gmra.mrb[0].mxu0 %v529
  %v934 = vpop.f32.mrb[0].mxu0
  %v935 = vadd.f32 0.0, %v934
  %v936 = vpop.f32.mrb[0].mxu0
  %v937 = vpop.f32.mrb[0].mxu0
  %v938 = vadd.f32 0.0, %v937
  %v939 = vpop.f32.mrb[0].mxu0
  %940 = vmatprep.mubr.bf16.mxu0 %v533
  %941 = vmatmul.mubr.bf16.gmra.mrb[0].mxu0 %v532
  %v942 = vpop.f32.mrb[0].mxu0
  %v943 = vadd.f32 0.0, %v942
  %v944 = vpop.f32.mrb[0].mxu0
  %v945 = vpop.f32.mrb[0].mxu0
  %v946 = vadd.f32 0.0, %v945
  %v947 = vpop.f32.mrb[0].mxu0
  %948 = vmatprep.mubr.bf16.mxu0 %v536
  %949 = vmatmul.mubr.bf16.gmra.mrb[0].mxu0 %v535
  %v950 = vpop.f32.mrb[0].mxu0
  %v951 = vadd.f32 0.0, %v950
  %v952 = vpop.f32.mrb[0].mxu0
  %v953 = vpop.f32.mrb[0].mxu0
  %v954 = vadd.f32 0.0, %v953
  %v955 = vpop.f32.mrb[0].mxu0
  %956 = vmatprep.mubr.bf16.mxu0 %v539
  %957 = vmatmul.mubr.bf16.gmra.mrb[0].mxu0 %v538
  %v958 = vpop.f32.mrb[0].mxu0
  %v959 = vadd.f32 0.0, %v958
  %v960 = vpop.f32.mrb[0].mxu0
  %v961 = vpop.f32.mrb[0].mxu0
  %v962 = vadd.f32 0.0, %v961
  %v963 = vpop.f32.mrb[0].mxu0
  %964 = vmatprep.mubr.bf16.mxu0 %v542
  %965 = vmatmul.mubr.bf16.gmra.mrb[0].mxu0 %v541
  %v966 = vpop.f32.mrb[0].mxu0
  %v967 = vadd.f32 0.0, %v966
  %v968 = vpop.f32.mrb[0].mxu0
  %v969 = vpop.f32.mrb[0].mxu0
  %v970 = vadd.f32 0.0, %v969
  %v971 = vpop.f32.mrb[0].mxu0
  %972 = vmatprep.mubr.bf16.mxu0 %v545
  %973 = vmatmul.mubr.bf16.gmra.mrb[0].mxu0 %v544
  %v974 = vpop.f32.mrb[0].mxu0
  %v975 = vadd.f32 0.0, %v974
  %v976 = vpop.f32.mrb[0].mxu0
  %v977 = vpop.f32.mrb[0].mxu0
  %v978 = vadd.f32 0.0, %v977
  %v979 = vpop.f32.mrb[0].mxu0
  %980 = vmatprep.mubr.bf16.mxu0 %v548
  %981 = vmatmul.mubr.bf16.gmra.mrb[0].mxu0 %v547
  %v982 = vpop.f32.mrb[0].mxu0
  %v983 = vadd.f32 0.0, %v982
  %v984 = vpop.f32.mrb[0].mxu0
  %v985 = vpop.f32.mrb[0].mxu0
  %v986 = vadd.f32 0.0, %v985
  %v987 = vpop.f32.mrb[0].mxu0
  %988 = vmatprep.mubr.bf16.mxu0 %v551
  %989 = vmatmul.mubr.bf16.gmra.mrb[0].mxu0 %v550
  %v990 = vpop.f32.mrb[0].mxu0
  %v991 = vadd.f32 0.0, %v990
  %v992 = vpop.f32.mrb[0].mxu0
  %v993 = vpop.f32.mrb[0].mxu0
  %v994 = vadd.f32 0.0, %v993
  %v995 = vpop.f32.mrb[0].mxu0
  %996 = vmatprep.mubr.bf16.mxu0 %v554
  %997 = vmatmul.mubr.bf16.gmra.mrb[0].mxu0 %v553
  %v998 = vpop.f32.mrb[0].mxu0
  %v999 = vadd.f32 0.0, %v998
  %v1000 = vpop.f32.mrb[0].mxu0
  %v1001 = vpop.f32.mrb[0].mxu0
  %v1002 = vadd.f32 0.0, %v1001
  %v1003 = vpop.f32.mrb[0].mxu0
  %1004 = vmatprep.mubr.bf16.mxu0 %v557
  %1005 = vmatmul.mubr.bf16.gmra.mrb[0].mxu0 %v556
  %v1006 = vpop.f32.mrb[0].mxu0
  %v1007 = vadd.f32 0.0, %v1006
  %v1008 = vpop.f32.mrb[0].mxu0
  %v1009 = vpop.f32.mrb[0].mxu0
  %v1010 = vadd.f32 0.0, %v1009
  %v1011 = vpop.f32.mrb[0].mxu0
  %1012 = vmatprep.mubr.bf16.mxu0 %v560
  %1013 = vmatmul.mubr.bf16.gmra.mrb[0].mxu0 %v559
  %v1014 = vpop.f32.mrb[0].mxu0
  %v1015 = vadd.f32 0.0, %v1014
  %v1016 = vpop.f32.mrb[0].mxu0
  %v1017 = vpop.f32.mrb[0].mxu0
  %v1018 = vadd.f32 0.0, %v1017
  %v1019 = vpop.f32.mrb[0].mxu0
  %1020 = vmatprep.mubr.bf16.mxu0 %v563
  %1021 = vmatmul.mubr.bf16.gmra.mrb[0].mxu0 %v562
  %v1022 = vpop.f32.mrb[0].mxu0
  %v1023 = vadd.f32 0.0, %v1022
  %v1024 = vpop.f32.mrb[0].mxu0
  %v1025 = vpop.f32.mrb[0].mxu0
  %v1026 = vadd.f32 0.0, %v1025
  %v1027 = vpop.f32.mrb[0].mxu0
  %1028 = vmatprep.mubr.bf16.mxu0 %v566
  %1029 = vmatmul.mubr.bf16.gmra.mrb[0].mxu0 %v565
  %v1030 = vpop.f32.mrb[0].mxu0
  %v1031 = vadd.f32 0.0, %v1030
  %v1032 = vpop.f32.mrb[0].mxu0
  %v1033 = vpop.f32.mrb[0].mxu0
  %v1034 = vadd.f32 0.0, %v1033
  %v1035 = vpop.f32.mrb[0].mxu0
  %1036 = vmatprep.mubr.bf16.mxu0 %v569
  %1037 = vmatmul.mubr.bf16.gmra.mrb[0].mxu0 %v568
  %v1038 = vpop.f32.mrb[0].mxu0
  %v1039 = vadd.f32 0.0, %v1038
  %v1040 = vpop.f32.mrb[0].mxu0
  %v1041 = vpop.f32.mrb[0].mxu0
  %v1042 = vadd.f32 0.0, %v1041
  %v1043 = vpop.f32.mrb[0].mxu0
  %1044 = vmatprep.mubr.bf16.mxu0 %v572
  %1045 = vmatmul.mubr.bf16.gmra.mrb[0].mxu0 %v571
  %v1046 = vpop.f32.mrb[0].mxu0
  %v1047 = vadd.f32 0.0, %v1046
  %v1048 = vpop.f32.mrb[0].mxu0
  %v1049 = vpop.f32.mrb[0].mxu0
  %v1050 = vadd.f32 0.0, %v1049
  %v1051 = vpop.f32.mrb[0].mxu0
  %1052 = vmatprep.mubr.bf16.mxu0 %v575
  %1053 = vmatmul.mubr.bf16.gmra.mrb[0].mxu0 %v574
  %v1054 = vpop.f32.mrb[0].mxu0
  %v1055 = vadd.f32 0.0, %v1054
  %v1056 = vpop.f32.mrb[0].mxu0
  %v1057 = vpop.f32.mrb[0].mxu0
  %v1058 = vadd.f32 0.0, %v1057
  %v1059 = vpop.f32.mrb[0].mxu0
  %1060 = vmatprep.mubr.bf16.mxu0 %v578
  %1061 = vmatmul.mubr.bf16.gmra.mrb[0].mxu0 %v577
  %v1062 = vpop.f32.mrb[0].mxu0
  %v1063 = vadd.f32 0.0, %v1062
  %v1064 = vpop.f32.mrb[0].mxu0
  %v1065 = vpop.f32.mrb[0].mxu0
  %v1066 = vadd.f32 0.0, %v1065
  %v1067 = vpop.f32.mrb[0].mxu0
  %1068 = vmatprep.mubr.bf16.mxu0 %v581
  %1069 = vmatmul.mubr.bf16.gmra.mrb[0].mxu0 %v580
  %v1070 = vpop.f32.mrb[0].mxu0
  %v1071 = vadd.f32 0.0, %v1070
  %v1072 = vpop.f32.mrb[0].mxu0
  %v1073 = vpop.f32.mrb[0].mxu0
  %v1074 = vadd.f32 0.0, %v1073
  %v1075 = vpop.f32.mrb[0].mxu0
  %1076 = vmatprep.mubr.bf16.mxu0 %v584
  %1077 = vmatmul.mubr.bf16.gmra.mrb[0].mxu0 %v583
  %v1078 = vpop.f32.mrb[0].mxu0
  %v1079 = vadd.f32 0.0, %v1078
  %v1080 = vpop.f32.mrb[0].mxu0
  %v1081 = vpop.f32.mrb[0].mxu0
  %v1082 = vadd.f32 0.0, %v1081
  %v1083 = vpop.f32.mrb[0].mxu0
  %1084 = vmatprep.mubr.bf16.mxu0 %v587
  %1085 = vmatmul.mubr.bf16.gmra.mrb[0].mxu0 %v586
  %v1086 = vpop.f32.mrb[0].mxu0
  %v1087 = vadd.f32 0.0, %v1086
  %v1088 = vpop.f32.mrb[0].mxu0
  %v1089 = vpop.f32.mrb[0].mxu0
  %v1090 = vadd.f32 0.0, %v1089
  %v1091 = vpop.f32.mrb[0].mxu0
  %1092 = vmatprep.mubr.bf16.mxu0 %v590
  %1093 = vmatmul.mubr.bf16.gmra.mrb[0].mxu0 %v589
  %v1094 = vpop.f32.mrb[0].mxu0
  %v1095 = vadd.f32 0.0, %v1094
  %v1096 = vpop.f32.mrb[0].mxu0
  %v1097 = vpop.f32.mrb[0].mxu0
  %v1098 = vadd.f32 0.0, %v1097
  %v1099 = vpop.f32.mrb[0].mxu0
  %1100 = vmatprep.mubr.bf16.mxu0 %v593
  %1101 = vmatmul.mubr.bf16.gmra.mrb[0].mxu0 %v592
  %v1102 = vpop.f32.mrb[0].mxu0
  %v1103 = vadd.f32 0.0, %v1102
  %v1104 = vpop.f32.mrb[0].mxu0
  %v1105 = vpop.f32.mrb[0].mxu0
  %v1106 = vadd.f32 0.0, %v1105
  %v1107 = vpop.f32.mrb[0].mxu0
  %1108 = vmatprep.mubr.bf16.mxu0 %v596
  %1109 = vmatmul.mubr.bf16.gmra.mrb[0].mxu0 %v595
  %v1110 = vpop.f32.mrb[0].mxu0
  %v1111 = vadd.f32 0.0, %v1110
  %v1112 = vpop.f32.mrb[0].mxu0
  %v1113 = vpop.f32.mrb[0].mxu0
  %v1114 = vadd.f32 0.0, %v1113
  %v1115 = vpop.f32.mrb[0].mxu0
  %1116 = vmatprep.mubr.bf16.mxu0 %v599
  %1117 = vmatmul.mubr.bf16.gmra.mrb[0].mxu0 %v598
  %v1118 = vpop.f32.mrb[0].mxu0
  %v1119 = vadd.f32 0.0, %v1118
  %v1120 = vpop.f32.mrb[0].mxu0
  %v1121 = vpop.f32.mrb[0].mxu0
  %v1122 = vadd.f32 0.0, %v1121
  %v1123 = vpop.f32.mrb[0].mxu0
  %1124 = vmatprep.mubr.bf16.mxu0 %v602
  %1125 = vmatmul.mubr.bf16.gmra.mrb[0].mxu0 %v601
  %v1126 = vpop.f32.mrb[0].mxu0
  %v1127 = vadd.f32 0.0, %v1126
  %v1128 = vpop.f32.mrb[0].mxu0
  %v1129 = vpop.f32.mrb[0].mxu0
  %v1130 = vadd.f32 0.0, %v1129
  %v1131 = vpop.f32.mrb[0].mxu0
  %1132 = vdwg.mxu0
  %1133 = vmatprep.subr.bf16.mxu0 0
  %1134 = vmatpush1.bf16.msra.mxu0 %v812
  %1135 = vmatprep.subr.bf16.mxu0 0
  %1136 = vmatpush1.bf16.msra.mxu0 %v813
  %1137 = vmatprep.subr.bf16.mxu0 0
  %1138 = vmatpush1.bf16.msra.mxu0 %v814
  %1139 = vmatprep.subr.bf16.mxu0 0
  %1140 = vmatpush1.bf16.msra.mxu0 %v815
  %1141 = vmatprep.subr.bf16.mxu0 0
  %1142 = vmatpush1.bf16.msra.mxu0 %v816
  %1143 = vmatprep.subr.bf16.mxu0 0
  %1144 = vmatpush1.bf16.msra.mxu0 %v817
  %1145 = vmatprep.subr.bf16.mxu0 0
  %1146 = vmatpush1.bf16.msra.mxu0 %v818
  %1147 = vmatprep.subr.bf16.mxu0 0
  %1148 = vmatpush1.bf16.msra.mxu0 %v819
  %1149 = vmatprep.subr.bf16.mxu0 0
  %1150 = vmatpush1.bf16.msra.mxu0 0
  %1151 = vmatprep.subr.bf16.mxu0 0
  %1152 = vmatpush1.bf16.msra.mxu0 0
  %1153 = vmatprep.subr.bf16.mxu0 0
  %1154 = vmatpush1.bf16.msra.mxu0 0
  %1155 = vmatprep.subr.bf16.mxu0 0
  %1156 = vmatpush1.bf16.msra.mxu0 0
  %1157 = vmatprep.subr.bf16.mxu0 0
  %1158 = vmatpush1.bf16.msra.mxu0 0
  %1159 = vmatprep.subr.bf16.mxu0 0
  %1160 = vmatpush1.bf16.msra.mxu0 0
  %1161 = vmatprep.subr.bf16.mxu0 0
  %1162 = vmatpush1.bf16.msra.mxu0 0
  %1163 = vmatprep.subr.bf16.mxu0 0
  %1164 = vmatpush1.bf16.msra.mxu0 0
  %1165 = vmatprep.mubr.bf16.mxu0 0
  %1166 = vmatmul.mubr.bf16.gmra.mrb[0].mxu0 %v510
  %v1167 = vpop.f32.mrb[0].mxu0
  %v1168 = vadd.f32 %v879, %v1167
  %v1169 = vpop.f32.mrb[0].mxu0
  %v1170 = vpop.f32.mrb[0].mxu0
  %v1171 = vadd.f32 %v882, %v1170
  %v1172 = vpop.f32.mrb[0].mxu0
  %1173 = vmatprep.mubr.bf16.mxu0 0
  %1174 = vmatmul.mubr.bf16.gmra.mrb[0].mxu0 %v513
  %v1175 = vpop.f32.mrb[0].mxu0
  %v1176 = vadd.f32 %v887, %v1175
  %v1177 = vpop.f32.mrb[0].mxu0
  %v1178 = vpop.f32.mrb[0].mxu0
  %v1179 = vadd.f32 %v890, %v1178
  %v1180 = vpop.f32.mrb[0].mxu0
  %1181 = vmatprep.mubr.bf16.mxu0 0
  %1182 = vmatmul.mubr.bf16.gmra.mrb[0].mxu0 %v516
  %v1183 = vpop.f32.mrb[0].mxu0
  %v1184 = vadd.f32 %v895, %v1183
  %v1185 = vpop.f32.mrb[0].mxu0
  %v1186 = vpop.f32.mrb[0].mxu0
  %v1187 = vadd.f32 %v898, %v1186
  %v1188 = vpop.f32.mrb[0].mxu0
  %1189 = vmatprep.mubr.bf16.mxu0 0
  %1190 = vmatmul.mubr.bf16.gmra.mrb[0].mxu0 %v519
  %v1191 = vpop.f32.mrb[0].mxu0
  %v1192 = vadd.f32 %v903, %v1191
  %v1193 = vpop.f32.mrb[0].mxu0
  %v1194 = vpop.f32.mrb[0].mxu0
  %v1195 = vadd.f32 %v906, %v1194
  %v1196 = vpop.f32.mrb[0].mxu0
  %1197 = vmatprep.mubr.bf16.mxu0 0
  %1198 = vmatmul.mubr.bf16.gmra.mrb[0].mxu0 %v522
  %v1199 = vpop.f32.mrb[0].mxu0
  %v1200 = vadd.f32 %v911, %v1199
  %v1201 = vpop.f32.mrb[0].mxu0
  %v1202 = vpop.f32.mrb[0].mxu0
  %v1203 = vadd.f32 %v914, %v1202
  %v1204 = vpop.f32.mrb[0].mxu0
  %1205 = vmatprep.mubr.bf16.mxu0 0
  %1206 = vmatmul.mubr.bf16.gmra.mrb[0].mxu0 %v525
  %v1207 = vpop.f32.mrb[0].mxu0
  %v1208 = vadd.f32 %v919, %v1207
  %v1209 = vpop.f32.mrb[0].mxu0
  %v1210 = vpop.f32.mrb[0].mxu0
  %v1211 = vadd.f32 %v922, %v1210
  %v1212 = vpop.f32.mrb[0].mxu0
  %1213 = vmatprep.mubr.bf16.mxu0 0
  %1214 = vmatmul.mubr.bf16.gmra.mrb[0].mxu0 %v528
  %v1215 = vpop.f32.mrb[0].mxu0
  %v1216 = vadd.f32 %v927, %v1215
  %v1217 = vpop.f32.mrb[0].mxu0
  %v1218 = vpop.f32.mrb[0].mxu0
  %v1219 = vadd.f32 %v930, %v1218
  %v1220 = vpop.f32.mrb[0].mxu0
  %1221 = vmatprep.mubr.bf16.mxu0 0
  %1222 = vmatmul.mubr.bf16.gmra.mrb[0].mxu0 %v531
  %v1223 = vpop.f32.mrb[0].mxu0
  %v1224 = vadd.f32 %v935, %v1223
  %v1225 = vpop.f32.mrb[0].mxu0
  %v1226 = vpop.f32.mrb[0].mxu0
  %v1227 = vadd.f32 %v938, %v1226
  %v1228 = vpop.f32.mrb[0].mxu0
  %1229 = vmatprep.mubr.bf16.mxu0 0
  %1230 = vmatmul.mubr.bf16.gmra.mrb[0].mxu0 %v534
  %v1231 = vpop.f32.mrb[0].mxu0
  %v1232 = vadd.f32 %v943, %v1231
  %v1233 = vpop.f32.mrb[0].mxu0
  %v1234 = vpop.f32.mrb[0].mxu0
  %v1235 = vadd.f32 %v946, %v1234
  %v1236 = vpop.f32.mrb[0].mxu0
  %1237 = vmatprep.mubr.bf16.mxu0 0
  %1238 = vmatmul.mubr.bf16.gmra.mrb[0].mxu0 %v537
  %v1239 = vpop.f32.mrb[0].mxu0
  %v1240 = vadd.f32 %v951, %v1239
  %v1241 = vpop.f32.mrb[0].mxu0
  %v1242 = vpop.f32.mrb[0].mxu0
  %v1243 = vadd.f32 %v954, %v1242
  %v1244 = vpop.f32.mrb[0].mxu0
  %1245 = vmatprep.mubr.bf16.mxu0 0
  %1246 = vmatmul.mubr.bf16.gmra.mrb[0].mxu0 %v540
  %v1247 = vpop.f32.mrb[0].mxu0
  %v1248 = vadd.f32 %v959, %v1247
  %v1249 = vpop.f32.mrb[0].mxu0
  %v1250 = vpop.f32.mrb[0].mxu0
  %v1251 = vadd.f32 %v962, %v1250
  %v1252 = vpop.f32.mrb[0].mxu0
  %1253 = vmatprep.mubr.bf16.mxu0 0
  %1254 = vmatmul.mubr.bf16.gmra.mrb[0].mxu0 %v543
  %v1255 = vpop.f32.mrb[0].mxu0
  %v1256 = vadd.f32 %v967, %v1255
  %v1257 = vpop.f32.mrb[0].mxu0
  %v1258 = vpop.f32.mrb[0].mxu0
  %v1259 = vadd.f32 %v970, %v1258
  %v1260 = vpop.f32.mrb[0].mxu0
  %1261 = vmatprep.mubr.bf16.mxu0 0
  %1262 = vmatmul.mubr.bf16.gmra.mrb[0].mxu0 %v546
  %v1263 = vpop.f32.mrb[0].mxu0
  %v1264 = vadd.f32 %v975, %v1263
  %v1265 = vpop.f32.mrb[0].mxu0
  %v1266 = vpop.f32.mrb[0].mxu0
  %v1267 = vadd.f32 %v978, %v1266
  %v1268 = vpop.f32.mrb[0].mxu0
  %1269 = vmatprep.mubr.bf16.mxu0 0
  %1270 = vmatmul.mubr.bf16.gmra.mrb[0].mxu0 %v549
  %v1271 = vpop.f32.mrb[0].mxu0
  %v1272 = vadd.f32 %v983, %v1271
  %v1273 = vpop.f32.mrb[0].mxu0
  %v1274 = vpop.f32.mrb[0].mxu0
  %v1275 = vadd.f32 %v986, %v1274
  %v1276 = vpop.f32.mrb[0].mxu0
  %1277 = vmatprep.mubr.bf16.mxu0 0
  %1278 = vmatmul.mubr.bf16.gmra.mrb[0].mxu0 %v552
  %v1279 = vpop.f32.mrb[0].mxu0
  %v1280 = vadd.f32 %v991, %v1279
  %v1281 = vpop.f32.mrb[0].mxu0
  %v1282 = vpop.f32.mrb[0].mxu0
  %v1283 = vadd.f32 %v994, %v1282
  %v1284 = vpop.f32.mrb[0].mxu0
  %1285 = vmatprep.mubr.bf16.mxu0 0
  %1286 = vmatmul.mubr.bf16.gmra.mrb[0].mxu0 %v555
  %v1287 = vpop.f32.mrb[0].mxu0
  %v1288 = vadd.f32 %v999, %v1287
  %v1289 = vpop.f32.mrb[0].mxu0
  %v1290 = vpop.f32.mrb[0].mxu0
  %v1291 = vadd.f32 %v1002, %v1290
  %v1292 = vpop.f32.mrb[0].mxu0
  %1293 = vmatprep.mubr.bf16.mxu0 0
  %1294 = vmatmul.mubr.bf16.gmra.mrb[0].mxu0 %v558
  %v1295 = vpop.f32.mrb[0].mxu0
  %v1296 = vadd.f32 %v1007, %v1295
  %v1297 = vpop.f32.mrb[0].mxu0
  %v1298 = vpop.f32.mrb[0].mxu0
  %v1299 = vadd.f32 %v1010, %v1298
  %v1300 = vpop.f32.mrb[0].mxu0
  %1301 = vmatprep.mubr.bf16.mxu0 0
  %1302 = vmatmul.mubr.bf16.gmra.mrb[0].mxu0 %v561
  %v1303 = vpop.f32.mrb[0].mxu0
  %v1304 = vadd.f32 %v1015, %v1303
  %v1305 = vpop.f32.mrb[0].mxu0
  %v1306 = vpop.f32.mrb[0].mxu0
  %v1307 = vadd.f32 %v1018, %v1306
  %v1308 = vpop.f32.mrb[0].mxu0
  %1309 = vmatprep.mubr.bf16.mxu0 0
  %1310 = vmatmul.mubr.bf16.gmra.mrb[0].mxu0 %v564
  %v1311 = vpop.f32.mrb[0].mxu0
  %v1312 = vadd.f32 %v1023, %v1311
  %v1313 = vpop.f32.mrb[0].mxu0
  %v1314 = vpop.f32.mrb[0].mxu0
  %v1315 = vadd.f32 %v1026, %v1314
  %v1316 = vpop.f32.mrb[0].mxu0
  %1317 = vmatprep.mubr.bf16.mxu0 0
  %1318 = vmatmul.mubr.bf16.gmra.mrb[0].mxu0 %v567
  %v1319 = vpop.f32.mrb[0].mxu0
  %v1320 = vadd.f32 %v1031, %v1319
  %v1321 = vpop.f32.mrb[0].mxu0
  %v1322 = vpop.f32.mrb[0].mxu0
  %v1323 = vadd.f32 %v1034, %v1322
  %v1324 = vpop.f32.mrb[0].mxu0
  %1325 = vmatprep.mubr.bf16.mxu0 0
  %1326 = vmatmul.mubr.bf16.gmra.mrb[0].mxu0 %v570
  %v1327 = vpop.f32.mrb[0].mxu0
  %v1328 = vadd.f32 %v1039, %v1327
  %v1329 = vpop.f32.mrb[0].mxu0
  %v1330 = vpop.f32.mrb[0].mxu0
  %v1331 = vadd.f32 %v1042, %v1330
  %v1332 = vpop.f32.mrb[0].mxu0
  %1333 = vmatprep.mubr.bf16.mxu0 0
  %1334 = vmatmul.mubr.bf16.gmra.mrb[0].mxu0 %v573
  %v1335 = vpop.f32.mrb[0].mxu0
  %v1336 = vadd.f32 %v1047, %v1335
  %v1337 = vpop.f32.mrb[0].mxu0
  %v1338 = vpop.f32.mrb[0].mxu0
  %v1339 = vadd.f32 %v1050, %v1338
  %v1340 = vpop.f32.mrb[0].mxu0
  %1341 = vmatprep.mubr.bf16.mxu0 0
  %1342 = vmatmul.mubr.bf16.gmra.mrb[0].mxu0 %v576
  %v1343 = vpop.f32.mrb[0].mxu0
  %v1344 = vadd.f32 %v1055, %v1343
  %v1345 = vpop.f32.mrb[0].mxu0
  %v1346 = vpop.f32.mrb[0].mxu0
  %v1347 = vadd.f32 %v1058, %v1346
  %v1348 = vpop.f32.mrb[0].mxu0
  %1349 = vmatprep.mubr.bf16.mxu0 0
  %1350 = vmatmul.mubr.bf16.gmra.mrb[0].mxu0 %v579
  %v1351 = vpop.f32.mrb[0].mxu0
  %v1352 = vadd.f32 %v1063, %v1351
  %v1353 = vpop.f32.mrb[0].mxu0
  %v1354 = vpop.f32.mrb[0].mxu0
  %v1355 = vadd.f32 %v1066, %v1354
  %v1356 = vpop.f32.mrb[0].mxu0
  %1357 = vmatprep.mubr.bf16.mxu0 0
  %1358 = vmatmul.mubr.bf16.gmra.mrb[0].mxu0 %v582
  %v1359 = vpop.f32.mrb[0].mxu0
  %v1360 = vadd.f32 %v1071, %v1359
  %v1361 = vpop.f32.mrb[0].mxu0
  %v1362 = vpop.f32.mrb[0].mxu0
  %v1363 = vadd.f32 %v1074, %v1362
  %v1364 = vpop.f32.mrb[0].mxu0
  %1365 = vmatprep.mubr.bf16.mxu0 0
  %1366 = vmatmul.mubr.bf16.gmra.mrb[0].mxu0 %v585
  %v1367 = vpop.f32.mrb[0].mxu0
  %v1368 = vadd.f32 %v1079, %v1367
  %v1369 = vpop.f32.mrb[0].mxu0
  %v1370 = vpop.f32.mrb[0].mxu0
  %v1371 = vadd.f32 %v1082, %v1370
  %v1372 = vpop.f32.mrb[0].mxu0
  %1373 = vmatprep.mubr.bf16.mxu0 0
  %1374 = vmatmul.mubr.bf16.gmra.mrb[0].mxu0 %v588
  %v1375 = vpop.f32.mrb[0].mxu0
  %v1376 = vadd.f32 %v1087, %v1375
  %v1377 = vpop.f32.mrb[0].mxu0
  %v1378 = vpop.f32.mrb[0].mxu0
  %v1379 = vadd.f32 %v1090, %v1378
  %v1380 = vpop.f32.mrb[0].mxu0
  %1381 = vmatprep.mubr.bf16.mxu0 0
  %1382 = vmatmul.mubr.bf16.gmra.mrb[0].mxu0 %v591
  %v1383 = vpop.f32.mrb[0].mxu0
  %v1384 = vadd.f32 %v1095, %v1383
  %v1385 = vpop.f32.mrb[0].mxu0
  %v1386 = vpop.f32.mrb[0].mxu0
  %v1387 = vadd.f32 %v1098, %v1386
  %v1388 = vpop.f32.mrb[0].mxu0
  %1389 = vmatprep.mubr.bf16.mxu0 0
  %1390 = vmatmul.mubr.bf16.gmra.mrb[0].mxu0 %v594
  %v1391 = vpop.f32.mrb[0].mxu0
  %v1392 = vadd.f32 %v1103, %v1391
  %v1393 = vpop.f32.mrb[0].mxu0
  %v1394 = vpop.f32.mrb[0].mxu0
  %v1395 = vadd.f32 %v1106, %v1394
  %v1396 = vpop.f32.mrb[0].mxu0
  %1397 = vmatprep.mubr.bf16.mxu0 0
  %1398 = vmatmul.mubr.bf16.gmra.mrb[0].mxu0 %v597
  %v1399 = vpop.f32.mrb[0].mxu0
  %v1400 = vadd.f32 %v1111, %v1399
  %v1401 = vpop.f32.mrb[0].mxu0
  %v1402 = vpop.f32.mrb[0].mxu0
  %v1403 = vadd.f32 %v1114, %v1402
  %v1404 = vpop.f32.mrb[0].mxu0
  %1405 = vmatprep.mubr.bf16.mxu0 0
  %1406 = vmatmul.mubr.bf16.gmra.mrb[0].mxu0 %v600
  %v1407 = vpop.f32.mrb[0].mxu0
  %v1408 = vadd.f32 %v1119, %v1407
  %v1409 = vpop.f32.mrb[0].mxu0
  %v1410 = vpop.f32.mrb[0].mxu0
  %v1411 = vadd.f32 %v1122, %v1410
  %v1412 = vpop.f32.mrb[0].mxu0
  %1413 = vmatprep.mubr.bf16.mxu0 0
  %1414 = vmatmul.mubr.bf16.gmra.mrb[0].mxu0 %v603
  %v1415 = vpop.f32.mrb[0].mxu0
  %v1416 = vadd.f32 %v1127, %v1415
  %v1417 = vpop.f32.mrb[0].mxu0
  %v1418 = vpop.f32.mrb[0].mxu0
  %v1419 = vadd.f32 %v1130, %v1418
  %v1420 = vpop.f32.mrb[0].mxu0
  %1421 = vdwg.mxu0
  %1422 = vst [vmem:[%s2] sm:$0xff] %v1168
  %1423 = vst [vmem:[%s2 + $0x8] sm:$0xff] %v1171
  %1424 = vst [vmem:[%s2 + $0x10] sm:$0xff] %v1176
  %1425 = vst [vmem:[%s2 + $0x18] sm:$0xff] %v1179
  %1426 = vst [vmem:[%s2 + $0x20] sm:$0xff] %v1184
  %1427 = vst [vmem:[%s2 + $0x28] sm:$0xff] %v1187
  %1428 = vst [vmem:[%s2 + $0x30] sm:$0xff] %v1192
  %1429 = vst [vmem:[%s2 + $0x38] sm:$0xff] %v1195
  %1430 = vst [vmem:[%s2 + $0x40] sm:$0xff] %v1200
  %1431 = vst [vmem:[%s2 + $0x48] sm:$0xff] %v1203
  %1432 = vst [vmem:[%s2 + $0x50] sm:$0xff] %v1208
  %1433 = vst [vmem:[%s2 + $0x58] sm:$0xff] %v1211
  %1434 = vst [vmem:[%s2 + $0x60] sm:$0xff] %v1216
  %1435 = vst [vmem:[%s2 + $0x68] sm:$0xff] %v1219
  %1436 = vst [vmem:[%s2 + $0x70] sm:$0xff] %v1224
  %1437 = vst [vmem:[%s2 + $0x78] sm:$0xff] %v1227
  %1438 = vst [vmem:[%s2 + $0x80] sm:$0xff] %v1232
  %1439 = vst [vmem:[%s2 + $0x88] sm:$0xff] %v1235
  %1440 = vst [vmem:[%s2 + $0x90] sm:$0xff] %v1240
  %1441 = vst [vmem:[%s2 + $0x98] sm:$0xff] %v1243
  %1442 = vst [vmem:[%s2 + $0xa0] sm:$0xff] %v1248
  %1443 = vst [vmem:[%s2 + $0xa8] sm:$0xff] %v1251
  %1444 = vst [vmem:[%s2 + $0xb0] sm:$0xff] %v1256
  %1445 = vst [vmem:[%s2 + $0xb8] sm:$0xff] %v1259
  %1446 = vst [vmem:[%s2 + $0xc0] sm:$0xff] %v1264
  %1447 = vst [vmem:[%s2 + $0xc8] sm:$0xff] %v1267
  %1448 = vst [vmem:[%s2 + $0xd0] sm:$0xff] %v1272
  %1449 = vst [vmem:[%s2 + $0xd8] sm:$0xff] %v1275
  %1450 = vst [vmem:[%s2 + $0xe0] sm:$0xff] %v1280
  %1451 = vst [vmem:[%s2 + $0xe8] sm:$0xff] %v1283
  %1452 = vst [vmem:[%s2 + $0xf0] sm:$0xff] %v1288
  %1453 = vst [vmem:[%s2 + $0xf8] sm:$0xff] %v1291
  %1454 = vst [vmem:[%s2 + $0x100] sm:$0xff] %v1296
  %1455 = vst [vmem:[%s2 + $0x108] sm:$0xff] %v1299
  %1456 = vst [vmem:[%s2 + $0x110] sm:$0xff] %v1304
  %1457 = vst [vmem:[%s2 + $0x118] sm:$0xff] %v1307
  %1458 = vst [vmem:[%s2 + $0x120] sm:$0xff] %v1312
  %1459 = vst [vmem:[%s2 + $0x128] sm:$0xff] %v1315
  %1460 = vst [vmem:[%s2 + $0x130] sm:$0xff] %v1320
  %1461 = vst [vmem:[%s2 + $0x138] sm:$0xff] %v1323
  %1462 = vst [vmem:[%s2 + $0x140] sm:$0xff] %v1328
  %1463 = vst [vmem:[%s2 + $0x148] sm:$0xff] %v1331
  %1464 = vst [vmem:[%s2 + $0x150] sm:$0xff] %v1336
  %1465 = vst [vmem:[%s2 + $0x158] sm:$0xff] %v1339
  %1466 = vst [vmem:[%s2 + $0x160] sm:$0xff] %v1344
  %1467 = vst [vmem:[%s2 + $0x168] sm:$0xff] %v1347
  %1468 = vst [vmem:[%s2 + $0x170] sm:$0xff] %v1352
  %1469 = vst [vmem:[%s2 + $0x178] sm:$0xff] %v1355
  %1470 = vst [vmem:[%s2 + $0x180] sm:$0xff] %v1360
  %1471 = vst [vmem:[%s2 + $0x188] sm:$0xff] %v1363
  %1472 = vst [vmem:[%s2 + $0x190] sm:$0xff] %v1368
  %1473 = vst [vmem:[%s2 + $0x198] sm:$0xff] %v1371
  %1474 = vst [vmem:[%s2 + $0x1a0] sm:$0xff] %v1376
  %1475 = vst [vmem:[%s2 + $0x1a8] sm:$0xff] %v1379
  %1476 = vst [vmem:[%s2 + $0x1b0] sm:$0xff] %v1384
  %1477 = vst [vmem:[%s2 + $0x1b8] sm:$0xff] %v1387
  %1478 = vst [vmem:[%s2 + $0x1c0] sm:$0xff] %v1392
  %1479 = vst [vmem:[%s2 + $0x1c8] sm:$0xff] %v1395
  %1480 = vst [vmem:[%s2 + $0x1d0] sm:$0xff] %v1400
  %1481 = vst [vmem:[%s2 + $0x1d8] sm:$0xff] %v1403
  %1482 = vst [vmem:[%s2 + $0x1e0] sm:$0xff] %v1408
  %1483 = vst [vmem:[%s2 + $0x1e8] sm:$0xff] %v1411
  %1484 = vst [vmem:[%s2 + $0x1f0] sm:$0xff] %v1416
  %1485 = vst [vmem:[%s2 + $0x1f8] sm:$0xff] %v1419
  // Predicated region
  $region10: #{cnn_autoencoder_forward.29} parent=0 // pred_check
    _
  $region11: #{cnn_autoencoder_forward.29} parent=0 // pred_check_branch
    %1487 = sbr.rel (0) target = $region13
  $region12: #{cnn_autoencoder_forward.29} parent=0 // pred_region
    _
  $region13: #{cnn_autoencoder_forward.29} parent=0 // pred_fallthru
    _
  // Predicated region
  $region14: #{cnn_autoencoder_forward.29} parent=0 // pred_check
    _
  $region15: #{cnn_autoencoder_forward.29} parent=0 // pred_check_branch
    %1489 = sbr.rel (0) target = $region17
  $region16: #{cnn_autoencoder_forward.29} parent=0 // pred_region
    _
  $region17: #{cnn_autoencoder_forward.29} parent=0 // pred_fallthru
    _

</llo_original>
